<compile_context>
chip_gen: v7x
topology: tpu7x:2x2x1
jax: 0.10.0
libtpu: 0.0.40
codegen_flags: <defaults>
</compile_context>

<pallas_src>
import math
import jax
import jax.numpy as jnp
from jax import lax
from jax.experimental import pallas as pl
from jax.experimental.pallas import tpu as pltpu  # noqa: F401  (TPU backend import)

# ----------------------------- configuration --------------------------------
B = 2            # batch
S = 8            # sequence length
VOCAB = 50       # synthetic vocab
D_BERT = 64      # "bert" hidden size (bert-base would be 768)
H = 32           # LSTM hidden size (module default 256, small here)
FFN = 128        # encoder FFN size
NUM_NER = 5
NUM_SENT = 3
LANE = 128       # lane-dense output width


# ------------------------------- helpers ------------------------------------
def _layernorm(x, g, b, eps=1e-12):
    mu = jnp.mean(x, axis=-1, keepdims=True)
    var = jnp.mean((x - mu) ** 2, axis=-1, keepdims=True)
    return (x - mu) * lax.rsqrt(var + eps) * g + b


def _gelu(x):
    return 0.5 * x * (1.0 + jnp.tanh(0.7978845608028654 * (x + 0.044715 * x * x * x)))


def _lstm_cell(gates, c):
    """gates: (B, 4H) pre-activation (i,f,g,o); c: (B, H) or None for step 0."""
    sig = jax.nn.sigmoid(gates)     # full-width EUP op over all 4H lanes
    th = jnp.tanh(gates)            # full-width EUP op
    i = sig[:, 0:H]
    f = sig[:, H:2 * H]
    g = th[:, 2 * H:3 * H]
    o = sig[:, 3 * H:4 * H]
    c_new = i * g if c is None else f * c + i * g
    h_new = o * jnp.tanh(c_new)
    return h_new, c_new


def _bilstm(x_tm, wi_ref, wh_ref, b_ref):
    """Bidirectional LSTM over time-major input.

    x_tm:   (S*B, Din) value, row r = t*B + b
    wi_ref: (Din, 8H)   [Wi_fwd | Wi_bwd]
    wh_ref: (H,   8H)   [Wh_fwd | Wh_bwd]
    b_ref:  (1,   8H)   [b_fwd  | b_bwd]
    returns (S*B, 2H) time-major [fwd | bwd] outputs.
    """
    G = 4 * H
    # hoisted input projection: one well-shaped matmul instead of 2*S tiny ones
    gx = jnp.dot(x_tm, wi_ref[...], preferred_element_type=jnp.float32) + b_ref[...]
    wh = wh_ref[...]
    wh_f = wh[:, 0:G]
    wh_b = wh[:, G:2 * G]

    h_f = h_b = None
    c_f = c_b = None
    outs_f = [None] * S
    outs_b = [None] * S
    for t in range(S):                      # static unroll: whole recurrence is straight-line code
        rf = t * B
        rb = (S - 1 - t) * B
        gf = gx[rf:rf + B, 0:G]
        gb = gx[rb:rb + B, G:2 * G]
        if t > 0:                           # h == 0 at t == 0, skip the recurrent matmul
            gf = gf + jnp.dot(h_f, wh_f, preferred_element_type=jnp.float32)
            gb = gb + jnp.dot(h_b, wh_b, preferred_element_type=jnp.float32)
        h_f, c_f = _lstm_cell(gf, c_f)
        h_b, c_b = _lstm_cell(gb, c_b)
        outs_f[t] = h_f
        outs_b[S - 1 - t] = h_b

    out_f = jnp.concatenate(outs_f, axis=0)               # (S*B, H), rows t*B+b
    out_b = jnp.concatenate(outs_b, axis=0)                # (S*B, H), rows t*B+b
    return jnp.concatenate([out_f, out_b], axis=-1)        # (S*B, 2H)


# ------------------------- fused forward kernel ------------------------------
def fused_forward_kernel(
        emb_ref, bias_ref,
        wqkv_ref, bqkv_ref, wo_ref, bo_ref, ln1_ref,
        w1_ref, b1_ref, w2_ref, b2_ref, ln2_ref,
        wi0_ref, wh0_ref, b0_ref,
        wi1_ref, wh1_ref, b1l_ref,
        wi2_ref, wh2_ref, b2l_ref,
        wi3_ref, wh3_ref, b3l_ref,
        sw1_ref, sb1_ref, sw2_ref,
        ncw_ref, nrw_ref, nb_ref,
        scw_ref, srw_ref, sb_ref,
        ner_out_ref, sent_out_ref):
    x = emb_ref[...]                                       # (S*B, D) time-major
    d = x.shape[-1]

    # ---------------- BERT-like encoder layer (single layer, single head) ----
    qkv = jnp.dot(x, wqkv_ref[...], preferred_element_type=jnp.float32) + bqkv_ref[...]
    q = qkv[:, 0:d]
    k = qkv[:, d:2 * d]
    v = qkv[:, 2 * d:3 * d]

    scores = (jnp.dot(q, k.T, preferred_element_type=jnp.float32) * (1.0 / math.sqrt(d))
              + bias_ref[...])                             # block-diag batch mask + padding mask
    m = jnp.max(scores, axis=-1, keepdims=True)
    e = jnp.exp(scores - m)
    attn = e / jnp.sum(e, axis=-1, keepdims=True)

    ctx = jnp.dot(attn, v, preferred_element_type=jnp.float32)
    attn_out = jnp.dot(ctx, wo_ref[...], preferred_element_type=jnp.float32) + bo_ref[...]
    ln1 = ln1_ref[...]
    h1 = _layernorm(x + attn_out, ln1[0:1, :], ln1[1:2, :])

    ffn = jnp.dot(_gelu(jnp.dot(h1, w1_ref[...], preferred_element_type=jnp.float32) + b1_ref[...]),
                  w2_ref[...], preferred_element_type=jnp.float32) + b2_ref[...]
    ln2 = ln2_ref[...]
    seq = _layernorm(h1 + ffn, ln2[0:1, :], ln2[1:2, :])   # (S*B, D) sequence_output

    # ---------------- LSTM stack (all time-major, all in VMEM) ---------------
    h = _bilstm(seq, wi0_ref, wh0_ref, b0_ref)             # shared layer 0
    h = _bilstm(h, wi1_ref, wh1_ref, b1l_ref)              # shared layer 1
    ner_h = _bilstm(h, wi2_ref, wh2_ref, b2l_ref)          # NER branch (independent of sent branch)
    sent_h = _bilstm(h, wi3_ref, wh3_ref, b3l_ref)         # sentiment branch

    # ---------------- heads ---------------------------------------------------
    # TODO(synk): the reference computes ner_attention weights but never uses them
    #             for the returned outputs — dead code removed here.
    # Token-level NER logits + BERT residual, written lane-dense into 128 lanes.
    ner_out_ref[...] = (jnp.dot(ner_h, ncw_ref[...], preferred_element_type=jnp.float32)
                        + jnp.dot(seq, nrw_ref[...], preferred_element_type=jnp.float32)
                        + nb_ref[...])                     # (S*B, 128)

    # Sentiment attention pooling: softmax over the S positions of each batch row.
    # (the reference does not mask padded positions here; matched.)
    # The final attention bias `sb2` is omitted: softmax is shift-invariant.
    s_scores = jnp.dot(jnp.tanh(jnp.dot(sent_h, sw1_ref[...],
                                        preferred_element_type=jnp.float32) + sb1_ref[...]),
                       sw2_ref[...], preferred_element_type=jnp.float32)     # (S*B, 1)

    row_id = lax.broadcasted_iota(jnp.int32, (S * B, 1), 0)
    att_rows = []
    for b in range(B):                                     # static unroll over batch
        sel = (row_id % B) == b                            # rows of batch b in time-major order
        msc = jnp.where(sel, s_scores, -1e30)
        mmax = jnp.max(msc, axis=0, keepdims=True)
        ew = jnp.where(sel, jnp.exp(s_scores - mmax), 0.0)
        w = ew / jnp.sum(ew, axis=0, keepdims=True)        # (S*B, 1), zero outside batch b
        att_rows.append(jnp.sum(w * sent_h, axis=0, keepdims=True))   # (1, 2H)
    attended = jnp.concatenate(att_rows, axis=0)           # (B, 2H)

    cls = seq[0:B, :]                                      # time-major rows t=0 == sequence_output[:, 0, :]
    sent_out_ref[...] = (jnp.dot(attended, scw_ref[...], preferred_element_type=jnp.float32)
                         + jnp.dot(cls, srw_ref[...], preferred_element_type=jnp.float32)
                         + sb_ref[...])                    # (B, 128)


# ------------------------------ parameters -----------------------------------
def init_params(key):
    ks = iter(jax.random.split(key, 64))

    def w(*shape, scale=0.02):
        return jax.random.normal(next(ks), shape, jnp.float32) * scale

    def zeros(*shape):
        return jnp.zeros(shape, jnp.float32)

    def ones(*shape):
        return jnp.ones(shape, jnp.float32)

    def pad_lanes(a):
        return jnp.pad(a, ((0, 0), (0, LANE - a.shape[1])))

    bert = dict(
        word_emb=w(VOCAB, D_BERT), pos_emb=w(S, D_BERT), type_emb=w(1, D_BERT),
        emb_ln_g=ones(D_BERT), emb_ln_b=zeros(D_BERT),
        # fused QKV projection
        wqkv=w(D_BERT, 3 * D_BERT), bqkv=zeros(1, 3 * D_BERT),
        wo=w(D_BERT, D_BERT), bo=zeros(1, D_BERT),
        ln1=jnp.concatenate([ones(1, D_BERT), zeros(1, D_BERT)], axis=0),   # rows: [gamma; beta]
        w1=w(D_BERT, FFN), b1=zeros(1, FFN),
        w2=w(FFN, D_BERT), b2=zeros(1, D_BERT),
        ln2=jnp.concatenate([ones(1, D_BERT), zeros(1, D_BERT)], axis=0),
    )

    def lstm(din):
        # [fwd | bwd] concatenated along the output dim; gate order i,f,g,o per direction
        return dict(wi=w(din, 8 * H), wh=w(H, 8 * H), b=zeros(1, 8 * H))

    lstms = [lstm(D_BERT), lstm(2 * H), lstm(2 * H), lstm(2 * H)]

    heads = dict(
        # sentiment attention MLP (ner attention is dead code in the reference -> omitted)
        sw1=w(2 * H, H), sb1=zeros(1, H), sw2=w(H, 1),
        # classifier + residual weights zero-padded to 128 lanes for lane-dense stores;
        # the classifier & residual bias vectors are pre-summed (they simply add).
        ncw=pad_lanes(w(2 * H, NUM_NER)), nrw=pad_lanes(w(D_BERT, NUM_NER)),
        nb=pad_lanes(zeros(1, NUM_NER)),
        scw=pad_lanes(w(2 * H, NUM_SENT)), srw=pad_lanes(w(D_BERT, NUM_SENT)),
        sb=pad_lanes(zeros(1, NUM_SENT)),
    )

    return dict(bert=bert, lstms=lstms, heads=heads)


# -------------------------------- forward ------------------------------------
@jax.jit
def forward(input_ids, attention_mask, params):
    pb = params['bert']
    ph = params['heads']

    # embeddings: gather + elementwise layernorm (glue, outside the kernel)
    we = pb['word_emb'][input_ids]                              # (B, S, D)
    emb = we + pb['pos_emb'][None, :, :] + pb['type_emb'][0][None, None, :]
    emb = _layernorm(emb, pb['emb_ln_g'], pb['emb_ln_b'])
    emb_tm = emb.transpose(1, 0, 2).reshape(S * B, D_BERT)      # time-major rows t*B+b

    # additive attention bias over the flattened rows:
    #   -1e9 for cross-batch pairs and for padded key positions.
    amask = attention_mask.astype(jnp.float32)                  # (B, S)
    cross = (1.0 - jnp.eye(B, dtype=jnp.float32)) * -1e9        # (B, B)
    keym = ((1.0 - amask) * -1e9).T                             # (S, B) indexed [t', b']
    bias = cross[None, :, None, :] + keym[None, None, :, :]     # (1, B, S, B)
    bias = jnp.broadcast_to(bias, (S, B, S, B)).reshape(S * B, S * B)

    args = [emb_tm, bias,
            pb['wqkv'], pb['bqkv'], pb['wo'], pb['bo'], pb['ln1'],
            pb['w1'], pb['b1'], pb['w2'], pb['b2'], pb['ln2']]
    for lp in params['lstms']:
        args += [lp['wi'], lp['wh'], lp['b']]
    args += [ph['sw1'], ph['sb1'], ph['sw2'],
             ph['ncw'], ph['nrw'], ph['nb'],
             ph['scw'], ph['srw'], ph['sb']]

    # Single fused kernel: everything (< 1 MiB of weights + activations) lives in VMEM.
    ner_slab, sent_slab = pl.pallas_call(
        fused_forward_kernel,
        out_shape=(jax.ShapeDtypeStruct((S * B, LANE), jnp.float32),
                   jax.ShapeDtypeStruct((B, LANE), jnp.float32)),
    )(*args)

    # layout plumbing back to (B, S, NUM_NER) / (B, NUM_SENT) in the wrapper
    ner_out = ner_slab.reshape(S, B, LANE)[:, :, :NUM_NER].transpose(1, 0, 2)
    sent_out = sent_slab[:, :NUM_SENT]
    return ner_out, sent_out


# --------------------------------- main ---------------------------------------
if __name__ == "__main__":
    key = jax.random.PRNGKey(0)
    pkey, dkey = jax.random.split(key)
    params = init_params(pkey)

    input_ids = jax.random.randint(dkey, (B, S), 0, VOCAB, dtype=jnp.int32)
    attention_mask = jnp.ones((B, S), jnp.int32).at[1, S - 2:].set(0)

    ner_out, sent_out = forward(input_ids, attention_mask, params)
    jax.block_until_ready((ner_out, sent_out))

    assert ner_out.shape == (B, S, NUM_NER), ner_out.shape
    assert sent_out.shape == (B, NUM_SENT), sent_out.shape
    assert bool(jnp.all(jnp.isfinite(ner_out))) and bool(jnp.all(jnp.isfinite(sent_out)))
    print("KERNEL_OK")
</pallas_src>

<mosaic_0001>
module attributes {stable_mosaic.version = 11 : i64} {
  func.func @fused_forward_kernel(%arg0: memref<16x64xf32, #tpu.memory_space<vmem>>, %arg1: memref<16x16xf32, #tpu.memory_space<vmem>>, %arg2: memref<64x192xf32, #tpu.memory_space<vmem>>, %arg3: memref<1x192xf32, #tpu.memory_space<vmem>>, %arg4: memref<64x64xf32, #tpu.memory_space<vmem>>, %arg5: memref<1x64xf32, #tpu.memory_space<vmem>>, %arg6: memref<2x64xf32, #tpu.memory_space<vmem>>, %arg7: memref<64x128xf32, #tpu.memory_space<vmem>>, %arg8: memref<1x128xf32, #tpu.memory_space<vmem>>, %arg9: memref<128x64xf32, #tpu.memory_space<vmem>>, %arg10: memref<1x64xf32, #tpu.memory_space<vmem>>, %arg11: memref<2x64xf32, #tpu.memory_space<vmem>>, %arg12: memref<64x256xf32, #tpu.memory_space<vmem>>, %arg13: memref<32x256xf32, #tpu.memory_space<vmem>>, %arg14: memref<1x256xf32, #tpu.memory_space<vmem>>, %arg15: memref<64x256xf32, #tpu.memory_space<vmem>>, %arg16: memref<32x256xf32, #tpu.memory_space<vmem>>, %arg17: memref<1x256xf32, #tpu.memory_space<vmem>>, %arg18: memref<64x256xf32, #tpu.memory_space<vmem>>, %arg19: memref<32x256xf32, #tpu.memory_space<vmem>>, %arg20: memref<1x256xf32, #tpu.memory_space<vmem>>, %arg21: memref<64x256xf32, #tpu.memory_space<vmem>>, %arg22: memref<32x256xf32, #tpu.memory_space<vmem>>, %arg23: memref<1x256xf32, #tpu.memory_space<vmem>>, %arg24: memref<64x32xf32, #tpu.memory_space<vmem>>, %arg25: memref<1x32xf32, #tpu.memory_space<vmem>>, %arg26: memref<32x1xf32, #tpu.memory_space<vmem>>, %arg27: memref<64x128xf32, #tpu.memory_space<vmem>>, %arg28: memref<64x128xf32, #tpu.memory_space<vmem>>, %arg29: memref<1x128xf32, #tpu.memory_space<vmem>>, %arg30: memref<64x128xf32, #tpu.memory_space<vmem>>, %arg31: memref<64x128xf32, #tpu.memory_space<vmem>>, %arg32: memref<1x128xf32, #tpu.memory_space<vmem>>, %arg33: memref<16x128xf32, #tpu.memory_space<vmem>>, %arg34: memref<2x128xf32, #tpu.memory_space<vmem>>) attributes {dimension_semantics = [], scalar_prefetch = 0 : i64, scratch_operands = 0 : i64, tpu.core_type = #tpu.core_type<tc>} {
    %c0 = arith.constant 0 : index
    %c0_0 = arith.constant 0 : index
    %0 = vector.load %arg0[%c0, %c0_0] : memref<16x64xf32, #tpu.memory_space<vmem>>, vector<16x64xf32>
    %c0_1 = arith.constant 0 : index
    %c0_2 = arith.constant 0 : index
    %1 = vector.load %arg2[%c0_1, %c0_2] : memref<64x192xf32, #tpu.memory_space<vmem>>, vector<64x192xf32>
    %cst = arith.constant dense<0.000000e+00> : vector<16x192xf32>
    %2 = tpu.matmul %0, %1, %cst {dimension_numbers = #tpu.dot_dimension_numbers<[1], [0], [0], [1], [0, 0, 1, 1], [], []>} : vector<16x64xf32>, vector<64x192xf32>, vector<16x192xf32> -> vector<16x192xf32>
    %c0_3 = arith.constant 0 : index
    %c0_4 = arith.constant 0 : index
    %3 = vector.load %arg3[%c0_3, %c0_4] : memref<1x192xf32, #tpu.memory_space<vmem>>, vector<1x192xf32>
    %4 = vector.broadcast %3 : vector<1x192xf32> to vector<16x192xf32>
    %5 = arith.addf %2, %4 : vector<16x192xf32>
    %6 = vector.extract_strided_slice %5 {offsets = [0, 0], sizes = [16, 64], strides = [1, 1]} : vector<16x192xf32> to vector<16x64xf32>
    %7 = vector.extract_strided_slice %5 {offsets = [0, 64], sizes = [16, 64], strides = [1, 1]} : vector<16x192xf32> to vector<16x64xf32>
    %8 = vector.extract_strided_slice %5 {offsets = [0, 128], sizes = [16, 64], strides = [1, 1]} : vector<16x192xf32> to vector<16x64xf32>
    %9 = tpu.transpose %7, [1, 0] : vector<16x64xf32> -> vector<64x16xf32>
    %cst_5 = arith.constant dense<0.000000e+00> : vector<16x16xf32>
    %10 = tpu.matmul %6, %9, %cst_5 {dimension_numbers = #tpu.dot_dimension_numbers<[1], [0], [0], [1], [0, 0, 1, 1], [], []>} : vector<16x64xf32>, vector<64x16xf32>, vector<16x16xf32> -> vector<16x16xf32>
    %cst_6 = arith.constant 1.250000e-01 : f32
    %11 = vector.broadcast %cst_6 : f32 to vector<16x16xf32>
    %12 = arith.mulf %10, %11 : vector<16x16xf32>
    %c0_7 = arith.constant 0 : index
    %c0_8 = arith.constant 0 : index
    %13 = vector.load %arg1[%c0_7, %c0_8] : memref<16x16xf32, #tpu.memory_space<vmem>>, vector<16x16xf32>
    %14 = arith.addf %12, %13 : vector<16x16xf32>
    %cst_9 = arith.constant dense<0xFF800000> : vector<16xf32>
    %15 = vector.multi_reduction <maximumf>, %14, %cst_9 [1] : vector<16x16xf32> to vector<16xf32>
    %16 = vector.shape_cast %15 : vector<16xf32> to vector<16x1xf32>
    %17 = vector.broadcast %16 : vector<16x1xf32> to vector<16x16xf32>
    %18 = arith.subf %14, %17 : vector<16x16xf32>
    %19 = math.exp %18 : vector<16x16xf32>
    %cst_10 = arith.constant dense<0.000000e+00> : vector<16xf32>
    %20 = vector.multi_reduction <add>, %19, %cst_10 [1] : vector<16x16xf32> to vector<16xf32>
    %21 = vector.shape_cast %20 : vector<16xf32> to vector<16x1xf32>
    %22 = vector.broadcast %21 : vector<16x1xf32> to vector<16x16xf32>
    %23 = arith.divf %19, %22 : vector<16x16xf32>
    %cst_11 = arith.constant dense<0.000000e+00> : vector<16x64xf32>
    %24 = tpu.matmul %23, %8, %cst_11 {dimension_numbers = #tpu.dot_dimension_numbers<[1], [0], [0], [1], [0, 0, 1, 1], [], []>} : vector<16x16xf32>, vector<16x64xf32>, vector<16x64xf32> -> vector<16x64xf32>
    %c0_12 = arith.constant 0 : index
    %c0_13 = arith.constant 0 : index
    %25 = vector.load %arg4[%c0_12, %c0_13] : memref<64x64xf32, #tpu.memory_space<vmem>>, vector<64x64xf32>
    %cst_14 = arith.constant dense<0.000000e+00> : vector<16x64xf32>
    %26 = tpu.matmul %24, %25, %cst_14 {dimension_numbers = #tpu.dot_dimension_numbers<[1], [0], [0], [1], [0, 0, 1, 1], [], []>} : vector<16x64xf32>, vector<64x64xf32>, vector<16x64xf32> -> vector<16x64xf32>
    %c0_15 = arith.constant 0 : index
    %c0_16 = arith.constant 0 : index
    %27 = vector.load %arg5[%c0_15, %c0_16] : memref<1x64xf32, #tpu.memory_space<vmem>>, vector<1x64xf32>
    %28 = vector.broadcast %27 : vector<1x64xf32> to vector<16x64xf32>
    %29 = arith.addf %26, %28 : vector<16x64xf32>
    %c0_17 = arith.constant 0 : index
    %c0_18 = arith.constant 0 : index
    %30 = vector.load %arg6[%c0_17, %c0_18] : memref<2x64xf32, #tpu.memory_space<vmem>>, vector<2x64xf32>
    %31 = arith.addf %0, %29 : vector<16x64xf32>
    %32 = vector.extract_strided_slice %30 {offsets = [0, 0], sizes = [1, 64], strides = [1, 1]} : vector<2x64xf32> to vector<1x64xf32>
    %33 = vector.extract_strided_slice %30 {offsets = [1, 0], sizes = [1, 64], strides = [1, 1]} : vector<2x64xf32> to vector<1x64xf32>
    %cst_19 = arith.constant dense<0.000000e+00> : vector<16xf32>
    %34 = vector.multi_reduction <add>, %31, %cst_19 [1] : vector<16x64xf32> to vector<16xf32>
    %35 = vector.shape_cast %34 : vector<16xf32> to vector<16x1xf32>
    %cst_20 = arith.constant 6.400000e+01 : f32
    %36 = vector.broadcast %cst_20 : f32 to vector<16x1xf32>
    %37 = arith.divf %35, %36 : vector<16x1xf32>
    %38 = vector.broadcast %37 : vector<16x1xf32> to vector<16x64xf32>
    %39 = arith.subf %31, %38 : vector<16x64xf32>
    %40 = arith.mulf %39, %39 : vector<16x64xf32>
    %cst_21 = arith.constant dense<0.000000e+00> : vector<16xf32>
    %41 = vector.multi_reduction <add>, %40, %cst_21 [1] : vector<16x64xf32> to vector<16xf32>
    %42 = vector.shape_cast %41 : vector<16xf32> to vector<16x1xf32>
    %cst_22 = arith.constant 6.400000e+01 : f32
    %43 = vector.broadcast %cst_22 : f32 to vector<16x1xf32>
    %44 = arith.divf %42, %43 : vector<16x1xf32>
    %45 = vector.broadcast %37 : vector<16x1xf32> to vector<16x64xf32>
    %46 = arith.subf %31, %45 : vector<16x64xf32>
    %cst_23 = arith.constant 9.99999996E-13 : f32
    %47 = vector.broadcast %cst_23 : f32 to vector<16x1xf32>
    %48 = arith.addf %44, %47 : vector<16x1xf32>
    %49 = math.rsqrt %48 : vector<16x1xf32>
    %50 = vector.broadcast %49 : vector<16x1xf32> to vector<16x64xf32>
    %51 = arith.mulf %46, %50 : vector<16x64xf32>
    %52 = vector.broadcast %32 : vector<1x64xf32> to vector<16x64xf32>
    %53 = arith.mulf %51, %52 : vector<16x64xf32>
    %54 = vector.broadcast %33 : vector<1x64xf32> to vector<16x64xf32>
    %55 = arith.addf %53, %54 : vector<16x64xf32>
    %c0_24 = arith.constant 0 : index
    %c0_25 = arith.constant 0 : index
    %56 = vector.load %arg7[%c0_24, %c0_25] : memref<64x128xf32, #tpu.memory_space<vmem>>, vector<64x128xf32>
    %cst_26 = arith.constant dense<0.000000e+00> : vector<16x128xf32>
    %57 = tpu.matmul %55, %56, %cst_26 {dimension_numbers = #tpu.dot_dimension_numbers<[1], [0], [0], [1], [0, 0, 1, 1], [], []>} : vector<16x64xf32>, vector<64x128xf32>, vector<16x128xf32> -> vector<16x128xf32>
    %c0_27 = arith.constant 0 : index
    %c0_28 = arith.constant 0 : index
    %58 = vector.load %arg8[%c0_27, %c0_28] : memref<1x128xf32, #tpu.memory_space<vmem>>, vector<1x128xf32>
    %59 = vector.broadcast %58 : vector<1x128xf32> to vector<16x128xf32>
    %60 = arith.addf %57, %59 : vector<16x128xf32>
    %cst_29 = arith.constant 5.000000e-01 : f32
    %61 = vector.broadcast %cst_29 : f32 to vector<16x128xf32>
    %62 = arith.mulf %61, %60 : vector<16x128xf32>
    %cst_30 = arith.constant 4.471500e-02 : f32
    %63 = vector.broadcast %cst_30 : f32 to vector<16x128xf32>
    %64 = arith.mulf %63, %60 : vector<16x128xf32>
    %65 = arith.mulf %64, %60 : vector<16x128xf32>
    %66 = arith.mulf %65, %60 : vector<16x128xf32>
    %67 = arith.addf %60, %66 : vector<16x128xf32>
    %cst_31 = arith.constant 0.797884583 : f32
    %68 = vector.broadcast %cst_31 : f32 to vector<16x128xf32>
    %69 = arith.mulf %68, %67 : vector<16x128xf32>
    %70 = math.tanh %69 : vector<16x128xf32>
    %cst_32 = arith.constant 1.000000e+00 : f32
    %71 = vector.broadcast %cst_32 : f32 to vector<16x128xf32>
    %72 = arith.addf %71, %70 : vector<16x128xf32>
    %73 = arith.mulf %62, %72 : vector<16x128xf32>
    %c0_33 = arith.constant 0 : index
    %c0_34 = arith.constant 0 : index
    %74 = vector.load %arg9[%c0_33, %c0_34] : memref<128x64xf32, #tpu.memory_space<vmem>>, vector<128x64xf32>
    %cst_35 = arith.constant dense<0.000000e+00> : vector<16x64xf32>
    %75 = tpu.matmul %73, %74, %cst_35 {dimension_numbers = #tpu.dot_dimension_numbers<[1], [0], [0], [1], [0, 0, 1, 1], [], []>} : vector<16x128xf32>, vector<128x64xf32>, vector<16x64xf32> -> vector<16x64xf32>
    %c0_36 = arith.constant 0 : index
    %c0_37 = arith.constant 0 : index
    %76 = vector.load %arg10[%c0_36, %c0_37] : memref<1x64xf32, #tpu.memory_space<vmem>>, vector<1x64xf32>
    %77 = vector.broadcast %76 : vector<1x64xf32> to vector<16x64xf32>
    %78 = arith.addf %75, %77 : vector<16x64xf32>
    %c0_38 = arith.constant 0 : index
    %c0_39 = arith.constant 0 : index
    %79 = vector.load %arg11[%c0_38, %c0_39] : memref<2x64xf32, #tpu.memory_space<vmem>>, vector<2x64xf32>
    %80 = arith.addf %55, %78 : vector<16x64xf32>
    %81 = vector.extract_strided_slice %79 {offsets = [0, 0], sizes = [1, 64], strides = [1, 1]} : vector<2x64xf32> to vector<1x64xf32>
    %82 = vector.extract_strided_slice %79 {offsets = [1, 0], sizes = [1, 64], strides = [1, 1]} : vector<2x64xf32> to vector<1x64xf32>
    %cst_40 = arith.constant dense<0.000000e+00> : vector<16xf32>
    %83 = vector.multi_reduction <add>, %80, %cst_40 [1] : vector<16x64xf32> to vector<16xf32>
    %84 = vector.shape_cast %83 : vector<16xf32> to vector<16x1xf32>
    %cst_41 = arith.constant 6.400000e+01 : f32
    %85 = vector.broadcast %cst_41 : f32 to vector<16x1xf32>
    %86 = arith.divf %84, %85 : vector<16x1xf32>
    %87 = vector.broadcast %86 : vector<16x1xf32> to vector<16x64xf32>
    %88 = arith.subf %80, %87 : vector<16x64xf32>
    %89 = arith.mulf %88, %88 : vector<16x64xf32>
    %cst_42 = arith.constant dense<0.000000e+00> : vector<16xf32>
    %90 = vector.multi_reduction <add>, %89, %cst_42 [1] : vector<16x64xf32> to vector<16xf32>
    %91 = vector.shape_cast %90 : vector<16xf32> to vector<16x1xf32>
    %cst_43 = arith.constant 6.400000e+01 : f32
    %92 = vector.broadcast %cst_43 : f32 to vector<16x1xf32>
    %93 = arith.divf %91, %92 : vector<16x1xf32>
    %94 = vector.broadcast %86 : vector<16x1xf32> to vector<16x64xf32>
    %95 = arith.subf %80, %94 : vector<16x64xf32>
    %cst_44 = arith.constant 9.99999996E-13 : f32
    %96 = vector.broadcast %cst_44 : f32 to vector<16x1xf32>
    %97 = arith.addf %93, %96 : vector<16x1xf32>
    %98 = math.rsqrt %97 : vector<16x1xf32>
    %99 = vector.broadcast %98 : vector<16x1xf32> to vector<16x64xf32>
    %100 = arith.mulf %95, %99 : vector<16x64xf32>
    %101 = vector.broadcast %81 : vector<1x64xf32> to vector<16x64xf32>
    %102 = arith.mulf %100, %101 : vector<16x64xf32>
    %103 = vector.broadcast %82 : vector<1x64xf32> to vector<16x64xf32>
    %104 = arith.addf %102, %103 : vector<16x64xf32>
    %c0_45 = arith.constant 0 : index
    %c0_46 = arith.constant 0 : index
    %105 = vector.load %arg12[%c0_45, %c0_46] : memref<64x256xf32, #tpu.memory_space<vmem>>, vector<64x256xf32>
    %cst_47 = arith.constant dense<0.000000e+00> : vector<16x256xf32>
    %106 = tpu.matmul %104, %105, %cst_47 {dimension_numbers = #tpu.dot_dimension_numbers<[1], [0], [0], [1], [0, 0, 1, 1], [], []>} : vector<16x64xf32>, vector<64x256xf32>, vector<16x256xf32> -> vector<16x256xf32>
    %c0_48 = arith.constant 0 : index
    %c0_49 = arith.constant 0 : index
    %107 = vector.load %arg14[%c0_48, %c0_49] : memref<1x256xf32, #tpu.memory_space<vmem>>, vector<1x256xf32>
    %108 = vector.broadcast %107 : vector<1x256xf32> to vector<16x256xf32>
    %109 = arith.addf %106, %108 : vector<16x256xf32>
    %c0_50 = arith.constant 0 : index
    %c0_51 = arith.constant 0 : index
    %110 = vector.load %arg13[%c0_50, %c0_51] : memref<32x256xf32, #tpu.memory_space<vmem>>, vector<32x256xf32>
    %111 = vector.extract_strided_slice %110 {offsets = [0, 0], sizes = [32, 128], strides = [1, 1]} : vector<32x256xf32> to vector<32x128xf32>
    %112 = vector.extract_strided_slice %110 {offsets = [0, 128], sizes = [32, 128], strides = [1, 1]} : vector<32x256xf32> to vector<32x128xf32>
    %113 = vector.extract_strided_slice %109 {offsets = [0, 0], sizes = [2, 128], strides = [1, 1]} : vector<16x256xf32> to vector<2x128xf32>
    %114 = vector.extract_strided_slice %109 {offsets = [14, 128], sizes = [2, 128], strides = [1, 1]} : vector<16x256xf32> to vector<2x128xf32>
    %115 = arith.negf %113 : vector<2x128xf32>
    %116 = math.exp %115 : vector<2x128xf32>
    %cst_52 = arith.constant 1.000000e+00 : f32
    %117 = vector.broadcast %cst_52 : f32 to vector<2x128xf32>
    %118 = arith.addf %117, %116 : vector<2x128xf32>
    %119 = arith.divf %117, %118 : vector<2x128xf32>
    %120 = math.tanh %113 : vector<2x128xf32>
    %121 = vector.extract_strided_slice %119 {offsets = [0, 0], sizes = [2, 32], strides = [1, 1]} : vector<2x128xf32> to vector<2x32xf32>
    %122 = vector.extract_strided_slice %120 {offsets = [0, 64], sizes = [2, 32], strides = [1, 1]} : vector<2x128xf32> to vector<2x32xf32>
    %123 = vector.extract_strided_slice %119 {offsets = [0, 96], sizes = [2, 32], strides = [1, 1]} : vector<2x128xf32> to vector<2x32xf32>
    %124 = arith.mulf %121, %122 : vector<2x32xf32>
    %125 = math.tanh %124 : vector<2x32xf32>
    %126 = arith.mulf %123, %125 : vector<2x32xf32>
    %127 = arith.negf %114 : vector<2x128xf32>
    %128 = math.exp %127 : vector<2x128xf32>
    %cst_53 = arith.constant 1.000000e+00 : f32
    %129 = vector.broadcast %cst_53 : f32 to vector<2x128xf32>
    %130 = arith.addf %129, %128 : vector<2x128xf32>
    %131 = arith.divf %129, %130 : vector<2x128xf32>
    %132 = math.tanh %114 : vector<2x128xf32>
    %133 = vector.extract_strided_slice %131 {offsets = [0, 0], sizes = [2, 32], strides = [1, 1]} : vector<2x128xf32> to vector<2x32xf32>
    %134 = vector.extract_strided_slice %132 {offsets = [0, 64], sizes = [2, 32], strides = [1, 1]} : vector<2x128xf32> to vector<2x32xf32>
    %135 = vector.extract_strided_slice %131 {offsets = [0, 96], sizes = [2, 32], strides = [1, 1]} : vector<2x128xf32> to vector<2x32xf32>
    %136 = arith.mulf %133, %134 : vector<2x32xf32>
    %137 = math.tanh %136 : vector<2x32xf32>
    %138 = arith.mulf %135, %137 : vector<2x32xf32>
    %139 = vector.extract_strided_slice %109 {offsets = [2, 0], sizes = [2, 128], strides = [1, 1]} : vector<16x256xf32> to vector<2x128xf32>
    %140 = vector.extract_strided_slice %109 {offsets = [12, 128], sizes = [2, 128], strides = [1, 1]} : vector<16x256xf32> to vector<2x128xf32>
    %cst_54 = arith.constant dense<0.000000e+00> : vector<2x128xf32>
    %141 = tpu.matmul %126, %111, %cst_54 {dimension_numbers = #tpu.dot_dimension_numbers<[1], [0], [0], [1], [0, 0, 1, 1], [], []>} : vector<2x32xf32>, vector<32x128xf32>, vector<2x128xf32> -> vector<2x128xf32>
    %142 = arith.addf %139, %141 : vector<2x128xf32>
    %cst_55 = arith.constant dense<0.000000e+00> : vector<2x128xf32>
    %143 = tpu.matmul %138, %112, %cst_55 {dimension_numbers = #tpu.dot_dimension_numbers<[1], [0], [0], [1], [0, 0, 1, 1], [], []>} : vector<2x32xf32>, vector<32x128xf32>, vector<2x128xf32> -> vector<2x128xf32>
    %144 = arith.addf %140, %143 : vector<2x128xf32>
    %145 = arith.negf %142 : vector<2x128xf32>
    %146 = math.exp %145 : vector<2x128xf32>
    %cst_56 = arith.constant 1.000000e+00 : f32
    %147 = vector.broadcast %cst_56 : f32 to vector<2x128xf32>
    %148 = arith.addf %147, %146 : vector<2x128xf32>
    %149 = arith.divf %147, %148 : vector<2x128xf32>
    %150 = math.tanh %142 : vector<2x128xf32>
    %151 = vector.extract_strided_slice %149 {offsets = [0, 0], sizes = [2, 32], strides = [1, 1]} : vector<2x128xf32> to vector<2x32xf32>
    %152 = vector.extract_strided_slice %149 {offsets = [0, 32], sizes = [2, 32], strides = [1, 1]} : vector<2x128xf32> to vector<2x32xf32>
    %153 = vector.extract_strided_slice %150 {offsets = [0, 64], sizes = [2, 32], strides = [1, 1]} : vector<2x128xf32> to vector<2x32xf32>
    %154 = vector.extract_strided_slice %149 {offsets = [0, 96], sizes = [2, 32], strides = [1, 1]} : vector<2x128xf32> to vector<2x32xf32>
    %155 = arith.mulf %152, %124 : vector<2x32xf32>
    %156 = arith.mulf %151, %153 : vector<2x32xf32>
    %157 = arith.addf %155, %156 : vector<2x32xf32>
    %158 = math.tanh %157 : vector<2x32xf32>
    %159 = arith.mulf %154, %158 : vector<2x32xf32>
    %160 = arith.negf %144 : vector<2x128xf32>
    %161 = math.exp %160 : vector<2x128xf32>
    %cst_57 = arith.constant 1.000000e+00 : f32
    %162 = vector.broadcast %cst_57 : f32 to vector<2x128xf32>
    %163 = arith.addf %162, %161 : vector<2x128xf32>
    %164 = arith.divf %162, %163 : vector<2x128xf32>
    %165 = math.tanh %144 : vector<2x128xf32>
    %166 = vector.extract_strided_slice %164 {offsets = [0, 0], sizes = [2, 32], strides = [1, 1]} : vector<2x128xf32> to vector<2x32xf32>
    %167 = vector.extract_strided_slice %164 {offsets = [0, 32], sizes = [2, 32], strides = [1, 1]} : vector<2x128xf32> to vector<2x32xf32>
    %168 = vector.extract_strided_slice %165 {offsets = [0, 64], sizes = [2, 32], strides = [1, 1]} : vector<2x128xf32> to vector<2x32xf32>
    %169 = vector.extract_strided_slice %164 {offsets = [0, 96], sizes = [2, 32], strides = [1, 1]} : vector<2x128xf32> to vector<2x32xf32>
    %170 = arith.mulf %167, %136 : vector<2x32xf32>
    %171 = arith.mulf %166, %168 : vector<2x32xf32>
    %172 = arith.addf %170, %171 : vector<2x32xf32>
    %173 = math.tanh %172 : vector<2x32xf32>
    %174 = arith.mulf %169, %173 : vector<2x32xf32>
    %175 = vector.extract_strided_slice %109 {offsets = [4, 0], sizes = [2, 128], strides = [1, 1]} : vector<16x256xf32> to vector<2x128xf32>
    %176 = vector.extract_strided_slice %109 {offsets = [10, 128], sizes = [2, 128], strides = [1, 1]} : vector<16x256xf32> to vector<2x128xf32>
    %cst_58 = arith.constant dense<0.000000e+00> : vector<2x128xf32>
    %177 = tpu.matmul %159, %111, %cst_58 {dimension_numbers = #tpu.dot_dimension_numbers<[1], [0], [0], [1], [0, 0, 1, 1], [], []>} : vector<2x32xf32>, vector<32x128xf32>, vector<2x128xf32> -> vector<2x128xf32>
    %178 = arith.addf %175, %177 : vector<2x128xf32>
    %cst_59 = arith.constant dense<0.000000e+00> : vector<2x128xf32>
    %179 = tpu.matmul %174, %112, %cst_59 {dimension_numbers = #tpu.dot_dimension_numbers<[1], [0], [0], [1], [0, 0, 1, 1], [], []>} : vector<2x32xf32>, vector<32x128xf32>, vector<2x128xf32> -> vector<2x128xf32>
    %180 = arith.addf %176, %179 : vector<2x128xf32>
    %181 = arith.negf %178 : vector<2x128xf32>
    %182 = math.exp %181 : vector<2x128xf32>
    %cst_60 = arith.constant 1.000000e+00 : f32
    %183 = vector.broadcast %cst_60 : f32 to vector<2x128xf32>
    %184 = arith.addf %183, %182 : vector<2x128xf32>
    %185 = arith.divf %183, %184 : vector<2x128xf32>
    %186 = math.tanh %178 : vector<2x128xf32>
    %187 = vector.extract_strided_slice %185 {offsets = [0, 0], sizes = [2, 32], strides = [1, 1]} : vector<2x128xf32> to vector<2x32xf32>
    %188 = vector.extract_strided_slice %185 {offsets = [0, 32], sizes = [2, 32], strides = [1, 1]} : vector<2x128xf32> to vector<2x32xf32>
    %189 = vector.extract_strided_slice %186 {offsets = [0, 64], sizes = [2, 32], strides = [1, 1]} : vector<2x128xf32> to vector<2x32xf32>
    %190 = vector.extract_strided_slice %185 {offsets = [0, 96], sizes = [2, 32], strides = [1, 1]} : vector<2x128xf32> to vector<2x32xf32>
    %191 = arith.mulf %188, %157 : vector<2x32xf32>
    %192 = arith.mulf %187, %189 : vector<2x32xf32>
    %193 = arith.addf %191, %192 : vector<2x32xf32>
    %194 = math.tanh %193 : vector<2x32xf32>
    %195 = arith.mulf %190, %194 : vector<2x32xf32>
    %196 = arith.negf %180 : vector<2x128xf32>
    %197 = math.exp %196 : vector<2x128xf32>
    %cst_61 = arith.constant 1.000000e+00 : f32
    %198 = vector.broadcast %cst_61 : f32 to vector<2x128xf32>
    %199 = arith.addf %198, %197 : vector<2x128xf32>
    %200 = arith.divf %198, %199 : vector<2x128xf32>
    %201 = math.tanh %180 : vector<2x128xf32>
    %202 = vector.extract_strided_slice %200 {offsets = [0, 0], sizes = [2, 32], strides = [1, 1]} : vector<2x128xf32> to vector<2x32xf32>
    %203 = vector.extract_strided_slice %200 {offsets = [0, 32], sizes = [2, 32], strides = [1, 1]} : vector<2x128xf32> to vector<2x32xf32>
    %204 = vector.extract_strided_slice %201 {offsets = [0, 64], sizes = [2, 32], strides = [1, 1]} : vector<2x128xf32> to vector<2x32xf32>
    %205 = vector.extract_strided_slice %200 {offsets = [0, 96], sizes = [2, 32], strides = [1, 1]} : vector<2x128xf32> to vector<2x32xf32>
    %206 = arith.mulf %203, %172 : vector<2x32xf32>
    %207 = arith.mulf %202, %204 : vector<2x32xf32>
    %208 = arith.addf %206, %207 : vector<2x32xf32>
    %209 = math.tanh %208 : vector<2x32xf32>
    %210 = arith.mulf %205, %209 : vector<2x32xf32>
    %211 = vector.extract_strided_slice %109 {offsets = [6, 0], sizes = [2, 128], strides = [1, 1]} : vector<16x256xf32> to vector<2x128xf32>
    %212 = vector.extract_strided_slice %109 {offsets = [8, 128], sizes = [2, 128], strides = [1, 1]} : vector<16x256xf32> to vector<2x128xf32>
    %cst_62 = arith.constant dense<0.000000e+00> : vector<2x128xf32>
    %213 = tpu.matmul %195, %111, %cst_62 {dimension_numbers = #tpu.dot_dimension_numbers<[1], [0], [0], [1], [0, 0, 1, 1], [], []>} : vector<2x32xf32>, vector<32x128xf32>, vector<2x128xf32> -> vector<2x128xf32>
    %214 = arith.addf %211, %213 : vector<2x128xf32>
    %cst_63 = arith.constant dense<0.000000e+00> : vector<2x128xf32>
    %215 = tpu.matmul %210, %112, %cst_63 {dimension_numbers = #tpu.dot_dimension_numbers<[1], [0], [0], [1], [0, 0, 1, 1], [], []>} : vector<2x32xf32>, vector<32x128xf32>, vector<2x128xf32> -> vector<2x128xf32>
    %216 = arith.addf %212, %215 : vector<2x128xf32>
    %217 = arith.negf %214 : vector<2x128xf32>
    %218 = math.exp %217 : vector<2x128xf32>
    %cst_64 = arith.constant 1.000000e+00 : f32
    %219 = vector.broadcast %cst_64 : f32 to vector<2x128xf32>
    %220 = arith.addf %219, %218 : vector<2x128xf32>
    %221 = arith.divf %219, %220 : vector<2x128xf32>
    %222 = math.tanh %214 : vector<2x128xf32>
    %223 = vector.extract_strided_slice %221 {offsets = [0, 0], sizes = [2, 32], strides = [1, 1]} : vector<2x128xf32> to vector<2x32xf32>
    %224 = vector.extract_strided_slice %221 {offsets = [0, 32], sizes = [2, 32], strides = [1, 1]} : vector<2x128xf32> to vector<2x32xf32>
    %225 = vector.extract_strided_slice %222 {offsets = [0, 64], sizes = [2, 32], strides = [1, 1]} : vector<2x128xf32> to vector<2x32xf32>
    %226 = vector.extract_strided_slice %221 {offsets = [0, 96], sizes = [2, 32], strides = [1, 1]} : vector<2x128xf32> to vector<2x32xf32>
    %227 = arith.mulf %224, %193 : vector<2x32xf32>
    %228 = arith.mulf %223, %225 : vector<2x32xf32>
    %229 = arith.addf %227, %228 : vector<2x32xf32>
    %230 = math.tanh %229 : vector<2x32xf32>
    %231 = arith.mulf %226, %230 : vector<2x32xf32>
    %232 = arith.negf %216 : vector<2x128xf32>
    %233 = math.exp %232 : vector<2x128xf32>
    %cst_65 = arith.constant 1.000000e+00 : f32
    %234 = vector.broadcast %cst_65 : f32 to vector<2x128xf32>
    %235 = arith.addf %234, %233 : vector<2x128xf32>
    %236 = arith.divf %234, %235 : vector<2x128xf32>
    %237 = math.tanh %216 : vector<2x128xf32>
    %238 = vector.extract_strided_slice %236 {offsets = [0, 0], sizes = [2, 32], strides = [1, 1]} : vector<2x128xf32> to vector<2x32xf32>
    %239 = vector.extract_strided_slice %236 {offsets = [0, 32], sizes = [2, 32], strides = [1, 1]} : vector<2x128xf32> to vector<2x32xf32>
    %240 = vector.extract_strided_slice %237 {offsets = [0, 64], sizes = [2, 32], strides = [1, 1]} : vector<2x128xf32> to vector<2x32xf32>
    %241 = vector.extract_strided_slice %236 {offsets = [0, 96], sizes = [2, 32], strides = [1, 1]} : vector<2x128xf32> to vector<2x32xf32>
    %242 = arith.mulf %239, %208 : vector<2x32xf32>
    %243 = arith.mulf %238, %240 : vector<2x32xf32>
    %244 = arith.addf %242, %243 : vector<2x32xf32>
    %245 = math.tanh %244 : vector<2x32xf32>
    %246 = arith.mulf %241, %245 : vector<2x32xf32>
    %247 = vector.extract_strided_slice %109 {offsets = [8, 0], sizes = [2, 128], strides = [1, 1]} : vector<16x256xf32> to vector<2x128xf32>
    %248 = vector.extract_strided_slice %109 {offsets = [6, 128], sizes = [2, 128], strides = [1, 1]} : vector<16x256xf32> to vector<2x128xf32>
    %cst_66 = arith.constant dense<0.000000e+00> : vector<2x128xf32>
    %249 = tpu.matmul %231, %111, %cst_66 {dimension_numbers = #tpu.dot_dimension_numbers<[1], [0], [0], [1], [0, 0, 1, 1], [], []>} : vector<2x32xf32>, vector<32x128xf32>, vector<2x128xf32> -> vector<2x128xf32>
    %250 = arith.addf %247, %249 : vector<2x128xf32>
    %cst_67 = arith.constant dense<0.000000e+00> : vector<2x128xf32>
    %251 = tpu.matmul %246, %112, %cst_67 {dimension_numbers = #tpu.dot_dimension_numbers<[1], [0], [0], [1], [0, 0, 1, 1], [], []>} : vector<2x32xf32>, vector<32x128xf32>, vector<2x128xf32> -> vector<2x128xf32>
    %252 = arith.addf %248, %251 : vector<2x128xf32>
    %253 = arith.negf %250 : vector<2x128xf32>
    %254 = math.exp %253 : vector<2x128xf32>
    %cst_68 = arith.constant 1.000000e+00 : f32
    %255 = vector.broadcast %cst_68 : f32 to vector<2x128xf32>
    %256 = arith.addf %255, %254 : vector<2x128xf32>
    %257 = arith.divf %255, %256 : vector<2x128xf32>
    %258 = math.tanh %250 : vector<2x128xf32>
    %259 = vector.extract_strided_slice %257 {offsets = [0, 0], sizes = [2, 32], strides = [1, 1]} : vector<2x128xf32> to vector<2x32xf32>
    %260 = vector.extract_strided_slice %257 {offsets = [0, 32], sizes = [2, 32], strides = [1, 1]} : vector<2x128xf32> to vector<2x32xf32>
    %261 = vector.extract_strided_slice %258 {offsets = [0, 64], sizes = [2, 32], strides = [1, 1]} : vector<2x128xf32> to vector<2x32xf32>
    %262 = vector.extract_strided_slice %257 {offsets = [0, 96], sizes = [2, 32], strides = [1, 1]} : vector<2x128xf32> to vector<2x32xf32>
    %263 = arith.mulf %260, %229 : vector<2x32xf32>
    %264 = arith.mulf %259, %261 : vector<2x32xf32>
    %265 = arith.addf %263, %264 : vector<2x32xf32>
    %266 = math.tanh %265 : vector<2x32xf32>
    %267 = arith.mulf %262, %266 : vector<2x32xf32>
    %268 = arith.negf %252 : vector<2x128xf32>
    %269 = math.exp %268 : vector<2x128xf32>
    %cst_69 = arith.constant 1.000000e+00 : f32
    %270 = vector.broadcast %cst_69 : f32 to vector<2x128xf32>
    %271 = arith.addf %270, %269 : vector<2x128xf32>
    %272 = arith.divf %270, %271 : vector<2x128xf32>
    %273 = math.tanh %252 : vector<2x128xf32>
    %274 = vector.extract_strided_slice %272 {offsets = [0, 0], sizes = [2, 32], strides = [1, 1]} : vector<2x128xf32> to vector<2x32xf32>
    %275 = vector.extract_strided_slice %272 {offsets = [0, 32], sizes = [2, 32], strides = [1, 1]} : vector<2x128xf32> to vector<2x32xf32>
    %276 = vector.extract_strided_slice %273 {offsets = [0, 64], sizes = [2, 32], strides = [1, 1]} : vector<2x128xf32> to vector<2x32xf32>
    %277 = vector.extract_strided_slice %272 {offsets = [0, 96], sizes = [2, 32], strides = [1, 1]} : vector<2x128xf32> to vector<2x32xf32>
    %278 = arith.mulf %275, %244 : vector<2x32xf32>
    %279 = arith.mulf %274, %276 : vector<2x32xf32>
    %280 = arith.addf %278, %279 : vector<2x32xf32>
    %281 = math.tanh %280 : vector<2x32xf32>
    %282 = arith.mulf %277, %281 : vector<2x32xf32>
    %283 = vector.extract_strided_slice %109 {offsets = [10, 0], sizes = [2, 128], strides = [1, 1]} : vector<16x256xf32> to vector<2x128xf32>
    %284 = vector.extract_strided_slice %109 {offsets = [4, 128], sizes = [2, 128], strides = [1, 1]} : vector<16x256xf32> to vector<2x128xf32>
    %cst_70 = arith.constant dense<0.000000e+00> : vector<2x128xf32>
    %285 = tpu.matmul %267, %111, %cst_70 {dimension_numbers = #tpu.dot_dimension_numbers<[1], [0], [0], [1], [0, 0, 1, 1], [], []>} : vector<2x32xf32>, vector<32x128xf32>, vector<2x128xf32> -> vector<2x128xf32>
    %286 = arith.addf %283, %285 : vector<2x128xf32>
    %cst_71 = arith.constant dense<0.000000e+00> : vector<2x128xf32>
    %287 = tpu.matmul %282, %112, %cst_71 {dimension_numbers = #tpu.dot_dimension_numbers<[1], [0], [0], [1], [0, 0, 1, 1], [], []>} : vector<2x32xf32>, vector<32x128xf32>, vector<2x128xf32> -> vector<2x128xf32>
    %288 = arith.addf %284, %287 : vector<2x128xf32>
    %289 = arith.negf %286 : vector<2x128xf32>
    %290 = math.exp %289 : vector<2x128xf32>
    %cst_72 = arith.constant 1.000000e+00 : f32
    %291 = vector.broadcast %cst_72 : f32 to vector<2x128xf32>
    %292 = arith.addf %291, %290 : vector<2x128xf32>
    %293 = arith.divf %291, %292 : vector<2x128xf32>
    %294 = math.tanh %286 : vector<2x128xf32>
    %295 = vector.extract_strided_slice %293 {offsets = [0, 0], sizes = [2, 32], strides = [1, 1]} : vector<2x128xf32> to vector<2x32xf32>
    %296 = vector.extract_strided_slice %293 {offsets = [0, 32], sizes = [2, 32], strides = [1, 1]} : vector<2x128xf32> to vector<2x32xf32>
    %297 = vector.extract_strided_slice %294 {offsets = [0, 64], sizes = [2, 32], strides = [1, 1]} : vector<2x128xf32> to vector<2x32xf32>
    %298 = vector.extract_strided_slice %293 {offsets = [0, 96], sizes = [2, 32], strides = [1, 1]} : vector<2x128xf32> to vector<2x32xf32>
    %299 = arith.mulf %296, %265 : vector<2x32xf32>
    %300 = arith.mulf %295, %297 : vector<2x32xf32>
    %301 = arith.addf %299, %300 : vector<2x32xf32>
    %302 = math.tanh %301 : vector<2x32xf32>
    %303 = arith.mulf %298, %302 : vector<2x32xf32>
    %304 = arith.negf %288 : vector<2x128xf32>
    %305 = math.exp %304 : vector<2x128xf32>
    %cst_73 = arith.constant 1.000000e+00 : f32
    %306 = vector.broadcast %cst_73 : f32 to vector<2x128xf32>
    %307 = arith.addf %306, %305 : vector<2x128xf32>
    %308 = arith.divf %306, %307 : vector<2x128xf32>
    %309 = math.tanh %288 : vector<2x128xf32>
    %310 = vector.extract_strided_slice %308 {offsets = [0, 0], sizes = [2, 32], strides = [1, 1]} : vector<2x128xf32> to vector<2x32xf32>
    %311 = vector.extract_strided_slice %308 {offsets = [0, 32], sizes = [2, 32], strides = [1, 1]} : vector<2x128xf32> to vector<2x32xf32>
    %312 = vector.extract_strided_slice %309 {offsets = [0, 64], sizes = [2, 32], strides = [1, 1]} : vector<2x128xf32> to vector<2x32xf32>
    %313 = vector.extract_strided_slice %308 {offsets = [0, 96], sizes = [2, 32], strides = [1, 1]} : vector<2x128xf32> to vector<2x32xf32>
    %314 = arith.mulf %311, %280 : vector<2x32xf32>
    %315 = arith.mulf %310, %312 : vector<2x32xf32>
    %316 = arith.addf %314, %315 : vector<2x32xf32>
    %317 = math.tanh %316 : vector<2x32xf32>
    %318 = arith.mulf %313, %317 : vector<2x32xf32>
    %319 = vector.extract_strided_slice %109 {offsets = [12, 0], sizes = [2, 128], strides = [1, 1]} : vector<16x256xf32> to vector<2x128xf32>
    %320 = vector.extract_strided_slice %109 {offsets = [2, 128], sizes = [2, 128], strides = [1, 1]} : vector<16x256xf32> to vector<2x128xf32>
    %cst_74 = arith.constant dense<0.000000e+00> : vector<2x128xf32>
    %321 = tpu.matmul %303, %111, %cst_74 {dimension_numbers = #tpu.dot_dimension_numbers<[1], [0], [0], [1], [0, 0, 1, 1], [], []>} : vector<2x32xf32>, vector<32x128xf32>, vector<2x128xf32> -> vector<2x128xf32>
    %322 = arith.addf %319, %321 : vector<2x128xf32>
    %cst_75 = arith.constant dense<0.000000e+00> : vector<2x128xf32>
    %323 = tpu.matmul %318, %112, %cst_75 {dimension_numbers = #tpu.dot_dimension_numbers<[1], [0], [0], [1], [0, 0, 1, 1], [], []>} : vector<2x32xf32>, vector<32x128xf32>, vector<2x128xf32> -> vector<2x128xf32>
    %324 = arith.addf %320, %323 : vector<2x128xf32>
    %325 = arith.negf %322 : vector<2x128xf32>
    %326 = math.exp %325 : vector<2x128xf32>
    %cst_76 = arith.constant 1.000000e+00 : f32
    %327 = vector.broadcast %cst_76 : f32 to vector<2x128xf32>
    %328 = arith.addf %327, %326 : vector<2x128xf32>
    %329 = arith.divf %327, %328 : vector<2x128xf32>
    %330 = math.tanh %322 : vector<2x128xf32>
    %331 = vector.extract_strided_slice %329 {offsets = [0, 0], sizes = [2, 32], strides = [1, 1]} : vector<2x128xf32> to vector<2x32xf32>
    %332 = vector.extract_strided_slice %329 {offsets = [0, 32], sizes = [2, 32], strides = [1, 1]} : vector<2x128xf32> to vector<2x32xf32>
    %333 = vector.extract_strided_slice %330 {offsets = [0, 64], sizes = [2, 32], strides = [1, 1]} : vector<2x128xf32> to vector<2x32xf32>
    %334 = vector.extract_strided_slice %329 {offsets = [0, 96], sizes = [2, 32], strides = [1, 1]} : vector<2x128xf32> to vector<2x32xf32>
    %335 = arith.mulf %332, %301 : vector<2x32xf32>
    %336 = arith.mulf %331, %333 : vector<2x32xf32>
    %337 = arith.addf %335, %336 : vector<2x32xf32>
    %338 = math.tanh %337 : vector<2x32xf32>
    %339 = arith.mulf %334, %338 : vector<2x32xf32>
    %340 = arith.negf %324 : vector<2x128xf32>
    %341 = math.exp %340 : vector<2x128xf32>
    %cst_77 = arith.constant 1.000000e+00 : f32
    %342 = vector.broadcast %cst_77 : f32 to vector<2x128xf32>
    %343 = arith.addf %342, %341 : vector<2x128xf32>
    %344 = arith.divf %342, %343 : vector<2x128xf32>
    %345 = math.tanh %324 : vector<2x128xf32>
    %346 = vector.extract_strided_slice %344 {offsets = [0, 0], sizes = [2, 32], strides = [1, 1]} : vector<2x128xf32> to vector<2x32xf32>
    %347 = vector.extract_strided_slice %344 {offsets = [0, 32], sizes = [2, 32], strides = [1, 1]} : vector<2x128xf32> to vector<2x32xf32>
    %348 = vector.extract_strided_slice %345 {offsets = [0, 64], sizes = [2, 32], strides = [1, 1]} : vector<2x128xf32> to vector<2x32xf32>
    %349 = vector.extract_strided_slice %344 {offsets = [0, 96], sizes = [2, 32], strides = [1, 1]} : vector<2x128xf32> to vector<2x32xf32>
    %350 = arith.mulf %347, %316 : vector<2x32xf32>
    %351 = arith.mulf %346, %348 : vector<2x32xf32>
    %352 = arith.addf %350, %351 : vector<2x32xf32>
    %353 = math.tanh %352 : vector<2x32xf32>
    %354 = arith.mulf %349, %353 : vector<2x32xf32>
    %355 = vector.extract_strided_slice %109 {offsets = [14, 0], sizes = [2, 128], strides = [1, 1]} : vector<16x256xf32> to vector<2x128xf32>
    %356 = vector.extract_strided_slice %109 {offsets = [0, 128], sizes = [2, 128], strides = [1, 1]} : vector<16x256xf32> to vector<2x128xf32>
    %cst_78 = arith.constant dense<0.000000e+00> : vector<2x128xf32>
    %357 = tpu.matmul %339, %111, %cst_78 {dimension_numbers = #tpu.dot_dimension_numbers<[1], [0], [0], [1], [0, 0, 1, 1], [], []>} : vector<2x32xf32>, vector<32x128xf32>, vector<2x128xf32> -> vector<2x128xf32>
    %358 = arith.addf %355, %357 : vector<2x128xf32>
    %cst_79 = arith.constant dense<0.000000e+00> : vector<2x128xf32>
    %359 = tpu.matmul %354, %112, %cst_79 {dimension_numbers = #tpu.dot_dimension_numbers<[1], [0], [0], [1], [0, 0, 1, 1], [], []>} : vector<2x32xf32>, vector<32x128xf32>, vector<2x128xf32> -> vector<2x128xf32>
    %360 = arith.addf %356, %359 : vector<2x128xf32>
    %361 = arith.negf %358 : vector<2x128xf32>
    %362 = math.exp %361 : vector<2x128xf32>
    %cst_80 = arith.constant 1.000000e+00 : f32
    %363 = vector.broadcast %cst_80 : f32 to vector<2x128xf32>
    %364 = arith.addf %363, %362 : vector<2x128xf32>
    %365 = arith.divf %363, %364 : vector<2x128xf32>
    %366 = math.tanh %358 : vector<2x128xf32>
    %367 = vector.extract_strided_slice %365 {offsets = [0, 0], sizes = [2, 32], strides = [1, 1]} : vector<2x128xf32> to vector<2x32xf32>
    %368 = vector.extract_strided_slice %365 {offsets = [0, 32], sizes = [2, 32], strides = [1, 1]} : vector<2x128xf32> to vector<2x32xf32>
    %369 = vector.extract_strided_slice %366 {offsets = [0, 64], sizes = [2, 32], strides = [1, 1]} : vector<2x128xf32> to vector<2x32xf32>
    %370 = vector.extract_strided_slice %365 {offsets = [0, 96], sizes = [2, 32], strides = [1, 1]} : vector<2x128xf32> to vector<2x32xf32>
    %371 = arith.mulf %368, %337 : vector<2x32xf32>
    %372 = arith.mulf %367, %369 : vector<2x32xf32>
    %373 = arith.addf %371, %372 : vector<2x32xf32>
    %374 = math.tanh %373 : vector<2x32xf32>
    %375 = arith.mulf %370, %374 : vector<2x32xf32>
    %376 = arith.negf %360 : vector<2x128xf32>
    %377 = math.exp %376 : vector<2x128xf32>
    %cst_81 = arith.constant 1.000000e+00 : f32
    %378 = vector.broadcast %cst_81 : f32 to vector<2x128xf32>
    %379 = arith.addf %378, %377 : vector<2x128xf32>
    %380 = arith.divf %378, %379 : vector<2x128xf32>
    %381 = math.tanh %360 : vector<2x128xf32>
    %382 = vector.extract_strided_slice %380 {offsets = [0, 0], sizes = [2, 32], strides = [1, 1]} : vector<2x128xf32> to vector<2x32xf32>
    %383 = vector.extract_strided_slice %380 {offsets = [0, 32], sizes = [2, 32], strides = [1, 1]} : vector<2x128xf32> to vector<2x32xf32>
    %384 = vector.extract_strided_slice %381 {offsets = [0, 64], sizes = [2, 32], strides = [1, 1]} : vector<2x128xf32> to vector<2x32xf32>
    %385 = vector.extract_strided_slice %380 {offsets = [0, 96], sizes = [2, 32], strides = [1, 1]} : vector<2x128xf32> to vector<2x32xf32>
    %386 = arith.mulf %383, %352 : vector<2x32xf32>
    %387 = arith.mulf %382, %384 : vector<2x32xf32>
    %388 = arith.addf %386, %387 : vector<2x32xf32>
    %389 = math.tanh %388 : vector<2x32xf32>
    %390 = arith.mulf %385, %389 : vector<2x32xf32>
    %391 = tpu.concatenate %126, %159, %195, %231, %267, %303, %339, %375 in 0 : vector<2x32xf32>, vector<2x32xf32>, vector<2x32xf32>, vector<2x32xf32>, vector<2x32xf32>, vector<2x32xf32>, vector<2x32xf32>, vector<2x32xf32> -> vector<16x32xf32>
    %392 = tpu.concatenate %390, %354, %318, %282, %246, %210, %174, %138 in 0 : vector<2x32xf32>, vector<2x32xf32>, vector<2x32xf32>, vector<2x32xf32>, vector<2x32xf32>, vector<2x32xf32>, vector<2x32xf32>, vector<2x32xf32> -> vector<16x32xf32>
    %393 = tpu.concatenate %391, %392 in 1 : vector<16x32xf32>, vector<16x32xf32> -> vector<16x64xf32>
    %c0_82 = arith.constant 0 : index
    %c0_83 = arith.constant 0 : index
    %394 = vector.load %arg15[%c0_82, %c0_83] : memref<64x256xf32, #tpu.memory_space<vmem>>, vector<64x256xf32>
    %cst_84 = arith.constant dense<0.000000e+00> : vector<16x256xf32>
    %395 = tpu.matmul %393, %394, %cst_84 {dimension_numbers = #tpu.dot_dimension_numbers<[1], [0], [0], [1], [0, 0, 1, 1], [], []>} : vector<16x64xf32>, vector<64x256xf32>, vector<16x256xf32> -> vector<16x256xf32>
    %c0_85 = arith.constant 0 : index
    %c0_86 = arith.constant 0 : index
    %396 = vector.load %arg17[%c0_85, %c0_86] : memref<1x256xf32, #tpu.memory_space<vmem>>, vector<1x256xf32>
    %397 = vector.broadcast %396 : vector<1x256xf32> to vector<16x256xf32>
    %398 = arith.addf %395, %397 : vector<16x256xf32>
    %c0_87 = arith.constant 0 : index
    %c0_88 = arith.constant 0 : index
    %399 = vector.load %arg16[%c0_87, %c0_88] : memref<32x256xf32, #tpu.memory_space<vmem>>, vector<32x256xf32>
    %400 = vector.extract_strided_slice %399 {offsets = [0, 0], sizes = [32, 128], strides = [1, 1]} : vector<32x256xf32> to vector<32x128xf32>
    %401 = vector.extract_strided_slice %399 {offsets = [0, 128], sizes = [32, 128], strides = [1, 1]} : vector<32x256xf32> to vector<32x128xf32>
    %402 = vector.extract_strided_slice %398 {offsets = [0, 0], sizes = [2, 128], strides = [1, 1]} : vector<16x256xf32> to vector<2x128xf32>
    %403 = vector.extract_strided_slice %398 {offsets = [14, 128], sizes = [2, 128], strides = [1, 1]} : vector<16x256xf32> to vector<2x128xf32>
    %404 = arith.negf %402 : vector<2x128xf32>
    %405 = math.exp %404 : vector<2x128xf32>
    %cst_89 = arith.constant 1.000000e+00 : f32
    %406 = vector.broadcast %cst_89 : f32 to vector<2x128xf32>
    %407 = arith.addf %406, %405 : vector<2x128xf32>
    %408 = arith.divf %406, %407 : vector<2x128xf32>
    %409 = math.tanh %402 : vector<2x128xf32>
    %410 = vector.extract_strided_slice %408 {offsets = [0, 0], sizes = [2, 32], strides = [1, 1]} : vector<2x128xf32> to vector<2x32xf32>
    %411 = vector.extract_strided_slice %409 {offsets = [0, 64], sizes = [2, 32], strides = [1, 1]} : vector<2x128xf32> to vector<2x32xf32>
    %412 = vector.extract_strided_slice %408 {offsets = [0, 96], sizes = [2, 32], strides = [1, 1]} : vector<2x128xf32> to vector<2x32xf32>
    %413 = arith.mulf %410, %411 : vector<2x32xf32>
    %414 = math.tanh %413 : vector<2x32xf32>
    %415 = arith.mulf %412, %414 : vector<2x32xf32>
    %416 = arith.negf %403 : vector<2x128xf32>
    %417 = math.exp %416 : vector<2x128xf32>
    %cst_90 = arith.constant 1.000000e+00 : f32
    %418 = vector.broadcast %cst_90 : f32 to vector<2x128xf32>
    %419 = arith.addf %418, %417 : vector<2x128xf32>
    %420 = arith.divf %418, %419 : vector<2x128xf32>
    %421 = math.tanh %403 : vector<2x128xf32>
    %422 = vector.extract_strided_slice %420 {offsets = [0, 0], sizes = [2, 32], strides = [1, 1]} : vector<2x128xf32> to vector<2x32xf32>
    %423 = vector.extract_strided_slice %421 {offsets = [0, 64], sizes = [2, 32], strides = [1, 1]} : vector<2x128xf32> to vector<2x32xf32>
    %424 = vector.extract_strided_slice %420 {offsets = [0, 96], sizes = [2, 32], strides = [1, 1]} : vector<2x128xf32> to vector<2x32xf32>
    %425 = arith.mulf %422, %423 : vector<2x32xf32>
    %426 = math.tanh %425 : vector<2x32xf32>
    %427 = arith.mulf %424, %426 : vector<2x32xf32>
    %428 = vector.extract_strided_slice %398 {offsets = [2, 0], sizes = [2, 128], strides = [1, 1]} : vector<16x256xf32> to vector<2x128xf32>
    %429 = vector.extract_strided_slice %398 {offsets = [12, 128], sizes = [2, 128], strides = [1, 1]} : vector<16x256xf32> to vector<2x128xf32>
    %cst_91 = arith.constant dense<0.000000e+00> : vector<2x128xf32>
    %430 = tpu.matmul %415, %400, %cst_91 {dimension_numbers = #tpu.dot_dimension_numbers<[1], [0], [0], [1], [0, 0, 1, 1], [], []>} : vector<2x32xf32>, vector<32x128xf32>, vector<2x128xf32> -> vector<2x128xf32>
    %431 = arith.addf %428, %430 : vector<2x128xf32>
    %cst_92 = arith.constant dense<0.000000e+00> : vector<2x128xf32>
    %432 = tpu.matmul %427, %401, %cst_92 {dimension_numbers = #tpu.dot_dimension_numbers<[1], [0], [0], [1], [0, 0, 1, 1], [], []>} : vector<2x32xf32>, vector<32x128xf32>, vector<2x128xf32> -> vector<2x128xf32>
    %433 = arith.addf %429, %432 : vector<2x128xf32>
    %434 = arith.negf %431 : vector<2x128xf32>
    %435 = math.exp %434 : vector<2x128xf32>
    %cst_93 = arith.constant 1.000000e+00 : f32
    %436 = vector.broadcast %cst_93 : f32 to vector<2x128xf32>
    %437 = arith.addf %436, %435 : vector<2x128xf32>
    %438 = arith.divf %436, %437 : vector<2x128xf32>
    %439 = math.tanh %431 : vector<2x128xf32>
    %440 = vector.extract_strided_slice %438 {offsets = [0, 0], sizes = [2, 32], strides = [1, 1]} : vector<2x128xf32> to vector<2x32xf32>
    %441 = vector.extract_strided_slice %438 {offsets = [0, 32], sizes = [2, 32], strides = [1, 1]} : vector<2x128xf32> to vector<2x32xf32>
    %442 = vector.extract_strided_slice %439 {offsets = [0, 64], sizes = [2, 32], strides = [1, 1]} : vector<2x128xf32> to vector<2x32xf32>
    %443 = vector.extract_strided_slice %438 {offsets = [0, 96], sizes = [2, 32], strides = [1, 1]} : vector<2x128xf32> to vector<2x32xf32>
    %444 = arith.mulf %441, %413 : vector<2x32xf32>
    %445 = arith.mulf %440, %442 : vector<2x32xf32>
    %446 = arith.addf %444, %445 : vector<2x32xf32>
    %447 = math.tanh %446 : vector<2x32xf32>
    %448 = arith.mulf %443, %447 : vector<2x32xf32>
    %449 = arith.negf %433 : vector<2x128xf32>
    %450 = math.exp %449 : vector<2x128xf32>
    %cst_94 = arith.constant 1.000000e+00 : f32
    %451 = vector.broadcast %cst_94 : f32 to vector<2x128xf32>
    %452 = arith.addf %451, %450 : vector<2x128xf32>
    %453 = arith.divf %451, %452 : vector<2x128xf32>
    %454 = math.tanh %433 : vector<2x128xf32>
    %455 = vector.extract_strided_slice %453 {offsets = [0, 0], sizes = [2, 32], strides = [1, 1]} : vector<2x128xf32> to vector<2x32xf32>
    %456 = vector.extract_strided_slice %453 {offsets = [0, 32], sizes = [2, 32], strides = [1, 1]} : vector<2x128xf32> to vector<2x32xf32>
    %457 = vector.extract_strided_slice %454 {offsets = [0, 64], sizes = [2, 32], strides = [1, 1]} : vector<2x128xf32> to vector<2x32xf32>
    %458 = vector.extract_strided_slice %453 {offsets = [0, 96], sizes = [2, 32], strides = [1, 1]} : vector<2x128xf32> to vector<2x32xf32>
    %459 = arith.mulf %456, %425 : vector<2x32xf32>
    %460 = arith.mulf %455, %457 : vector<2x32xf32>
    %461 = arith.addf %459, %460 : vector<2x32xf32>
    %462 = math.tanh %461 : vector<2x32xf32>
    %463 = arith.mulf %458, %462 : vector<2x32xf32>
    %464 = vector.extract_strided_slice %398 {offsets = [4, 0], sizes = [2, 128], strides = [1, 1]} : vector<16x256xf32> to vector<2x128xf32>
    %465 = vector.extract_strided_slice %398 {offsets = [10, 128], sizes = [2, 128], strides = [1, 1]} : vector<16x256xf32> to vector<2x128xf32>
    %cst_95 = arith.constant dense<0.000000e+00> : vector<2x128xf32>
    %466 = tpu.matmul %448, %400, %cst_95 {dimension_numbers = #tpu.dot_dimension_numbers<[1], [0], [0], [1], [0, 0, 1, 1], [], []>} : vector<2x32xf32>, vector<32x128xf32>, vector<2x128xf32> -> vector<2x128xf32>
    %467 = arith.addf %464, %466 : vector<2x128xf32>
    %cst_96 = arith.constant dense<0.000000e+00> : vector<2x128xf32>
    %468 = tpu.matmul %463, %401, %cst_96 {dimension_numbers = #tpu.dot_dimension_numbers<[1], [0], [0], [1], [0, 0, 1, 1], [], []>} : vector<2x32xf32>, vector<32x128xf32>, vector<2x128xf32> -> vector<2x128xf32>
    %469 = arith.addf %465, %468 : vector<2x128xf32>
    %470 = arith.negf %467 : vector<2x128xf32>
    %471 = math.exp %470 : vector<2x128xf32>
    %cst_97 = arith.constant 1.000000e+00 : f32
    %472 = vector.broadcast %cst_97 : f32 to vector<2x128xf32>
    %473 = arith.addf %472, %471 : vector<2x128xf32>
    %474 = arith.divf %472, %473 : vector<2x128xf32>
    %475 = math.tanh %467 : vector<2x128xf32>
    %476 = vector.extract_strided_slice %474 {offsets = [0, 0], sizes = [2, 32], strides = [1, 1]} : vector<2x128xf32> to vector<2x32xf32>
    %477 = vector.extract_strided_slice %474 {offsets = [0, 32], sizes = [2, 32], strides = [1, 1]} : vector<2x128xf32> to vector<2x32xf32>
    %478 = vector.extract_strided_slice %475 {offsets = [0, 64], sizes = [2, 32], strides = [1, 1]} : vector<2x128xf32> to vector<2x32xf32>
    %479 = vector.extract_strided_slice %474 {offsets = [0, 96], sizes = [2, 32], strides = [1, 1]} : vector<2x128xf32> to vector<2x32xf32>
    %480 = arith.mulf %477, %446 : vector<2x32xf32>
    %481 = arith.mulf %476, %478 : vector<2x32xf32>
    %482 = arith.addf %480, %481 : vector<2x32xf32>
    %483 = math.tanh %482 : vector<2x32xf32>
    %484 = arith.mulf %479, %483 : vector<2x32xf32>
    %485 = arith.negf %469 : vector<2x128xf32>
    %486 = math.exp %485 : vector<2x128xf32>
    %cst_98 = arith.constant 1.000000e+00 : f32
    %487 = vector.broadcast %cst_98 : f32 to vector<2x128xf32>
    %488 = arith.addf %487, %486 : vector<2x128xf32>
    %489 = arith.divf %487, %488 : vector<2x128xf32>
    %490 = math.tanh %469 : vector<2x128xf32>
    %491 = vector.extract_strided_slice %489 {offsets = [0, 0], sizes = [2, 32], strides = [1, 1]} : vector<2x128xf32> to vector<2x32xf32>
    %492 = vector.extract_strided_slice %489 {offsets = [0, 32], sizes = [2, 32], strides = [1, 1]} : vector<2x128xf32> to vector<2x32xf32>
    %493 = vector.extract_strided_slice %490 {offsets = [0, 64], sizes = [2, 32], strides = [1, 1]} : vector<2x128xf32> to vector<2x32xf32>
    %494 = vector.extract_strided_slice %489 {offsets = [0, 96], sizes = [2, 32], strides = [1, 1]} : vector<2x128xf32> to vector<2x32xf32>
    %495 = arith.mulf %492, %461 : vector<2x32xf32>
    %496 = arith.mulf %491, %493 : vector<2x32xf32>
    %497 = arith.addf %495, %496 : vector<2x32xf32>
    %498 = math.tanh %497 : vector<2x32xf32>
    %499 = arith.mulf %494, %498 : vector<2x32xf32>
    %500 = vector.extract_strided_slice %398 {offsets = [6, 0], sizes = [2, 128], strides = [1, 1]} : vector<16x256xf32> to vector<2x128xf32>
    %501 = vector.extract_strided_slice %398 {offsets = [8, 128], sizes = [2, 128], strides = [1, 1]} : vector<16x256xf32> to vector<2x128xf32>
    %cst_99 = arith.constant dense<0.000000e+00> : vector<2x128xf32>
    %502 = tpu.matmul %484, %400, %cst_99 {dimension_numbers = #tpu.dot_dimension_numbers<[1], [0], [0], [1], [0, 0, 1, 1], [], []>} : vector<2x32xf32>, vector<32x128xf32>, vector<2x128xf32> -> vector<2x128xf32>
    %503 = arith.addf %500, %502 : vector<2x128xf32>
    %cst_100 = arith.constant dense<0.000000e+00> : vector<2x128xf32>
    %504 = tpu.matmul %499, %401, %cst_100 {dimension_numbers = #tpu.dot_dimension_numbers<[1], [0], [0], [1], [0, 0, 1, 1], [], []>} : vector<2x32xf32>, vector<32x128xf32>, vector<2x128xf32> -> vector<2x128xf32>
    %505 = arith.addf %501, %504 : vector<2x128xf32>
    %506 = arith.negf %503 : vector<2x128xf32>
    %507 = math.exp %506 : vector<2x128xf32>
    %cst_101 = arith.constant 1.000000e+00 : f32
    %508 = vector.broadcast %cst_101 : f32 to vector<2x128xf32>
    %509 = arith.addf %508, %507 : vector<2x128xf32>
    %510 = arith.divf %508, %509 : vector<2x128xf32>
    %511 = math.tanh %503 : vector<2x128xf32>
    %512 = vector.extract_strided_slice %510 {offsets = [0, 0], sizes = [2, 32], strides = [1, 1]} : vector<2x128xf32> to vector<2x32xf32>
    %513 = vector.extract_strided_slice %510 {offsets = [0, 32], sizes = [2, 32], strides = [1, 1]} : vector<2x128xf32> to vector<2x32xf32>
    %514 = vector.extract_strided_slice %511 {offsets = [0, 64], sizes = [2, 32], strides = [1, 1]} : vector<2x128xf32> to vector<2x32xf32>
    %515 = vector.extract_strided_slice %510 {offsets = [0, 96], sizes = [2, 32], strides = [1, 1]} : vector<2x128xf32> to vector<2x32xf32>
    %516 = arith.mulf %513, %482 : vector<2x32xf32>
    %517 = arith.mulf %512, %514 : vector<2x32xf32>
    %518 = arith.addf %516, %517 : vector<2x32xf32>
    %519 = math.tanh %518 : vector<2x32xf32>
    %520 = arith.mulf %515, %519 : vector<2x32xf32>
    %521 = arith.negf %505 : vector<2x128xf32>
    %522 = math.exp %521 : vector<2x128xf32>
    %cst_102 = arith.constant 1.000000e+00 : f32
    %523 = vector.broadcast %cst_102 : f32 to vector<2x128xf32>
    %524 = arith.addf %523, %522 : vector<2x128xf32>
    %525 = arith.divf %523, %524 : vector<2x128xf32>
    %526 = math.tanh %505 : vector<2x128xf32>
    %527 = vector.extract_strided_slice %525 {offsets = [0, 0], sizes = [2, 32], strides = [1, 1]} : vector<2x128xf32> to vector<2x32xf32>
    %528 = vector.extract_strided_slice %525 {offsets = [0, 32], sizes = [2, 32], strides = [1, 1]} : vector<2x128xf32> to vector<2x32xf32>
    %529 = vector.extract_strided_slice %526 {offsets = [0, 64], sizes = [2, 32], strides = [1, 1]} : vector<2x128xf32> to vector<2x32xf32>
    %530 = vector.extract_strided_slice %525 {offsets = [0, 96], sizes = [2, 32], strides = [1, 1]} : vector<2x128xf32> to vector<2x32xf32>
    %531 = arith.mulf %528, %497 : vector<2x32xf32>
    %532 = arith.mulf %527, %529 : vector<2x32xf32>
    %533 = arith.addf %531, %532 : vector<2x32xf32>
    %534 = math.tanh %533 : vector<2x32xf32>
    %535 = arith.mulf %530, %534 : vector<2x32xf32>
    %536 = vector.extract_strided_slice %398 {offsets = [8, 0], sizes = [2, 128], strides = [1, 1]} : vector<16x256xf32> to vector<2x128xf32>
    %537 = vector.extract_strided_slice %398 {offsets = [6, 128], sizes = [2, 128], strides = [1, 1]} : vector<16x256xf32> to vector<2x128xf32>
    %cst_103 = arith.constant dense<0.000000e+00> : vector<2x128xf32>
    %538 = tpu.matmul %520, %400, %cst_103 {dimension_numbers = #tpu.dot_dimension_numbers<[1], [0], [0], [1], [0, 0, 1, 1], [], []>} : vector<2x32xf32>, vector<32x128xf32>, vector<2x128xf32> -> vector<2x128xf32>
    %539 = arith.addf %536, %538 : vector<2x128xf32>
    %cst_104 = arith.constant dense<0.000000e+00> : vector<2x128xf32>
    %540 = tpu.matmul %535, %401, %cst_104 {dimension_numbers = #tpu.dot_dimension_numbers<[1], [0], [0], [1], [0, 0, 1, 1], [], []>} : vector<2x32xf32>, vector<32x128xf32>, vector<2x128xf32> -> vector<2x128xf32>
    %541 = arith.addf %537, %540 : vector<2x128xf32>
    %542 = arith.negf %539 : vector<2x128xf32>
    %543 = math.exp %542 : vector<2x128xf32>
    %cst_105 = arith.constant 1.000000e+00 : f32
    %544 = vector.broadcast %cst_105 : f32 to vector<2x128xf32>
    %545 = arith.addf %544, %543 : vector<2x128xf32>
    %546 = arith.divf %544, %545 : vector<2x128xf32>
    %547 = math.tanh %539 : vector<2x128xf32>
    %548 = vector.extract_strided_slice %546 {offsets = [0, 0], sizes = [2, 32], strides = [1, 1]} : vector<2x128xf32> to vector<2x32xf32>
    %549 = vector.extract_strided_slice %546 {offsets = [0, 32], sizes = [2, 32], strides = [1, 1]} : vector<2x128xf32> to vector<2x32xf32>
    %550 = vector.extract_strided_slice %547 {offsets = [0, 64], sizes = [2, 32], strides = [1, 1]} : vector<2x128xf32> to vector<2x32xf32>
    %551 = vector.extract_strided_slice %546 {offsets = [0, 96], sizes = [2, 32], strides = [1, 1]} : vector<2x128xf32> to vector<2x32xf32>
    %552 = arith.mulf %549, %518 : vector<2x32xf32>
    %553 = arith.mulf %548, %550 : vector<2x32xf32>
    %554 = arith.addf %552, %553 : vector<2x32xf32>
    %555 = math.tanh %554 : vector<2x32xf32>
    %556 = arith.mulf %551, %555 : vector<2x32xf32>
    %557 = arith.negf %541 : vector<2x128xf32>
    %558 = math.exp %557 : vector<2x128xf32>
    %cst_106 = arith.constant 1.000000e+00 : f32
    %559 = vector.broadcast %cst_106 : f32 to vector<2x128xf32>
    %560 = arith.addf %559, %558 : vector<2x128xf32>
    %561 = arith.divf %559, %560 : vector<2x128xf32>
    %562 = math.tanh %541 : vector<2x128xf32>
    %563 = vector.extract_strided_slice %561 {offsets = [0, 0], sizes = [2, 32], strides = [1, 1]} : vector<2x128xf32> to vector<2x32xf32>
    %564 = vector.extract_strided_slice %561 {offsets = [0, 32], sizes = [2, 32], strides = [1, 1]} : vector<2x128xf32> to vector<2x32xf32>
    %565 = vector.extract_strided_slice %562 {offsets = [0, 64], sizes = [2, 32], strides = [1, 1]} : vector<2x128xf32> to vector<2x32xf32>
    %566 = vector.extract_strided_slice %561 {offsets = [0, 96], sizes = [2, 32], strides = [1, 1]} : vector<2x128xf32> to vector<2x32xf32>
    %567 = arith.mulf %564, %533 : vector<2x32xf32>
    %568 = arith.mulf %563, %565 : vector<2x32xf32>
    %569 = arith.addf %567, %568 : vector<2x32xf32>
    %570 = math.tanh %569 : vector<2x32xf32>
    %571 = arith.mulf %566, %570 : vector<2x32xf32>
    %572 = vector.extract_strided_slice %398 {offsets = [10, 0], sizes = [2, 128], strides = [1, 1]} : vector<16x256xf32> to vector<2x128xf32>
    %573 = vector.extract_strided_slice %398 {offsets = [4, 128], sizes = [2, 128], strides = [1, 1]} : vector<16x256xf32> to vector<2x128xf32>
    %cst_107 = arith.constant dense<0.000000e+00> : vector<2x128xf32>
    %574 = tpu.matmul %556, %400, %cst_107 {dimension_numbers = #tpu.dot_dimension_numbers<[1], [0], [0], [1], [0, 0, 1, 1], [], []>} : vector<2x32xf32>, vector<32x128xf32>, vector<2x128xf32> -> vector<2x128xf32>
    %575 = arith.addf %572, %574 : vector<2x128xf32>
    %cst_108 = arith.constant dense<0.000000e+00> : vector<2x128xf32>
    %576 = tpu.matmul %571, %401, %cst_108 {dimension_numbers = #tpu.dot_dimension_numbers<[1], [0], [0], [1], [0, 0, 1, 1], [], []>} : vector<2x32xf32>, vector<32x128xf32>, vector<2x128xf32> -> vector<2x128xf32>
    %577 = arith.addf %573, %576 : vector<2x128xf32>
    %578 = arith.negf %575 : vector<2x128xf32>
    %579 = math.exp %578 : vector<2x128xf32>
    %cst_109 = arith.constant 1.000000e+00 : f32
    %580 = vector.broadcast %cst_109 : f32 to vector<2x128xf32>
    %581 = arith.addf %580, %579 : vector<2x128xf32>
    %582 = arith.divf %580, %581 : vector<2x128xf32>
    %583 = math.tanh %575 : vector<2x128xf32>
    %584 = vector.extract_strided_slice %582 {offsets = [0, 0], sizes = [2, 32], strides = [1, 1]} : vector<2x128xf32> to vector<2x32xf32>
    %585 = vector.extract_strided_slice %582 {offsets = [0, 32], sizes = [2, 32], strides = [1, 1]} : vector<2x128xf32> to vector<2x32xf32>
    %586 = vector.extract_strided_slice %583 {offsets = [0, 64], sizes = [2, 32], strides = [1, 1]} : vector<2x128xf32> to vector<2x32xf32>
    %587 = vector.extract_strided_slice %582 {offsets = [0, 96], sizes = [2, 32], strides = [1, 1]} : vector<2x128xf32> to vector<2x32xf32>
    %588 = arith.mulf %585, %554 : vector<2x32xf32>
    %589 = arith.mulf %584, %586 : vector<2x32xf32>
    %590 = arith.addf %588, %589 : vector<2x32xf32>
    %591 = math.tanh %590 : vector<2x32xf32>
    %592 = arith.mulf %587, %591 : vector<2x32xf32>
    %593 = arith.negf %577 : vector<2x128xf32>
    %594 = math.exp %593 : vector<2x128xf32>
    %cst_110 = arith.constant 1.000000e+00 : f32
    %595 = vector.broadcast %cst_110 : f32 to vector<2x128xf32>
    %596 = arith.addf %595, %594 : vector<2x128xf32>
    %597 = arith.divf %595, %596 : vector<2x128xf32>
    %598 = math.tanh %577 : vector<2x128xf32>
    %599 = vector.extract_strided_slice %597 {offsets = [0, 0], sizes = [2, 32], strides = [1, 1]} : vector<2x128xf32> to vector<2x32xf32>
    %600 = vector.extract_strided_slice %597 {offsets = [0, 32], sizes = [2, 32], strides = [1, 1]} : vector<2x128xf32> to vector<2x32xf32>
    %601 = vector.extract_strided_slice %598 {offsets = [0, 64], sizes = [2, 32], strides = [1, 1]} : vector<2x128xf32> to vector<2x32xf32>
    %602 = vector.extract_strided_slice %597 {offsets = [0, 96], sizes = [2, 32], strides = [1, 1]} : vector<2x128xf32> to vector<2x32xf32>
    %603 = arith.mulf %600, %569 : vector<2x32xf32>
    %604 = arith.mulf %599, %601 : vector<2x32xf32>
    %605 = arith.addf %603, %604 : vector<2x32xf32>
    %606 = math.tanh %605 : vector<2x32xf32>
    %607 = arith.mulf %602, %606 : vector<2x32xf32>
    %608 = vector.extract_strided_slice %398 {offsets = [12, 0], sizes = [2, 128], strides = [1, 1]} : vector<16x256xf32> to vector<2x128xf32>
    %609 = vector.extract_strided_slice %398 {offsets = [2, 128], sizes = [2, 128], strides = [1, 1]} : vector<16x256xf32> to vector<2x128xf32>
    %cst_111 = arith.constant dense<0.000000e+00> : vector<2x128xf32>
    %610 = tpu.matmul %592, %400, %cst_111 {dimension_numbers = #tpu.dot_dimension_numbers<[1], [0], [0], [1], [0, 0, 1, 1], [], []>} : vector<2x32xf32>, vector<32x128xf32>, vector<2x128xf32> -> vector<2x128xf32>
    %611 = arith.addf %608, %610 : vector<2x128xf32>
    %cst_112 = arith.constant dense<0.000000e+00> : vector<2x128xf32>
    %612 = tpu.matmul %607, %401, %cst_112 {dimension_numbers = #tpu.dot_dimension_numbers<[1], [0], [0], [1], [0, 0, 1, 1], [], []>} : vector<2x32xf32>, vector<32x128xf32>, vector<2x128xf32> -> vector<2x128xf32>
    %613 = arith.addf %609, %612 : vector<2x128xf32>
    %614 = arith.negf %611 : vector<2x128xf32>
    %615 = math.exp %614 : vector<2x128xf32>
    %cst_113 = arith.constant 1.000000e+00 : f32
    %616 = vector.broadcast %cst_113 : f32 to vector<2x128xf32>
    %617 = arith.addf %616, %615 : vector<2x128xf32>
    %618 = arith.divf %616, %617 : vector<2x128xf32>
    %619 = math.tanh %611 : vector<2x128xf32>
    %620 = vector.extract_strided_slice %618 {offsets = [0, 0], sizes = [2, 32], strides = [1, 1]} : vector<2x128xf32> to vector<2x32xf32>
    %621 = vector.extract_strided_slice %618 {offsets = [0, 32], sizes = [2, 32], strides = [1, 1]} : vector<2x128xf32> to vector<2x32xf32>
    %622 = vector.extract_strided_slice %619 {offsets = [0, 64], sizes = [2, 32], strides = [1, 1]} : vector<2x128xf32> to vector<2x32xf32>
    %623 = vector.extract_strided_slice %618 {offsets = [0, 96], sizes = [2, 32], strides = [1, 1]} : vector<2x128xf32> to vector<2x32xf32>
    %624 = arith.mulf %621, %590 : vector<2x32xf32>
    %625 = arith.mulf %620, %622 : vector<2x32xf32>
    %626 = arith.addf %624, %625 : vector<2x32xf32>
    %627 = math.tanh %626 : vector<2x32xf32>
    %628 = arith.mulf %623, %627 : vector<2x32xf32>
    %629 = arith.negf %613 : vector<2x128xf32>
    %630 = math.exp %629 : vector<2x128xf32>
    %cst_114 = arith.constant 1.000000e+00 : f32
    %631 = vector.broadcast %cst_114 : f32 to vector<2x128xf32>
    %632 = arith.addf %631, %630 : vector<2x128xf32>
    %633 = arith.divf %631, %632 : vector<2x128xf32>
    %634 = math.tanh %613 : vector<2x128xf32>
    %635 = vector.extract_strided_slice %633 {offsets = [0, 0], sizes = [2, 32], strides = [1, 1]} : vector<2x128xf32> to vector<2x32xf32>
    %636 = vector.extract_strided_slice %633 {offsets = [0, 32], sizes = [2, 32], strides = [1, 1]} : vector<2x128xf32> to vector<2x32xf32>
    %637 = vector.extract_strided_slice %634 {offsets = [0, 64], sizes = [2, 32], strides = [1, 1]} : vector<2x128xf32> to vector<2x32xf32>
    %638 = vector.extract_strided_slice %633 {offsets = [0, 96], sizes = [2, 32], strides = [1, 1]} : vector<2x128xf32> to vector<2x32xf32>
    %639 = arith.mulf %636, %605 : vector<2x32xf32>
    %640 = arith.mulf %635, %637 : vector<2x32xf32>
    %641 = arith.addf %639, %640 : vector<2x32xf32>
    %642 = math.tanh %641 : vector<2x32xf32>
    %643 = arith.mulf %638, %642 : vector<2x32xf32>
    %644 = vector.extract_strided_slice %398 {offsets = [14, 0], sizes = [2, 128], strides = [1, 1]} : vector<16x256xf32> to vector<2x128xf32>
    %645 = vector.extract_strided_slice %398 {offsets = [0, 128], sizes = [2, 128], strides = [1, 1]} : vector<16x256xf32> to vector<2x128xf32>
    %cst_115 = arith.constant dense<0.000000e+00> : vector<2x128xf32>
    %646 = tpu.matmul %628, %400, %cst_115 {dimension_numbers = #tpu.dot_dimension_numbers<[1], [0], [0], [1], [0, 0, 1, 1], [], []>} : vector<2x32xf32>, vector<32x128xf32>, vector<2x128xf32> -> vector<2x128xf32>
    %647 = arith.addf %644, %646 : vector<2x128xf32>
    %cst_116 = arith.constant dense<0.000000e+00> : vector<2x128xf32>
    %648 = tpu.matmul %643, %401, %cst_116 {dimension_numbers = #tpu.dot_dimension_numbers<[1], [0], [0], [1], [0, 0, 1, 1], [], []>} : vector<2x32xf32>, vector<32x128xf32>, vector<2x128xf32> -> vector<2x128xf32>
    %649 = arith.addf %645, %648 : vector<2x128xf32>
    %650 = arith.negf %647 : vector<2x128xf32>
    %651 = math.exp %650 : vector<2x128xf32>
    %cst_117 = arith.constant 1.000000e+00 : f32
    %652 = vector.broadcast %cst_117 : f32 to vector<2x128xf32>
    %653 = arith.addf %652, %651 : vector<2x128xf32>
    %654 = arith.divf %652, %653 : vector<2x128xf32>
    %655 = math.tanh %647 : vector<2x128xf32>
    %656 = vector.extract_strided_slice %654 {offsets = [0, 0], sizes = [2, 32], strides = [1, 1]} : vector<2x128xf32> to vector<2x32xf32>
    %657 = vector.extract_strided_slice %654 {offsets = [0, 32], sizes = [2, 32], strides = [1, 1]} : vector<2x128xf32> to vector<2x32xf32>
    %658 = vector.extract_strided_slice %655 {offsets = [0, 64], sizes = [2, 32], strides = [1, 1]} : vector<2x128xf32> to vector<2x32xf32>
    %659 = vector.extract_strided_slice %654 {offsets = [0, 96], sizes = [2, 32], strides = [1, 1]} : vector<2x128xf32> to vector<2x32xf32>
    %660 = arith.mulf %657, %626 : vector<2x32xf32>
    %661 = arith.mulf %656, %658 : vector<2x32xf32>
    %662 = arith.addf %660, %661 : vector<2x32xf32>
    %663 = math.tanh %662 : vector<2x32xf32>
    %664 = arith.mulf %659, %663 : vector<2x32xf32>
    %665 = arith.negf %649 : vector<2x128xf32>
    %666 = math.exp %665 : vector<2x128xf32>
    %cst_118 = arith.constant 1.000000e+00 : f32
    %667 = vector.broadcast %cst_118 : f32 to vector<2x128xf32>
    %668 = arith.addf %667, %666 : vector<2x128xf32>
    %669 = arith.divf %667, %668 : vector<2x128xf32>
    %670 = math.tanh %649 : vector<2x128xf32>
    %671 = vector.extract_strided_slice %669 {offsets = [0, 0], sizes = [2, 32], strides = [1, 1]} : vector<2x128xf32> to vector<2x32xf32>
    %672 = vector.extract_strided_slice %669 {offsets = [0, 32], sizes = [2, 32], strides = [1, 1]} : vector<2x128xf32> to vector<2x32xf32>
    %673 = vector.extract_strided_slice %670 {offsets = [0, 64], sizes = [2, 32], strides = [1, 1]} : vector<2x128xf32> to vector<2x32xf32>
    %674 = vector.extract_strided_slice %669 {offsets = [0, 96], sizes = [2, 32], strides = [1, 1]} : vector<2x128xf32> to vector<2x32xf32>
    %675 = arith.mulf %672, %641 : vector<2x32xf32>
    %676 = arith.mulf %671, %673 : vector<2x32xf32>
    %677 = arith.addf %675, %676 : vector<2x32xf32>
    %678 = math.tanh %677 : vector<2x32xf32>
    %679 = arith.mulf %674, %678 : vector<2x32xf32>
    %680 = tpu.concatenate %415, %448, %484, %520, %556, %592, %628, %664 in 0 : vector<2x32xf32>, vector<2x32xf32>, vector<2x32xf32>, vector<2x32xf32>, vector<2x32xf32>, vector<2x32xf32>, vector<2x32xf32>, vector<2x32xf32> -> vector<16x32xf32>
    %681 = tpu.concatenate %679, %643, %607, %571, %535, %499, %463, %427 in 0 : vector<2x32xf32>, vector<2x32xf32>, vector<2x32xf32>, vector<2x32xf32>, vector<2x32xf32>, vector<2x32xf32>, vector<2x32xf32>, vector<2x32xf32> -> vector<16x32xf32>
    %682 = tpu.concatenate %680, %681 in 1 : vector<16x32xf32>, vector<16x32xf32> -> vector<16x64xf32>
    %c0_119 = arith.constant 0 : index
    %c0_120 = arith.constant 0 : index
    %683 = vector.load %arg18[%c0_119, %c0_120] : memref<64x256xf32, #tpu.memory_space<vmem>>, vector<64x256xf32>
    %cst_121 = arith.constant dense<0.000000e+00> : vector<16x256xf32>
    %684 = tpu.matmul %682, %683, %cst_121 {dimension_numbers = #tpu.dot_dimension_numbers<[1], [0], [0], [1], [0, 0, 1, 1], [], []>} : vector<16x64xf32>, vector<64x256xf32>, vector<16x256xf32> -> vector<16x256xf32>
    %c0_122 = arith.constant 0 : index
    %c0_123 = arith.constant 0 : index
    %685 = vector.load %arg20[%c0_122, %c0_123] : memref<1x256xf32, #tpu.memory_space<vmem>>, vector<1x256xf32>
    %686 = vector.broadcast %685 : vector<1x256xf32> to vector<16x256xf32>
    %687 = arith.addf %684, %686 : vector<16x256xf32>
    %c0_124 = arith.constant 0 : index
    %c0_125 = arith.constant 0 : index
    %688 = vector.load %arg19[%c0_124, %c0_125] : memref<32x256xf32, #tpu.memory_space<vmem>>, vector<32x256xf32>
    %689 = vector.extract_strided_slice %688 {offsets = [0, 0], sizes = [32, 128], strides = [1, 1]} : vector<32x256xf32> to vector<32x128xf32>
    %690 = vector.extract_strided_slice %688 {offsets = [0, 128], sizes = [32, 128], strides = [1, 1]} : vector<32x256xf32> to vector<32x128xf32>
    %691 = vector.extract_strided_slice %687 {offsets = [0, 0], sizes = [2, 128], strides = [1, 1]} : vector<16x256xf32> to vector<2x128xf32>
    %692 = vector.extract_strided_slice %687 {offsets = [14, 128], sizes = [2, 128], strides = [1, 1]} : vector<16x256xf32> to vector<2x128xf32>
    %693 = arith.negf %691 : vector<2x128xf32>
    %694 = math.exp %693 : vector<2x128xf32>
    %cst_126 = arith.constant 1.000000e+00 : f32
    %695 = vector.broadcast %cst_126 : f32 to vector<2x128xf32>
    %696 = arith.addf %695, %694 : vector<2x128xf32>
    %697 = arith.divf %695, %696 : vector<2x128xf32>
    %698 = math.tanh %691 : vector<2x128xf32>
    %699 = vector.extract_strided_slice %697 {offsets = [0, 0], sizes = [2, 32], strides = [1, 1]} : vector<2x128xf32> to vector<2x32xf32>
    %700 = vector.extract_strided_slice %698 {offsets = [0, 64], sizes = [2, 32], strides = [1, 1]} : vector<2x128xf32> to vector<2x32xf32>
    %701 = vector.extract_strided_slice %697 {offsets = [0, 96], sizes = [2, 32], strides = [1, 1]} : vector<2x128xf32> to vector<2x32xf32>
    %702 = arith.mulf %699, %700 : vector<2x32xf32>
    %703 = math.tanh %702 : vector<2x32xf32>
    %704 = arith.mulf %701, %703 : vector<2x32xf32>
    %705 = arith.negf %692 : vector<2x128xf32>
    %706 = math.exp %705 : vector<2x128xf32>
    %cst_127 = arith.constant 1.000000e+00 : f32
    %707 = vector.broadcast %cst_127 : f32 to vector<2x128xf32>
    %708 = arith.addf %707, %706 : vector<2x128xf32>
    %709 = arith.divf %707, %708 : vector<2x128xf32>
    %710 = math.tanh %692 : vector<2x128xf32>
    %711 = vector.extract_strided_slice %709 {offsets = [0, 0], sizes = [2, 32], strides = [1, 1]} : vector<2x128xf32> to vector<2x32xf32>
    %712 = vector.extract_strided_slice %710 {offsets = [0, 64], sizes = [2, 32], strides = [1, 1]} : vector<2x128xf32> to vector<2x32xf32>
    %713 = vector.extract_strided_slice %709 {offsets = [0, 96], sizes = [2, 32], strides = [1, 1]} : vector<2x128xf32> to vector<2x32xf32>
    %714 = arith.mulf %711, %712 : vector<2x32xf32>
    %715 = math.tanh %714 : vector<2x32xf32>
    %716 = arith.mulf %713, %715 : vector<2x32xf32>
    %717 = vector.extract_strided_slice %687 {offsets = [2, 0], sizes = [2, 128], strides = [1, 1]} : vector<16x256xf32> to vector<2x128xf32>
    %718 = vector.extract_strided_slice %687 {offsets = [12, 128], sizes = [2, 128], strides = [1, 1]} : vector<16x256xf32> to vector<2x128xf32>
    %cst_128 = arith.constant dense<0.000000e+00> : vector<2x128xf32>
    %719 = tpu.matmul %704, %689, %cst_128 {dimension_numbers = #tpu.dot_dimension_numbers<[1], [0], [0], [1], [0, 0, 1, 1], [], []>} : vector<2x32xf32>, vector<32x128xf32>, vector<2x128xf32> -> vector<2x128xf32>
    %720 = arith.addf %717, %719 : vector<2x128xf32>
    %cst_129 = arith.constant dense<0.000000e+00> : vector<2x128xf32>
    %721 = tpu.matmul %716, %690, %cst_129 {dimension_numbers = #tpu.dot_dimension_numbers<[1], [0], [0], [1], [0, 0, 1, 1], [], []>} : vector<2x32xf32>, vector<32x128xf32>, vector<2x128xf32> -> vector<2x128xf32>
    %722 = arith.addf %718, %721 : vector<2x128xf32>
    %723 = arith.negf %720 : vector<2x128xf32>
    %724 = math.exp %723 : vector<2x128xf32>
    %cst_130 = arith.constant 1.000000e+00 : f32
    %725 = vector.broadcast %cst_130 : f32 to vector<2x128xf32>
    %726 = arith.addf %725, %724 : vector<2x128xf32>
    %727 = arith.divf %725, %726 : vector<2x128xf32>
    %728 = math.tanh %720 : vector<2x128xf32>
    %729 = vector.extract_strided_slice %727 {offsets = [0, 0], sizes = [2, 32], strides = [1, 1]} : vector<2x128xf32> to vector<2x32xf32>
    %730 = vector.extract_strided_slice %727 {offsets = [0, 32], sizes = [2, 32], strides = [1, 1]} : vector<2x128xf32> to vector<2x32xf32>
    %731 = vector.extract_strided_slice %728 {offsets = [0, 64], sizes = [2, 32], strides = [1, 1]} : vector<2x128xf32> to vector<2x32xf32>
    %732 = vector.extract_strided_slice %727 {offsets = [0, 96], sizes = [2, 32], strides = [1, 1]} : vector<2x128xf32> to vector<2x32xf32>
    %733 = arith.mulf %730, %702 : vector<2x32xf32>
    %734 = arith.mulf %729, %731 : vector<2x32xf32>
    %735 = arith.addf %733, %734 : vector<2x32xf32>
    %736 = math.tanh %735 : vector<2x32xf32>
    %737 = arith.mulf %732, %736 : vector<2x32xf32>
    %738 = arith.negf %722 : vector<2x128xf32>
    %739 = math.exp %738 : vector<2x128xf32>
    %cst_131 = arith.constant 1.000000e+00 : f32
    %740 = vector.broadcast %cst_131 : f32 to vector<2x128xf32>
    %741 = arith.addf %740, %739 : vector<2x128xf32>
    %742 = arith.divf %740, %741 : vector<2x128xf32>
    %743 = math.tanh %722 : vector<2x128xf32>
    %744 = vector.extract_strided_slice %742 {offsets = [0, 0], sizes = [2, 32], strides = [1, 1]} : vector<2x128xf32> to vector<2x32xf32>
    %745 = vector.extract_strided_slice %742 {offsets = [0, 32], sizes = [2, 32], strides = [1, 1]} : vector<2x128xf32> to vector<2x32xf32>
    %746 = vector.extract_strided_slice %743 {offsets = [0, 64], sizes = [2, 32], strides = [1, 1]} : vector<2x128xf32> to vector<2x32xf32>
    %747 = vector.extract_strided_slice %742 {offsets = [0, 96], sizes = [2, 32], strides = [1, 1]} : vector<2x128xf32> to vector<2x32xf32>
    %748 = arith.mulf %745, %714 : vector<2x32xf32>
    %749 = arith.mulf %744, %746 : vector<2x32xf32>
    %750 = arith.addf %748, %749 : vector<2x32xf32>
    %751 = math.tanh %750 : vector<2x32xf32>
    %752 = arith.mulf %747, %751 : vector<2x32xf32>
    %753 = vector.extract_strided_slice %687 {offsets = [4, 0], sizes = [2, 128], strides = [1, 1]} : vector<16x256xf32> to vector<2x128xf32>
    %754 = vector.extract_strided_slice %687 {offsets = [10, 128], sizes = [2, 128], strides = [1, 1]} : vector<16x256xf32> to vector<2x128xf32>
    %cst_132 = arith.constant dense<0.000000e+00> : vector<2x128xf32>
    %755 = tpu.matmul %737, %689, %cst_132 {dimension_numbers = #tpu.dot_dimension_numbers<[1], [0], [0], [1], [0, 0, 1, 1], [], []>} : vector<2x32xf32>, vector<32x128xf32>, vector<2x128xf32> -> vector<2x128xf32>
    %756 = arith.addf %753, %755 : vector<2x128xf32>
    %cst_133 = arith.constant dense<0.000000e+00> : vector<2x128xf32>
    %757 = tpu.matmul %752, %690, %cst_133 {dimension_numbers = #tpu.dot_dimension_numbers<[1], [0], [0], [1], [0, 0, 1, 1], [], []>} : vector<2x32xf32>, vector<32x128xf32>, vector<2x128xf32> -> vector<2x128xf32>
    %758 = arith.addf %754, %757 : vector<2x128xf32>
    %759 = arith.negf %756 : vector<2x128xf32>
    %760 = math.exp %759 : vector<2x128xf32>
    %cst_134 = arith.constant 1.000000e+00 : f32
    %761 = vector.broadcast %cst_134 : f32 to vector<2x128xf32>
    %762 = arith.addf %761, %760 : vector<2x128xf32>
    %763 = arith.divf %761, %762 : vector<2x128xf32>
    %764 = math.tanh %756 : vector<2x128xf32>
    %765 = vector.extract_strided_slice %763 {offsets = [0, 0], sizes = [2, 32], strides = [1, 1]} : vector<2x128xf32> to vector<2x32xf32>
    %766 = vector.extract_strided_slice %763 {offsets = [0, 32], sizes = [2, 32], strides = [1, 1]} : vector<2x128xf32> to vector<2x32xf32>
    %767 = vector.extract_strided_slice %764 {offsets = [0, 64], sizes = [2, 32], strides = [1, 1]} : vector<2x128xf32> to vector<2x32xf32>
    %768 = vector.extract_strided_slice %763 {offsets = [0, 96], sizes = [2, 32], strides = [1, 1]} : vector<2x128xf32> to vector<2x32xf32>
    %769 = arith.mulf %766, %735 : vector<2x32xf32>
    %770 = arith.mulf %765, %767 : vector<2x32xf32>
    %771 = arith.addf %769, %770 : vector<2x32xf32>
    %772 = math.tanh %771 : vector<2x32xf32>
    %773 = arith.mulf %768, %772 : vector<2x32xf32>
    %774 = arith.negf %758 : vector<2x128xf32>
    %775 = math.exp %774 : vector<2x128xf32>
    %cst_135 = arith.constant 1.000000e+00 : f32
    %776 = vector.broadcast %cst_135 : f32 to vector<2x128xf32>
    %777 = arith.addf %776, %775 : vector<2x128xf32>
    %778 = arith.divf %776, %777 : vector<2x128xf32>
    %779 = math.tanh %758 : vector<2x128xf32>
    %780 = vector.extract_strided_slice %778 {offsets = [0, 0], sizes = [2, 32], strides = [1, 1]} : vector<2x128xf32> to vector<2x32xf32>
    %781 = vector.extract_strided_slice %778 {offsets = [0, 32], sizes = [2, 32], strides = [1, 1]} : vector<2x128xf32> to vector<2x32xf32>
    %782 = vector.extract_strided_slice %779 {offsets = [0, 64], sizes = [2, 32], strides = [1, 1]} : vector<2x128xf32> to vector<2x32xf32>
    %783 = vector.extract_strided_slice %778 {offsets = [0, 96], sizes = [2, 32], strides = [1, 1]} : vector<2x128xf32> to vector<2x32xf32>
    %784 = arith.mulf %781, %750 : vector<2x32xf32>
    %785 = arith.mulf %780, %782 : vector<2x32xf32>
    %786 = arith.addf %784, %785 : vector<2x32xf32>
    %787 = math.tanh %786 : vector<2x32xf32>
    %788 = arith.mulf %783, %787 : vector<2x32xf32>
    %789 = vector.extract_strided_slice %687 {offsets = [6, 0], sizes = [2, 128], strides = [1, 1]} : vector<16x256xf32> to vector<2x128xf32>
    %790 = vector.extract_strided_slice %687 {offsets = [8, 128], sizes = [2, 128], strides = [1, 1]} : vector<16x256xf32> to vector<2x128xf32>
    %cst_136 = arith.constant dense<0.000000e+00> : vector<2x128xf32>
    %791 = tpu.matmul %773, %689, %cst_136 {dimension_numbers = #tpu.dot_dimension_numbers<[1], [0], [0], [1], [0, 0, 1, 1], [], []>} : vector<2x32xf32>, vector<32x128xf32>, vector<2x128xf32> -> vector<2x128xf32>
    %792 = arith.addf %789, %791 : vector<2x128xf32>
    %cst_137 = arith.constant dense<0.000000e+00> : vector<2x128xf32>
    %793 = tpu.matmul %788, %690, %cst_137 {dimension_numbers = #tpu.dot_dimension_numbers<[1], [0], [0], [1], [0, 0, 1, 1], [], []>} : vector<2x32xf32>, vector<32x128xf32>, vector<2x128xf32> -> vector<2x128xf32>
    %794 = arith.addf %790, %793 : vector<2x128xf32>
    %795 = arith.negf %792 : vector<2x128xf32>
    %796 = math.exp %795 : vector<2x128xf32>
    %cst_138 = arith.constant 1.000000e+00 : f32
    %797 = vector.broadcast %cst_138 : f32 to vector<2x128xf32>
    %798 = arith.addf %797, %796 : vector<2x128xf32>
    %799 = arith.divf %797, %798 : vector<2x128xf32>
    %800 = math.tanh %792 : vector<2x128xf32>
    %801 = vector.extract_strided_slice %799 {offsets = [0, 0], sizes = [2, 32], strides = [1, 1]} : vector<2x128xf32> to vector<2x32xf32>
    %802 = vector.extract_strided_slice %799 {offsets = [0, 32], sizes = [2, 32], strides = [1, 1]} : vector<2x128xf32> to vector<2x32xf32>
    %803 = vector.extract_strided_slice %800 {offsets = [0, 64], sizes = [2, 32], strides = [1, 1]} : vector<2x128xf32> to vector<2x32xf32>
    %804 = vector.extract_strided_slice %799 {offsets = [0, 96], sizes = [2, 32], strides = [1, 1]} : vector<2x128xf32> to vector<2x32xf32>
    %805 = arith.mulf %802, %771 : vector<2x32xf32>
    %806 = arith.mulf %801, %803 : vector<2x32xf32>
    %807 = arith.addf %805, %806 : vector<2x32xf32>
    %808 = math.tanh %807 : vector<2x32xf32>
    %809 = arith.mulf %804, %808 : vector<2x32xf32>
    %810 = arith.negf %794 : vector<2x128xf32>
    %811 = math.exp %810 : vector<2x128xf32>
    %cst_139 = arith.constant 1.000000e+00 : f32
    %812 = vector.broadcast %cst_139 : f32 to vector<2x128xf32>
    %813 = arith.addf %812, %811 : vector<2x128xf32>
    %814 = arith.divf %812, %813 : vector<2x128xf32>
    %815 = math.tanh %794 : vector<2x128xf32>
    %816 = vector.extract_strided_slice %814 {offsets = [0, 0], sizes = [2, 32], strides = [1, 1]} : vector<2x128xf32> to vector<2x32xf32>
    %817 = vector.extract_strided_slice %814 {offsets = [0, 32], sizes = [2, 32], strides = [1, 1]} : vector<2x128xf32> to vector<2x32xf32>
    %818 = vector.extract_strided_slice %815 {offsets = [0, 64], sizes = [2, 32], strides = [1, 1]} : vector<2x128xf32> to vector<2x32xf32>
    %819 = vector.extract_strided_slice %814 {offsets = [0, 96], sizes = [2, 32], strides = [1, 1]} : vector<2x128xf32> to vector<2x32xf32>
    %820 = arith.mulf %817, %786 : vector<2x32xf32>
    %821 = arith.mulf %816, %818 : vector<2x32xf32>
    %822 = arith.addf %820, %821 : vector<2x32xf32>
    %823 = math.tanh %822 : vector<2x32xf32>
    %824 = arith.mulf %819, %823 : vector<2x32xf32>
    %825 = vector.extract_strided_slice %687 {offsets = [8, 0], sizes = [2, 128], strides = [1, 1]} : vector<16x256xf32> to vector<2x128xf32>
    %826 = vector.extract_strided_slice %687 {offsets = [6, 128], sizes = [2, 128], strides = [1, 1]} : vector<16x256xf32> to vector<2x128xf32>
    %cst_140 = arith.constant dense<0.000000e+00> : vector<2x128xf32>
    %827 = tpu.matmul %809, %689, %cst_140 {dimension_numbers = #tpu.dot_dimension_numbers<[1], [0], [0], [1], [0, 0, 1, 1], [], []>} : vector<2x32xf32>, vector<32x128xf32>, vector<2x128xf32> -> vector<2x128xf32>
    %828 = arith.addf %825, %827 : vector<2x128xf32>
    %cst_141 = arith.constant dense<0.000000e+00> : vector<2x128xf32>
    %829 = tpu.matmul %824, %690, %cst_141 {dimension_numbers = #tpu.dot_dimension_numbers<[1], [0], [0], [1], [0, 0, 1, 1], [], []>} : vector<2x32xf32>, vector<32x128xf32>, vector<2x128xf32> -> vector<2x128xf32>
    %830 = arith.addf %826, %829 : vector<2x128xf32>
    %831 = arith.negf %828 : vector<2x128xf32>
    %832 = math.exp %831 : vector<2x128xf32>
    %cst_142 = arith.constant 1.000000e+00 : f32
    %833 = vector.broadcast %cst_142 : f32 to vector<2x128xf32>
    %834 = arith.addf %833, %832 : vector<2x128xf32>
    %835 = arith.divf %833, %834 : vector<2x128xf32>
    %836 = math.tanh %828 : vector<2x128xf32>
    %837 = vector.extract_strided_slice %835 {offsets = [0, 0], sizes = [2, 32], strides = [1, 1]} : vector<2x128xf32> to vector<2x32xf32>
    %838 = vector.extract_strided_slice %835 {offsets = [0, 32], sizes = [2, 32], strides = [1, 1]} : vector<2x128xf32> to vector<2x32xf32>
    %839 = vector.extract_strided_slice %836 {offsets = [0, 64], sizes = [2, 32], strides = [1, 1]} : vector<2x128xf32> to vector<2x32xf32>
    %840 = vector.extract_strided_slice %835 {offsets = [0, 96], sizes = [2, 32], strides = [1, 1]} : vector<2x128xf32> to vector<2x32xf32>
    %841 = arith.mulf %838, %807 : vector<2x32xf32>
    %842 = arith.mulf %837, %839 : vector<2x32xf32>
    %843 = arith.addf %841, %842 : vector<2x32xf32>
    %844 = math.tanh %843 : vector<2x32xf32>
    %845 = arith.mulf %840, %844 : vector<2x32xf32>
    %846 = arith.negf %830 : vector<2x128xf32>
    %847 = math.exp %846 : vector<2x128xf32>
    %cst_143 = arith.constant 1.000000e+00 : f32
    %848 = vector.broadcast %cst_143 : f32 to vector<2x128xf32>
    %849 = arith.addf %848, %847 : vector<2x128xf32>
    %850 = arith.divf %848, %849 : vector<2x128xf32>
    %851 = math.tanh %830 : vector<2x128xf32>
    %852 = vector.extract_strided_slice %850 {offsets = [0, 0], sizes = [2, 32], strides = [1, 1]} : vector<2x128xf32> to vector<2x32xf32>
    %853 = vector.extract_strided_slice %850 {offsets = [0, 32], sizes = [2, 32], strides = [1, 1]} : vector<2x128xf32> to vector<2x32xf32>
    %854 = vector.extract_strided_slice %851 {offsets = [0, 64], sizes = [2, 32], strides = [1, 1]} : vector<2x128xf32> to vector<2x32xf32>
    %855 = vector.extract_strided_slice %850 {offsets = [0, 96], sizes = [2, 32], strides = [1, 1]} : vector<2x128xf32> to vector<2x32xf32>
    %856 = arith.mulf %853, %822 : vector<2x32xf32>
    %857 = arith.mulf %852, %854 : vector<2x32xf32>
    %858 = arith.addf %856, %857 : vector<2x32xf32>
    %859 = math.tanh %858 : vector<2x32xf32>
    %860 = arith.mulf %855, %859 : vector<2x32xf32>
    %861 = vector.extract_strided_slice %687 {offsets = [10, 0], sizes = [2, 128], strides = [1, 1]} : vector<16x256xf32> to vector<2x128xf32>
    %862 = vector.extract_strided_slice %687 {offsets = [4, 128], sizes = [2, 128], strides = [1, 1]} : vector<16x256xf32> to vector<2x128xf32>
    %cst_144 = arith.constant dense<0.000000e+00> : vector<2x128xf32>
    %863 = tpu.matmul %845, %689, %cst_144 {dimension_numbers = #tpu.dot_dimension_numbers<[1], [0], [0], [1], [0, 0, 1, 1], [], []>} : vector<2x32xf32>, vector<32x128xf32>, vector<2x128xf32> -> vector<2x128xf32>
    %864 = arith.addf %861, %863 : vector<2x128xf32>
    %cst_145 = arith.constant dense<0.000000e+00> : vector<2x128xf32>
    %865 = tpu.matmul %860, %690, %cst_145 {dimension_numbers = #tpu.dot_dimension_numbers<[1], [0], [0], [1], [0, 0, 1, 1], [], []>} : vector<2x32xf32>, vector<32x128xf32>, vector<2x128xf32> -> vector<2x128xf32>
    %866 = arith.addf %862, %865 : vector<2x128xf32>
    %867 = arith.negf %864 : vector<2x128xf32>
    %868 = math.exp %867 : vector<2x128xf32>
    %cst_146 = arith.constant 1.000000e+00 : f32
    %869 = vector.broadcast %cst_146 : f32 to vector<2x128xf32>
    %870 = arith.addf %869, %868 : vector<2x128xf32>
    %871 = arith.divf %869, %870 : vector<2x128xf32>
    %872 = math.tanh %864 : vector<2x128xf32>
    %873 = vector.extract_strided_slice %871 {offsets = [0, 0], sizes = [2, 32], strides = [1, 1]} : vector<2x128xf32> to vector<2x32xf32>
    %874 = vector.extract_strided_slice %871 {offsets = [0, 32], sizes = [2, 32], strides = [1, 1]} : vector<2x128xf32> to vector<2x32xf32>
    %875 = vector.extract_strided_slice %872 {offsets = [0, 64], sizes = [2, 32], strides = [1, 1]} : vector<2x128xf32> to vector<2x32xf32>
    %876 = vector.extract_strided_slice %871 {offsets = [0, 96], sizes = [2, 32], strides = [1, 1]} : vector<2x128xf32> to vector<2x32xf32>
    %877 = arith.mulf %874, %843 : vector<2x32xf32>
    %878 = arith.mulf %873, %875 : vector<2x32xf32>
    %879 = arith.addf %877, %878 : vector<2x32xf32>
    %880 = math.tanh %879 : vector<2x32xf32>
    %881 = arith.mulf %876, %880 : vector<2x32xf32>
    %882 = arith.negf %866 : vector<2x128xf32>
    %883 = math.exp %882 : vector<2x128xf32>
    %cst_147 = arith.constant 1.000000e+00 : f32
    %884 = vector.broadcast %cst_147 : f32 to vector<2x128xf32>
    %885 = arith.addf %884, %883 : vector<2x128xf32>
    %886 = arith.divf %884, %885 : vector<2x128xf32>
    %887 = math.tanh %866 : vector<2x128xf32>
    %888 = vector.extract_strided_slice %886 {offsets = [0, 0], sizes = [2, 32], strides = [1, 1]} : vector<2x128xf32> to vector<2x32xf32>
    %889 = vector.extract_strided_slice %886 {offsets = [0, 32], sizes = [2, 32], strides = [1, 1]} : vector<2x128xf32> to vector<2x32xf32>
    %890 = vector.extract_strided_slice %887 {offsets = [0, 64], sizes = [2, 32], strides = [1, 1]} : vector<2x128xf32> to vector<2x32xf32>
    %891 = vector.extract_strided_slice %886 {offsets = [0, 96], sizes = [2, 32], strides = [1, 1]} : vector<2x128xf32> to vector<2x32xf32>
    %892 = arith.mulf %889, %858 : vector<2x32xf32>
    %893 = arith.mulf %888, %890 : vector<2x32xf32>
    %894 = arith.addf %892, %893 : vector<2x32xf32>
    %895 = math.tanh %894 : vector<2x32xf32>
    %896 = arith.mulf %891, %895 : vector<2x32xf32>
    %897 = vector.extract_strided_slice %687 {offsets = [12, 0], sizes = [2, 128], strides = [1, 1]} : vector<16x256xf32> to vector<2x128xf32>
    %898 = vector.extract_strided_slice %687 {offsets = [2, 128], sizes = [2, 128], strides = [1, 1]} : vector<16x256xf32> to vector<2x128xf32>
    %cst_148 = arith.constant dense<0.000000e+00> : vector<2x128xf32>
    %899 = tpu.matmul %881, %689, %cst_148 {dimension_numbers = #tpu.dot_dimension_numbers<[1], [0], [0], [1], [0, 0, 1, 1], [], []>} : vector<2x32xf32>, vector<32x128xf32>, vector<2x128xf32> -> vector<2x128xf32>
    %900 = arith.addf %897, %899 : vector<2x128xf32>
    %cst_149 = arith.constant dense<0.000000e+00> : vector<2x128xf32>
    %901 = tpu.matmul %896, %690, %cst_149 {dimension_numbers = #tpu.dot_dimension_numbers<[1], [0], [0], [1], [0, 0, 1, 1], [], []>} : vector<2x32xf32>, vector<32x128xf32>, vector<2x128xf32> -> vector<2x128xf32>
    %902 = arith.addf %898, %901 : vector<2x128xf32>
    %903 = arith.negf %900 : vector<2x128xf32>
    %904 = math.exp %903 : vector<2x128xf32>
    %cst_150 = arith.constant 1.000000e+00 : f32
    %905 = vector.broadcast %cst_150 : f32 to vector<2x128xf32>
    %906 = arith.addf %905, %904 : vector<2x128xf32>
    %907 = arith.divf %905, %906 : vector<2x128xf32>
    %908 = math.tanh %900 : vector<2x128xf32>
    %909 = vector.extract_strided_slice %907 {offsets = [0, 0], sizes = [2, 32], strides = [1, 1]} : vector<2x128xf32> to vector<2x32xf32>
    %910 = vector.extract_strided_slice %907 {offsets = [0, 32], sizes = [2, 32], strides = [1, 1]} : vector<2x128xf32> to vector<2x32xf32>
    %911 = vector.extract_strided_slice %908 {offsets = [0, 64], sizes = [2, 32], strides = [1, 1]} : vector<2x128xf32> to vector<2x32xf32>
    %912 = vector.extract_strided_slice %907 {offsets = [0, 96], sizes = [2, 32], strides = [1, 1]} : vector<2x128xf32> to vector<2x32xf32>
    %913 = arith.mulf %910, %879 : vector<2x32xf32>
    %914 = arith.mulf %909, %911 : vector<2x32xf32>
    %915 = arith.addf %913, %914 : vector<2x32xf32>
    %916 = math.tanh %915 : vector<2x32xf32>
    %917 = arith.mulf %912, %916 : vector<2x32xf32>
    %918 = arith.negf %902 : vector<2x128xf32>
    %919 = math.exp %918 : vector<2x128xf32>
    %cst_151 = arith.constant 1.000000e+00 : f32
    %920 = vector.broadcast %cst_151 : f32 to vector<2x128xf32>
    %921 = arith.addf %920, %919 : vector<2x128xf32>
    %922 = arith.divf %920, %921 : vector<2x128xf32>
    %923 = math.tanh %902 : vector<2x128xf32>
    %924 = vector.extract_strided_slice %922 {offsets = [0, 0], sizes = [2, 32], strides = [1, 1]} : vector<2x128xf32> to vector<2x32xf32>
    %925 = vector.extract_strided_slice %922 {offsets = [0, 32], sizes = [2, 32], strides = [1, 1]} : vector<2x128xf32> to vector<2x32xf32>
    %926 = vector.extract_strided_slice %923 {offsets = [0, 64], sizes = [2, 32], strides = [1, 1]} : vector<2x128xf32> to vector<2x32xf32>
    %927 = vector.extract_strided_slice %922 {offsets = [0, 96], sizes = [2, 32], strides = [1, 1]} : vector<2x128xf32> to vector<2x32xf32>
    %928 = arith.mulf %925, %894 : vector<2x32xf32>
    %929 = arith.mulf %924, %926 : vector<2x32xf32>
    %930 = arith.addf %928, %929 : vector<2x32xf32>
    %931 = math.tanh %930 : vector<2x32xf32>
    %932 = arith.mulf %927, %931 : vector<2x32xf32>
    %933 = vector.extract_strided_slice %687 {offsets = [14, 0], sizes = [2, 128], strides = [1, 1]} : vector<16x256xf32> to vector<2x128xf32>
    %934 = vector.extract_strided_slice %687 {offsets = [0, 128], sizes = [2, 128], strides = [1, 1]} : vector<16x256xf32> to vector<2x128xf32>
    %cst_152 = arith.constant dense<0.000000e+00> : vector<2x128xf32>
    %935 = tpu.matmul %917, %689, %cst_152 {dimension_numbers = #tpu.dot_dimension_numbers<[1], [0], [0], [1], [0, 0, 1, 1], [], []>} : vector<2x32xf32>, vector<32x128xf32>, vector<2x128xf32> -> vector<2x128xf32>
    %936 = arith.addf %933, %935 : vector<2x128xf32>
    %cst_153 = arith.constant dense<0.000000e+00> : vector<2x128xf32>
    %937 = tpu.matmul %932, %690, %cst_153 {dimension_numbers = #tpu.dot_dimension_numbers<[1], [0], [0], [1], [0, 0, 1, 1], [], []>} : vector<2x32xf32>, vector<32x128xf32>, vector<2x128xf32> -> vector<2x128xf32>
    %938 = arith.addf %934, %937 : vector<2x128xf32>
    %939 = arith.negf %936 : vector<2x128xf32>
    %940 = math.exp %939 : vector<2x128xf32>
    %cst_154 = arith.constant 1.000000e+00 : f32
    %941 = vector.broadcast %cst_154 : f32 to vector<2x128xf32>
    %942 = arith.addf %941, %940 : vector<2x128xf32>
    %943 = arith.divf %941, %942 : vector<2x128xf32>
    %944 = math.tanh %936 : vector<2x128xf32>
    %945 = vector.extract_strided_slice %943 {offsets = [0, 0], sizes = [2, 32], strides = [1, 1]} : vector<2x128xf32> to vector<2x32xf32>
    %946 = vector.extract_strided_slice %943 {offsets = [0, 32], sizes = [2, 32], strides = [1, 1]} : vector<2x128xf32> to vector<2x32xf32>
    %947 = vector.extract_strided_slice %944 {offsets = [0, 64], sizes = [2, 32], strides = [1, 1]} : vector<2x128xf32> to vector<2x32xf32>
    %948 = vector.extract_strided_slice %943 {offsets = [0, 96], sizes = [2, 32], strides = [1, 1]} : vector<2x128xf32> to vector<2x32xf32>
    %949 = arith.mulf %946, %915 : vector<2x32xf32>
    %950 = arith.mulf %945, %947 : vector<2x32xf32>
    %951 = arith.addf %949, %950 : vector<2x32xf32>
    %952 = math.tanh %951 : vector<2x32xf32>
    %953 = arith.mulf %948, %952 : vector<2x32xf32>
    %954 = arith.negf %938 : vector<2x128xf32>
    %955 = math.exp %954 : vector<2x128xf32>
    %cst_155 = arith.constant 1.000000e+00 : f32
    %956 = vector.broadcast %cst_155 : f32 to vector<2x128xf32>
    %957 = arith.addf %956, %955 : vector<2x128xf32>
    %958 = arith.divf %956, %957 : vector<2x128xf32>
    %959 = math.tanh %938 : vector<2x128xf32>
    %960 = vector.extract_strided_slice %958 {offsets = [0, 0], sizes = [2, 32], strides = [1, 1]} : vector<2x128xf32> to vector<2x32xf32>
    %961 = vector.extract_strided_slice %958 {offsets = [0, 32], sizes = [2, 32], strides = [1, 1]} : vector<2x128xf32> to vector<2x32xf32>
    %962 = vector.extract_strided_slice %959 {offsets = [0, 64], sizes = [2, 32], strides = [1, 1]} : vector<2x128xf32> to vector<2x32xf32>
    %963 = vector.extract_strided_slice %958 {offsets = [0, 96], sizes = [2, 32], strides = [1, 1]} : vector<2x128xf32> to vector<2x32xf32>
    %964 = arith.mulf %961, %930 : vector<2x32xf32>
    %965 = arith.mulf %960, %962 : vector<2x32xf32>
    %966 = arith.addf %964, %965 : vector<2x32xf32>
    %967 = math.tanh %966 : vector<2x32xf32>
    %968 = arith.mulf %963, %967 : vector<2x32xf32>
    %969 = tpu.concatenate %704, %737, %773, %809, %845, %881, %917, %953 in 0 : vector<2x32xf32>, vector<2x32xf32>, vector<2x32xf32>, vector<2x32xf32>, vector<2x32xf32>, vector<2x32xf32>, vector<2x32xf32>, vector<2x32xf32> -> vector<16x32xf32>
    %970 = tpu.concatenate %968, %932, %896, %860, %824, %788, %752, %716 in 0 : vector<2x32xf32>, vector<2x32xf32>, vector<2x32xf32>, vector<2x32xf32>, vector<2x32xf32>, vector<2x32xf32>, vector<2x32xf32>, vector<2x32xf32> -> vector<16x32xf32>
    %971 = tpu.concatenate %969, %970 in 1 : vector<16x32xf32>, vector<16x32xf32> -> vector<16x64xf32>
    %c0_156 = arith.constant 0 : index
    %c0_157 = arith.constant 0 : index
    %972 = vector.load %arg21[%c0_156, %c0_157] : memref<64x256xf32, #tpu.memory_space<vmem>>, vector<64x256xf32>
    %cst_158 = arith.constant dense<0.000000e+00> : vector<16x256xf32>
    %973 = tpu.matmul %682, %972, %cst_158 {dimension_numbers = #tpu.dot_dimension_numbers<[1], [0], [0], [1], [0, 0, 1, 1], [], []>} : vector<16x64xf32>, vector<64x256xf32>, vector<16x256xf32> -> vector<16x256xf32>
    %c0_159 = arith.constant 0 : index
    %c0_160 = arith.constant 0 : index
    %974 = vector.load %arg23[%c0_159, %c0_160] : memref<1x256xf32, #tpu.memory_space<vmem>>, vector<1x256xf32>
    %975 = vector.broadcast %974 : vector<1x256xf32> to vector<16x256xf32>
    %976 = arith.addf %973, %975 : vector<16x256xf32>
    %c0_161 = arith.constant 0 : index
    %c0_162 = arith.constant 0 : index
    %977 = vector.load %arg22[%c0_161, %c0_162] : memref<32x256xf32, #tpu.memory_space<vmem>>, vector<32x256xf32>
    %978 = vector.extract_strided_slice %977 {offsets = [0, 0], sizes = [32, 128], strides = [1, 1]} : vector<32x256xf32> to vector<32x128xf32>
    %979 = vector.extract_strided_slice %977 {offsets = [0, 128], sizes = [32, 128], strides = [1, 1]} : vector<32x256xf32> to vector<32x128xf32>
    %980 = vector.extract_strided_slice %976 {offsets = [0, 0], sizes = [2, 128], strides = [1, 1]} : vector<16x256xf32> to vector<2x128xf32>
    %981 = vector.extract_strided_slice %976 {offsets = [14, 128], sizes = [2, 128], strides = [1, 1]} : vector<16x256xf32> to vector<2x128xf32>
    %982 = arith.negf %980 : vector<2x128xf32>
    %983 = math.exp %982 : vector<2x128xf32>
    %cst_163 = arith.constant 1.000000e+00 : f32
    %984 = vector.broadcast %cst_163 : f32 to vector<2x128xf32>
    %985 = arith.addf %984, %983 : vector<2x128xf32>
    %986 = arith.divf %984, %985 : vector<2x128xf32>
    %987 = math.tanh %980 : vector<2x128xf32>
    %988 = vector.extract_strided_slice %986 {offsets = [0, 0], sizes = [2, 32], strides = [1, 1]} : vector<2x128xf32> to vector<2x32xf32>
    %989 = vector.extract_strided_slice %987 {offsets = [0, 64], sizes = [2, 32], strides = [1, 1]} : vector<2x128xf32> to vector<2x32xf32>
    %990 = vector.extract_strided_slice %986 {offsets = [0, 96], sizes = [2, 32], strides = [1, 1]} : vector<2x128xf32> to vector<2x32xf32>
    %991 = arith.mulf %988, %989 : vector<2x32xf32>
    %992 = math.tanh %991 : vector<2x32xf32>
    %993 = arith.mulf %990, %992 : vector<2x32xf32>
    %994 = arith.negf %981 : vector<2x128xf32>
    %995 = math.exp %994 : vector<2x128xf32>
    %cst_164 = arith.constant 1.000000e+00 : f32
    %996 = vector.broadcast %cst_164 : f32 to vector<2x128xf32>
    %997 = arith.addf %996, %995 : vector<2x128xf32>
    %998 = arith.divf %996, %997 : vector<2x128xf32>
    %999 = math.tanh %981 : vector<2x128xf32>
    %1000 = vector.extract_strided_slice %998 {offsets = [0, 0], sizes = [2, 32], strides = [1, 1]} : vector<2x128xf32> to vector<2x32xf32>
    %1001 = vector.extract_strided_slice %999 {offsets = [0, 64], sizes = [2, 32], strides = [1, 1]} : vector<2x128xf32> to vector<2x32xf32>
    %1002 = vector.extract_strided_slice %998 {offsets = [0, 96], sizes = [2, 32], strides = [1, 1]} : vector<2x128xf32> to vector<2x32xf32>
    %1003 = arith.mulf %1000, %1001 : vector<2x32xf32>
    %1004 = math.tanh %1003 : vector<2x32xf32>
    %1005 = arith.mulf %1002, %1004 : vector<2x32xf32>
    %1006 = vector.extract_strided_slice %976 {offsets = [2, 0], sizes = [2, 128], strides = [1, 1]} : vector<16x256xf32> to vector<2x128xf32>
    %1007 = vector.extract_strided_slice %976 {offsets = [12, 128], sizes = [2, 128], strides = [1, 1]} : vector<16x256xf32> to vector<2x128xf32>
    %cst_165 = arith.constant dense<0.000000e+00> : vector<2x128xf32>
    %1008 = tpu.matmul %993, %978, %cst_165 {dimension_numbers = #tpu.dot_dimension_numbers<[1], [0], [0], [1], [0, 0, 1, 1], [], []>} : vector<2x32xf32>, vector<32x128xf32>, vector<2x128xf32> -> vector<2x128xf32>
    %1009 = arith.addf %1006, %1008 : vector<2x128xf32>
    %cst_166 = arith.constant dense<0.000000e+00> : vector<2x128xf32>
    %1010 = tpu.matmul %1005, %979, %cst_166 {dimension_numbers = #tpu.dot_dimension_numbers<[1], [0], [0], [1], [0, 0, 1, 1], [], []>} : vector<2x32xf32>, vector<32x128xf32>, vector<2x128xf32> -> vector<2x128xf32>
    %1011 = arith.addf %1007, %1010 : vector<2x128xf32>
    %1012 = arith.negf %1009 : vector<2x128xf32>
    %1013 = math.exp %1012 : vector<2x128xf32>
    %cst_167 = arith.constant 1.000000e+00 : f32
    %1014 = vector.broadcast %cst_167 : f32 to vector<2x128xf32>
    %1015 = arith.addf %1014, %1013 : vector<2x128xf32>
    %1016 = arith.divf %1014, %1015 : vector<2x128xf32>
    %1017 = math.tanh %1009 : vector<2x128xf32>
    %1018 = vector.extract_strided_slice %1016 {offsets = [0, 0], sizes = [2, 32], strides = [1, 1]} : vector<2x128xf32> to vector<2x32xf32>
    %1019 = vector.extract_strided_slice %1016 {offsets = [0, 32], sizes = [2, 32], strides = [1, 1]} : vector<2x128xf32> to vector<2x32xf32>
    %1020 = vector.extract_strided_slice %1017 {offsets = [0, 64], sizes = [2, 32], strides = [1, 1]} : vector<2x128xf32> to vector<2x32xf32>
    %1021 = vector.extract_strided_slice %1016 {offsets = [0, 96], sizes = [2, 32], strides = [1, 1]} : vector<2x128xf32> to vector<2x32xf32>
    %1022 = arith.mulf %1019, %991 : vector<2x32xf32>
    %1023 = arith.mulf %1018, %1020 : vector<2x32xf32>
    %1024 = arith.addf %1022, %1023 : vector<2x32xf32>
    %1025 = math.tanh %1024 : vector<2x32xf32>
    %1026 = arith.mulf %1021, %1025 : vector<2x32xf32>
    %1027 = arith.negf %1011 : vector<2x128xf32>
    %1028 = math.exp %1027 : vector<2x128xf32>
    %cst_168 = arith.constant 1.000000e+00 : f32
    %1029 = vector.broadcast %cst_168 : f32 to vector<2x128xf32>
    %1030 = arith.addf %1029, %1028 : vector<2x128xf32>
    %1031 = arith.divf %1029, %1030 : vector<2x128xf32>
    %1032 = math.tanh %1011 : vector<2x128xf32>
    %1033 = vector.extract_strided_slice %1031 {offsets = [0, 0], sizes = [2, 32], strides = [1, 1]} : vector<2x128xf32> to vector<2x32xf32>
    %1034 = vector.extract_strided_slice %1031 {offsets = [0, 32], sizes = [2, 32], strides = [1, 1]} : vector<2x128xf32> to vector<2x32xf32>
    %1035 = vector.extract_strided_slice %1032 {offsets = [0, 64], sizes = [2, 32], strides = [1, 1]} : vector<2x128xf32> to vector<2x32xf32>
    %1036 = vector.extract_strided_slice %1031 {offsets = [0, 96], sizes = [2, 32], strides = [1, 1]} : vector<2x128xf32> to vector<2x32xf32>
    %1037 = arith.mulf %1034, %1003 : vector<2x32xf32>
    %1038 = arith.mulf %1033, %1035 : vector<2x32xf32>
    %1039 = arith.addf %1037, %1038 : vector<2x32xf32>
    %1040 = math.tanh %1039 : vector<2x32xf32>
    %1041 = arith.mulf %1036, %1040 : vector<2x32xf32>
    %1042 = vector.extract_strided_slice %976 {offsets = [4, 0], sizes = [2, 128], strides = [1, 1]} : vector<16x256xf32> to vector<2x128xf32>
    %1043 = vector.extract_strided_slice %976 {offsets = [10, 128], sizes = [2, 128], strides = [1, 1]} : vector<16x256xf32> to vector<2x128xf32>
    %cst_169 = arith.constant dense<0.000000e+00> : vector<2x128xf32>
    %1044 = tpu.matmul %1026, %978, %cst_169 {dimension_numbers = #tpu.dot_dimension_numbers<[1], [0], [0], [1], [0, 0, 1, 1], [], []>} : vector<2x32xf32>, vector<32x128xf32>, vector<2x128xf32> -> vector<2x128xf32>
    %1045 = arith.addf %1042, %1044 : vector<2x128xf32>
    %cst_170 = arith.constant dense<0.000000e+00> : vector<2x128xf32>
    %1046 = tpu.matmul %1041, %979, %cst_170 {dimension_numbers = #tpu.dot_dimension_numbers<[1], [0], [0], [1], [0, 0, 1, 1], [], []>} : vector<2x32xf32>, vector<32x128xf32>, vector<2x128xf32> -> vector<2x128xf32>
    %1047 = arith.addf %1043, %1046 : vector<2x128xf32>
    %1048 = arith.negf %1045 : vector<2x128xf32>
    %1049 = math.exp %1048 : vector<2x128xf32>
    %cst_171 = arith.constant 1.000000e+00 : f32
    %1050 = vector.broadcast %cst_171 : f32 to vector<2x128xf32>
    %1051 = arith.addf %1050, %1049 : vector<2x128xf32>
    %1052 = arith.divf %1050, %1051 : vector<2x128xf32>
    %1053 = math.tanh %1045 : vector<2x128xf32>
    %1054 = vector.extract_strided_slice %1052 {offsets = [0, 0], sizes = [2, 32], strides = [1, 1]} : vector<2x128xf32> to vector<2x32xf32>
    %1055 = vector.extract_strided_slice %1052 {offsets = [0, 32], sizes = [2, 32], strides = [1, 1]} : vector<2x128xf32> to vector<2x32xf32>
    %1056 = vector.extract_strided_slice %1053 {offsets = [0, 64], sizes = [2, 32], strides = [1, 1]} : vector<2x128xf32> to vector<2x32xf32>
    %1057 = vector.extract_strided_slice %1052 {offsets = [0, 96], sizes = [2, 32], strides = [1, 1]} : vector<2x128xf32> to vector<2x32xf32>
    %1058 = arith.mulf %1055, %1024 : vector<2x32xf32>
    %1059 = arith.mulf %1054, %1056 : vector<2x32xf32>
    %1060 = arith.addf %1058, %1059 : vector<2x32xf32>
    %1061 = math.tanh %1060 : vector<2x32xf32>
    %1062 = arith.mulf %1057, %1061 : vector<2x32xf32>
    %1063 = arith.negf %1047 : vector<2x128xf32>
    %1064 = math.exp %1063 : vector<2x128xf32>
    %cst_172 = arith.constant 1.000000e+00 : f32
    %1065 = vector.broadcast %cst_172 : f32 to vector<2x128xf32>
    %1066 = arith.addf %1065, %1064 : vector<2x128xf32>
    %1067 = arith.divf %1065, %1066 : vector<2x128xf32>
    %1068 = math.tanh %1047 : vector<2x128xf32>
    %1069 = vector.extract_strided_slice %1067 {offsets = [0, 0], sizes = [2, 32], strides = [1, 1]} : vector<2x128xf32> to vector<2x32xf32>
    %1070 = vector.extract_strided_slice %1067 {offsets = [0, 32], sizes = [2, 32], strides = [1, 1]} : vector<2x128xf32> to vector<2x32xf32>
    %1071 = vector.extract_strided_slice %1068 {offsets = [0, 64], sizes = [2, 32], strides = [1, 1]} : vector<2x128xf32> to vector<2x32xf32>
    %1072 = vector.extract_strided_slice %1067 {offsets = [0, 96], sizes = [2, 32], strides = [1, 1]} : vector<2x128xf32> to vector<2x32xf32>
    %1073 = arith.mulf %1070, %1039 : vector<2x32xf32>
    %1074 = arith.mulf %1069, %1071 : vector<2x32xf32>
    %1075 = arith.addf %1073, %1074 : vector<2x32xf32>
    %1076 = math.tanh %1075 : vector<2x32xf32>
    %1077 = arith.mulf %1072, %1076 : vector<2x32xf32>
    %1078 = vector.extract_strided_slice %976 {offsets = [6, 0], sizes = [2, 128], strides = [1, 1]} : vector<16x256xf32> to vector<2x128xf32>
    %1079 = vector.extract_strided_slice %976 {offsets = [8, 128], sizes = [2, 128], strides = [1, 1]} : vector<16x256xf32> to vector<2x128xf32>
    %cst_173 = arith.constant dense<0.000000e+00> : vector<2x128xf32>
    %1080 = tpu.matmul %1062, %978, %cst_173 {dimension_numbers = #tpu.dot_dimension_numbers<[1], [0], [0], [1], [0, 0, 1, 1], [], []>} : vector<2x32xf32>, vector<32x128xf32>, vector<2x128xf32> -> vector<2x128xf32>
    %1081 = arith.addf %1078, %1080 : vector<2x128xf32>
    %cst_174 = arith.constant dense<0.000000e+00> : vector<2x128xf32>
    %1082 = tpu.matmul %1077, %979, %cst_174 {dimension_numbers = #tpu.dot_dimension_numbers<[1], [0], [0], [1], [0, 0, 1, 1], [], []>} : vector<2x32xf32>, vector<32x128xf32>, vector<2x128xf32> -> vector<2x128xf32>
    %1083 = arith.addf %1079, %1082 : vector<2x128xf32>
    %1084 = arith.negf %1081 : vector<2x128xf32>
    %1085 = math.exp %1084 : vector<2x128xf32>
    %cst_175 = arith.constant 1.000000e+00 : f32
    %1086 = vector.broadcast %cst_175 : f32 to vector<2x128xf32>
    %1087 = arith.addf %1086, %1085 : vector<2x128xf32>
    %1088 = arith.divf %1086, %1087 : vector<2x128xf32>
    %1089 = math.tanh %1081 : vector<2x128xf32>
    %1090 = vector.extract_strided_slice %1088 {offsets = [0, 0], sizes = [2, 32], strides = [1, 1]} : vector<2x128xf32> to vector<2x32xf32>
    %1091 = vector.extract_strided_slice %1088 {offsets = [0, 32], sizes = [2, 32], strides = [1, 1]} : vector<2x128xf32> to vector<2x32xf32>
    %1092 = vector.extract_strided_slice %1089 {offsets = [0, 64], sizes = [2, 32], strides = [1, 1]} : vector<2x128xf32> to vector<2x32xf32>
    %1093 = vector.extract_strided_slice %1088 {offsets = [0, 96], sizes = [2, 32], strides = [1, 1]} : vector<2x128xf32> to vector<2x32xf32>
    %1094 = arith.mulf %1091, %1060 : vector<2x32xf32>
    %1095 = arith.mulf %1090, %1092 : vector<2x32xf32>
    %1096 = arith.addf %1094, %1095 : vector<2x32xf32>
    %1097 = math.tanh %1096 : vector<2x32xf32>
    %1098 = arith.mulf %1093, %1097 : vector<2x32xf32>
    %1099 = arith.negf %1083 : vector<2x128xf32>
    %1100 = math.exp %1099 : vector<2x128xf32>
    %cst_176 = arith.constant 1.000000e+00 : f32
    %1101 = vector.broadcast %cst_176 : f32 to vector<2x128xf32>
    %1102 = arith.addf %1101, %1100 : vector<2x128xf32>
    %1103 = arith.divf %1101, %1102 : vector<2x128xf32>
    %1104 = math.tanh %1083 : vector<2x128xf32>
    %1105 = vector.extract_strided_slice %1103 {offsets = [0, 0], sizes = [2, 32], strides = [1, 1]} : vector<2x128xf32> to vector<2x32xf32>
    %1106 = vector.extract_strided_slice %1103 {offsets = [0, 32], sizes = [2, 32], strides = [1, 1]} : vector<2x128xf32> to vector<2x32xf32>
    %1107 = vector.extract_strided_slice %1104 {offsets = [0, 64], sizes = [2, 32], strides = [1, 1]} : vector<2x128xf32> to vector<2x32xf32>
    %1108 = vector.extract_strided_slice %1103 {offsets = [0, 96], sizes = [2, 32], strides = [1, 1]} : vector<2x128xf32> to vector<2x32xf32>
    %1109 = arith.mulf %1106, %1075 : vector<2x32xf32>
    %1110 = arith.mulf %1105, %1107 : vector<2x32xf32>
    %1111 = arith.addf %1109, %1110 : vector<2x32xf32>
    %1112 = math.tanh %1111 : vector<2x32xf32>
    %1113 = arith.mulf %1108, %1112 : vector<2x32xf32>
    %1114 = vector.extract_strided_slice %976 {offsets = [8, 0], sizes = [2, 128], strides = [1, 1]} : vector<16x256xf32> to vector<2x128xf32>
    %1115 = vector.extract_strided_slice %976 {offsets = [6, 128], sizes = [2, 128], strides = [1, 1]} : vector<16x256xf32> to vector<2x128xf32>
    %cst_177 = arith.constant dense<0.000000e+00> : vector<2x128xf32>
    %1116 = tpu.matmul %1098, %978, %cst_177 {dimension_numbers = #tpu.dot_dimension_numbers<[1], [0], [0], [1], [0, 0, 1, 1], [], []>} : vector<2x32xf32>, vector<32x128xf32>, vector<2x128xf32> -> vector<2x128xf32>
    %1117 = arith.addf %1114, %1116 : vector<2x128xf32>
    %cst_178 = arith.constant dense<0.000000e+00> : vector<2x128xf32>
    %1118 = tpu.matmul %1113, %979, %cst_178 {dimension_numbers = #tpu.dot_dimension_numbers<[1], [0], [0], [1], [0, 0, 1, 1], [], []>} : vector<2x32xf32>, vector<32x128xf32>, vector<2x128xf32> -> vector<2x128xf32>
    %1119 = arith.addf %1115, %1118 : vector<2x128xf32>
    %1120 = arith.negf %1117 : vector<2x128xf32>
    %1121 = math.exp %1120 : vector<2x128xf32>
    %cst_179 = arith.constant 1.000000e+00 : f32
    %1122 = vector.broadcast %cst_179 : f32 to vector<2x128xf32>
    %1123 = arith.addf %1122, %1121 : vector<2x128xf32>
    %1124 = arith.divf %1122, %1123 : vector<2x128xf32>
    %1125 = math.tanh %1117 : vector<2x128xf32>
    %1126 = vector.extract_strided_slice %1124 {offsets = [0, 0], sizes = [2, 32], strides = [1, 1]} : vector<2x128xf32> to vector<2x32xf32>
    %1127 = vector.extract_strided_slice %1124 {offsets = [0, 32], sizes = [2, 32], strides = [1, 1]} : vector<2x128xf32> to vector<2x32xf32>
    %1128 = vector.extract_strided_slice %1125 {offsets = [0, 64], sizes = [2, 32], strides = [1, 1]} : vector<2x128xf32> to vector<2x32xf32>
    %1129 = vector.extract_strided_slice %1124 {offsets = [0, 96], sizes = [2, 32], strides = [1, 1]} : vector<2x128xf32> to vector<2x32xf32>
    %1130 = arith.mulf %1127, %1096 : vector<2x32xf32>
    %1131 = arith.mulf %1126, %1128 : vector<2x32xf32>
    %1132 = arith.addf %1130, %1131 : vector<2x32xf32>
    %1133 = math.tanh %1132 : vector<2x32xf32>
    %1134 = arith.mulf %1129, %1133 : vector<2x32xf32>
    %1135 = arith.negf %1119 : vector<2x128xf32>
    %1136 = math.exp %1135 : vector<2x128xf32>
    %cst_180 = arith.constant 1.000000e+00 : f32
    %1137 = vector.broadcast %cst_180 : f32 to vector<2x128xf32>
    %1138 = arith.addf %1137, %1136 : vector<2x128xf32>
    %1139 = arith.divf %1137, %1138 : vector<2x128xf32>
    %1140 = math.tanh %1119 : vector<2x128xf32>
    %1141 = vector.extract_strided_slice %1139 {offsets = [0, 0], sizes = [2, 32], strides = [1, 1]} : vector<2x128xf32> to vector<2x32xf32>
    %1142 = vector.extract_strided_slice %1139 {offsets = [0, 32], sizes = [2, 32], strides = [1, 1]} : vector<2x128xf32> to vector<2x32xf32>
    %1143 = vector.extract_strided_slice %1140 {offsets = [0, 64], sizes = [2, 32], strides = [1, 1]} : vector<2x128xf32> to vector<2x32xf32>
    %1144 = vector.extract_strided_slice %1139 {offsets = [0, 96], sizes = [2, 32], strides = [1, 1]} : vector<2x128xf32> to vector<2x32xf32>
    %1145 = arith.mulf %1142, %1111 : vector<2x32xf32>
    %1146 = arith.mulf %1141, %1143 : vector<2x32xf32>
    %1147 = arith.addf %1145, %1146 : vector<2x32xf32>
    %1148 = math.tanh %1147 : vector<2x32xf32>
    %1149 = arith.mulf %1144, %1148 : vector<2x32xf32>
    %1150 = vector.extract_strided_slice %976 {offsets = [10, 0], sizes = [2, 128], strides = [1, 1]} : vector<16x256xf32> to vector<2x128xf32>
    %1151 = vector.extract_strided_slice %976 {offsets = [4, 128], sizes = [2, 128], strides = [1, 1]} : vector<16x256xf32> to vector<2x128xf32>
    %cst_181 = arith.constant dense<0.000000e+00> : vector<2x128xf32>
    %1152 = tpu.matmul %1134, %978, %cst_181 {dimension_numbers = #tpu.dot_dimension_numbers<[1], [0], [0], [1], [0, 0, 1, 1], [], []>} : vector<2x32xf32>, vector<32x128xf32>, vector<2x128xf32> -> vector<2x128xf32>
    %1153 = arith.addf %1150, %1152 : vector<2x128xf32>
    %cst_182 = arith.constant dense<0.000000e+00> : vector<2x128xf32>
    %1154 = tpu.matmul %1149, %979, %cst_182 {dimension_numbers = #tpu.dot_dimension_numbers<[1], [0], [0], [1], [0, 0, 1, 1], [], []>} : vector<2x32xf32>, vector<32x128xf32>, vector<2x128xf32> -> vector<2x128xf32>
    %1155 = arith.addf %1151, %1154 : vector<2x128xf32>
    %1156 = arith.negf %1153 : vector<2x128xf32>
    %1157 = math.exp %1156 : vector<2x128xf32>
    %cst_183 = arith.constant 1.000000e+00 : f32
    %1158 = vector.broadcast %cst_183 : f32 to vector<2x128xf32>
    %1159 = arith.addf %1158, %1157 : vector<2x128xf32>
    %1160 = arith.divf %1158, %1159 : vector<2x128xf32>
    %1161 = math.tanh %1153 : vector<2x128xf32>
    %1162 = vector.extract_strided_slice %1160 {offsets = [0, 0], sizes = [2, 32], strides = [1, 1]} : vector<2x128xf32> to vector<2x32xf32>
    %1163 = vector.extract_strided_slice %1160 {offsets = [0, 32], sizes = [2, 32], strides = [1, 1]} : vector<2x128xf32> to vector<2x32xf32>
    %1164 = vector.extract_strided_slice %1161 {offsets = [0, 64], sizes = [2, 32], strides = [1, 1]} : vector<2x128xf32> to vector<2x32xf32>
    %1165 = vector.extract_strided_slice %1160 {offsets = [0, 96], sizes = [2, 32], strides = [1, 1]} : vector<2x128xf32> to vector<2x32xf32>
    %1166 = arith.mulf %1163, %1132 : vector<2x32xf32>
    %1167 = arith.mulf %1162, %1164 : vector<2x32xf32>
    %1168 = arith.addf %1166, %1167 : vector<2x32xf32>
    %1169 = math.tanh %1168 : vector<2x32xf32>
    %1170 = arith.mulf %1165, %1169 : vector<2x32xf32>
    %1171 = arith.negf %1155 : vector<2x128xf32>
    %1172 = math.exp %1171 : vector<2x128xf32>
    %cst_184 = arith.constant 1.000000e+00 : f32
    %1173 = vector.broadcast %cst_184 : f32 to vector<2x128xf32>
    %1174 = arith.addf %1173, %1172 : vector<2x128xf32>
    %1175 = arith.divf %1173, %1174 : vector<2x128xf32>
    %1176 = math.tanh %1155 : vector<2x128xf32>
    %1177 = vector.extract_strided_slice %1175 {offsets = [0, 0], sizes = [2, 32], strides = [1, 1]} : vector<2x128xf32> to vector<2x32xf32>
    %1178 = vector.extract_strided_slice %1175 {offsets = [0, 32], sizes = [2, 32], strides = [1, 1]} : vector<2x128xf32> to vector<2x32xf32>
    %1179 = vector.extract_strided_slice %1176 {offsets = [0, 64], sizes = [2, 32], strides = [1, 1]} : vector<2x128xf32> to vector<2x32xf32>
    %1180 = vector.extract_strided_slice %1175 {offsets = [0, 96], sizes = [2, 32], strides = [1, 1]} : vector<2x128xf32> to vector<2x32xf32>
    %1181 = arith.mulf %1178, %1147 : vector<2x32xf32>
    %1182 = arith.mulf %1177, %1179 : vector<2x32xf32>
    %1183 = arith.addf %1181, %1182 : vector<2x32xf32>
    %1184 = math.tanh %1183 : vector<2x32xf32>
    %1185 = arith.mulf %1180, %1184 : vector<2x32xf32>
    %1186 = vector.extract_strided_slice %976 {offsets = [12, 0], sizes = [2, 128], strides = [1, 1]} : vector<16x256xf32> to vector<2x128xf32>
    %1187 = vector.extract_strided_slice %976 {offsets = [2, 128], sizes = [2, 128], strides = [1, 1]} : vector<16x256xf32> to vector<2x128xf32>
    %cst_185 = arith.constant dense<0.000000e+00> : vector<2x128xf32>
    %1188 = tpu.matmul %1170, %978, %cst_185 {dimension_numbers = #tpu.dot_dimension_numbers<[1], [0], [0], [1], [0, 0, 1, 1], [], []>} : vector<2x32xf32>, vector<32x128xf32>, vector<2x128xf32> -> vector<2x128xf32>
    %1189 = arith.addf %1186, %1188 : vector<2x128xf32>
    %cst_186 = arith.constant dense<0.000000e+00> : vector<2x128xf32>
    %1190 = tpu.matmul %1185, %979, %cst_186 {dimension_numbers = #tpu.dot_dimension_numbers<[1], [0], [0], [1], [0, 0, 1, 1], [], []>} : vector<2x32xf32>, vector<32x128xf32>, vector<2x128xf32> -> vector<2x128xf32>
    %1191 = arith.addf %1187, %1190 : vector<2x128xf32>
    %1192 = arith.negf %1189 : vector<2x128xf32>
    %1193 = math.exp %1192 : vector<2x128xf32>
    %cst_187 = arith.constant 1.000000e+00 : f32
    %1194 = vector.broadcast %cst_187 : f32 to vector<2x128xf32>
    %1195 = arith.addf %1194, %1193 : vector<2x128xf32>
    %1196 = arith.divf %1194, %1195 : vector<2x128xf32>
    %1197 = math.tanh %1189 : vector<2x128xf32>
    %1198 = vector.extract_strided_slice %1196 {offsets = [0, 0], sizes = [2, 32], strides = [1, 1]} : vector<2x128xf32> to vector<2x32xf32>
    %1199 = vector.extract_strided_slice %1196 {offsets = [0, 32], sizes = [2, 32], strides = [1, 1]} : vector<2x128xf32> to vector<2x32xf32>
    %1200 = vector.extract_strided_slice %1197 {offsets = [0, 64], sizes = [2, 32], strides = [1, 1]} : vector<2x128xf32> to vector<2x32xf32>
    %1201 = vector.extract_strided_slice %1196 {offsets = [0, 96], sizes = [2, 32], strides = [1, 1]} : vector<2x128xf32> to vector<2x32xf32>
    %1202 = arith.mulf %1199, %1168 : vector<2x32xf32>
    %1203 = arith.mulf %1198, %1200 : vector<2x32xf32>
    %1204 = arith.addf %1202, %1203 : vector<2x32xf32>
    %1205 = math.tanh %1204 : vector<2x32xf32>
    %1206 = arith.mulf %1201, %1205 : vector<2x32xf32>
    %1207 = arith.negf %1191 : vector<2x128xf32>
    %1208 = math.exp %1207 : vector<2x128xf32>
    %cst_188 = arith.constant 1.000000e+00 : f32
    %1209 = vector.broadcast %cst_188 : f32 to vector<2x128xf32>
    %1210 = arith.addf %1209, %1208 : vector<2x128xf32>
    %1211 = arith.divf %1209, %1210 : vector<2x128xf32>
    %1212 = math.tanh %1191 : vector<2x128xf32>
    %1213 = vector.extract_strided_slice %1211 {offsets = [0, 0], sizes = [2, 32], strides = [1, 1]} : vector<2x128xf32> to vector<2x32xf32>
    %1214 = vector.extract_strided_slice %1211 {offsets = [0, 32], sizes = [2, 32], strides = [1, 1]} : vector<2x128xf32> to vector<2x32xf32>
    %1215 = vector.extract_strided_slice %1212 {offsets = [0, 64], sizes = [2, 32], strides = [1, 1]} : vector<2x128xf32> to vector<2x32xf32>
    %1216 = vector.extract_strided_slice %1211 {offsets = [0, 96], sizes = [2, 32], strides = [1, 1]} : vector<2x128xf32> to vector<2x32xf32>
    %1217 = arith.mulf %1214, %1183 : vector<2x32xf32>
    %1218 = arith.mulf %1213, %1215 : vector<2x32xf32>
    %1219 = arith.addf %1217, %1218 : vector<2x32xf32>
    %1220 = math.tanh %1219 : vector<2x32xf32>
    %1221 = arith.mulf %1216, %1220 : vector<2x32xf32>
    %1222 = vector.extract_strided_slice %976 {offsets = [14, 0], sizes = [2, 128], strides = [1, 1]} : vector<16x256xf32> to vector<2x128xf32>
    %1223 = vector.extract_strided_slice %976 {offsets = [0, 128], sizes = [2, 128], strides = [1, 1]} : vector<16x256xf32> to vector<2x128xf32>
    %cst_189 = arith.constant dense<0.000000e+00> : vector<2x128xf32>
    %1224 = tpu.matmul %1206, %978, %cst_189 {dimension_numbers = #tpu.dot_dimension_numbers<[1], [0], [0], [1], [0, 0, 1, 1], [], []>} : vector<2x32xf32>, vector<32x128xf32>, vector<2x128xf32> -> vector<2x128xf32>
    %1225 = arith.addf %1222, %1224 : vector<2x128xf32>
    %cst_190 = arith.constant dense<0.000000e+00> : vector<2x128xf32>
    %1226 = tpu.matmul %1221, %979, %cst_190 {dimension_numbers = #tpu.dot_dimension_numbers<[1], [0], [0], [1], [0, 0, 1, 1], [], []>} : vector<2x32xf32>, vector<32x128xf32>, vector<2x128xf32> -> vector<2x128xf32>
    %1227 = arith.addf %1223, %1226 : vector<2x128xf32>
    %1228 = arith.negf %1225 : vector<2x128xf32>
    %1229 = math.exp %1228 : vector<2x128xf32>
    %cst_191 = arith.constant 1.000000e+00 : f32
    %1230 = vector.broadcast %cst_191 : f32 to vector<2x128xf32>
    %1231 = arith.addf %1230, %1229 : vector<2x128xf32>
    %1232 = arith.divf %1230, %1231 : vector<2x128xf32>
    %1233 = math.tanh %1225 : vector<2x128xf32>
    %1234 = vector.extract_strided_slice %1232 {offsets = [0, 0], sizes = [2, 32], strides = [1, 1]} : vector<2x128xf32> to vector<2x32xf32>
    %1235 = vector.extract_strided_slice %1232 {offsets = [0, 32], sizes = [2, 32], strides = [1, 1]} : vector<2x128xf32> to vector<2x32xf32>
    %1236 = vector.extract_strided_slice %1233 {offsets = [0, 64], sizes = [2, 32], strides = [1, 1]} : vector<2x128xf32> to vector<2x32xf32>
    %1237 = vector.extract_strided_slice %1232 {offsets = [0, 96], sizes = [2, 32], strides = [1, 1]} : vector<2x128xf32> to vector<2x32xf32>
    %1238 = arith.mulf %1235, %1204 : vector<2x32xf32>
    %1239 = arith.mulf %1234, %1236 : vector<2x32xf32>
    %1240 = arith.addf %1238, %1239 : vector<2x32xf32>
    %1241 = math.tanh %1240 : vector<2x32xf32>
    %1242 = arith.mulf %1237, %1241 : vector<2x32xf32>
    %1243 = arith.negf %1227 : vector<2x128xf32>
    %1244 = math.exp %1243 : vector<2x128xf32>
    %cst_192 = arith.constant 1.000000e+00 : f32
    %1245 = vector.broadcast %cst_192 : f32 to vector<2x128xf32>
    %1246 = arith.addf %1245, %1244 : vector<2x128xf32>
    %1247 = arith.divf %1245, %1246 : vector<2x128xf32>
    %1248 = math.tanh %1227 : vector<2x128xf32>
    %1249 = vector.extract_strided_slice %1247 {offsets = [0, 0], sizes = [2, 32], strides = [1, 1]} : vector<2x128xf32> to vector<2x32xf32>
    %1250 = vector.extract_strided_slice %1247 {offsets = [0, 32], sizes = [2, 32], strides = [1, 1]} : vector<2x128xf32> to vector<2x32xf32>
    %1251 = vector.extract_strided_slice %1248 {offsets = [0, 64], sizes = [2, 32], strides = [1, 1]} : vector<2x128xf32> to vector<2x32xf32>
    %1252 = vector.extract_strided_slice %1247 {offsets = [0, 96], sizes = [2, 32], strides = [1, 1]} : vector<2x128xf32> to vector<2x32xf32>
    %1253 = arith.mulf %1250, %1219 : vector<2x32xf32>
    %1254 = arith.mulf %1249, %1251 : vector<2x32xf32>
    %1255 = arith.addf %1253, %1254 : vector<2x32xf32>
    %1256 = math.tanh %1255 : vector<2x32xf32>
    %1257 = arith.mulf %1252, %1256 : vector<2x32xf32>
    %1258 = tpu.concatenate %993, %1026, %1062, %1098, %1134, %1170, %1206, %1242 in 0 : vector<2x32xf32>, vector<2x32xf32>, vector<2x32xf32>, vector<2x32xf32>, vector<2x32xf32>, vector<2x32xf32>, vector<2x32xf32>, vector<2x32xf32> -> vector<16x32xf32>
    %1259 = tpu.concatenate %1257, %1221, %1185, %1149, %1113, %1077, %1041, %1005 in 0 : vector<2x32xf32>, vector<2x32xf32>, vector<2x32xf32>, vector<2x32xf32>, vector<2x32xf32>, vector<2x32xf32>, vector<2x32xf32>, vector<2x32xf32> -> vector<16x32xf32>
    %1260 = tpu.concatenate %1258, %1259 in 1 : vector<16x32xf32>, vector<16x32xf32> -> vector<16x64xf32>
    %c0_193 = arith.constant 0 : index
    %c0_194 = arith.constant 0 : index
    %1261 = vector.load %arg27[%c0_193, %c0_194] : memref<64x128xf32, #tpu.memory_space<vmem>>, vector<64x128xf32>
    %cst_195 = arith.constant dense<0.000000e+00> : vector<16x128xf32>
    %1262 = tpu.matmul %971, %1261, %cst_195 {dimension_numbers = #tpu.dot_dimension_numbers<[1], [0], [0], [1], [0, 0, 1, 1], [], []>} : vector<16x64xf32>, vector<64x128xf32>, vector<16x128xf32> -> vector<16x128xf32>
    %c0_196 = arith.constant 0 : index
    %c0_197 = arith.constant 0 : index
    %1263 = vector.load %arg28[%c0_196, %c0_197] : memref<64x128xf32, #tpu.memory_space<vmem>>, vector<64x128xf32>
    %cst_198 = arith.constant dense<0.000000e+00> : vector<16x128xf32>
    %1264 = tpu.matmul %104, %1263, %cst_198 {dimension_numbers = #tpu.dot_dimension_numbers<[1], [0], [0], [1], [0, 0, 1, 1], [], []>} : vector<16x64xf32>, vector<64x128xf32>, vector<16x128xf32> -> vector<16x128xf32>
    %1265 = arith.addf %1262, %1264 : vector<16x128xf32>
    %c0_199 = arith.constant 0 : index
    %c0_200 = arith.constant 0 : index
    %1266 = vector.load %arg29[%c0_199, %c0_200] : memref<1x128xf32, #tpu.memory_space<vmem>>, vector<1x128xf32>
    %1267 = vector.broadcast %1266 : vector<1x128xf32> to vector<16x128xf32>
    %1268 = arith.addf %1265, %1267 : vector<16x128xf32>
    %c0_201 = arith.constant 0 : index
    %c0_202 = arith.constant 0 : index
    %1269 = vector.load %arg33[%c0_201, %c0_202] : memref<16x128xf32, #tpu.memory_space<vmem>>, vector<16x128xf32>
    tpu.vector_store %arg33[%c0_201, %c0_202], %1268 {strides = array<i32>} : memref<16x128xf32, #tpu.memory_space<vmem>>, vector<16x128xf32>,
    %c0_203 = arith.constant 0 : index
    %c0_204 = arith.constant 0 : index
    %1270 = vector.load %arg24[%c0_203, %c0_204] : memref<64x32xf32, #tpu.memory_space<vmem>>, vector<64x32xf32>
    %cst_205 = arith.constant dense<0.000000e+00> : vector<16x32xf32>
    %1271 = tpu.matmul %1260, %1270, %cst_205 {dimension_numbers = #tpu.dot_dimension_numbers<[1], [0], [0], [1], [0, 0, 1, 1], [], []>} : vector<16x64xf32>, vector<64x32xf32>, vector<16x32xf32> -> vector<16x32xf32>
    %c0_206 = arith.constant 0 : index
    %c0_207 = arith.constant 0 : index
    %1272 = vector.load %arg25[%c0_206, %c0_207] : memref<1x32xf32, #tpu.memory_space<vmem>>, vector<1x32xf32>
    %1273 = vector.broadcast %1272 : vector<1x32xf32> to vector<16x32xf32>
    %1274 = arith.addf %1271, %1273 : vector<16x32xf32>
    %1275 = math.tanh %1274 : vector<16x32xf32>
    %c0_208 = arith.constant 0 : index
    %c0_209 = arith.constant 0 : index
    %1276 = vector.load %arg26[%c0_208, %c0_209] : memref<32x1xf32, #tpu.memory_space<vmem>>, vector<32x1xf32>
    %cst_210 = arith.constant dense<0.000000e+00> : vector<16x1xf32>
    %1277 = tpu.matmul %1275, %1276, %cst_210 {dimension_numbers = #tpu.dot_dimension_numbers<[1], [0], [0], [1], [0, 0, 1, 1], [], []>} : vector<16x32xf32>, vector<32x1xf32>, vector<16x1xf32> -> vector<16x1xf32>
    %1278 = tpu.iota {dimensions = array<i32: 0>} : vector<16x1xi32>
    %c2_i32 = arith.constant 2 : i32
    %c0_i32 = arith.constant 0 : i32
    %1279 = arith.cmpi eq, %c2_i32, %c0_i32 : i32
    %c1_i32 = arith.constant 1 : i32
    %1280 = arith.select %1279, %c1_i32, %c2_i32 : i32
    %1281 = vector.broadcast %1280 : i32 to vector<16x1xi32>
    %1282 = arith.remsi %1278, %1281 : vector<16x1xi32>
    %c0_i32_211 = arith.constant 0 : i32
    %1283 = vector.broadcast %c0_i32_211 : i32 to vector<16x1xi32>
    %1284 = arith.cmpi ne, %1282, %1283 : vector<16x1xi32>
    %c0_i32_212 = arith.constant 0 : i32
    %1285 = vector.broadcast %c0_i32_212 : i32 to vector<16x1xi32>
    %1286 = arith.cmpi slt, %1282, %1285 : vector<16x1xi32>
    %c0_i32_213 = arith.constant 0 : i32
    %1287 = arith.cmpi slt, %1280, %c0_i32_213 : i32
    %1288 = vector.broadcast %1287 : i1 to vector<16x1xi1>
    %1289 = vector.broadcast %1288 : vector<16x1xi1> to vector<16x1xi1>
    %1290 = arith.xori %1286, %1289 : vector<16x1xi1>
    %1291 = arith.andi %1290, %1284 : vector<16x1xi1>
    %1292 = vector.broadcast %1280 : i32 to vector<16x1xi32>
    %1293 = arith.addi %1282, %1292 : vector<16x1xi32>
    %1294 = arith.select %1291, %1293, %1282 : vector<16x1xi1>, vector<16x1xi32>
    %c0_i32_214 = arith.constant 0 : i32
    %1295 = vector.broadcast %c0_i32_214 : i32 to vector<16x1xi32>
    %1296 = arith.cmpi eq, %1294, %1295 : vector<16x1xi32>
    %cst_215 = arith.constant -1.000000e+30 : f32
    %1297 = vector.broadcast %cst_215 : f32 to vector<16x1xf32>
    %1298 = arith.select %1296, %1277, %1297 : vector<16x1xi1>, vector<16x1xf32>
    %cst_216 = arith.constant dense<0xFF800000> : vector<1xf32>
    %1299 = vector.multi_reduction <maximumf>, %1298, %cst_216 [0] : vector<16x1xf32> to vector<1xf32>
    %1300 = vector.shape_cast %1299 : vector<1xf32> to vector<1x1xf32>
    %1301 = vector.broadcast %1300 : vector<1x1xf32> to vector<16x1xf32>
    %1302 = arith.subf %1277, %1301 : vector<16x1xf32>
    %1303 = math.exp %1302 : vector<16x1xf32>
    %cst_217 = arith.constant 0.000000e+00 : f32
    %1304 = vector.broadcast %cst_217 : f32 to vector<16x1xf32>
    %1305 = arith.select %1296, %1303, %1304 : vector<16x1xi1>, vector<16x1xf32>
    %cst_218 = arith.constant dense<0.000000e+00> : vector<1xf32>
    %1306 = vector.multi_reduction <add>, %1305, %cst_218 [0] : vector<16x1xf32> to vector<1xf32>
    %1307 = vector.shape_cast %1306 : vector<1xf32> to vector<1x1xf32>
    %1308 = vector.broadcast %1307 : vector<1x1xf32> to vector<16x1xf32>
    %1309 = arith.divf %1305, %1308 : vector<16x1xf32>
    %1310 = vector.broadcast %1309 : vector<16x1xf32> to vector<16x64xf32>
    %1311 = arith.mulf %1310, %1260 : vector<16x64xf32>
    %cst_219 = arith.constant dense<0.000000e+00> : vector<64xf32>
    %1312 = vector.multi_reduction <add>, %1311, %cst_219 [0] : vector<16x64xf32> to vector<64xf32>
    %1313 = vector.shape_cast %1312 : vector<64xf32> to vector<1x64xf32>
    %c2_i32_220 = arith.constant 2 : i32
    %c0_i32_221 = arith.constant 0 : i32
    %1314 = arith.cmpi eq, %c2_i32_220, %c0_i32_221 : i32
    %c1_i32_222 = arith.constant 1 : i32
    %1315 = arith.select %1314, %c1_i32_222, %c2_i32_220 : i32
    %1316 = vector.broadcast %1315 : i32 to vector<16x1xi32>
    %1317 = arith.remsi %1278, %1316 : vector<16x1xi32>
    %c0_i32_223 = arith.constant 0 : i32
    %1318 = vector.broadcast %c0_i32_223 : i32 to vector<16x1xi32>
    %1319 = arith.cmpi ne, %1317, %1318 : vector<16x1xi32>
    %c0_i32_224 = arith.constant 0 : i32
    %1320 = vector.broadcast %c0_i32_224 : i32 to vector<16x1xi32>
    %1321 = arith.cmpi slt, %1317, %1320 : vector<16x1xi32>
    %c0_i32_225 = arith.constant 0 : i32
    %1322 = arith.cmpi slt, %1315, %c0_i32_225 : i32
    %1323 = vector.broadcast %1322 : i1 to vector<16x1xi1>
    %1324 = vector.broadcast %1323 : vector<16x1xi1> to vector<16x1xi1>
    %1325 = arith.xori %1321, %1324 : vector<16x1xi1>
    %1326 = arith.andi %1325, %1319 : vector<16x1xi1>
    %1327 = vector.broadcast %1315 : i32 to vector<16x1xi32>
    %1328 = arith.addi %1317, %1327 : vector<16x1xi32>
    %1329 = arith.select %1326, %1328, %1317 : vector<16x1xi1>, vector<16x1xi32>
    %c1_i32_226 = arith.constant 1 : i32
    %1330 = vector.broadcast %c1_i32_226 : i32 to vector<16x1xi32>
    %1331 = arith.cmpi eq, %1329, %1330 : vector<16x1xi32>
    %cst_227 = arith.constant -1.000000e+30 : f32
    %1332 = vector.broadcast %cst_227 : f32 to vector<16x1xf32>
    %1333 = arith.select %1331, %1277, %1332 : vector<16x1xi1>, vector<16x1xf32>
    %cst_228 = arith.constant dense<0xFF800000> : vector<1xf32>
    %1334 = vector.multi_reduction <maximumf>, %1333, %cst_228 [0] : vector<16x1xf32> to vector<1xf32>
    %1335 = vector.shape_cast %1334 : vector<1xf32> to vector<1x1xf32>
    %1336 = vector.broadcast %1335 : vector<1x1xf32> to vector<16x1xf32>
    %1337 = arith.subf %1277, %1336 : vector<16x1xf32>
    %1338 = math.exp %1337 : vector<16x1xf32>
    %cst_229 = arith.constant 0.000000e+00 : f32
    %1339 = vector.broadcast %cst_229 : f32 to vector<16x1xf32>
    %1340 = arith.select %1331, %1338, %1339 : vector<16x1xi1>, vector<16x1xf32>
    %cst_230 = arith.constant dense<0.000000e+00> : vector<1xf32>
    %1341 = vector.multi_reduction <add>, %1340, %cst_230 [0] : vector<16x1xf32> to vector<1xf32>
    %1342 = vector.shape_cast %1341 : vector<1xf32> to vector<1x1xf32>
    %1343 = vector.broadcast %1342 : vector<1x1xf32> to vector<16x1xf32>
    %1344 = arith.divf %1340, %1343 : vector<16x1xf32>
    %1345 = vector.broadcast %1344 : vector<16x1xf32> to vector<16x64xf32>
    %1346 = arith.mulf %1345, %1260 : vector<16x64xf32>
    %cst_231 = arith.constant dense<0.000000e+00> : vector<64xf32>
    %1347 = vector.multi_reduction <add>, %1346, %cst_231 [0] : vector<16x64xf32> to vector<64xf32>
    %1348 = vector.shape_cast %1347 : vector<64xf32> to vector<1x64xf32>
    %1349 = tpu.concatenate %1313, %1348 in 0 : vector<1x64xf32>, vector<1x64xf32> -> vector<2x64xf32>
    %1350 = vector.extract_strided_slice %104 {offsets = [0, 0], sizes = [2, 64], strides = [1, 1]} : vector<16x64xf32> to vector<2x64xf32>
    %c0_232 = arith.constant 0 : index
    %c0_233 = arith.constant 0 : index
    %1351 = vector.load %arg30[%c0_232, %c0_233] : memref<64x128xf32, #tpu.memory_space<vmem>>, vector<64x128xf32>
    %cst_234 = arith.constant dense<0.000000e+00> : vector<2x128xf32>
    %1352 = tpu.matmul %1349, %1351, %cst_234 {dimension_numbers = #tpu.dot_dimension_numbers<[1], [0], [0], [1], [0, 0, 1, 1], [], []>} : vector<2x64xf32>, vector<64x128xf32>, vector<2x128xf32> -> vector<2x128xf32>
    %c0_235 = arith.constant 0 : index
    %c0_236 = arith.constant 0 : index
    %1353 = vector.load %arg31[%c0_235, %c0_236] : memref<64x128xf32, #tpu.memory_space<vmem>>, vector<64x128xf32>
    %cst_237 = arith.constant dense<0.000000e+00> : vector<2x128xf32>
    %1354 = tpu.matmul %1350, %1353, %cst_237 {dimension_numbers = #tpu.dot_dimension_numbers<[1], [0], [0], [1], [0, 0, 1, 1], [], []>} : vector<2x64xf32>, vector<64x128xf32>, vector<2x128xf32> -> vector<2x128xf32>
    %1355 = arith.addf %1352, %1354 : vector<2x128xf32>
    %c0_238 = arith.constant 0 : index
    %c0_239 = arith.constant 0 : index
    %1356 = vector.load %arg32[%c0_238, %c0_239] : memref<1x128xf32, #tpu.memory_space<vmem>>, vector<1x128xf32>
    %1357 = vector.broadcast %1356 : vector<1x128xf32> to vector<2x128xf32>
    %1358 = arith.addf %1355, %1357 : vector<2x128xf32>
    %c0_240 = arith.constant 0 : index
    %c0_241 = arith.constant 0 : index
    %1359 = vector.load %arg34[%c0_240, %c0_241] : memref<2x128xf32, #tpu.memory_space<vmem>>, vector<2x128xf32>
    tpu.vector_store %arg34[%c0_240, %c0_241], %1358 {strides = array<i32>} : memref<2x128xf32, #tpu.memory_space<vmem>>, vector<2x128xf32>,
    return
  }
}

</mosaic_0001>

<llo_original>
// kernel: forward.1
$region0: #{forward.1}
  #allocation0 [shape = 'u32[]', space=smem, size = 0x4, offset = 0x4, fixed_abs, tag = 'smem constant byte address 0x4 - core index']
  #allocation1 [shape = 'u32[144,128]{1,0:T(1,128)}', space=vmem, size = 0x12000, scoped, tag = 'internal scratch']
  %s0 = inlined_call_operand.smem [shape: u32[35], index: -1, kind: input, shape index: {}]
  %s1 = sld [smem:[%s0]]
  %s2 = scalar_lea.smem %s0, 1
  %s3 = sld [smem:[%s2]]
  %s4 = scalar_lea.smem %s0, 2
  %s5 = sld [smem:[%s4]]
  %s6 = scalar_lea.smem %s0, 3
  %s7 = sld [smem:[%s6]]
  %s8 = scalar_lea.smem %s0, 4
  %s9 = sld [smem:[%s8]]
  %s10 = scalar_lea.smem %s0, 5
  %s11 = sld [smem:[%s10]]
  %s12 = scalar_lea.smem %s0, 6
  %s13 = sld [smem:[%s12]]
  %s14 = scalar_lea.smem %s0, 7
  %s15 = sld [smem:[%s14]]
  %s16 = scalar_lea.smem %s0, 8
  %s17 = sld [smem:[%s16]]
  %s18 = scalar_lea.smem %s0, 9
  %s19 = sld [smem:[%s18]]
  %s20 = scalar_lea.smem %s0, 10
  %s21 = sld [smem:[%s20]]
  %s22 = scalar_lea.smem %s0, 11
  %s23 = sld [smem:[%s22]]
  %s24 = scalar_lea.smem %s0, 12
  %s25 = sld [smem:[%s24]]
  %s26 = scalar_lea.smem %s0, 13
  %s27 = sld [smem:[%s26]]
  %s28 = scalar_lea.smem %s0, 14
  %s29 = sld [smem:[%s28]]
  %s30 = scalar_lea.smem %s0, 15
  %s31 = sld [smem:[%s30]]
  %s32 = scalar_lea.smem %s0, 16
  %s33 = sld [smem:[%s32]]
  %s34 = scalar_lea.smem %s0, 17
  %s35 = sld [smem:[%s34]]
  %s36 = scalar_lea.smem %s0, 18
  %s37 = sld [smem:[%s36]]
  %s38 = scalar_lea.smem %s0, 19
  %s39 = sld [smem:[%s38]]
  %s40 = scalar_lea.smem %s0, 20
  %s41 = sld [smem:[%s40]]
  %s42 = scalar_lea.smem %s0, 21
  %s43 = sld [smem:[%s42]]
  %s44 = scalar_lea.smem %s0, 22
  %s45 = sld [smem:[%s44]]
  %s46 = scalar_lea.smem %s0, 23
  %s47 = sld [smem:[%s46]]
  %s48 = scalar_lea.smem %s0, 24
  %s49 = sld [smem:[%s48]]
  %s50 = scalar_lea.smem %s0, 25
  %s51 = sld [smem:[%s50]]
  %s52 = scalar_lea.smem %s0, 26
  %s53 = sld [smem:[%s52]]
  %s54 = scalar_lea.smem %s0, 27
  %s55 = sld [smem:[%s54]]
  %s56 = scalar_lea.smem %s0, 28
  %s57 = sld [smem:[%s56]]
  %s58 = scalar_lea.smem %s0, 29
  %s59 = sld [smem:[%s58]]
  %s60 = scalar_lea.smem %s0, 30
  %s61 = sld [smem:[%s60]]
  %s62 = scalar_lea.smem %s0, 31
  %s63 = sld [smem:[%s62]]
  %s64 = scalar_lea.smem %s0, 32
  %s65 = sld [smem:[%s64]]
  %s66 = scalar_lea.smem %s0, 33
  %s67 = sld [smem:[%s66]]
  %s68 = scalar_lea.smem %s0, 34
  %s69 = sld [smem:[%s68]]
  %70 = xla_tuple %s67, %s69
  %s71 = sld [smem:[#allocation0]]
  $region194: #{forward.1} parent=0
    _
  %s73 = ssub.s32 1, %s71
  %s74 = scalar_select 0, %s73, %s71
  $region1: #{forward.1} parent=0
    #allocation2 [shape = 'u8[512]{0}', space=vmem, size = 0x400, scoped, tag = 'input window, operand 5, single buffered']
    #allocation3 [shape = 's32[1]{0}', space=sflag, size = 0x4, scoped, tag = 'scoped memory for forward.1']
    #allocation4 [shape = 's32[1]{0}', space=sflag, size = 0x4, scoped, tag = 'scoped memory for forward.1']
    #allocation5 [shape = 'u8[512]{0}', space=vmem, size = 0x400, scoped, tag = 'input window, operand 8, single buffered']
    #allocation6 [shape = 's32[1]{0}', space=sflag, size = 0x4, scoped, tag = 'scoped memory for forward.1']
    #allocation7 [shape = 'u8[512]{0}', space=vmem, size = 0x400, scoped, tag = 'input window, operand 10, single buffered']
    #allocation8 [shape = 'u8[1024]{0}', space=vmem, size = 0x400, scoped, tag = 'input window, operand 11, single buffered']
    #allocation9 [shape = 's32[1]{0}', space=sflag, size = 0x4, scoped, tag = 'scoped memory for forward.1']
    #allocation10 [shape = 'u8[512]{0}', space=vmem, size = 0x400, scoped, tag = 'input window, operand 25, single buffered']
    #allocation11 [shape = 'u8[32768]{0}', space=vmem, size = 0x8000, scoped, tag = 'input window, operand 27, single buffered']
    #allocation12 [shape = 's32[1]{0}', space=sflag, size = 0x4, scoped, tag = 'scoped memory for forward.1']
    #allocation13 [shape = 'u8[32768]{0}', space=vmem, size = 0x8000, scoped, tag = 'input window, operand 28, single buffered']
    #allocation14 [shape = 'u8[512]{0}', space=vmem, size = 0x400, scoped, tag = 'input window, operand 29, single buffered']
    #allocation15 [shape = 's32[1]{0}', space=sflag, size = 0x4, scoped, tag = 'scoped memory for forward.1']
    #allocation16 [shape = 'u8[32768]{0}', space=vmem, size = 0x8000, scoped, tag = 'input window, operand 30, single buffered']
    #allocation17 [shape = 'u8[32768]{0}', space=vmem, size = 0x8000, scoped, tag = 'input window, operand 31, single buffered']
    #allocation18 [shape = 's32[1]{0}', space=sflag, size = 0x4, scoped, tag = 'scoped memory for forward.1']
    #allocation19 [shape = 'u8[512]{0}', space=vmem, size = 0x400, scoped, tag = 'input window, operand 32, single buffered']
    #allocation20 [shape = 'u8[1024]{0}', space=vmem, size = 0x400, scoped, tag = 'output window, operand 1, single buffered']
    %75 = vsyncpa [#allocation3], 0
    %76 = vsyncpa [#allocation6], 0
    %77 = vsyncpa [#allocation9], 0
    %78 = vsyncpa [#allocation12], 0
    %79 = vsyncpa [#allocation15], 0
    %80 = vsyncpa [#allocation18], 0
    %81 = vsyncpa [#allocation4], 0
    // Predicated region
    $region2: #{forward.1} parent=1 // pred_check
      _
    $region3: #{forward.1} parent=1 // pred_check_branch
      %83 = sbr.rel (0) target = $region5
    $region4: #{forward.1} parent=1 // pred_region
      _
    $region5: #{forward.1} parent=1 // pred_fallthru
      _
    // Predicated region
    $region6: #{forward.1} parent=1 // pred_check
      _
    $region7: #{forward.1} parent=1 // pred_check_branch
      %85 = sbr.rel (0) target = $region9
    $region8: #{forward.1} parent=1 // pred_region
      _
    $region9: #{forward.1} parent=1 // pred_fallthru
      _
    // Predicated region
    $region10: #{forward.1} parent=1 // pred_check
      _
    $region11: #{forward.1} parent=1 // pred_check_branch
      %87 = sbr.rel (0) target = $region13
    $region12: #{forward.1} parent=1 // pred_region
      _
    $region13: #{forward.1} parent=1 // pred_fallthru
      _
    // Predicated region
    $region14: #{forward.1} parent=1 // pred_check
      _
    $region15: #{forward.1} parent=1 // pred_check_branch
      %89 = sbr.rel (0) target = $region17
    $region16: #{forward.1} parent=1 // pred_region
      _
    $region17: #{forward.1} parent=1 // pred_fallthru
      _
    // Predicated region
    $region18: #{forward.1} parent=1 // pred_check
      _
    $region19: #{forward.1} parent=1 // pred_check_branch
      %91 = sbr.rel (0) target = $region21
    $region20: #{forward.1} parent=1 // pred_region
      _
    $region21: #{forward.1} parent=1 // pred_fallthru
      _
    // Predicated region
    $region22: #{forward.1} parent=1 // pred_check
      _
    $region23: #{forward.1} parent=1 // pred_check_branch
      %93 = sbr.rel (0) target = $region25
    $region24: #{forward.1} parent=1 // pred_region
      %s95 = ssub.s32 16, 16
      %96 = vsyncadd [#allocation3], %s95
      %s98 = sshll.u32 [#allocation2], 4
      %s99 = int_to_ptr.vmem [resolvable:$true] %s98
      %101 = dma.hbm_to_vmem [thread:$0]  %s11, 16, %s99, [#allocation3]
    $region25: #{forward.1} parent=1 // pred_fallthru
      _
    // Predicated region
    $region26: #{forward.1} parent=1 // pred_check
      _
    $region27: #{forward.1} parent=1 // pred_check_branch
      %103 = sbr.rel (0) target = $region29
    $region28: #{forward.1} parent=1 // pred_region
      _
    $region29: #{forward.1} parent=1 // pred_fallthru
      _
    // Predicated region
    $region30: #{forward.1} parent=1 // pred_check
      _
    $region31: #{forward.1} parent=1 // pred_check_branch
      %105 = sbr.rel (0) target = $region33
    $region32: #{forward.1} parent=1 // pred_region
      _
    $region33: #{forward.1} parent=1 // pred_fallthru
      _
    // Predicated region
    $region34: #{forward.1} parent=1 // pred_check
      _
    $region35: #{forward.1} parent=1 // pred_check_branch
      %107 = sbr.rel (0) target = $region37
    $region36: #{forward.1} parent=1 // pred_region
      %s109 = ssub.s32 16, 16
      %110 = vsyncadd [#allocation6], %s109
      %s112 = sshll.u32 [#allocation5], 4
      %s113 = int_to_ptr.vmem [resolvable:$true] %s112
      %115 = dma.hbm_to_vmem [thread:$0]  %s17, 16, %s113, [#allocation6]
    $region37: #{forward.1} parent=1 // pred_fallthru
      _
    // Predicated region
    $region38: #{forward.1} parent=1 // pred_check
      _
    $region39: #{forward.1} parent=1 // pred_check_branch
      %117 = sbr.rel (0) target = $region41
    $region40: #{forward.1} parent=1 // pred_region
      _
    $region41: #{forward.1} parent=1 // pred_fallthru
      _
    // Predicated region
    $region42: #{forward.1} parent=1 // pred_check
      _
    $region43: #{forward.1} parent=1 // pred_check_branch
      %119 = sbr.rel (0) target = $region45
    $region44: #{forward.1} parent=1 // pred_region
      %s121 = ssub.s32 16, 16
      %122 = vsyncadd [#allocation6], %s121
      %s124 = sshll.u32 [#allocation7], 4
      %s125 = int_to_ptr.vmem [resolvable:$true] %s124
      %127 = dma.hbm_to_vmem [thread:$0]  %s21, 16, %s125, [#allocation6]
    $region45: #{forward.1} parent=1 // pred_fallthru
      _
    // Predicated region
    $region46: #{forward.1} parent=1 // pred_check
      _
    $region47: #{forward.1} parent=1 // pred_check_branch
      %129 = sbr.rel (0) target = $region49
    $region48: #{forward.1} parent=1 // pred_region
      %s131 = ssub.s32 32, 32
      %132 = vsyncadd [#allocation9], %s131
      %s134 = sshll.u32 [#allocation8], 4
      %s135 = int_to_ptr.vmem [resolvable:$true] %s134
      %137 = dma.hbm_to_vmem [thread:$0]  %s23, 32, %s135, [#allocation9]
    $region49: #{forward.1} parent=1 // pred_fallthru
      _
    // Predicated region
    $region50: #{forward.1} parent=1 // pred_check
      _
    $region51: #{forward.1} parent=1 // pred_check_branch
      %139 = sbr.rel (0) target = $region53
    $region52: #{forward.1} parent=1 // pred_region
      _
    $region53: #{forward.1} parent=1 // pred_fallthru
      _
    // Predicated region
    $region54: #{forward.1} parent=1 // pred_check
      _
    $region55: #{forward.1} parent=1 // pred_check_branch
      %141 = sbr.rel (0) target = $region57
    $region56: #{forward.1} parent=1 // pred_region
      _
    $region57: #{forward.1} parent=1 // pred_fallthru
      _
    // Predicated region
    $region58: #{forward.1} parent=1 // pred_check
      _
    $region59: #{forward.1} parent=1 // pred_check_branch
      %143 = sbr.rel (0) target = $region61
    $region60: #{forward.1} parent=1 // pred_region
      _
    $region61: #{forward.1} parent=1 // pred_fallthru
      _
    // Predicated region
    $region62: #{forward.1} parent=1 // pred_check
      _
    $region63: #{forward.1} parent=1 // pred_check_branch
      %145 = sbr.rel (0) target = $region65
    $region64: #{forward.1} parent=1 // pred_region
      _
    $region65: #{forward.1} parent=1 // pred_fallthru
      _
    // Predicated region
    $region66: #{forward.1} parent=1 // pred_check
      _
    $region67: #{forward.1} parent=1 // pred_check_branch
      %147 = sbr.rel (0) target = $region69
    $region68: #{forward.1} parent=1 // pred_region
      _
    $region69: #{forward.1} parent=1 // pred_fallthru
      _
    // Predicated region
    $region70: #{forward.1} parent=1 // pred_check
      _
    $region71: #{forward.1} parent=1 // pred_check_branch
      %149 = sbr.rel (0) target = $region73
    $region72: #{forward.1} parent=1 // pred_region
      _
    $region73: #{forward.1} parent=1 // pred_fallthru
      _
    // Predicated region
    $region74: #{forward.1} parent=1 // pred_check
      _
    $region75: #{forward.1} parent=1 // pred_check_branch
      %151 = sbr.rel (0) target = $region77
    $region76: #{forward.1} parent=1 // pred_region
      _
    $region77: #{forward.1} parent=1 // pred_fallthru
      _
    // Predicated region
    $region78: #{forward.1} parent=1 // pred_check
      _
    $region79: #{forward.1} parent=1 // pred_check_branch
      %153 = sbr.rel (0) target = $region81
    $region80: #{forward.1} parent=1 // pred_region
      _
    $region81: #{forward.1} parent=1 // pred_fallthru
      _
    // Predicated region
    $region82: #{forward.1} parent=1 // pred_check
      _
    $region83: #{forward.1} parent=1 // pred_check_branch
      %155 = sbr.rel (0) target = $region85
    $region84: #{forward.1} parent=1 // pred_region
      _
    $region85: #{forward.1} parent=1 // pred_fallthru
      _
    // Predicated region
    $region86: #{forward.1} parent=1 // pred_check
      _
    $region87: #{forward.1} parent=1 // pred_check_branch
      %157 = sbr.rel (0) target = $region89
    $region88: #{forward.1} parent=1 // pred_region
      _
    $region89: #{forward.1} parent=1 // pred_fallthru
      _
    // Predicated region
    $region90: #{forward.1} parent=1 // pred_check
      _
    $region91: #{forward.1} parent=1 // pred_check_branch
      %159 = sbr.rel (0) target = $region93
    $region92: #{forward.1} parent=1 // pred_region
      _
    $region93: #{forward.1} parent=1 // pred_fallthru
      _
    // Predicated region
    $region94: #{forward.1} parent=1 // pred_check
      _
    $region95: #{forward.1} parent=1 // pred_check_branch
      %161 = sbr.rel (0) target = $region97
    $region96: #{forward.1} parent=1 // pred_region
      _
    $region97: #{forward.1} parent=1 // pred_fallthru
      _
    // Predicated region
    $region98: #{forward.1} parent=1 // pred_check
      _
    $region99: #{forward.1} parent=1 // pred_check_branch
      %163 = sbr.rel (0) target = $region101
    $region100: #{forward.1} parent=1 // pred_region
      _
    $region101: #{forward.1} parent=1 // pred_fallthru
      _
    // Predicated region
    $region102: #{forward.1} parent=1 // pred_check
      _
    $region103: #{forward.1} parent=1 // pred_check_branch
      %165 = sbr.rel (0) target = $region105
    $region104: #{forward.1} parent=1 // pred_region
      %s167 = ssub.s32 16, 16
      %168 = vsyncadd [#allocation9], %s167
      %s170 = sshll.u32 [#allocation10], 4
      %s171 = int_to_ptr.vmem [resolvable:$true] %s170
      %173 = dma.hbm_to_vmem [thread:$0]  %s51, 16, %s171, [#allocation9]
    $region105: #{forward.1} parent=1 // pred_fallthru
      _
    // Predicated region
    $region106: #{forward.1} parent=1 // pred_check
      _
    $region107: #{forward.1} parent=1 // pred_check_branch
      %175 = sbr.rel (0) target = $region109
    $region108: #{forward.1} parent=1 // pred_region
      _
    $region109: #{forward.1} parent=1 // pred_fallthru
      _
    // Predicated region
    $region110: #{forward.1} parent=1 // pred_check
      _
    $region111: #{forward.1} parent=1 // pred_check_branch
      %177 = sbr.rel (0) target = $region113
    $region112: #{forward.1} parent=1 // pred_region
      %s179 = ssub.s32 1024, 1024
      %180 = vsyncadd [#allocation12], %s179
      %s181 = sshll.u32 [#allocation11], 4
      %s182 = int_to_ptr.vmem [resolvable:$true] %s181
      %187 = dma.hbm_to_vmem [thread:$0]  %s55, 1024, %s182, [#allocation12], 128, 128, 8
    $region113: #{forward.1} parent=1 // pred_fallthru
      _
    // Predicated region
    $region114: #{forward.1} parent=1 // pred_check
      _
    $region115: #{forward.1} parent=1 // pred_check_branch
      %189 = sbr.rel (0) target = $region117
    $region116: #{forward.1} parent=1 // pred_region
      %s191 = ssub.s32 1024, 1024
      %192 = vsyncadd [#allocation12], %s191
      %s193 = sshll.u32 [#allocation13], 4
      %s194 = int_to_ptr.vmem [resolvable:$true] %s193
      %199 = dma.hbm_to_vmem [thread:$0]  %s57, 1024, %s194, [#allocation12], 128, 128, 8
    $region117: #{forward.1} parent=1 // pred_fallthru
      _
    // Predicated region
    $region118: #{forward.1} parent=1 // pred_check
      _
    $region119: #{forward.1} parent=1 // pred_check_branch
      %201 = sbr.rel (0) target = $region121
    $region120: #{forward.1} parent=1 // pred_region
      %s203 = ssub.s32 16, 16
      %204 = vsyncadd [#allocation15], %s203
      %s206 = sshll.u32 [#allocation14], 4
      %s207 = int_to_ptr.vmem [resolvable:$true] %s206
      %209 = dma.hbm_to_vmem [thread:$0]  %s59, 16, %s207, [#allocation15]
    $region121: #{forward.1} parent=1 // pred_fallthru
      _
    // Predicated region
    $region122: #{forward.1} parent=1 // pred_check
      _
    $region123: #{forward.1} parent=1 // pred_check_branch
      %211 = sbr.rel (0) target = $region125
    $region124: #{forward.1} parent=1 // pred_region
      %s213 = ssub.s32 1024, 1024
      %214 = vsyncadd [#allocation15], %s213
      %s215 = sshll.u32 [#allocation16], 4
      %s216 = int_to_ptr.vmem [resolvable:$true] %s215
      %221 = dma.hbm_to_vmem [thread:$0]  %s61, 1024, %s216, [#allocation15], 128, 128, 8
    $region125: #{forward.1} parent=1 // pred_fallthru
      _
    // Predicated region
    $region126: #{forward.1} parent=1 // pred_check
      _
    $region127: #{forward.1} parent=1 // pred_check_branch
      %223 = sbr.rel (0) target = $region129
    $region128: #{forward.1} parent=1 // pred_region
      %s225 = ssub.s32 1024, 1024
      %226 = vsyncadd [#allocation18], %s225
      %s227 = sshll.u32 [#allocation17], 4
      %s228 = int_to_ptr.vmem [resolvable:$true] %s227
      %233 = dma.hbm_to_vmem [thread:$0]  %s63, 1024, %s228, [#allocation18], 128, 128, 8
    $region129: #{forward.1} parent=1 // pred_fallthru
      _
    // Predicated region
    $region130: #{forward.1} parent=1 // pred_check
      _
    $region131: #{forward.1} parent=1 // pred_check_branch
      %235 = sbr.rel (0) target = $region133
    $region132: #{forward.1} parent=1 // pred_region
      %s237 = ssub.s32 16, 16
      %238 = vsyncadd [#allocation18], %s237
      %s240 = sshll.u32 [#allocation19], 4
      %s241 = int_to_ptr.vmem [resolvable:$true] %s240
      %243 = dma.hbm_to_vmem [thread:$0]  %s65, 16, %s241, [#allocation18]
    $region133: #{forward.1} parent=1 // pred_fallthru
      _
    // Predicated region
    $region134: #{forward.1} parent=1 // pred_check
      _
    $region135: #{forward.1} parent=1 // pred_check_branch
      %245 = sbr.rel (0) target = $region137
    $region136: #{forward.1} parent=1 // pred_region
      %246 = dma.done [#allocation3], 16
    $region137: #{forward.1} parent=1 // pred_fallthru
      _
    // Predicated region
    $region138: #{forward.1} parent=1 // pred_check
      _
    $region139: #{forward.1} parent=1 // pred_check_branch
      %248 = sbr.rel (0) target = $region141
    $region140: #{forward.1} parent=1 // pred_region
      %249 = dma.done [#allocation6], 16
    $region141: #{forward.1} parent=1 // pred_fallthru
      _
    // Predicated region
    $region142: #{forward.1} parent=1 // pred_check
      _
    $region143: #{forward.1} parent=1 // pred_check_branch
      %251 = sbr.rel (0) target = $region145
    $region144: #{forward.1} parent=1 // pred_region
      %252 = dma.done [#allocation6], 16
    $region145: #{forward.1} parent=1 // pred_fallthru
      _
    // Predicated region
    $region146: #{forward.1} parent=1 // pred_check
      _
    $region147: #{forward.1} parent=1 // pred_check_branch
      %254 = sbr.rel (0) target = $region149
    $region148: #{forward.1} parent=1 // pred_region
      %255 = dma.done [#allocation9], 32
    $region149: #{forward.1} parent=1 // pred_fallthru
      _
    // Predicated region
    $region150: #{forward.1} parent=1 // pred_check
      _
    $region151: #{forward.1} parent=1 // pred_check_branch
      %257 = sbr.rel (0) target = $region153
    $region152: #{forward.1} parent=1 // pred_region
      %258 = dma.done [#allocation9], 16
    $region153: #{forward.1} parent=1 // pred_fallthru
      _
    // Predicated region
    $region154: #{forward.1} parent=1 // pred_check
      _
    $region155: #{forward.1} parent=1 // pred_check_branch
      %260 = sbr.rel (0) target = $region157
    $region156: #{forward.1} parent=1 // pred_region
      %261 = dma.done [#allocation12], 1024
    $region157: #{forward.1} parent=1 // pred_fallthru
      _
    // Predicated region
    $region158: #{forward.1} parent=1 // pred_check
      _
    $region159: #{forward.1} parent=1 // pred_check_branch
      %263 = sbr.rel (0) target = $region161
    $region160: #{forward.1} parent=1 // pred_region
      %264 = dma.done [#allocation12], 1024
    $region161: #{forward.1} parent=1 // pred_fallthru
      _
    // Predicated region
    $region162: #{forward.1} parent=1 // pred_check
      _
    $region163: #{forward.1} parent=1 // pred_check_branch
      %266 = sbr.rel (0) target = $region165
    $region164: #{forward.1} parent=1 // pred_region
      %267 = dma.done [#allocation15], 16
    $region165: #{forward.1} parent=1 // pred_fallthru
      _
    // Predicated region
    $region166: #{forward.1} parent=1 // pred_check
      _
    $region167: #{forward.1} parent=1 // pred_check_branch
      %269 = sbr.rel (0) target = $region169
    $region168: #{forward.1} parent=1 // pred_region
      %270 = dma.done [#allocation15], 1024
    $region169: #{forward.1} parent=1 // pred_fallthru
      _
    // Predicated region
    $region170: #{forward.1} parent=1 // pred_check
      _
    $region171: #{forward.1} parent=1 // pred_check_branch
      %272 = sbr.rel (0) target = $region173
    $region172: #{forward.1} parent=1 // pred_region
      %273 = dma.done [#allocation18], 1024
    $region173: #{forward.1} parent=1 // pred_fallthru
      _
    // Predicated region
    $region174: #{forward.1} parent=1 // pred_check
      _
    $region175: #{forward.1} parent=1 // pred_check_branch
      %275 = sbr.rel (0) target = $region177
    $region176: #{forward.1} parent=1 // pred_region
      %276 = dma.done [#allocation18], 16
    $region177: #{forward.1} parent=1 // pred_fallthru
      _
    %v277 = vld [vmem:[%s1] sm:$0xff]
    %v278 = vld [vmem:[%s1 + $0x8] sm:$0xff]
    %v279 = vld [vmem:[%s5] sm:$0xff]
    %v280 = vld [vmem:[%s5 + $0x8] sm:$0xff]
    %v281 = vld [vmem:[%s5 + $0x10] sm:$0xff]
    %v282 = vld [vmem:[%s5 + $0x18] sm:$0xff]
    %v283 = vld [vmem:[%s5 + $0x20] sm:$0xff]
    %v284 = vld [vmem:[%s5 + $0x28] sm:$0xff]
    %v285 = vld [vmem:[%s5 + $0x30] sm:$0xff]
    %v286 = vld [vmem:[%s5 + $0x38] sm:$0xff]
    %v287 = vld [vmem:[%s5 + $0x40] sm:$0xff]
    %v288 = vld [vmem:[%s5 + $0x48] sm:$0xff]
    %v289 = vld [vmem:[%s5 + $0x50] sm:$0xff]
    %v290 = vld [vmem:[%s5 + $0x58] sm:$0xff]
    %v291 = vld [vmem:[%s5 + $0x60] sm:$0xff]
    %v292 = vld [vmem:[%s5 + $0x68] sm:$0xff]
    %v293 = vld [vmem:[%s5 + $0x70] sm:$0xff]
    %v294 = vld [vmem:[%s5 + $0x78] sm:$0xff]
    %v295 = vld [vmem:[%s7] sm:$0x3]
    %v297 = vlaneseq
    %v298 = vshrl.u32 %v297, 7
    %v299 = vsub.s32 0, %v298
    %v300 = vrot.slane %v295, %v299
    %v301 = vlaneseq
    %v302 = vshrl.u32 %v301, 7
    %v303 = vsub.s32 1, %v302
    %v304 = vrot.slane %v295, %v303
    %vm307 = vcmask 523264
    %v309 = vsel %vm307, %v277, 0
    %v312 = vsel %vm307, %v278, 0
    %314 = vmatprep.subr.mxu0 %v280
    %315 = vmatpush1.msra.mxu0 %v279
    %316 = vmatprep.subr.mxu0 %v282
    %317 = vmatpush1.msra.mxu0 %v281
    %318 = vmatprep.subr.mxu0 %v284
    %319 = vmatpush1.msra.mxu0 %v283
    %320 = vmatprep.subr.mxu0 %v286
    %321 = vmatpush1.msra.mxu0 %v285
    %322 = vmatprep.subr.mxu0 %v288
    %323 = vmatpush1.msra.mxu0 %v287
    %324 = vmatprep.subr.mxu0 %v290
    %325 = vmatpush1.msra.mxu0 %v289
    %326 = vmatprep.subr.mxu0 %v292
    %327 = vmatpush1.msra.mxu0 %v291
    %328 = vmatprep.subr.mxu0 %v294
    %329 = vmatpush1.msra.mxu0 %v293
    %330 = vmatprep.subr.mxu0 0.0
    %331 = vmatpush1.msra.mxu0 0.0
    %332 = vmatprep.subr.mxu0 0.0
    %333 = vmatpush1.msra.mxu0 0.0
    %334 = vmatprep.subr.mxu0 0.0
    %335 = vmatpush1.msra.mxu0 0.0
    %336 = vmatprep.subr.mxu0 0.0
    %337 = vmatpush1.msra.mxu0 0.0
    %338 = vmatprep.subr.mxu0 0.0
    %339 = vmatpush1.msra.mxu0 0.0
    %340 = vmatprep.subr.mxu0 0.0
    %341 = vmatpush1.msra.mxu0 0.0
    %342 = vmatprep.subr.mxu0 0.0
    %343 = vmatpush1.msra.mxu0 0.0
    %344 = vmatprep.subr.mxu0 0.0
    %345 = vmatpush1.msra.mxu0 0.0
    %346 = vmatprep.subr.mxu0 0.0
    %347 = vmatpush1.msra.mxu0 0.0
    %348 = vmatprep.subr.mxu0 0.0
    %349 = vmatpush1.msra.mxu0 0.0
    %350 = vmatprep.subr.mxu0 0.0
    %351 = vmatpush1.msra.mxu0 0.0
    %352 = vmatprep.subr.mxu0 0.0
    %353 = vmatpush1.msra.mxu0 0.0
    %354 = vmatprep.subr.mxu0 0.0
    %355 = vmatpush1.msra.mxu0 0.0
    %356 = vmatprep.subr.mxu0 0.0
    %357 = vmatpush1.msra.mxu0 0.0
    %358 = vmatprep.subr.mxu0 0.0
    %359 = vmatpush1.msra.mxu0 0.0
    %360 = vmatprep.subr.mxu0 0.0
    %361 = vmatpush1.msra.mxu0 0.0
    %362 = vmatprep.subr.mxu0 0.0
    %363 = vmatpush1.msra.mxu0 0.0
    %364 = vmatprep.subr.mxu0 0.0
    %365 = vmatpush1.msra.mxu0 0.0
    %366 = vmatprep.subr.mxu0 0.0
    %367 = vmatpush1.msra.mxu0 0.0
    %368 = vmatprep.subr.mxu0 0.0
    %369 = vmatpush1.msra.mxu0 0.0
    %370 = vmatprep.subr.mxu0 0.0
    %371 = vmatpush1.msra.mxu0 0.0
    %372 = vmatprep.subr.mxu0 0.0
    %373 = vmatpush1.msra.mxu0 0.0
    %374 = vmatprep.subr.mxu0 0.0
    %375 = vmatpush1.msra.mxu0 0.0
    %376 = vmatprep.subr.mxu0 0.0
    %377 = vmatpush1.msra.mxu0 0.0
    %378 = vmatprep.mubr.f32.mxu0 0.0
    %379 = vmatmul.mubr.f32.gmra.mrb[0].mxu0 %v309
    %v380 = vpop.f32.mrb[0].mxu0
    %v381 = vadd.f32 %v300, %v380
    %v382 = vpop.f32.mrb[0].mxu0
    %v383 = vadd.f32 %v304, %v382
    %384 = vmatprep.mubr.f32.mxu0 0.0
    %385 = vmatmul.mubr.f32.gmra.mrb[0].mxu0 %v312
    %v386 = vpop.f32.mrb[0].mxu0
    %v387 = vadd.f32 %v300, %v386
    %v388 = vpop.f32.mrb[0].mxu0
    %v389 = vadd.f32 %v304, %v388
    %390 = vdwg.mxu0
    %393 = vrot.lane.b32.xlu0 %v381, 64
    %v394 = vpop.permute.xlu0 %393
    %395 = vrot.lane.b32.xlu0 %v387, 64
    %v396 = vpop.permute.xlu0 %395
    %v397 = vsel %vm307, %v381, 0
    %v399 = vsel %vm307, %v387, 0
    %v401 = vsel %vm307, %v394, 0
    %v403 = vsel %vm307, %v396, 0
    %405 = vmatprep.subr.mxu0 0.0
    %406 = vmatpush1.xpose.msra.mxu0 %v401
    %407 = vmatprep.subr.mxu0 0.0
    %408 = vmatpush1.xpose.msra.mxu0 %v403
    %409 = vmatprep.subr.mxu0 0.0
    %410 = vmatpush1.xpose.msra.mxu0 0.0
    %411 = vmatprep.subr.mxu0 0.0
    %412 = vmatpush1.xpose.msra.mxu0 0.0
    %413 = vmatprep.subr.mxu0 0.0
    %414 = vmatpush1.xpose.msra.mxu0 0.0
    %415 = vmatprep.subr.mxu0 0.0
    %416 = vmatpush1.xpose.msra.mxu0 0.0
    %417 = vmatprep.subr.mxu0 0.0
    %418 = vmatpush1.xpose.msra.mxu0 0.0
    %419 = vmatprep.subr.mxu0 0.0
    %420 = vmatpush1.xpose.msra.mxu0 0.0
    %421 = vmatprep.subr.mxu0 0.0
    %422 = vmatpush1.xpose.msra.mxu0 0.0
    %423 = vmatprep.subr.mxu0 0.0
    %424 = vmatpush1.xpose.msra.mxu0 0.0
    %425 = vmatprep.subr.mxu0 0.0
    %426 = vmatpush1.xpose.msra.mxu0 0.0
    %427 = vmatprep.subr.mxu0 0.0
    %428 = vmatpush1.xpose.msra.mxu0 0.0
    %429 = vmatprep.subr.mxu0 0.0
    %430 = vmatpush1.xpose.msra.mxu0 0.0
    %431 = vmatprep.subr.mxu0 0.0
    %432 = vmatpush1.xpose.msra.mxu0 0.0
    %433 = vmatprep.subr.mxu0 0.0
    %434 = vmatpush1.xpose.msra.mxu0 0.0
    %435 = vmatprep.subr.mxu0 0.0
    %436 = vmatpush1.xpose.msra.mxu0 0.0
    %437 = vmatprep.subr.mxu0 0.0
    %438 = vmatpush1.xpose.msra.mxu0 0.0
    %439 = vmatprep.subr.mxu0 0.0
    %440 = vmatpush1.xpose.msra.mxu0 0.0
    %441 = vmatprep.subr.mxu0 0.0
    %442 = vmatpush1.xpose.msra.mxu0 0.0
    %443 = vmatprep.subr.mxu0 0.0
    %444 = vmatpush1.xpose.msra.mxu0 0.0
    %445 = vmatprep.subr.mxu0 0.0
    %446 = vmatpush1.xpose.msra.mxu0 0.0
    %447 = vmatprep.subr.mxu0 0.0
    %448 = vmatpush1.xpose.msra.mxu0 0.0
    %449 = vmatprep.subr.mxu0 0.0
    %450 = vmatpush1.xpose.msra.mxu0 0.0
    %451 = vmatprep.subr.mxu0 0.0
    %452 = vmatpush1.xpose.msra.mxu0 0.0
    %453 = vmatprep.subr.mxu0 0.0
    %454 = vmatpush1.xpose.msra.mxu0 0.0
    %455 = vmatprep.subr.mxu0 0.0
    %456 = vmatpush1.xpose.msra.mxu0 0.0
    %457 = vmatprep.subr.mxu0 0.0
    %458 = vmatpush1.xpose.msra.mxu0 0.0
    %459 = vmatprep.subr.mxu0 0.0
    %460 = vmatpush1.xpose.msra.mxu0 0.0
    %461 = vmatprep.subr.mxu0 0.0
    %462 = vmatpush1.xpose.msra.mxu0 0.0
    %463 = vmatprep.subr.mxu0 0.0
    %464 = vmatpush1.xpose.msra.mxu0 0.0
    %465 = vmatprep.subr.mxu0 0.0
    %466 = vmatpush1.xpose.msra.mxu0 0.0
    %467 = vmatprep.subr.mxu0 0.0
    %468 = vmatpush1.xpose.msra.mxu0 0.0
    %469 = vmatprep.mubr.f32.mxu0 0.0
    %470 = vmatmul.mubr.f32.gmra.mrb[0].mxu0 %v397
    %v471 = vpop.f32.mrb[0].mxu0
    %v472 = vadd.f32 0.0, %v471
    %v473 = vpop.f32.mrb[0].mxu0
    %474 = vmatprep.mubr.f32.mxu0 0.0
    %475 = vmatmul.mubr.f32.gmra.mrb[0].mxu0 %v399
    %v476 = vpop.f32.mrb[0].mxu0
    %v477 = vadd.f32 0.0, %v476
    %v478 = vpop.f32.mrb[0].mxu0
    %479 = vdwg.mxu0
    %v480 = vmul.f32 %v472, 0.125
    %v481 = vmul.f32 %v477, 0.125
    %v482 = vld [vmem:[%s3] sm:$0xff]
    %v483 = vld [vmem:[%s3 + $0x8] sm:$0xff]
    %v484 = vadd.f32 %v480, %v482
    %v485 = vadd.f32 %v481, %v483
    %vm486 = vcmask 130048
    %v487 = vsel %vm486, %v484, -inf
    %488 = vmax.xlane.f32.xlu0 %v487
    %v489 = vpop.xlane.xlu0 %488
    %v490 = vsel %vm486, %v485, -inf
    %491 = vmax.xlane.f32.xlu0 %v490
    %v492 = vpop.xlane.xlu0 %491
    %v493 = vsub.f32 %v484, %v489
    %v494 = vsub.f32 %v485, %v492
    %v495 = vmul.f32 %v493, 1.442695
    %v496 = vpow.pop %v495
    %v497 = vmul.f32 %v494, 1.442695
    %v498 = vpow.pop %v497
    %v499 = vsel %vm486, %v496, 0.0
    %500 = vadd.xlane.f32.xlu0 %v499
    %v501 = vpop.xlane.xlu0 %500
    %v502 = vsel %vm486, %v498, 0.0
    %503 = vadd.xlane.f32.xlu0 %v502
    %v504 = vpop.xlane.xlu0 %503
    %v505 = vrcp.pop %v501
    %v506 = vmul.f32 %v496, %v505
    %v507 = vrcp.pop %v504
    %v508 = vmul.f32 %v498, %v507
    %v510 = vsel %vm486, %v506, 0
    %v513 = vsel %vm486, %v508, 0
    %515 = vmatprep.subr.mxu0 0.0
    %516 = vmatpush1.msra.mxu0 %v383
    %517 = vmatprep.subr.mxu0 0.0
    %518 = vmatpush1.msra.mxu0 %v389
    %519 = vmatprep.subr.mxu0 0.0
    %520 = vmatpush1.msra.mxu0 0.0
    %521 = vmatprep.subr.mxu0 0.0
    %522 = vmatpush1.msra.mxu0 0.0
    %523 = vmatprep.subr.mxu0 0.0
    %524 = vmatpush1.msra.mxu0 0.0
    %525 = vmatprep.subr.mxu0 0.0
    %526 = vmatpush1.msra.mxu0 0.0
    %527 = vmatprep.subr.mxu0 0.0
    %528 = vmatpush1.msra.mxu0 0.0
    %529 = vmatprep.subr.mxu0 0.0
    %530 = vmatpush1.msra.mxu0 0.0
    %531 = vmatprep.subr.mxu0 0.0
    %532 = vmatpush1.msra.mxu0 0.0
    %533 = vmatprep.subr.mxu0 0.0
    %534 = vmatpush1.msra.mxu0 0.0
    %535 = vmatprep.subr.mxu0 0.0
    %536 = vmatpush1.msra.mxu0 0.0
    %537 = vmatprep.subr.mxu0 0.0
    %538 = vmatpush1.msra.mxu0 0.0
    %539 = vmatprep.subr.mxu0 0.0
    %540 = vmatpush1.msra.mxu0 0.0
    %541 = vmatprep.subr.mxu0 0.0
    %542 = vmatpush1.msra.mxu0 0.0
    %543 = vmatprep.subr.mxu0 0.0
    %544 = vmatpush1.msra.mxu0 0.0
    %545 = vmatprep.subr.mxu0 0.0
    %546 = vmatpush1.msra.mxu0 0.0
    %547 = vmatprep.subr.mxu0 0.0
    %548 = vmatpush1.msra.mxu0 0.0
    %549 = vmatprep.subr.mxu0 0.0
    %550 = vmatpush1.msra.mxu0 0.0
    %551 = vmatprep.subr.mxu0 0.0
    %552 = vmatpush1.msra.mxu0 0.0
    %553 = vmatprep.subr.mxu0 0.0
    %554 = vmatpush1.msra.mxu0 0.0
    %555 = vmatprep.subr.mxu0 0.0
    %556 = vmatpush1.msra.mxu0 0.0
    %557 = vmatprep.subr.mxu0 0.0
    %558 = vmatpush1.msra.mxu0 0.0
    %559 = vmatprep.subr.mxu0 0.0
    %560 = vmatpush1.msra.mxu0 0.0
    %561 = vmatprep.subr.mxu0 0.0
    %562 = vmatpush1.msra.mxu0 0.0
    %563 = vmatprep.subr.mxu0 0.0
    %564 = vmatpush1.msra.mxu0 0.0
    %565 = vmatprep.subr.mxu0 0.0
    %566 = vmatpush1.msra.mxu0 0.0
    %567 = vmatprep.subr.mxu0 0.0
    %568 = vmatpush1.msra.mxu0 0.0
    %569 = vmatprep.subr.mxu0 0.0
    %570 = vmatpush1.msra.mxu0 0.0
    %571 = vmatprep.subr.mxu0 0.0
    %572 = vmatpush1.msra.mxu0 0.0
    %573 = vmatprep.subr.mxu0 0.0
    %574 = vmatpush1.msra.mxu0 0.0
    %575 = vmatprep.subr.mxu0 0.0
    %576 = vmatpush1.msra.mxu0 0.0
    %577 = vmatprep.subr.mxu0 0.0
    %578 = vmatpush1.msra.mxu0 0.0
    %579 = vmatprep.mubr.f32.mxu0 0.0
    %580 = vmatmul.mubr.f32.gmra.mrb[0].mxu0 %v510
    %v581 = vpop.f32.mrb[0].mxu0
    %v582 = vadd.f32 0.0, %v581
    %v583 = vpop.f32.mrb[0].mxu0
    %584 = vmatprep.mubr.f32.mxu0 0.0
    %585 = vmatmul.mubr.f32.gmra.mrb[0].mxu0 %v513
    %v586 = vpop.f32.mrb[0].mxu0
    %v587 = vadd.f32 0.0, %v586
    %v588 = vpop.f32.mrb[0].mxu0
    %589 = vdwg.mxu0
    %v590 = vld [vmem:[%s9] sm:$0xff]
    %v591 = vld [vmem:[%s9 + $0x8] sm:$0xff]
    %v592 = vld [vmem:[%s9 + $0x10] sm:$0xff]
    %v593 = vld [vmem:[%s9 + $0x18] sm:$0xff]
    %v594 = vld [vmem:[%s9 + $0x20] sm:$0xff]
    %v595 = vld [vmem:[%s9 + $0x28] sm:$0xff]
    %v596 = vld [vmem:[%s9 + $0x30] sm:$0xff]
    %v597 = vld [vmem:[%s9 + $0x38] sm:$0xff]
    %v598 = vld [vmem:[#allocation2] sm:$0x1]
    %v600 = vlaneseq
    %v601 = vshrl.u32 %v600, 7
    %v602 = vsub.s32 0, %v601
    %v603 = vrot.slane %v598, %v602
    %v606 = vsel %vm307, %v582, 0
    %v609 = vsel %vm307, %v587, 0
    %611 = vmatprep.subr.mxu0 0.0
    %612 = vmatpush1.msra.mxu0 %v590
    %613 = vmatprep.subr.mxu0 0.0
    %614 = vmatpush1.msra.mxu0 %v591
    %615 = vmatprep.subr.mxu0 0.0
    %616 = vmatpush1.msra.mxu0 %v592
    %617 = vmatprep.subr.mxu0 0.0
    %618 = vmatpush1.msra.mxu0 %v593
    %619 = vmatprep.subr.mxu0 0.0
    %620 = vmatpush1.msra.mxu0 %v594
    %621 = vmatprep.subr.mxu0 0.0
    %622 = vmatpush1.msra.mxu0 %v595
    %623 = vmatprep.subr.mxu0 0.0
    %624 = vmatpush1.msra.mxu0 %v596
    %625 = vmatprep.subr.mxu0 0.0
    %626 = vmatpush1.msra.mxu0 %v597
    %627 = vmatprep.subr.mxu0 0.0
    %628 = vmatpush1.msra.mxu0 0.0
    %629 = vmatprep.subr.mxu0 0.0
    %630 = vmatpush1.msra.mxu0 0.0
    %631 = vmatprep.subr.mxu0 0.0
    %632 = vmatpush1.msra.mxu0 0.0
    %633 = vmatprep.subr.mxu0 0.0
    %634 = vmatpush1.msra.mxu0 0.0
    %635 = vmatprep.subr.mxu0 0.0
    %636 = vmatpush1.msra.mxu0 0.0
    %637 = vmatprep.subr.mxu0 0.0
    %638 = vmatpush1.msra.mxu0 0.0
    %639 = vmatprep.subr.mxu0 0.0
    %640 = vmatpush1.msra.mxu0 0.0
    %641 = vmatprep.subr.mxu0 0.0
    %642 = vmatpush1.msra.mxu0 0.0
    %643 = vmatprep.subr.mxu0 0.0
    %644 = vmatpush1.msra.mxu0 0.0
    %645 = vmatprep.subr.mxu0 0.0
    %646 = vmatpush1.msra.mxu0 0.0
    %647 = vmatprep.subr.mxu0 0.0
    %648 = vmatpush1.msra.mxu0 0.0
    %649 = vmatprep.subr.mxu0 0.0
    %650 = vmatpush1.msra.mxu0 0.0
    %651 = vmatprep.subr.mxu0 0.0
    %652 = vmatpush1.msra.mxu0 0.0
    %653 = vmatprep.subr.mxu0 0.0
    %654 = vmatpush1.msra.mxu0 0.0
    %655 = vmatprep.subr.mxu0 0.0
    %656 = vmatpush1.msra.mxu0 0.0
    %657 = vmatprep.subr.mxu0 0.0
    %658 = vmatpush1.msra.mxu0 0.0
    %659 = vmatprep.subr.mxu0 0.0
    %660 = vmatpush1.msra.mxu0 0.0
    %661 = vmatprep.subr.mxu0 0.0
    %662 = vmatpush1.msra.mxu0 0.0
    %663 = vmatprep.subr.mxu0 0.0
    %664 = vmatpush1.msra.mxu0 0.0
    %665 = vmatprep.subr.mxu0 0.0
    %666 = vmatpush1.msra.mxu0 0.0
    %667 = vmatprep.subr.mxu0 0.0
    %668 = vmatpush1.msra.mxu0 0.0
    %669 = vmatprep.subr.mxu0 0.0
    %670 = vmatpush1.msra.mxu0 0.0
    %671 = vmatprep.subr.mxu0 0.0
    %672 = vmatpush1.msra.mxu0 0.0
    %673 = vmatprep.subr.mxu0 0.0
    %674 = vmatpush1.msra.mxu0 0.0
    %675 = vmatprep.mubr.f32.mxu0 0.0
    %676 = vmatmul.mubr.f32.gmra.mrb[0].mxu0 %v606
    %v677 = vpop.f32.mrb[0].mxu0
    %v678 = vadd.f32 %v603, %v677
    %v679 = vpop.f32.mrb[0].mxu0
    %680 = vmatprep.mubr.f32.mxu0 0.0
    %681 = vmatmul.mubr.f32.gmra.mrb[0].mxu0 %v609
    %v682 = vpop.f32.mrb[0].mxu0
    %v683 = vadd.f32 %v603, %v682
    %v684 = vpop.f32.mrb[0].mxu0
    %685 = vdwg.mxu0
    %v686 = vld [vmem:[%s13] sm:$0x3]
    %v687 = vadd.f32 %v277, %v678
    %v688 = vadd.f32 %v278, %v683
    %v689 = vsel %vm307, %v687, 0.0
    %690 = vadd.xlane.f32.xlu0 %v689
    %v691 = vpop.xlane.xlu0 %690
    %v692 = vsel %vm307, %v688, 0.0
    %693 = vadd.xlane.f32.xlu0 %v692
    %v694 = vpop.xlane.xlu0 %693
    %v695 = vrcp.pop 64.0
    %v696 = vmul.f32 %v691, %v695
    %v697 = vmul.f32 %v694, %v695
    %v698 = vsub.f32 %v687, %v696
    %v699 = vsub.f32 %v688, %v697
    %v700 = vmul.f32 %v698, %v698
    %v701 = vmul.f32 %v699, %v699
    %v702 = vsel %vm307, %v700, 0.0
    %703 = vadd.xlane.f32.xlu0 %v702
    %v704 = vpop.xlane.xlu0 %703
    %v705 = vsel %vm307, %v701, 0.0
    %706 = vadd.xlane.f32.xlu0 %v705
    %v707 = vpop.xlane.xlu0 %706
    %v708 = vmul.f32 %v704, %v695
    %v709 = vmul.f32 %v707, %v695
    %v710 = vadd.f32 %v708, 1e-12
    %v711 = vadd.f32 %v709, 1e-12
    %v712 = vrsqrt.pop %v710
    %v713 = vrsqrt.pop %v711
    %v714 = vmul.f32 %v698, %v712
    %v715 = vmul.f32 %v699, %v713
    %v716 = vlaneseq
    %v717 = vshrl.u32 %v716, 7
    %v718 = vsub.s32 0, %v717
    %v719 = vrot.slane %v686, %v718
    %v720 = vmul.f32 %v714, %v719
    %v721 = vmul.f32 %v715, %v719
    %v722 = vlaneseq
    %v723 = vshrl.u32 %v722, 7
    %v724 = vsub.s32 1, %v723
    %v725 = vrot.slane %v686, %v724
    %v726 = vadd.f32 %v720, %v725
    %v727 = vadd.f32 %v721, %v725
    %v728 = vld [vmem:[%s15] sm:$0xff]
    %v729 = vld [vmem:[%s15 + $0x8] sm:$0xff]
    %v730 = vld [vmem:[%s15 + $0x10] sm:$0xff]
    %v731 = vld [vmem:[%s15 + $0x18] sm:$0xff]
    %v732 = vld [vmem:[%s15 + $0x20] sm:$0xff]
    %v733 = vld [vmem:[%s15 + $0x28] sm:$0xff]
    %v734 = vld [vmem:[%s15 + $0x30] sm:$0xff]
    %v735 = vld [vmem:[%s15 + $0x38] sm:$0xff]
    %v736 = vld [vmem:[#allocation5] sm:$0x1]
    %v738 = vlaneseq
    %v739 = vshrl.u32 %v738, 7
    %v740 = vsub.s32 0, %v739
    %v741 = vrot.slane %v736, %v740
    %v744 = vsel %vm307, %v726, 0
    %v747 = vsel %vm307, %v727, 0
    %749 = vmatprep.subr.mxu0 0.0
    %750 = vmatpush1.msra.mxu0 %v728
    %751 = vmatprep.subr.mxu0 0.0
    %752 = vmatpush1.msra.mxu0 %v729
    %753 = vmatprep.subr.mxu0 0.0
    %754 = vmatpush1.msra.mxu0 %v730
    %755 = vmatprep.subr.mxu0 0.0
    %756 = vmatpush1.msra.mxu0 %v731
    %757 = vmatprep.subr.mxu0 0.0
    %758 = vmatpush1.msra.mxu0 %v732
    %759 = vmatprep.subr.mxu0 0.0
    %760 = vmatpush1.msra.mxu0 %v733
    %761 = vmatprep.subr.mxu0 0.0
    %762 = vmatpush1.msra.mxu0 %v734
    %763 = vmatprep.subr.mxu0 0.0
    %764 = vmatpush1.msra.mxu0 %v735
    %765 = vmatprep.subr.mxu0 0.0
    %766 = vmatpush1.msra.mxu0 0.0
    %767 = vmatprep.subr.mxu0 0.0
    %768 = vmatpush1.msra.mxu0 0.0
    %769 = vmatprep.subr.mxu0 0.0
    %770 = vmatpush1.msra.mxu0 0.0
    %771 = vmatprep.subr.mxu0 0.0
    %772 = vmatpush1.msra.mxu0 0.0
    %773 = vmatprep.subr.mxu0 0.0
    %774 = vmatpush1.msra.mxu0 0.0
    %775 = vmatprep.subr.mxu0 0.0
    %776 = vmatpush1.msra.mxu0 0.0
    %777 = vmatprep.subr.mxu0 0.0
    %778 = vmatpush1.msra.mxu0 0.0
    %779 = vmatprep.subr.mxu0 0.0
    %780 = vmatpush1.msra.mxu0 0.0
    %781 = vmatprep.subr.mxu0 0.0
    %782 = vmatpush1.msra.mxu0 0.0
    %783 = vmatprep.subr.mxu0 0.0
    %784 = vmatpush1.msra.mxu0 0.0
    %785 = vmatprep.subr.mxu0 0.0
    %786 = vmatpush1.msra.mxu0 0.0
    %787 = vmatprep.subr.mxu0 0.0
    %788 = vmatpush1.msra.mxu0 0.0
    %789 = vmatprep.subr.mxu0 0.0
    %790 = vmatpush1.msra.mxu0 0.0
    %791 = vmatprep.subr.mxu0 0.0
    %792 = vmatpush1.msra.mxu0 0.0
    %793 = vmatprep.subr.mxu0 0.0
    %794 = vmatpush1.msra.mxu0 0.0
    %795 = vmatprep.subr.mxu0 0.0
    %796 = vmatpush1.msra.mxu0 0.0
    %797 = vmatprep.subr.mxu0 0.0
    %798 = vmatpush1.msra.mxu0 0.0
    %799 = vmatprep.subr.mxu0 0.0
    %800 = vmatpush1.msra.mxu0 0.0
    %801 = vmatprep.subr.mxu0 0.0
    %802 = vmatpush1.msra.mxu0 0.0
    %803 = vmatprep.subr.mxu0 0.0
    %804 = vmatpush1.msra.mxu0 0.0
    %805 = vmatprep.subr.mxu0 0.0
    %806 = vmatpush1.msra.mxu0 0.0
    %807 = vmatprep.subr.mxu0 0.0
    %808 = vmatpush1.msra.mxu0 0.0
    %809 = vmatprep.subr.mxu0 0.0
    %810 = vmatpush1.msra.mxu0 0.0
    %811 = vmatprep.subr.mxu0 0.0
    %812 = vmatpush1.msra.mxu0 0.0
    %813 = vmatprep.mubr.f32.mxu0 0.0
    %814 = vmatmul.mubr.f32.gmra.mrb[0].mxu0 %v744
    %v815 = vpop.f32.mrb[0].mxu0
    %v816 = vadd.f32 %v741, %v815
    %v817 = vpop.f32.mrb[0].mxu0
    %818 = vmatprep.mubr.f32.mxu0 0.0
    %819 = vmatmul.mubr.f32.gmra.mrb[0].mxu0 %v747
    %v820 = vpop.f32.mrb[0].mxu0
    %v821 = vadd.f32 %v741, %v820
    %v822 = vpop.f32.mrb[0].mxu0
    %823 = vdwg.mxu0
    %v824 = vmul.f32 %v816, 0.5
    %v825 = vmul.f32 %v821, 0.5
    %v826 = vmul.f32 %v816, 0.044715
    %v827 = vmul.f32 %v821, 0.044715
    %v828 = vmul.f32 %v826, %v816
    %v829 = vmul.f32 %v827, %v821
    %v830 = vmul.f32 %v828, %v816
    %v831 = vmul.f32 %v829, %v821
    %v832 = vadd.f32 %v816, %v830
    %v833 = vadd.f32 %v821, %v831
    %v834 = vmul.f32 %v832, 0.7978846
    %v835 = vmul.f32 %v833, 0.7978846
    %v836 = vtanh.pop %v834
    %v837 = vtanh.pop %v835
    %v838 = vadd.f32 %v836, 1.0
    %v839 = vadd.f32 %v837, 1.0
    %v840 = vmul.f32 %v824, %v838
    %v841 = vmul.f32 %v825, %v839
    %v842 = vld [vmem:[%s19] sm:$0xff]
    %v843 = vld [vmem:[%s19 + $0x8] sm:$0xff]
    %v844 = vld [vmem:[%s19 + $0x10] sm:$0xff]
    %v845 = vld [vmem:[%s19 + $0x18] sm:$0xff]
    %v846 = vld [vmem:[%s19 + $0x20] sm:$0xff]
    %v847 = vld [vmem:[%s19 + $0x28] sm:$0xff]
    %v848 = vld [vmem:[%s19 + $0x30] sm:$0xff]
    %v849 = vld [vmem:[%s19 + $0x38] sm:$0xff]
    %v850 = vld [vmem:[%s19 + $0x40] sm:$0xff]
    %v851 = vld [vmem:[%s19 + $0x48] sm:$0xff]
    %v852 = vld [vmem:[%s19 + $0x50] sm:$0xff]
    %v853 = vld [vmem:[%s19 + $0x58] sm:$0xff]
    %v854 = vld [vmem:[%s19 + $0x60] sm:$0xff]
    %v855 = vld [vmem:[%s19 + $0x68] sm:$0xff]
    %v856 = vld [vmem:[%s19 + $0x70] sm:$0xff]
    %v857 = vld [vmem:[%s19 + $0x78] sm:$0xff]
    %v858 = vld [vmem:[#allocation7] sm:$0x1]
    %v860 = vlaneseq
    %v861 = vshrl.u32 %v860, 7
    %v862 = vsub.s32 0, %v861
    %v863 = vrot.slane %v858, %v862
    %865 = vmatprep.subr.mxu0 0.0
    %866 = vmatpush1.msra.mxu0 %v842
    %867 = vmatprep.subr.mxu0 0.0
    %868 = vmatpush1.msra.mxu0 %v843
    %869 = vmatprep.subr.mxu0 0.0
    %870 = vmatpush1.msra.mxu0 %v844
    %871 = vmatprep.subr.mxu0 0.0
    %872 = vmatpush1.msra.mxu0 %v845
    %873 = vmatprep.subr.mxu0 0.0
    %874 = vmatpush1.msra.mxu0 %v846
    %875 = vmatprep.subr.mxu0 0.0
    %876 = vmatpush1.msra.mxu0 %v847
    %877 = vmatprep.subr.mxu0 0.0
    %878 = vmatpush1.msra.mxu0 %v848
    %879 = vmatprep.subr.mxu0 0.0
    %880 = vmatpush1.msra.mxu0 %v849
    %881 = vmatprep.subr.mxu0 0.0
    %882 = vmatpush1.msra.mxu0 %v850
    %883 = vmatprep.subr.mxu0 0.0
    %884 = vmatpush1.msra.mxu0 %v851
    %885 = vmatprep.subr.mxu0 0.0
    %886 = vmatpush1.msra.mxu0 %v852
    %887 = vmatprep.subr.mxu0 0.0
    %888 = vmatpush1.msra.mxu0 %v853
    %889 = vmatprep.subr.mxu0 0.0
    %890 = vmatpush1.msra.mxu0 %v854
    %891 = vmatprep.subr.mxu0 0.0
    %892 = vmatpush1.msra.mxu0 %v855
    %893 = vmatprep.subr.mxu0 0.0
    %894 = vmatpush1.msra.mxu0 %v856
    %895 = vmatprep.subr.mxu0 0.0
    %896 = vmatpush1.msra.mxu0 %v857
    %897 = vmatprep.subr.mxu0 0.0
    %898 = vmatpush1.msra.mxu0 0.0
    %899 = vmatprep.subr.mxu0 0.0
    %900 = vmatpush1.msra.mxu0 0.0
    %901 = vmatprep.subr.mxu0 0.0
    %902 = vmatpush1.msra.mxu0 0.0
    %903 = vmatprep.subr.mxu0 0.0
    %904 = vmatpush1.msra.mxu0 0.0
    %905 = vmatprep.subr.mxu0 0.0
    %906 = vmatpush1.msra.mxu0 0.0
    %907 = vmatprep.subr.mxu0 0.0
    %908 = vmatpush1.msra.mxu0 0.0
    %909 = vmatprep.subr.mxu0 0.0
    %910 = vmatpush1.msra.mxu0 0.0
    %911 = vmatprep.subr.mxu0 0.0
    %912 = vmatpush1.msra.mxu0 0.0
    %913 = vmatprep.subr.mxu0 0.0
    %914 = vmatpush1.msra.mxu0 0.0
    %915 = vmatprep.subr.mxu0 0.0
    %916 = vmatpush1.msra.mxu0 0.0
    %917 = vmatprep.subr.mxu0 0.0
    %918 = vmatpush1.msra.mxu0 0.0
    %919 = vmatprep.subr.mxu0 0.0
    %920 = vmatpush1.msra.mxu0 0.0
    %921 = vmatprep.subr.mxu0 0.0
    %922 = vmatpush1.msra.mxu0 0.0
    %923 = vmatprep.subr.mxu0 0.0
    %924 = vmatpush1.msra.mxu0 0.0
    %925 = vmatprep.subr.mxu0 0.0
    %926 = vmatpush1.msra.mxu0 0.0
    %927 = vmatprep.subr.mxu0 0.0
    %928 = vmatpush1.msra.mxu0 0.0
    %929 = vmatprep.mubr.f32.mxu0 0.0
    %930 = vmatmul.mubr.f32.gmra.mrb[0].mxu0 %v840
    %v931 = vpop.f32.mrb[0].mxu0
    %v932 = vadd.f32 %v863, %v931
    %v933 = vpop.f32.mrb[0].mxu0
    %934 = vmatprep.mubr.f32.mxu0 0.0
    %935 = vmatmul.mubr.f32.gmra.mrb[0].mxu0 %v841
    %v936 = vpop.f32.mrb[0].mxu0
    %v937 = vadd.f32 %v863, %v936
    %v938 = vpop.f32.mrb[0].mxu0
    %939 = vdwg.mxu0
    %v940 = vld [vmem:[#allocation8] sm:$0x3]
    %v941 = vadd.f32 %v726, %v932
    %v942 = vadd.f32 %v727, %v937
    %v943 = vsel %vm307, %v941, 0.0
    %944 = vadd.xlane.f32.xlu0 %v943
    %v945 = vpop.xlane.xlu0 %944
    %v946 = vsel %vm307, %v942, 0.0
    %947 = vadd.xlane.f32.xlu0 %v946
    %v948 = vpop.xlane.xlu0 %947
    %v949 = vmul.f32 %v945, %v695
    %v950 = vmul.f32 %v948, %v695
    %v951 = vsub.f32 %v941, %v949
    %v952 = vsub.f32 %v942, %v950
    %v953 = vmul.f32 %v951, %v951
    %v954 = vmul.f32 %v952, %v952
    %v955 = vsel %vm307, %v953, 0.0
    %956 = vadd.xlane.f32.xlu0 %v955
    %v957 = vpop.xlane.xlu0 %956
    %v958 = vsel %vm307, %v954, 0.0
    %959 = vadd.xlane.f32.xlu0 %v958
    %v960 = vpop.xlane.xlu0 %959
    %v961 = vmul.f32 %v957, %v695
    %v962 = vmul.f32 %v960, %v695
    %v963 = vadd.f32 %v961, 1e-12
    %v964 = vadd.f32 %v962, 1e-12
    %v965 = vrsqrt.pop %v963
    %v966 = vrsqrt.pop %v964
    %v967 = vmul.f32 %v951, %v965
    %v968 = vmul.f32 %v952, %v966
    %v969 = vlaneseq
    %v970 = vshrl.u32 %v969, 7
    %v971 = vsub.s32 0, %v970
    %v972 = vrot.slane %v940, %v971
    %v973 = vmul.f32 %v967, %v972
    %v974 = vmul.f32 %v968, %v972
    %v975 = vlaneseq
    %v976 = vshrl.u32 %v975, 7
    %v977 = vsub.s32 1, %v976
    %v978 = vrot.slane %v940, %v977
    %v979 = vadd.f32 %v973, %v978
    %v980 = vadd.f32 %v974, %v978
    %v981 = vld [vmem:[%s25] sm:$0xff]
    %v982 = vld [vmem:[%s25 + $0x8] sm:$0xff]
    %v983 = vld [vmem:[%s25 + $0x10] sm:$0xff]
    %v984 = vld [vmem:[%s25 + $0x18] sm:$0xff]
    %v985 = vld [vmem:[%s25 + $0x20] sm:$0xff]
    %v986 = vld [vmem:[%s25 + $0x28] sm:$0xff]
    %v987 = vld [vmem:[%s25 + $0x30] sm:$0xff]
    %v988 = vld [vmem:[%s25 + $0x38] sm:$0xff]
    %v989 = vld [vmem:[%s25 + $0x40] sm:$0xff]
    %v990 = vld [vmem:[%s25 + $0x48] sm:$0xff]
    %v991 = vld [vmem:[%s25 + $0x50] sm:$0xff]
    %v992 = vld [vmem:[%s25 + $0x58] sm:$0xff]
    %v993 = vld [vmem:[%s25 + $0x60] sm:$0xff]
    %v994 = vld [vmem:[%s25 + $0x68] sm:$0xff]
    %v995 = vld [vmem:[%s25 + $0x70] sm:$0xff]
    %v996 = vld [vmem:[%s25 + $0x78] sm:$0xff]
    %v997 = vld [vmem:[%s29] sm:$0x3]
    %v999 = vlaneseq
    %v1000 = vshrl.u32 %v999, 7
    %v1001 = vsub.s32 0, %v1000
    %v1002 = vrot.slane %v997, %v1001
    %v1003 = vlaneseq
    %v1004 = vshrl.u32 %v1003, 7
    %v1005 = vsub.s32 1, %v1004
    %v1006 = vrot.slane %v997, %v1005
    %v1010 = vsel %vm307, %v979, 0
    %v1013 = vsel %vm307, %v980, 0
    %1015 = vmatprep.subr.mxu0 %v982
    %1016 = vmatpush1.msra.mxu0 %v981
    %1017 = vmatprep.subr.mxu0 %v984
    %1018 = vmatpush1.msra.mxu0 %v983
    %1019 = vmatprep.subr.mxu0 %v986
    %1020 = vmatpush1.msra.mxu0 %v985
    %1021 = vmatprep.subr.mxu0 %v988
    %1022 = vmatpush1.msra.mxu0 %v987
    %1023 = vmatprep.subr.mxu0 %v990
    %1024 = vmatpush1.msra.mxu0 %v989
    %1025 = vmatprep.subr.mxu0 %v992
    %1026 = vmatpush1.msra.mxu0 %v991
    %1027 = vmatprep.subr.mxu0 %v994
    %1028 = vmatpush1.msra.mxu0 %v993
    %1029 = vmatprep.subr.mxu0 %v996
    %1030 = vmatpush1.msra.mxu0 %v995
    %1031 = vmatprep.subr.mxu0 0.0
    %1032 = vmatpush1.msra.mxu0 0.0
    %1033 = vmatprep.subr.mxu0 0.0
    %1034 = vmatpush1.msra.mxu0 0.0
    %1035 = vmatprep.subr.mxu0 0.0
    %1036 = vmatpush1.msra.mxu0 0.0
    %1037 = vmatprep.subr.mxu0 0.0
    %1038 = vmatpush1.msra.mxu0 0.0
    %1039 = vmatprep.subr.mxu0 0.0
    %1040 = vmatpush1.msra.mxu0 0.0
    %1041 = vmatprep.subr.mxu0 0.0
    %1042 = vmatpush1.msra.mxu0 0.0
    %1043 = vmatprep.subr.mxu0 0.0
    %1044 = vmatpush1.msra.mxu0 0.0
    %1045 = vmatprep.subr.mxu0 0.0
    %1046 = vmatpush1.msra.mxu0 0.0
    %1047 = vmatprep.subr.mxu0 0.0
    %1048 = vmatpush1.msra.mxu0 0.0
    %1049 = vmatprep.subr.mxu0 0.0
    %1050 = vmatpush1.msra.mxu0 0.0
    %1051 = vmatprep.subr.mxu0 0.0
    %1052 = vmatpush1.msra.mxu0 0.0
    %1053 = vmatprep.subr.mxu0 0.0
    %1054 = vmatpush1.msra.mxu0 0.0
    %1055 = vmatprep.subr.mxu0 0.0
    %1056 = vmatpush1.msra.mxu0 0.0
    %1057 = vmatprep.subr.mxu0 0.0
    %1058 = vmatpush1.msra.mxu0 0.0
    %1059 = vmatprep.subr.mxu0 0.0
    %1060 = vmatpush1.msra.mxu0 0.0
    %1061 = vmatprep.subr.mxu0 0.0
    %1062 = vmatpush1.msra.mxu0 0.0
    %1063 = vmatprep.subr.mxu0 0.0
    %1064 = vmatpush1.msra.mxu0 0.0
    %1065 = vmatprep.subr.mxu0 0.0
    %1066 = vmatpush1.msra.mxu0 0.0
    %1067 = vmatprep.subr.mxu0 0.0
    %1068 = vmatpush1.msra.mxu0 0.0
    %1069 = vmatprep.subr.mxu0 0.0
    %1070 = vmatpush1.msra.mxu0 0.0
    %1071 = vmatprep.subr.mxu0 0.0
    %1072 = vmatpush1.msra.mxu0 0.0
    %1073 = vmatprep.subr.mxu0 0.0
    %1074 = vmatpush1.msra.mxu0 0.0
    %1075 = vmatprep.subr.mxu0 0.0
    %1076 = vmatpush1.msra.mxu0 0.0
    %1077 = vmatprep.subr.mxu0 0.0
    %1078 = vmatpush1.msra.mxu0 0.0
    %1079 = vmatprep.mubr.f32.mxu0 0.0
    %1080 = vmatmul.mubr.f32.gmra.mrb[0].mxu0 %v1010
    %v1081 = vpop.f32.mrb[0].mxu0
    %v1082 = vadd.f32 %v1002, %v1081
    %v1083 = vpop.f32.mrb[0].mxu0
    %v1084 = vadd.f32 %v1006, %v1083
    %1085 = vmatprep.mubr.f32.mxu0 0.0
    %1086 = vmatmul.mubr.f32.gmra.mrb[0].mxu0 %v1013
    %v1087 = vpop.f32.mrb[0].mxu0
    %v1088 = vadd.f32 %v1002, %v1087
    %v1089 = vpop.f32.mrb[0].mxu0
    %v1090 = vadd.f32 %v1006, %v1089
    %1091 = vdwg.mxu0
    %v1092 = vld [vmem:[%s27] sm:$0xff]
    %v1093 = vld [vmem:[%s27 + $0x8] sm:$0xff]
    %v1094 = vld [vmem:[%s27 + $0x10] sm:$0xff]
    %v1095 = vld [vmem:[%s27 + $0x18] sm:$0xff]
    %v1096 = vld [vmem:[%s27 + $0x20] sm:$0xff]
    %v1097 = vld [vmem:[%s27 + $0x28] sm:$0xff]
    %v1098 = vld [vmem:[%s27 + $0x30] sm:$0xff]
    %v1099 = vld [vmem:[%s27 + $0x38] sm:$0xff]
    %v1100 = vxor.u32 %v1082, 2147483648
    %v1101 = vmul.f32 %v1100, 1.442695
    %v1102 = vpow.pop %v1101
    %v1103 = vadd.f32 %v1102, 1.0
    %v1104 = vrcp.pop %v1103
    %v1105 = vmul.f32 1.0, %v1104
    %v1106 = vtanh.pop %v1082
    %1108 = vrot.lane.b32.xlu0 %v1106, 64
    %v1109 = vpop.permute.xlu0 %1108
    %v1111 = vmul.f32 %v1105, %v1109
    %v1112 = vtanh.pop %v1111
    %1114 = vrot.lane.b32.xlu0 %v1112, 96
    %v1115 = vpop.permute.xlu0 %1114
    %v1117 = vmul.f32 %v1105, %v1115
    %v1118 = vxor.u32 %v1090, 2147483648
    %v1119 = vmul.f32 %v1118, 1.442695
    %v1120 = vpow.pop %v1119
    %v1121 = vadd.f32 %v1120, 1.0
    %v1122 = vrcp.pop %v1121
    %v1123 = vmul.f32 1.0, %v1122
    %v1124 = vtanh.pop %v1090
    %1126 = vrot.lane.b32.xlu0 %v1124, 64
    %v1127 = vpop.permute.xlu0 %1126
    %v1129 = vmul.f32 %v1123, %v1127
    %v1130 = vtanh.pop %v1129
    %1132 = vrot.lane.b32.xlu0 %v1130, 96
    %v1133 = vpop.permute.xlu0 %1132
    %v1135 = vmul.f32 %v1123, %v1133
    %1137 = vrot.lane.b32.xlu0 %v1117, 32
    %v1138 = vpop.permute.xlu0 %1137
    %vm1139 = vcmask 261120
    %v1140 = vsel %vm1139, %v1138, 0
    %1142 = vmatprep.subr.mxu0 0.0
    %1143 = vmatpush1.msra.mxu0 %v1092
    %1144 = vmatprep.subr.mxu0 0.0
    %1145 = vmatpush1.msra.mxu0 %v1094
    %1146 = vmatprep.subr.mxu0 0.0
    %1147 = vmatpush1.msra.mxu0 %v1096
    %1148 = vmatprep.subr.mxu0 0.0
    %1149 = vmatpush1.msra.mxu0 %v1098
    %1150 = vmatprep.subr.mxu0 0.0
    %1151 = vmatpush1.msra.mxu0 0.0
    %1152 = vmatprep.subr.mxu0 0.0
    %1153 = vmatpush1.msra.mxu0 0.0
    %1154 = vmatprep.subr.mxu0 0.0
    %1155 = vmatpush1.msra.mxu0 0.0
    %1156 = vmatprep.subr.mxu0 0.0
    %1157 = vmatpush1.msra.mxu0 0.0
    %1158 = vmatprep.subr.mxu0 0.0
    %1159 = vmatpush1.msra.mxu0 0.0
    %1160 = vmatprep.subr.mxu0 0.0
    %1161 = vmatpush1.msra.mxu0 0.0
    %1162 = vmatprep.subr.mxu0 0.0
    %1163 = vmatpush1.msra.mxu0 0.0
    %1164 = vmatprep.subr.mxu0 0.0
    %1165 = vmatpush1.msra.mxu0 0.0
    %1166 = vmatprep.subr.mxu0 0.0
    %1167 = vmatpush1.msra.mxu0 0.0
    %1168 = vmatprep.subr.mxu0 0.0
    %1169 = vmatpush1.msra.mxu0 0.0
    %1170 = vmatprep.subr.mxu0 0.0
    %1171 = vmatpush1.msra.mxu0 0.0
    %1172 = vmatprep.subr.mxu0 0.0
    %1173 = vmatpush1.msra.mxu0 0.0
    %1174 = vmatprep.subr.mxu0 0.0
    %1175 = vmatpush1.msra.mxu0 0.0
    %1176 = vmatprep.subr.mxu0 0.0
    %1177 = vmatpush1.msra.mxu0 0.0
    %1178 = vmatprep.subr.mxu0 0.0
    %1179 = vmatpush1.msra.mxu0 0.0
    %1180 = vmatprep.subr.mxu0 0.0
    %1181 = vmatpush1.msra.mxu0 0.0
    %1182 = vmatprep.subr.mxu0 0.0
    %1183 = vmatpush1.msra.mxu0 0.0
    %1184 = vmatprep.subr.mxu0 0.0
    %1185 = vmatpush1.msra.mxu0 0.0
    %1186 = vmatprep.subr.mxu0 0.0
    %1187 = vmatpush1.msra.mxu0 0.0
    %1188 = vmatprep.subr.mxu0 0.0
    %1189 = vmatpush1.msra.mxu0 0.0
    %1190 = vmatprep.subr.mxu0 0.0
    %1191 = vmatpush1.msra.mxu0 0.0
    %1192 = vmatprep.subr.mxu0 0.0
    %1193 = vmatpush1.msra.mxu0 0.0
    %1194 = vmatprep.subr.mxu0 0.0
    %1195 = vmatpush1.msra.mxu0 0.0
    %1196 = vmatprep.subr.mxu0 0.0
    %1197 = vmatpush1.msra.mxu0 0.0
    %1198 = vmatprep.subr.mxu0 0.0
    %1199 = vmatpush1.msra.mxu0 0.0
    %1200 = vmatprep.subr.mxu0 0.0
    %1201 = vmatpush1.msra.mxu0 0.0
    %1202 = vmatprep.subr.mxu0 0.0
    %1203 = vmatpush1.msra.mxu0 0.0
    %1204 = vmatprep.subr.mxu0 0.0
    %1205 = vmatpush1.msra.mxu0 0.0
    %1206 = vmatprep.mubr.f32.mxu0 0.0
    %1207 = vmatmul.mubr.f32.gmra.mrb[0].mxu0 %v1140
    %v1208 = vpop.f32.mrb[0].mxu0
    %v1209 = vadd.f32 0.0, %v1208
    %v1210 = vpop.f32.mrb[0].mxu0
    %1211 = vdwg.mxu0
    %v1213 = vrot.slane %v1209, 6
    %v1215 = vadd.f32 %v1082, %v1213
    %v1217 = vrot.slane %v1135, 6
    %1218 = vrot.lane.b32.xlu0 %v1217, 32
    %v1219 = vpop.permute.xlu0 %1218
    %v1220 = vsel %vm1139, %v1219, 0
    %1222 = vmatprep.subr.mxu0 0.0
    %1223 = vmatpush1.msra.mxu0 %v1093
    %1224 = vmatprep.subr.mxu0 0.0
    %1225 = vmatpush1.msra.mxu0 %v1095
    %1226 = vmatprep.subr.mxu0 0.0
    %1227 = vmatpush1.msra.mxu0 %v1097
    %1228 = vmatprep.subr.mxu0 0.0
    %1229 = vmatpush1.msra.mxu0 %v1099
    %1230 = vmatprep.subr.mxu0 0.0
    %1231 = vmatpush1.msra.mxu0 0.0
    %1232 = vmatprep.subr.mxu0 0.0
    %1233 = vmatpush1.msra.mxu0 0.0
    %1234 = vmatprep.subr.mxu0 0.0
    %1235 = vmatpush1.msra.mxu0 0.0
    %1236 = vmatprep.subr.mxu0 0.0
    %1237 = vmatpush1.msra.mxu0 0.0
    %1238 = vmatprep.subr.mxu0 0.0
    %1239 = vmatpush1.msra.mxu0 0.0
    %1240 = vmatprep.subr.mxu0 0.0
    %1241 = vmatpush1.msra.mxu0 0.0
    %1242 = vmatprep.subr.mxu0 0.0
    %1243 = vmatpush1.msra.mxu0 0.0
    %1244 = vmatprep.subr.mxu0 0.0
    %1245 = vmatpush1.msra.mxu0 0.0
    %1246 = vmatprep.subr.mxu0 0.0
    %1247 = vmatpush1.msra.mxu0 0.0
    %1248 = vmatprep.subr.mxu0 0.0
    %1249 = vmatpush1.msra.mxu0 0.0
    %1250 = vmatprep.subr.mxu0 0.0
    %1251 = vmatpush1.msra.mxu0 0.0
    %1252 = vmatprep.subr.mxu0 0.0
    %1253 = vmatpush1.msra.mxu0 0.0
    %1254 = vmatprep.subr.mxu0 0.0
    %1255 = vmatpush1.msra.mxu0 0.0
    %1256 = vmatprep.subr.mxu0 0.0
    %1257 = vmatpush1.msra.mxu0 0.0
    %1258 = vmatprep.subr.mxu0 0.0
    %1259 = vmatpush1.msra.mxu0 0.0
    %1260 = vmatprep.subr.mxu0 0.0
    %1261 = vmatpush1.msra.mxu0 0.0
    %1262 = vmatprep.subr.mxu0 0.0
    %1263 = vmatpush1.msra.mxu0 0.0
    %1264 = vmatprep.subr.mxu0 0.0
    %1265 = vmatpush1.msra.mxu0 0.0
    %1266 = vmatprep.subr.mxu0 0.0
    %1267 = vmatpush1.msra.mxu0 0.0
    %1268 = vmatprep.subr.mxu0 0.0
    %1269 = vmatpush1.msra.mxu0 0.0
    %1270 = vmatprep.subr.mxu0 0.0
    %1271 = vmatpush1.msra.mxu0 0.0
    %1272 = vmatprep.subr.mxu0 0.0
    %1273 = vmatpush1.msra.mxu0 0.0
    %1274 = vmatprep.subr.mxu0 0.0
    %1275 = vmatpush1.msra.mxu0 0.0
    %1276 = vmatprep.subr.mxu0 0.0
    %1277 = vmatpush1.msra.mxu0 0.0
    %1278 = vmatprep.subr.mxu0 0.0
    %1279 = vmatpush1.msra.mxu0 0.0
    %1280 = vmatprep.subr.mxu0 0.0
    %1281 = vmatpush1.msra.mxu0 0.0
    %1282 = vmatprep.subr.mxu0 0.0
    %1283 = vmatpush1.msra.mxu0 0.0
    %1284 = vmatprep.subr.mxu0 0.0
    %1285 = vmatpush1.msra.mxu0 0.0
    %1286 = vmatprep.mubr.f32.mxu0 0.0
    %1287 = vmatmul.mubr.f32.gmra.mrb[0].mxu0 %v1220
    %v1288 = vpop.f32.mrb[0].mxu0
    %v1289 = vadd.f32 0.0, %v1288
    %v1290 = vpop.f32.mrb[0].mxu0
    %1291 = vdwg.mxu0
    %v1293 = vrot.slane %v1289, 4
    %v1295 = vadd.f32 %v1090, %v1293
    %v1296 = vxor.u32 %v1215, 2147483648
    %v1297 = vmul.f32 %v1296, 1.442695
    %v1298 = vpow.pop %v1297
    %v1299 = vadd.f32 %v1298, 1.0
    %v1300 = vrcp.pop %v1299
    %v1301 = vmul.f32 1.0, %v1300
    %v1302 = vtanh.pop %v1215
    %v1304 = vrot.slane %v1111, 6
    %1305 = vrot.lane.b32.xlu0 %v1304, 32
    %v1306 = vpop.permute.xlu0 %1305
    %v1308 = vmul.f32 %v1301, %v1306
    %1310 = vrot.lane.b32.xlu0 %v1302, 64
    %v1311 = vpop.permute.xlu0 %1310
    %v1313 = vmul.f32 %v1301, %v1311
    %1315 = vrot.lane.b32.xlu0 %v1313, 32
    %v1316 = vpop.permute.xlu0 %1315
    %v1318 = vadd.f32 %v1308, %v1316
    %v1319 = vtanh.pop %v1318
    %1321 = vrot.lane.b32.xlu0 %v1319, 64
    %v1322 = vpop.permute.xlu0 %1321
    %v1324 = vmul.f32 %v1301, %v1322
    %v1325 = vxor.u32 %v1295, 2147483648
    %v1326 = vmul.f32 %v1325, 1.442695
    %v1327 = vpow.pop %v1326
    %v1328 = vadd.f32 %v1327, 1.0
    %v1329 = vrcp.pop %v1328
    %v1330 = vmul.f32 1.0, %v1329
    %v1331 = vtanh.pop %v1295
    %v1333 = vrot.slane %v1129, 2
    %1334 = vrot.lane.b32.xlu0 %v1333, 32
    %v1335 = vpop.permute.xlu0 %1334
    %v1337 = vmul.f32 %v1330, %v1335
    %1339 = vrot.lane.b32.xlu0 %v1331, 64
    %v1340 = vpop.permute.xlu0 %1339
    %v1342 = vmul.f32 %v1330, %v1340
    %1344 = vrot.lane.b32.xlu0 %v1342, 32
    %v1345 = vpop.permute.xlu0 %1344
    %v1347 = vadd.f32 %v1337, %v1345
    %v1348 = vtanh.pop %v1347
    %1350 = vrot.lane.b32.xlu0 %v1348, 64
    %v1351 = vpop.permute.xlu0 %1350
    %v1353 = vmul.f32 %v1330, %v1351
    %v1355 = vrot.slane %v1324, 2
    %1356 = vrot.lane.b32.xlu0 %v1355, 32
    %v1357 = vpop.permute.xlu0 %1356
    %v1358 = vsel %vm1139, %v1357, 0
    %1360 = vmatprep.subr.mxu0 0.0
    %1361 = vmatpush1.msra.mxu0 %v1092
    %1362 = vmatprep.subr.mxu0 0.0
    %1363 = vmatpush1.msra.mxu0 %v1094
    %1364 = vmatprep.subr.mxu0 0.0
    %1365 = vmatpush1.msra.mxu0 %v1096
    %1366 = vmatprep.subr.mxu0 0.0
    %1367 = vmatpush1.msra.mxu0 %v1098
    %1368 = vmatprep.subr.mxu0 0.0
    %1369 = vmatpush1.msra.mxu0 0.0
    %1370 = vmatprep.subr.mxu0 0.0
    %1371 = vmatpush1.msra.mxu0 0.0
    %1372 = vmatprep.subr.mxu0 0.0
    %1373 = vmatpush1.msra.mxu0 0.0
    %1374 = vmatprep.subr.mxu0 0.0
    %1375 = vmatpush1.msra.mxu0 0.0
    %1376 = vmatprep.subr.mxu0 0.0
    %1377 = vmatpush1.msra.mxu0 0.0
    %1378 = vmatprep.subr.mxu0 0.0
    %1379 = vmatpush1.msra.mxu0 0.0
    %1380 = vmatprep.subr.mxu0 0.0
    %1381 = vmatpush1.msra.mxu0 0.0
    %1382 = vmatprep.subr.mxu0 0.0
    %1383 = vmatpush1.msra.mxu0 0.0
    %1384 = vmatprep.subr.mxu0 0.0
    %1385 = vmatpush1.msra.mxu0 0.0
    %1386 = vmatprep.subr.mxu0 0.0
    %1387 = vmatpush1.msra.mxu0 0.0
    %1388 = vmatprep.subr.mxu0 0.0
    %1389 = vmatpush1.msra.mxu0 0.0
    %1390 = vmatprep.subr.mxu0 0.0
    %1391 = vmatpush1.msra.mxu0 0.0
    %1392 = vmatprep.subr.mxu0 0.0
    %1393 = vmatpush1.msra.mxu0 0.0
    %1394 = vmatprep.subr.mxu0 0.0
    %1395 = vmatpush1.msra.mxu0 0.0
    %1396 = vmatprep.subr.mxu0 0.0
    %1397 = vmatpush1.msra.mxu0 0.0
    %1398 = vmatprep.subr.mxu0 0.0
    %1399 = vmatpush1.msra.mxu0 0.0
    %1400 = vmatprep.subr.mxu0 0.0
    %1401 = vmatpush1.msra.mxu0 0.0
    %1402 = vmatprep.subr.mxu0 0.0
    %1403 = vmatpush1.msra.mxu0 0.0
    %1404 = vmatprep.subr.mxu0 0.0
    %1405 = vmatpush1.msra.mxu0 0.0
    %1406 = vmatprep.subr.mxu0 0.0
    %1407 = vmatpush1.msra.mxu0 0.0
    %1408 = vmatprep.subr.mxu0 0.0
    %1409 = vmatpush1.msra.mxu0 0.0
    %1410 = vmatprep.subr.mxu0 0.0
    %1411 = vmatpush1.msra.mxu0 0.0
    %1412 = vmatprep.subr.mxu0 0.0
    %1413 = vmatpush1.msra.mxu0 0.0
    %1414 = vmatprep.subr.mxu0 0.0
    %1415 = vmatpush1.msra.mxu0 0.0
    %1416 = vmatprep.subr.mxu0 0.0
    %1417 = vmatpush1.msra.mxu0 0.0
    %1418 = vmatprep.subr.mxu0 0.0
    %1419 = vmatpush1.msra.mxu0 0.0
    %1420 = vmatprep.subr.mxu0 0.0
    %1421 = vmatpush1.msra.mxu0 0.0
    %1422 = vmatprep.subr.mxu0 0.0
    %1423 = vmatpush1.msra.mxu0 0.0
    %1424 = vmatprep.mubr.f32.mxu0 0.0
    %1425 = vmatmul.mubr.f32.gmra.mrb[0].mxu0 %v1358
    %v1426 = vpop.f32.mrb[0].mxu0
    %v1427 = vadd.f32 0.0, %v1426
    %v1428 = vpop.f32.mrb[0].mxu0
    %1429 = vdwg.mxu0
    %v1431 = vrot.slane %v1427, 4
    %v1433 = vadd.f32 %v1082, %v1431
    %v1435 = vrot.slane %v1353, 4
    %1436 = vrot.lane.b32.xlu0 %v1435, 32
    %v1437 = vpop.permute.xlu0 %1436
    %v1438 = vsel %vm1139, %v1437, 0
    %1440 = vmatprep.subr.mxu0 0.0
    %1441 = vmatpush1.msra.mxu0 %v1093
    %1442 = vmatprep.subr.mxu0 0.0
    %1443 = vmatpush1.msra.mxu0 %v1095
    %1444 = vmatprep.subr.mxu0 0.0
    %1445 = vmatpush1.msra.mxu0 %v1097
    %1446 = vmatprep.subr.mxu0 0.0
    %1447 = vmatpush1.msra.mxu0 %v1099
    %1448 = vmatprep.subr.mxu0 0.0
    %1449 = vmatpush1.msra.mxu0 0.0
    %1450 = vmatprep.subr.mxu0 0.0
    %1451 = vmatpush1.msra.mxu0 0.0
    %1452 = vmatprep.subr.mxu0 0.0
    %1453 = vmatpush1.msra.mxu0 0.0
    %1454 = vmatprep.subr.mxu0 0.0
    %1455 = vmatpush1.msra.mxu0 0.0
    %1456 = vmatprep.subr.mxu0 0.0
    %1457 = vmatpush1.msra.mxu0 0.0
    %1458 = vmatprep.subr.mxu0 0.0
    %1459 = vmatpush1.msra.mxu0 0.0
    %1460 = vmatprep.subr.mxu0 0.0
    %1461 = vmatpush1.msra.mxu0 0.0
    %1462 = vmatprep.subr.mxu0 0.0
    %1463 = vmatpush1.msra.mxu0 0.0
    %1464 = vmatprep.subr.mxu0 0.0
    %1465 = vmatpush1.msra.mxu0 0.0
    %1466 = vmatprep.subr.mxu0 0.0
    %1467 = vmatpush1.msra.mxu0 0.0
    %1468 = vmatprep.subr.mxu0 0.0
    %1469 = vmatpush1.msra.mxu0 0.0
    %1470 = vmatprep.subr.mxu0 0.0
    %1471 = vmatpush1.msra.mxu0 0.0
    %1472 = vmatprep.subr.mxu0 0.0
    %1473 = vmatpush1.msra.mxu0 0.0
    %1474 = vmatprep.subr.mxu0 0.0
    %1475 = vmatpush1.msra.mxu0 0.0
    %1476 = vmatprep.subr.mxu0 0.0
    %1477 = vmatpush1.msra.mxu0 0.0
    %1478 = vmatprep.subr.mxu0 0.0
    %1479 = vmatpush1.msra.mxu0 0.0
    %1480 = vmatprep.subr.mxu0 0.0
    %1481 = vmatpush1.msra.mxu0 0.0
    %1482 = vmatprep.subr.mxu0 0.0
    %1483 = vmatpush1.msra.mxu0 0.0
    %1484 = vmatprep.subr.mxu0 0.0
    %1485 = vmatpush1.msra.mxu0 0.0
    %1486 = vmatprep.subr.mxu0 0.0
    %1487 = vmatpush1.msra.mxu0 0.0
    %1488 = vmatprep.subr.mxu0 0.0
    %1489 = vmatpush1.msra.mxu0 0.0
    %1490 = vmatprep.subr.mxu0 0.0
    %1491 = vmatpush1.msra.mxu0 0.0
    %1492 = vmatprep.subr.mxu0 0.0
    %1493 = vmatpush1.msra.mxu0 0.0
    %1494 = vmatprep.subr.mxu0 0.0
    %1495 = vmatpush1.msra.mxu0 0.0
    %1496 = vmatprep.subr.mxu0 0.0
    %1497 = vmatpush1.msra.mxu0 0.0
    %1498 = vmatprep.subr.mxu0 0.0
    %1499 = vmatpush1.msra.mxu0 0.0
    %1500 = vmatprep.subr.mxu0 0.0
    %1501 = vmatpush1.msra.mxu0 0.0
    %1502 = vmatprep.subr.mxu0 0.0
    %1503 = vmatpush1.msra.mxu0 0.0
    %1504 = vmatprep.mubr.f32.mxu0 0.0
    %1505 = vmatmul.mubr.f32.gmra.mrb[0].mxu0 %v1438
    %v1506 = vpop.f32.mrb[0].mxu0
    %v1507 = vadd.f32 0.0, %v1506
    %v1508 = vpop.f32.mrb[0].mxu0
    %1509 = vdwg.mxu0
    %v1511 = vrot.slane %v1507, 6
    %v1513 = vadd.f32 %v1090, %v1511
    %v1514 = vxor.u32 %v1433, 2147483648
    %v1515 = vmul.f32 %v1514, 1.442695
    %v1516 = vpow.pop %v1515
    %v1517 = vadd.f32 %v1516, 1.0
    %v1518 = vrcp.pop %v1517
    %v1519 = vmul.f32 1.0, %v1518
    %v1520 = vtanh.pop %v1433
    %v1522 = vrot.slane %v1318, 6
    %v1524 = vmul.f32 %v1519, %v1522
    %1526 = vrot.lane.b32.xlu0 %v1520, 64
    %v1527 = vpop.permute.xlu0 %1526
    %v1529 = vmul.f32 %v1519, %v1527
    %1531 = vrot.lane.b32.xlu0 %v1529, 32
    %v1532 = vpop.permute.xlu0 %1531
    %v1534 = vadd.f32 %v1524, %v1532
    %v1535 = vtanh.pop %v1534
    %1537 = vrot.lane.b32.xlu0 %v1535, 64
    %v1538 = vpop.permute.xlu0 %1537
    %v1540 = vmul.f32 %v1519, %v1538
    %v1541 = vxor.u32 %v1513, 2147483648
    %v1542 = vmul.f32 %v1541, 1.442695
    %v1543 = vpow.pop %v1542
    %v1544 = vadd.f32 %v1543, 1.0
    %v1545 = vrcp.pop %v1544
    %v1546 = vmul.f32 1.0, %v1545
    %v1547 = vtanh.pop %v1513
    %v1549 = vrot.slane %v1347, 2
    %v1551 = vmul.f32 %v1546, %v1549
    %1553 = vrot.lane.b32.xlu0 %v1547, 64
    %v1554 = vpop.permute.xlu0 %1553
    %v1556 = vmul.f32 %v1546, %v1554
    %1558 = vrot.lane.b32.xlu0 %v1556, 32
    %v1559 = vpop.permute.xlu0 %1558
    %v1561 = vadd.f32 %v1551, %v1559
    %v1562 = vtanh.pop %v1561
    %1564 = vrot.lane.b32.xlu0 %v1562, 64
    %v1565 = vpop.permute.xlu0 %1564
    %v1567 = vmul.f32 %v1546, %v1565
    %v1569 = vrot.slane %v1540, 4
    %1570 = vrot.lane.b32.xlu0 %v1569, 32
    %v1571 = vpop.permute.xlu0 %1570
    %v1572 = vsel %vm1139, %v1571, 0
    %1574 = vmatprep.subr.mxu0 0.0
    %1575 = vmatpush1.msra.mxu0 %v1092
    %1576 = vmatprep.subr.mxu0 0.0
    %1577 = vmatpush1.msra.mxu0 %v1094
    %1578 = vmatprep.subr.mxu0 0.0
    %1579 = vmatpush1.msra.mxu0 %v1096
    %1580 = vmatprep.subr.mxu0 0.0
    %1581 = vmatpush1.msra.mxu0 %v1098
    %1582 = vmatprep.subr.mxu0 0.0
    %1583 = vmatpush1.msra.mxu0 0.0
    %1584 = vmatprep.subr.mxu0 0.0
    %1585 = vmatpush1.msra.mxu0 0.0
    %1586 = vmatprep.subr.mxu0 0.0
    %1587 = vmatpush1.msra.mxu0 0.0
    %1588 = vmatprep.subr.mxu0 0.0
    %1589 = vmatpush1.msra.mxu0 0.0
    %1590 = vmatprep.subr.mxu0 0.0
    %1591 = vmatpush1.msra.mxu0 0.0
    %1592 = vmatprep.subr.mxu0 0.0
    %1593 = vmatpush1.msra.mxu0 0.0
    %1594 = vmatprep.subr.mxu0 0.0
    %1595 = vmatpush1.msra.mxu0 0.0
    %1596 = vmatprep.subr.mxu0 0.0
    %1597 = vmatpush1.msra.mxu0 0.0
    %1598 = vmatprep.subr.mxu0 0.0
    %1599 = vmatpush1.msra.mxu0 0.0
    %1600 = vmatprep.subr.mxu0 0.0
    %1601 = vmatpush1.msra.mxu0 0.0
    %1602 = vmatprep.subr.mxu0 0.0
    %1603 = vmatpush1.msra.mxu0 0.0
    %1604 = vmatprep.subr.mxu0 0.0
    %1605 = vmatpush1.msra.mxu0 0.0
    %1606 = vmatprep.subr.mxu0 0.0
    %1607 = vmatpush1.msra.mxu0 0.0
    %1608 = vmatprep.subr.mxu0 0.0
    %1609 = vmatpush1.msra.mxu0 0.0
    %1610 = vmatprep.subr.mxu0 0.0
    %1611 = vmatpush1.msra.mxu0 0.0
    %1612 = vmatprep.subr.mxu0 0.0
    %1613 = vmatpush1.msra.mxu0 0.0
    %1614 = vmatprep.subr.mxu0 0.0
    %1615 = vmatpush1.msra.mxu0 0.0
    %1616 = vmatprep.subr.mxu0 0.0
    %1617 = vmatpush1.msra.mxu0 0.0
    %1618 = vmatprep.subr.mxu0 0.0
    %1619 = vmatpush1.msra.mxu0 0.0
    %1620 = vmatprep.subr.mxu0 0.0
    %1621 = vmatpush1.msra.mxu0 0.0
    %1622 = vmatprep.subr.mxu0 0.0
    %1623 = vmatpush1.msra.mxu0 0.0
    %1624 = vmatprep.subr.mxu0 0.0
    %1625 = vmatpush1.msra.mxu0 0.0
    %1626 = vmatprep.subr.mxu0 0.0
    %1627 = vmatpush1.msra.mxu0 0.0
    %1628 = vmatprep.subr.mxu0 0.0
    %1629 = vmatpush1.msra.mxu0 0.0
    %1630 = vmatprep.subr.mxu0 0.0
    %1631 = vmatpush1.msra.mxu0 0.0
    %1632 = vmatprep.subr.mxu0 0.0
    %1633 = vmatpush1.msra.mxu0 0.0
    %1634 = vmatprep.subr.mxu0 0.0
    %1635 = vmatpush1.msra.mxu0 0.0
    %1636 = vmatprep.subr.mxu0 0.0
    %1637 = vmatpush1.msra.mxu0 0.0
    %1638 = vmatprep.mubr.f32.mxu0 0.0
    %1639 = vmatmul.mubr.f32.gmra.mrb[0].mxu0 %v1572
    %v1640 = vpop.f32.mrb[0].mxu0
    %v1641 = vadd.f32 0.0, %v1640
    %v1642 = vpop.f32.mrb[0].mxu0
    %1643 = vdwg.mxu0
    %v1645 = vrot.slane %v1641, 2
    %v1647 = vadd.f32 %v1082, %v1645
    %v1649 = vrot.slane %v1567, 2
    %1650 = vrot.lane.b32.xlu0 %v1649, 32
    %v1651 = vpop.permute.xlu0 %1650
    %v1652 = vsel %vm1139, %v1651, 0
    %1654 = vmatprep.subr.mxu0 0.0
    %1655 = vmatpush1.msra.mxu0 %v1093
    %1656 = vmatprep.subr.mxu0 0.0
    %1657 = vmatpush1.msra.mxu0 %v1095
    %1658 = vmatprep.subr.mxu0 0.0
    %1659 = vmatpush1.msra.mxu0 %v1097
    %1660 = vmatprep.subr.mxu0 0.0
    %1661 = vmatpush1.msra.mxu0 %v1099
    %1662 = vmatprep.subr.mxu0 0.0
    %1663 = vmatpush1.msra.mxu0 0.0
    %1664 = vmatprep.subr.mxu0 0.0
    %1665 = vmatpush1.msra.mxu0 0.0
    %1666 = vmatprep.subr.mxu0 0.0
    %1667 = vmatpush1.msra.mxu0 0.0
    %1668 = vmatprep.subr.mxu0 0.0
    %1669 = vmatpush1.msra.mxu0 0.0
    %1670 = vmatprep.subr.mxu0 0.0
    %1671 = vmatpush1.msra.mxu0 0.0
    %1672 = vmatprep.subr.mxu0 0.0
    %1673 = vmatpush1.msra.mxu0 0.0
    %1674 = vmatprep.subr.mxu0 0.0
    %1675 = vmatpush1.msra.mxu0 0.0
    %1676 = vmatprep.subr.mxu0 0.0
    %1677 = vmatpush1.msra.mxu0 0.0
    %1678 = vmatprep.subr.mxu0 0.0
    %1679 = vmatpush1.msra.mxu0 0.0
    %1680 = vmatprep.subr.mxu0 0.0
    %1681 = vmatpush1.msra.mxu0 0.0
    %1682 = vmatprep.subr.mxu0 0.0
    %1683 = vmatpush1.msra.mxu0 0.0
    %1684 = vmatprep.subr.mxu0 0.0
    %1685 = vmatpush1.msra.mxu0 0.0
    %1686 = vmatprep.subr.mxu0 0.0
    %1687 = vmatpush1.msra.mxu0 0.0
    %1688 = vmatprep.subr.mxu0 0.0
    %1689 = vmatpush1.msra.mxu0 0.0
    %1690 = vmatprep.subr.mxu0 0.0
    %1691 = vmatpush1.msra.mxu0 0.0
    %1692 = vmatprep.subr.mxu0 0.0
    %1693 = vmatpush1.msra.mxu0 0.0
    %1694 = vmatprep.subr.mxu0 0.0
    %1695 = vmatpush1.msra.mxu0 0.0
    %1696 = vmatprep.subr.mxu0 0.0
    %1697 = vmatpush1.msra.mxu0 0.0
    %1698 = vmatprep.subr.mxu0 0.0
    %1699 = vmatpush1.msra.mxu0 0.0
    %1700 = vmatprep.subr.mxu0 0.0
    %1701 = vmatpush1.msra.mxu0 0.0
    %1702 = vmatprep.subr.mxu0 0.0
    %1703 = vmatpush1.msra.mxu0 0.0
    %1704 = vmatprep.subr.mxu0 0.0
    %1705 = vmatpush1.msra.mxu0 0.0
    %1706 = vmatprep.subr.mxu0 0.0
    %1707 = vmatpush1.msra.mxu0 0.0
    %1708 = vmatprep.subr.mxu0 0.0
    %1709 = vmatpush1.msra.mxu0 0.0
    %1710 = vmatprep.subr.mxu0 0.0
    %1711 = vmatpush1.msra.mxu0 0.0
    %1712 = vmatprep.subr.mxu0 0.0
    %1713 = vmatpush1.msra.mxu0 0.0
    %1714 = vmatprep.subr.mxu0 0.0
    %1715 = vmatpush1.msra.mxu0 0.0
    %1716 = vmatprep.subr.mxu0 0.0
    %1717 = vmatpush1.msra.mxu0 0.0
    %1718 = vmatprep.mubr.f32.mxu0 0.0
    %1719 = vmatmul.mubr.f32.gmra.mrb[0].mxu0 %v1652
    %v1720 = vpop.f32.mrb[0].mxu0
    %v1721 = vadd.f32 0.0, %v1720
    %v1722 = vpop.f32.mrb[0].mxu0
    %1723 = vdwg.mxu0
    %v1724 = vadd.f32 %v1090, %v1721
    %v1725 = vxor.u32 %v1647, 2147483648
    %v1726 = vmul.f32 %v1725, 1.442695
    %v1727 = vpow.pop %v1726
    %v1728 = vadd.f32 %v1727, 1.0
    %v1729 = vrcp.pop %v1728
    %v1730 = vmul.f32 1.0, %v1729
    %v1731 = vtanh.pop %v1647
    %v1733 = vrot.slane %v1534, 6
    %v1735 = vmul.f32 %v1730, %v1733
    %1737 = vrot.lane.b32.xlu0 %v1731, 64
    %v1738 = vpop.permute.xlu0 %1737
    %v1740 = vmul.f32 %v1730, %v1738
    %1742 = vrot.lane.b32.xlu0 %v1740, 32
    %v1743 = vpop.permute.xlu0 %1742
    %v1745 = vadd.f32 %v1735, %v1743
    %v1746 = vtanh.pop %v1745
    %1748 = vrot.lane.b32.xlu0 %v1746, 64
    %v1749 = vpop.permute.xlu0 %1748
    %v1751 = vmul.f32 %v1730, %v1749
    %v1752 = vxor.u32 %v1724, 2147483648
    %v1753 = vmul.f32 %v1752, 1.442695
    %v1754 = vpow.pop %v1753
    %v1755 = vadd.f32 %v1754, 1.0
    %v1756 = vrcp.pop %v1755
    %v1757 = vmul.f32 1.0, %v1756
    %v1758 = vtanh.pop %v1724
    %v1760 = vrot.slane %v1561, 2
    %v1762 = vmul.f32 %v1757, %v1760
    %1764 = vrot.lane.b32.xlu0 %v1758, 64
    %v1765 = vpop.permute.xlu0 %1764
    %v1767 = vmul.f32 %v1757, %v1765
    %1769 = vrot.lane.b32.xlu0 %v1767, 32
    %v1770 = vpop.permute.xlu0 %1769
    %v1772 = vadd.f32 %v1762, %v1770
    %v1773 = vtanh.pop %v1772
    %1775 = vrot.lane.b32.xlu0 %v1773, 64
    %v1776 = vpop.permute.xlu0 %1775
    %v1778 = vmul.f32 %v1757, %v1776
    %v1780 = vrot.slane %v1751, 6
    %1781 = vrot.lane.b32.xlu0 %v1780, 32
    %v1782 = vpop.permute.xlu0 %1781
    %v1783 = vsel %vm1139, %v1782, 0
    %1785 = vmatprep.subr.mxu0 0.0
    %1786 = vmatpush1.msra.mxu0 %v1092
    %1787 = vmatprep.subr.mxu0 0.0
    %1788 = vmatpush1.msra.mxu0 %v1094
    %1789 = vmatprep.subr.mxu0 0.0
    %1790 = vmatpush1.msra.mxu0 %v1096
    %1791 = vmatprep.subr.mxu0 0.0
    %1792 = vmatpush1.msra.mxu0 %v1098
    %1793 = vmatprep.subr.mxu0 0.0
    %1794 = vmatpush1.msra.mxu0 0.0
    %1795 = vmatprep.subr.mxu0 0.0
    %1796 = vmatpush1.msra.mxu0 0.0
    %1797 = vmatprep.subr.mxu0 0.0
    %1798 = vmatpush1.msra.mxu0 0.0
    %1799 = vmatprep.subr.mxu0 0.0
    %1800 = vmatpush1.msra.mxu0 0.0
    %1801 = vmatprep.subr.mxu0 0.0
    %1802 = vmatpush1.msra.mxu0 0.0
    %1803 = vmatprep.subr.mxu0 0.0
    %1804 = vmatpush1.msra.mxu0 0.0
    %1805 = vmatprep.subr.mxu0 0.0
    %1806 = vmatpush1.msra.mxu0 0.0
    %1807 = vmatprep.subr.mxu0 0.0
    %1808 = vmatpush1.msra.mxu0 0.0
    %1809 = vmatprep.subr.mxu0 0.0
    %1810 = vmatpush1.msra.mxu0 0.0
    %1811 = vmatprep.subr.mxu0 0.0
    %1812 = vmatpush1.msra.mxu0 0.0
    %1813 = vmatprep.subr.mxu0 0.0
    %1814 = vmatpush1.msra.mxu0 0.0
    %1815 = vmatprep.subr.mxu0 0.0
    %1816 = vmatpush1.msra.mxu0 0.0
    %1817 = vmatprep.subr.mxu0 0.0
    %1818 = vmatpush1.msra.mxu0 0.0
    %1819 = vmatprep.subr.mxu0 0.0
    %1820 = vmatpush1.msra.mxu0 0.0
    %1821 = vmatprep.subr.mxu0 0.0
    %1822 = vmatpush1.msra.mxu0 0.0
    %1823 = vmatprep.subr.mxu0 0.0
    %1824 = vmatpush1.msra.mxu0 0.0
    %1825 = vmatprep.subr.mxu0 0.0
    %1826 = vmatpush1.msra.mxu0 0.0
    %1827 = vmatprep.subr.mxu0 0.0
    %1828 = vmatpush1.msra.mxu0 0.0
    %1829 = vmatprep.subr.mxu0 0.0
    %1830 = vmatpush1.msra.mxu0 0.0
    %1831 = vmatprep.subr.mxu0 0.0
    %1832 = vmatpush1.msra.mxu0 0.0
    %1833 = vmatprep.subr.mxu0 0.0
    %1834 = vmatpush1.msra.mxu0 0.0
    %1835 = vmatprep.subr.mxu0 0.0
    %1836 = vmatpush1.msra.mxu0 0.0
    %1837 = vmatprep.subr.mxu0 0.0
    %1838 = vmatpush1.msra.mxu0 0.0
    %1839 = vmatprep.subr.mxu0 0.0
    %1840 = vmatpush1.msra.mxu0 0.0
    %1841 = vmatprep.subr.mxu0 0.0
    %1842 = vmatpush1.msra.mxu0 0.0
    %1843 = vmatprep.subr.mxu0 0.0
    %1844 = vmatpush1.msra.mxu0 0.0
    %1845 = vmatprep.subr.mxu0 0.0
    %1846 = vmatpush1.msra.mxu0 0.0
    %1847 = vmatprep.subr.mxu0 0.0
    %1848 = vmatpush1.msra.mxu0 0.0
    %1849 = vmatprep.mubr.f32.mxu0 0.0
    %1850 = vmatmul.mubr.f32.gmra.mrb[0].mxu0 %v1783
    %v1851 = vpop.f32.mrb[0].mxu0
    %v1852 = vadd.f32 0.0, %v1851
    %v1853 = vpop.f32.mrb[0].mxu0
    %1854 = vdwg.mxu0
    %v1855 = vadd.f32 %v1088, %v1852
    %1857 = vrot.lane.b32.xlu0 %v1778, 32
    %v1858 = vpop.permute.xlu0 %1857
    %v1859 = vsel %vm1139, %v1858, 0
    %1861 = vmatprep.subr.mxu0 0.0
    %1862 = vmatpush1.msra.mxu0 %v1093
    %1863 = vmatprep.subr.mxu0 0.0
    %1864 = vmatpush1.msra.mxu0 %v1095
    %1865 = vmatprep.subr.mxu0 0.0
    %1866 = vmatpush1.msra.mxu0 %v1097
    %1867 = vmatprep.subr.mxu0 0.0
    %1868 = vmatpush1.msra.mxu0 %v1099
    %1869 = vmatprep.subr.mxu0 0.0
    %1870 = vmatpush1.msra.mxu0 0.0
    %1871 = vmatprep.subr.mxu0 0.0
    %1872 = vmatpush1.msra.mxu0 0.0
    %1873 = vmatprep.subr.mxu0 0.0
    %1874 = vmatpush1.msra.mxu0 0.0
    %1875 = vmatprep.subr.mxu0 0.0
    %1876 = vmatpush1.msra.mxu0 0.0
    %1877 = vmatprep.subr.mxu0 0.0
    %1878 = vmatpush1.msra.mxu0 0.0
    %1879 = vmatprep.subr.mxu0 0.0
    %1880 = vmatpush1.msra.mxu0 0.0
    %1881 = vmatprep.subr.mxu0 0.0
    %1882 = vmatpush1.msra.mxu0 0.0
    %1883 = vmatprep.subr.mxu0 0.0
    %1884 = vmatpush1.msra.mxu0 0.0
    %1885 = vmatprep.subr.mxu0 0.0
    %1886 = vmatpush1.msra.mxu0 0.0
    %1887 = vmatprep.subr.mxu0 0.0
    %1888 = vmatpush1.msra.mxu0 0.0
    %1889 = vmatprep.subr.mxu0 0.0
    %1890 = vmatpush1.msra.mxu0 0.0
    %1891 = vmatprep.subr.mxu0 0.0
    %1892 = vmatpush1.msra.mxu0 0.0
    %1893 = vmatprep.subr.mxu0 0.0
    %1894 = vmatpush1.msra.mxu0 0.0
    %1895 = vmatprep.subr.mxu0 0.0
    %1896 = vmatpush1.msra.mxu0 0.0
    %1897 = vmatprep.subr.mxu0 0.0
    %1898 = vmatpush1.msra.mxu0 0.0
    %1899 = vmatprep.subr.mxu0 0.0
    %1900 = vmatpush1.msra.mxu0 0.0
    %1901 = vmatprep.subr.mxu0 0.0
    %1902 = vmatpush1.msra.mxu0 0.0
    %1903 = vmatprep.subr.mxu0 0.0
    %1904 = vmatpush1.msra.mxu0 0.0
    %1905 = vmatprep.subr.mxu0 0.0
    %1906 = vmatpush1.msra.mxu0 0.0
    %1907 = vmatprep.subr.mxu0 0.0
    %1908 = vmatpush1.msra.mxu0 0.0
    %1909 = vmatprep.subr.mxu0 0.0
    %1910 = vmatpush1.msra.mxu0 0.0
    %1911 = vmatprep.subr.mxu0 0.0
    %1912 = vmatpush1.msra.mxu0 0.0
    %1913 = vmatprep.subr.mxu0 0.0
    %1914 = vmatpush1.msra.mxu0 0.0
    %1915 = vmatprep.subr.mxu0 0.0
    %1916 = vmatpush1.msra.mxu0 0.0
    %1917 = vmatprep.subr.mxu0 0.0
    %1918 = vmatpush1.msra.mxu0 0.0
    %1919 = vmatprep.subr.mxu0 0.0
    %1920 = vmatpush1.msra.mxu0 0.0
    %1921 = vmatprep.subr.mxu0 0.0
    %1922 = vmatpush1.msra.mxu0 0.0
    %1923 = vmatprep.subr.mxu0 0.0
    %1924 = vmatpush1.msra.mxu0 0.0
    %1925 = vmatprep.mubr.f32.mxu0 0.0
    %1926 = vmatmul.mubr.f32.gmra.mrb[0].mxu0 %v1859
    %v1927 = vpop.f32.mrb[0].mxu0
    %v1928 = vadd.f32 0.0, %v1927
    %v1929 = vpop.f32.mrb[0].mxu0
    %1930 = vdwg.mxu0
    %v1932 = vrot.slane %v1928, 2
    %v1934 = vadd.f32 %v1084, %v1932
    %v1935 = vxor.u32 %v1855, 2147483648
    %v1936 = vmul.f32 %v1935, 1.442695
    %v1937 = vpow.pop %v1936
    %v1938 = vadd.f32 %v1937, 1.0
    %v1939 = vrcp.pop %v1938
    %v1940 = vmul.f32 1.0, %v1939
    %v1941 = vtanh.pop %v1855
    %v1943 = vrot.slane %v1745, 6
    %v1945 = vmul.f32 %v1940, %v1943
    %1947 = vrot.lane.b32.xlu0 %v1941, 64
    %v1948 = vpop.permute.xlu0 %1947
    %v1950 = vmul.f32 %v1940, %v1948
    %1952 = vrot.lane.b32.xlu0 %v1950, 32
    %v1953 = vpop.permute.xlu0 %1952
    %v1955 = vadd.f32 %v1945, %v1953
    %v1956 = vtanh.pop %v1955
    %1958 = vrot.lane.b32.xlu0 %v1956, 64
    %v1959 = vpop.permute.xlu0 %1958
    %v1961 = vmul.f32 %v1940, %v1959
    %v1962 = vxor.u32 %v1934, 2147483648
    %v1963 = vmul.f32 %v1962, 1.442695
    %v1964 = vpow.pop %v1963
    %v1965 = vadd.f32 %v1964, 1.0
    %v1966 = vrcp.pop %v1965
    %v1967 = vmul.f32 1.0, %v1966
    %v1968 = vtanh.pop %v1934
    %v1970 = vrot.slane %v1772, 2
    %v1972 = vmul.f32 %v1967, %v1970
    %1974 = vrot.lane.b32.xlu0 %v1968, 64
    %v1975 = vpop.permute.xlu0 %1974
    %v1977 = vmul.f32 %v1967, %v1975
    %1979 = vrot.lane.b32.xlu0 %v1977, 32
    %v1980 = vpop.permute.xlu0 %1979
    %v1982 = vadd.f32 %v1972, %v1980
    %v1983 = vtanh.pop %v1982
    %1985 = vrot.lane.b32.xlu0 %v1983, 64
    %v1986 = vpop.permute.xlu0 %1985
    %v1988 = vmul.f32 %v1967, %v1986
    %1990 = vrot.lane.b32.xlu0 %v1961, 32
    %v1991 = vpop.permute.xlu0 %1990
    %v1992 = vsel %vm1139, %v1991, 0
    %1994 = vmatprep.subr.mxu0 0.0
    %1995 = vmatpush1.msra.mxu0 %v1092
    %1996 = vmatprep.subr.mxu0 0.0
    %1997 = vmatpush1.msra.mxu0 %v1094
    %1998 = vmatprep.subr.mxu0 0.0
    %1999 = vmatpush1.msra.mxu0 %v1096
    %2000 = vmatprep.subr.mxu0 0.0
    %2001 = vmatpush1.msra.mxu0 %v1098
    %2002 = vmatprep.subr.mxu0 0.0
    %2003 = vmatpush1.msra.mxu0 0.0
    %2004 = vmatprep.subr.mxu0 0.0
    %2005 = vmatpush1.msra.mxu0 0.0
    %2006 = vmatprep.subr.mxu0 0.0
    %2007 = vmatpush1.msra.mxu0 0.0
    %2008 = vmatprep.subr.mxu0 0.0
    %2009 = vmatpush1.msra.mxu0 0.0
    %2010 = vmatprep.subr.mxu0 0.0
    %2011 = vmatpush1.msra.mxu0 0.0
    %2012 = vmatprep.subr.mxu0 0.0
    %2013 = vmatpush1.msra.mxu0 0.0
    %2014 = vmatprep.subr.mxu0 0.0
    %2015 = vmatpush1.msra.mxu0 0.0
    %2016 = vmatprep.subr.mxu0 0.0
    %2017 = vmatpush1.msra.mxu0 0.0
    %2018 = vmatprep.subr.mxu0 0.0
    %2019 = vmatpush1.msra.mxu0 0.0
    %2020 = vmatprep.subr.mxu0 0.0
    %2021 = vmatpush1.msra.mxu0 0.0
    %2022 = vmatprep.subr.mxu0 0.0
    %2023 = vmatpush1.msra.mxu0 0.0
    %2024 = vmatprep.subr.mxu0 0.0
    %2025 = vmatpush1.msra.mxu0 0.0
    %2026 = vmatprep.subr.mxu0 0.0
    %2027 = vmatpush1.msra.mxu0 0.0
    %2028 = vmatprep.subr.mxu0 0.0
    %2029 = vmatpush1.msra.mxu0 0.0
    %2030 = vmatprep.subr.mxu0 0.0
    %2031 = vmatpush1.msra.mxu0 0.0
    %2032 = vmatprep.subr.mxu0 0.0
    %2033 = vmatpush1.msra.mxu0 0.0
    %2034 = vmatprep.subr.mxu0 0.0
    %2035 = vmatpush1.msra.mxu0 0.0
    %2036 = vmatprep.subr.mxu0 0.0
    %2037 = vmatpush1.msra.mxu0 0.0
    %2038 = vmatprep.subr.mxu0 0.0
    %2039 = vmatpush1.msra.mxu0 0.0
    %2040 = vmatprep.subr.mxu0 0.0
    %2041 = vmatpush1.msra.mxu0 0.0
    %2042 = vmatprep.subr.mxu0 0.0
    %2043 = vmatpush1.msra.mxu0 0.0
    %2044 = vmatprep.subr.mxu0 0.0
    %2045 = vmatpush1.msra.mxu0 0.0
    %2046 = vmatprep.subr.mxu0 0.0
    %2047 = vmatpush1.msra.mxu0 0.0
    %2048 = vmatprep.subr.mxu0 0.0
    %2049 = vmatpush1.msra.mxu0 0.0
    %2050 = vmatprep.subr.mxu0 0.0
    %2051 = vmatpush1.msra.mxu0 0.0
    %2052 = vmatprep.subr.mxu0 0.0
    %2053 = vmatpush1.msra.mxu0 0.0
    %2054 = vmatprep.subr.mxu0 0.0
    %2055 = vmatpush1.msra.mxu0 0.0
    %2056 = vmatprep.subr.mxu0 0.0
    %2057 = vmatpush1.msra.mxu0 0.0
    %2058 = vmatprep.mubr.f32.mxu0 0.0
    %2059 = vmatmul.mubr.f32.gmra.mrb[0].mxu0 %v1992
    %v2060 = vpop.f32.mrb[0].mxu0
    %v2061 = vadd.f32 0.0, %v2060
    %v2062 = vpop.f32.mrb[0].mxu0
    %2063 = vdwg.mxu0
    %v2065 = vrot.slane %v2061, 6
    %v2067 = vadd.f32 %v1088, %v2065
    %v2069 = vrot.slane %v1988, 6
    %2070 = vrot.lane.b32.xlu0 %v2069, 32
    %v2071 = vpop.permute.xlu0 %2070
    %v2072 = vsel %vm1139, %v2071, 0
    %2074 = vmatprep.subr.mxu0 0.0
    %2075 = vmatpush1.msra.mxu0 %v1093
    %2076 = vmatprep.subr.mxu0 0.0
    %2077 = vmatpush1.msra.mxu0 %v1095
    %2078 = vmatprep.subr.mxu0 0.0
    %2079 = vmatpush1.msra.mxu0 %v1097
    %2080 = vmatprep.subr.mxu0 0.0
    %2081 = vmatpush1.msra.mxu0 %v1099
    %2082 = vmatprep.subr.mxu0 0.0
    %2083 = vmatpush1.msra.mxu0 0.0
    %2084 = vmatprep.subr.mxu0 0.0
    %2085 = vmatpush1.msra.mxu0 0.0
    %2086 = vmatprep.subr.mxu0 0.0
    %2087 = vmatpush1.msra.mxu0 0.0
    %2088 = vmatprep.subr.mxu0 0.0
    %2089 = vmatpush1.msra.mxu0 0.0
    %2090 = vmatprep.subr.mxu0 0.0
    %2091 = vmatpush1.msra.mxu0 0.0
    %2092 = vmatprep.subr.mxu0 0.0
    %2093 = vmatpush1.msra.mxu0 0.0
    %2094 = vmatprep.subr.mxu0 0.0
    %2095 = vmatpush1.msra.mxu0 0.0
    %2096 = vmatprep.subr.mxu0 0.0
    %2097 = vmatpush1.msra.mxu0 0.0
    %2098 = vmatprep.subr.mxu0 0.0
    %2099 = vmatpush1.msra.mxu0 0.0
    %2100 = vmatprep.subr.mxu0 0.0
    %2101 = vmatpush1.msra.mxu0 0.0
    %2102 = vmatprep.subr.mxu0 0.0
    %2103 = vmatpush1.msra.mxu0 0.0
    %2104 = vmatprep.subr.mxu0 0.0
    %2105 = vmatpush1.msra.mxu0 0.0
    %2106 = vmatprep.subr.mxu0 0.0
    %2107 = vmatpush1.msra.mxu0 0.0
    %2108 = vmatprep.subr.mxu0 0.0
    %2109 = vmatpush1.msra.mxu0 0.0
    %2110 = vmatprep.subr.mxu0 0.0
    %2111 = vmatpush1.msra.mxu0 0.0
    %2112 = vmatprep.subr.mxu0 0.0
    %2113 = vmatpush1.msra.mxu0 0.0
    %2114 = vmatprep.subr.mxu0 0.0
    %2115 = vmatpush1.msra.mxu0 0.0
    %2116 = vmatprep.subr.mxu0 0.0
    %2117 = vmatpush1.msra.mxu0 0.0
    %2118 = vmatprep.subr.mxu0 0.0
    %2119 = vmatpush1.msra.mxu0 0.0
    %2120 = vmatprep.subr.mxu0 0.0
    %2121 = vmatpush1.msra.mxu0 0.0
    %2122 = vmatprep.subr.mxu0 0.0
    %2123 = vmatpush1.msra.mxu0 0.0
    %2124 = vmatprep.subr.mxu0 0.0
    %2125 = vmatpush1.msra.mxu0 0.0
    %2126 = vmatprep.subr.mxu0 0.0
    %2127 = vmatpush1.msra.mxu0 0.0
    %2128 = vmatprep.subr.mxu0 0.0
    %2129 = vmatpush1.msra.mxu0 0.0
    %2130 = vmatprep.subr.mxu0 0.0
    %2131 = vmatpush1.msra.mxu0 0.0
    %2132 = vmatprep.subr.mxu0 0.0
    %2133 = vmatpush1.msra.mxu0 0.0
    %2134 = vmatprep.subr.mxu0 0.0
    %2135 = vmatpush1.msra.mxu0 0.0
    %2136 = vmatprep.subr.mxu0 0.0
    %2137 = vmatpush1.msra.mxu0 0.0
    %2138 = vmatprep.mubr.f32.mxu0 0.0
    %2139 = vmatmul.mubr.f32.gmra.mrb[0].mxu0 %v2072
    %v2140 = vpop.f32.mrb[0].mxu0
    %v2141 = vadd.f32 0.0, %v2140
    %v2142 = vpop.f32.mrb[0].mxu0
    %2143 = vdwg.mxu0
    %v2145 = vrot.slane %v2141, 4
    %v2147 = vadd.f32 %v1084, %v2145
    %v2148 = vxor.u32 %v2067, 2147483648
    %v2149 = vmul.f32 %v2148, 1.442695
    %v2150 = vpow.pop %v2149
    %v2151 = vadd.f32 %v2150, 1.0
    %v2152 = vrcp.pop %v2151
    %v2153 = vmul.f32 1.0, %v2152
    %v2154 = vtanh.pop %v2067
    %v2156 = vrot.slane %v1955, 6
    %v2158 = vmul.f32 %v2153, %v2156
    %2160 = vrot.lane.b32.xlu0 %v2154, 64
    %v2161 = vpop.permute.xlu0 %2160
    %v2163 = vmul.f32 %v2153, %v2161
    %2165 = vrot.lane.b32.xlu0 %v2163, 32
    %v2166 = vpop.permute.xlu0 %2165
    %v2168 = vadd.f32 %v2158, %v2166
    %v2169 = vtanh.pop %v2168
    %2171 = vrot.lane.b32.xlu0 %v2169, 64
    %v2172 = vpop.permute.xlu0 %2171
    %v2174 = vmul.f32 %v2153, %v2172
    %v2175 = vxor.u32 %v2147, 2147483648
    %v2176 = vmul.f32 %v2175, 1.442695
    %v2177 = vpow.pop %v2176
    %v2178 = vadd.f32 %v2177, 1.0
    %v2179 = vrcp.pop %v2178
    %v2180 = vmul.f32 1.0, %v2179
    %v2181 = vtanh.pop %v2147
    %v2183 = vrot.slane %v1982, 2
    %v2185 = vmul.f32 %v2180, %v2183
    %2187 = vrot.lane.b32.xlu0 %v2181, 64
    %v2188 = vpop.permute.xlu0 %2187
    %v2190 = vmul.f32 %v2180, %v2188
    %2192 = vrot.lane.b32.xlu0 %v2190, 32
    %v2193 = vpop.permute.xlu0 %2192
    %v2195 = vadd.f32 %v2185, %v2193
    %v2196 = vtanh.pop %v2195
    %2198 = vrot.lane.b32.xlu0 %v2196, 64
    %v2199 = vpop.permute.xlu0 %2198
    %v2201 = vmul.f32 %v2180, %v2199
    %v2203 = vrot.slane %v2174, 2
    %2204 = vrot.lane.b32.xlu0 %v2203, 32
    %v2205 = vpop.permute.xlu0 %2204
    %v2206 = vsel %vm1139, %v2205, 0
    %2208 = vmatprep.subr.mxu0 0.0
    %2209 = vmatpush1.msra.mxu0 %v1092
    %2210 = vmatprep.subr.mxu0 0.0
    %2211 = vmatpush1.msra.mxu0 %v1094
    %2212 = vmatprep.subr.mxu0 0.0
    %2213 = vmatpush1.msra.mxu0 %v1096
    %2214 = vmatprep.subr.mxu0 0.0
    %2215 = vmatpush1.msra.mxu0 %v1098
    %2216 = vmatprep.subr.mxu0 0.0
    %2217 = vmatpush1.msra.mxu0 0.0
    %2218 = vmatprep.subr.mxu0 0.0
    %2219 = vmatpush1.msra.mxu0 0.0
    %2220 = vmatprep.subr.mxu0 0.0
    %2221 = vmatpush1.msra.mxu0 0.0
    %2222 = vmatprep.subr.mxu0 0.0
    %2223 = vmatpush1.msra.mxu0 0.0
    %2224 = vmatprep.subr.mxu0 0.0
    %2225 = vmatpush1.msra.mxu0 0.0
    %2226 = vmatprep.subr.mxu0 0.0
    %2227 = vmatpush1.msra.mxu0 0.0
    %2228 = vmatprep.subr.mxu0 0.0
    %2229 = vmatpush1.msra.mxu0 0.0
    %2230 = vmatprep.subr.mxu0 0.0
    %2231 = vmatpush1.msra.mxu0 0.0
    %2232 = vmatprep.subr.mxu0 0.0
    %2233 = vmatpush1.msra.mxu0 0.0
    %2234 = vmatprep.subr.mxu0 0.0
    %2235 = vmatpush1.msra.mxu0 0.0
    %2236 = vmatprep.subr.mxu0 0.0
    %2237 = vmatpush1.msra.mxu0 0.0
    %2238 = vmatprep.subr.mxu0 0.0
    %2239 = vmatpush1.msra.mxu0 0.0
    %2240 = vmatprep.subr.mxu0 0.0
    %2241 = vmatpush1.msra.mxu0 0.0
    %2242 = vmatprep.subr.mxu0 0.0
    %2243 = vmatpush1.msra.mxu0 0.0
    %2244 = vmatprep.subr.mxu0 0.0
    %2245 = vmatpush1.msra.mxu0 0.0
    %2246 = vmatprep.subr.mxu0 0.0
    %2247 = vmatpush1.msra.mxu0 0.0
    %2248 = vmatprep.subr.mxu0 0.0
    %2249 = vmatpush1.msra.mxu0 0.0
    %2250 = vmatprep.subr.mxu0 0.0
    %2251 = vmatpush1.msra.mxu0 0.0
    %2252 = vmatprep.subr.mxu0 0.0
    %2253 = vmatpush1.msra.mxu0 0.0
    %2254 = vmatprep.subr.mxu0 0.0
    %2255 = vmatpush1.msra.mxu0 0.0
    %2256 = vmatprep.subr.mxu0 0.0
    %2257 = vmatpush1.msra.mxu0 0.0
    %2258 = vmatprep.subr.mxu0 0.0
    %2259 = vmatpush1.msra.mxu0 0.0
    %2260 = vmatprep.subr.mxu0 0.0
    %2261 = vmatpush1.msra.mxu0 0.0
    %2262 = vmatprep.subr.mxu0 0.0
    %2263 = vmatpush1.msra.mxu0 0.0
    %2264 = vmatprep.subr.mxu0 0.0
    %2265 = vmatpush1.msra.mxu0 0.0
    %2266 = vmatprep.subr.mxu0 0.0
    %2267 = vmatpush1.msra.mxu0 0.0
    %2268 = vmatprep.subr.mxu0 0.0
    %2269 = vmatpush1.msra.mxu0 0.0
    %2270 = vmatprep.subr.mxu0 0.0
    %2271 = vmatpush1.msra.mxu0 0.0
    %2272 = vmatprep.mubr.f32.mxu0 0.0
    %2273 = vmatmul.mubr.f32.gmra.mrb[0].mxu0 %v2206
    %v2274 = vpop.f32.mrb[0].mxu0
    %v2275 = vadd.f32 0.0, %v2274
    %v2276 = vpop.f32.mrb[0].mxu0
    %2277 = vdwg.mxu0
    %v2279 = vrot.slane %v2275, 4
    %v2281 = vadd.f32 %v1088, %v2279
    %v2283 = vrot.slane %v2201, 4
    %2284 = vrot.lane.b32.xlu0 %v2283, 32
    %v2285 = vpop.permute.xlu0 %2284
    %v2286 = vsel %vm1139, %v2285, 0
    %2288 = vmatprep.subr.mxu0 0.0
    %2289 = vmatpush1.msra.mxu0 %v1093
    %2290 = vmatprep.subr.mxu0 0.0
    %2291 = vmatpush1.msra.mxu0 %v1095
    %2292 = vmatprep.subr.mxu0 0.0
    %2293 = vmatpush1.msra.mxu0 %v1097
    %2294 = vmatprep.subr.mxu0 0.0
    %2295 = vmatpush1.msra.mxu0 %v1099
    %2296 = vmatprep.subr.mxu0 0.0
    %2297 = vmatpush1.msra.mxu0 0.0
    %2298 = vmatprep.subr.mxu0 0.0
    %2299 = vmatpush1.msra.mxu0 0.0
    %2300 = vmatprep.subr.mxu0 0.0
    %2301 = vmatpush1.msra.mxu0 0.0
    %2302 = vmatprep.subr.mxu0 0.0
    %2303 = vmatpush1.msra.mxu0 0.0
    %2304 = vmatprep.subr.mxu0 0.0
    %2305 = vmatpush1.msra.mxu0 0.0
    %2306 = vmatprep.subr.mxu0 0.0
    %2307 = vmatpush1.msra.mxu0 0.0
    %2308 = vmatprep.subr.mxu0 0.0
    %2309 = vmatpush1.msra.mxu0 0.0
    %2310 = vmatprep.subr.mxu0 0.0
    %2311 = vmatpush1.msra.mxu0 0.0
    %2312 = vmatprep.subr.mxu0 0.0
    %2313 = vmatpush1.msra.mxu0 0.0
    %2314 = vmatprep.subr.mxu0 0.0
    %2315 = vmatpush1.msra.mxu0 0.0
    %2316 = vmatprep.subr.mxu0 0.0
    %2317 = vmatpush1.msra.mxu0 0.0
    %2318 = vmatprep.subr.mxu0 0.0
    %2319 = vmatpush1.msra.mxu0 0.0
    %2320 = vmatprep.subr.mxu0 0.0
    %2321 = vmatpush1.msra.mxu0 0.0
    %2322 = vmatprep.subr.mxu0 0.0
    %2323 = vmatpush1.msra.mxu0 0.0
    %2324 = vmatprep.subr.mxu0 0.0
    %2325 = vmatpush1.msra.mxu0 0.0
    %2326 = vmatprep.subr.mxu0 0.0
    %2327 = vmatpush1.msra.mxu0 0.0
    %2328 = vmatprep.subr.mxu0 0.0
    %2329 = vmatpush1.msra.mxu0 0.0
    %2330 = vmatprep.subr.mxu0 0.0
    %2331 = vmatpush1.msra.mxu0 0.0
    %2332 = vmatprep.subr.mxu0 0.0
    %2333 = vmatpush1.msra.mxu0 0.0
    %2334 = vmatprep.subr.mxu0 0.0
    %2335 = vmatpush1.msra.mxu0 0.0
    %2336 = vmatprep.subr.mxu0 0.0
    %2337 = vmatpush1.msra.mxu0 0.0
    %2338 = vmatprep.subr.mxu0 0.0
    %2339 = vmatpush1.msra.mxu0 0.0
    %2340 = vmatprep.subr.mxu0 0.0
    %2341 = vmatpush1.msra.mxu0 0.0
    %2342 = vmatprep.subr.mxu0 0.0
    %2343 = vmatpush1.msra.mxu0 0.0
    %2344 = vmatprep.subr.mxu0 0.0
    %2345 = vmatpush1.msra.mxu0 0.0
    %2346 = vmatprep.subr.mxu0 0.0
    %2347 = vmatpush1.msra.mxu0 0.0
    %2348 = vmatprep.subr.mxu0 0.0
    %2349 = vmatpush1.msra.mxu0 0.0
    %2350 = vmatprep.subr.mxu0 0.0
    %2351 = vmatpush1.msra.mxu0 0.0
    %2352 = vmatprep.mubr.f32.mxu0 0.0
    %2353 = vmatmul.mubr.f32.gmra.mrb[0].mxu0 %v2286
    %v2354 = vpop.f32.mrb[0].mxu0
    %v2355 = vadd.f32 0.0, %v2354
    %v2356 = vpop.f32.mrb[0].mxu0
    %2357 = vdwg.mxu0
    %v2359 = vrot.slane %v2355, 6
    %v2361 = vadd.f32 %v1084, %v2359
    %v2362 = vxor.u32 %v2281, 2147483648
    %v2363 = vmul.f32 %v2362, 1.442695
    %v2364 = vpow.pop %v2363
    %v2365 = vadd.f32 %v2364, 1.0
    %v2366 = vrcp.pop %v2365
    %v2367 = vmul.f32 1.0, %v2366
    %v2368 = vtanh.pop %v2281
    %v2370 = vrot.slane %v2168, 6
    %v2372 = vmul.f32 %v2367, %v2370
    %2374 = vrot.lane.b32.xlu0 %v2368, 64
    %v2375 = vpop.permute.xlu0 %2374
    %v2377 = vmul.f32 %v2367, %v2375
    %2379 = vrot.lane.b32.xlu0 %v2377, 32
    %v2380 = vpop.permute.xlu0 %2379
    %v2382 = vadd.f32 %v2372, %v2380
    %v2383 = vtanh.pop %v2382
    %2385 = vrot.lane.b32.xlu0 %v2383, 64
    %v2386 = vpop.permute.xlu0 %2385
    %v2388 = vmul.f32 %v2367, %v2386
    %v2389 = vxor.u32 %v2361, 2147483648
    %v2390 = vmul.f32 %v2389, 1.442695
    %v2391 = vpow.pop %v2390
    %v2392 = vadd.f32 %v2391, 1.0
    %v2393 = vrcp.pop %v2392
    %v2394 = vmul.f32 1.0, %v2393
    %v2395 = vtanh.pop %v2361
    %v2397 = vrot.slane %v2195, 2
    %v2399 = vmul.f32 %v2394, %v2397
    %2401 = vrot.lane.b32.xlu0 %v2395, 64
    %v2402 = vpop.permute.xlu0 %2401
    %v2404 = vmul.f32 %v2394, %v2402
    %2406 = vrot.lane.b32.xlu0 %v2404, 32
    %v2407 = vpop.permute.xlu0 %2406
    %v2409 = vadd.f32 %v2399, %v2407
    %v2410 = vtanh.pop %v2409
    %2412 = vrot.lane.b32.xlu0 %v2410, 64
    %v2413 = vpop.permute.xlu0 %2412
    %v2415 = vmul.f32 %v2394, %v2413
    %v2417 = vrot.slane %v2388, 4
    %2418 = vrot.lane.b32.xlu0 %v2417, 32
    %v2419 = vpop.permute.xlu0 %2418
    %v2420 = vsel %vm1139, %v2419, 0
    %2422 = vmatprep.subr.mxu0 0.0
    %2423 = vmatpush1.msra.mxu0 %v1092
    %2424 = vmatprep.subr.mxu0 0.0
    %2425 = vmatpush1.msra.mxu0 %v1094
    %2426 = vmatprep.subr.mxu0 0.0
    %2427 = vmatpush1.msra.mxu0 %v1096
    %2428 = vmatprep.subr.mxu0 0.0
    %2429 = vmatpush1.msra.mxu0 %v1098
    %2430 = vmatprep.subr.mxu0 0.0
    %2431 = vmatpush1.msra.mxu0 0.0
    %2432 = vmatprep.subr.mxu0 0.0
    %2433 = vmatpush1.msra.mxu0 0.0
    %2434 = vmatprep.subr.mxu0 0.0
    %2435 = vmatpush1.msra.mxu0 0.0
    %2436 = vmatprep.subr.mxu0 0.0
    %2437 = vmatpush1.msra.mxu0 0.0
    %2438 = vmatprep.subr.mxu0 0.0
    %2439 = vmatpush1.msra.mxu0 0.0
    %2440 = vmatprep.subr.mxu0 0.0
    %2441 = vmatpush1.msra.mxu0 0.0
    %2442 = vmatprep.subr.mxu0 0.0
    %2443 = vmatpush1.msra.mxu0 0.0
    %2444 = vmatprep.subr.mxu0 0.0
    %2445 = vmatpush1.msra.mxu0 0.0
    %2446 = vmatprep.subr.mxu0 0.0
    %2447 = vmatpush1.msra.mxu0 0.0
    %2448 = vmatprep.subr.mxu0 0.0
    %2449 = vmatpush1.msra.mxu0 0.0
    %2450 = vmatprep.subr.mxu0 0.0
    %2451 = vmatpush1.msra.mxu0 0.0
    %2452 = vmatprep.subr.mxu0 0.0
    %2453 = vmatpush1.msra.mxu0 0.0
    %2454 = vmatprep.subr.mxu0 0.0
    %2455 = vmatpush1.msra.mxu0 0.0
    %2456 = vmatprep.subr.mxu0 0.0
    %2457 = vmatpush1.msra.mxu0 0.0
    %2458 = vmatprep.subr.mxu0 0.0
    %2459 = vmatpush1.msra.mxu0 0.0
    %2460 = vmatprep.subr.mxu0 0.0
    %2461 = vmatpush1.msra.mxu0 0.0
    %2462 = vmatprep.subr.mxu0 0.0
    %2463 = vmatpush1.msra.mxu0 0.0
    %2464 = vmatprep.subr.mxu0 0.0
    %2465 = vmatpush1.msra.mxu0 0.0
    %2466 = vmatprep.subr.mxu0 0.0
    %2467 = vmatpush1.msra.mxu0 0.0
    %2468 = vmatprep.subr.mxu0 0.0
    %2469 = vmatpush1.msra.mxu0 0.0
    %2470 = vmatprep.subr.mxu0 0.0
    %2471 = vmatpush1.msra.mxu0 0.0
    %2472 = vmatprep.subr.mxu0 0.0
    %2473 = vmatpush1.msra.mxu0 0.0
    %2474 = vmatprep.subr.mxu0 0.0
    %2475 = vmatpush1.msra.mxu0 0.0
    %2476 = vmatprep.subr.mxu0 0.0
    %2477 = vmatpush1.msra.mxu0 0.0
    %2478 = vmatprep.subr.mxu0 0.0
    %2479 = vmatpush1.msra.mxu0 0.0
    %2480 = vmatprep.subr.mxu0 0.0
    %2481 = vmatpush1.msra.mxu0 0.0
    %2482 = vmatprep.subr.mxu0 0.0
    %2483 = vmatpush1.msra.mxu0 0.0
    %2484 = vmatprep.subr.mxu0 0.0
    %2485 = vmatpush1.msra.mxu0 0.0
    %2486 = vmatprep.mubr.f32.mxu0 0.0
    %2487 = vmatmul.mubr.f32.gmra.mrb[0].mxu0 %v2420
    %v2488 = vpop.f32.mrb[0].mxu0
    %v2489 = vadd.f32 0.0, %v2488
    %v2490 = vpop.f32.mrb[0].mxu0
    %2491 = vdwg.mxu0
    %v2493 = vrot.slane %v2489, 2
    %v2495 = vadd.f32 %v1088, %v2493
    %v2497 = vrot.slane %v2415, 2
    %2498 = vrot.lane.b32.xlu0 %v2497, 32
    %v2499 = vpop.permute.xlu0 %2498
    %v2500 = vsel %vm1139, %v2499, 0
    %2502 = vmatprep.subr.mxu0 0.0
    %2503 = vmatpush1.msra.mxu0 %v1093
    %2504 = vmatprep.subr.mxu0 0.0
    %2505 = vmatpush1.msra.mxu0 %v1095
    %2506 = vmatprep.subr.mxu0 0.0
    %2507 = vmatpush1.msra.mxu0 %v1097
    %2508 = vmatprep.subr.mxu0 0.0
    %2509 = vmatpush1.msra.mxu0 %v1099
    %2510 = vmatprep.subr.mxu0 0.0
    %2511 = vmatpush1.msra.mxu0 0.0
    %2512 = vmatprep.subr.mxu0 0.0
    %2513 = vmatpush1.msra.mxu0 0.0
    %2514 = vmatprep.subr.mxu0 0.0
    %2515 = vmatpush1.msra.mxu0 0.0
    %2516 = vmatprep.subr.mxu0 0.0
    %2517 = vmatpush1.msra.mxu0 0.0
    %2518 = vmatprep.subr.mxu0 0.0
    %2519 = vmatpush1.msra.mxu0 0.0
    %2520 = vmatprep.subr.mxu0 0.0
    %2521 = vmatpush1.msra.mxu0 0.0
    %2522 = vmatprep.subr.mxu0 0.0
    %2523 = vmatpush1.msra.mxu0 0.0
    %2524 = vmatprep.subr.mxu0 0.0
    %2525 = vmatpush1.msra.mxu0 0.0
    %2526 = vmatprep.subr.mxu0 0.0
    %2527 = vmatpush1.msra.mxu0 0.0
    %2528 = vmatprep.subr.mxu0 0.0
    %2529 = vmatpush1.msra.mxu0 0.0
    %2530 = vmatprep.subr.mxu0 0.0
    %2531 = vmatpush1.msra.mxu0 0.0
    %2532 = vmatprep.subr.mxu0 0.0
    %2533 = vmatpush1.msra.mxu0 0.0
    %2534 = vmatprep.subr.mxu0 0.0
    %2535 = vmatpush1.msra.mxu0 0.0
    %2536 = vmatprep.subr.mxu0 0.0
    %2537 = vmatpush1.msra.mxu0 0.0
    %2538 = vmatprep.subr.mxu0 0.0
    %2539 = vmatpush1.msra.mxu0 0.0
    %2540 = vmatprep.subr.mxu0 0.0
    %2541 = vmatpush1.msra.mxu0 0.0
    %2542 = vmatprep.subr.mxu0 0.0
    %2543 = vmatpush1.msra.mxu0 0.0
    %2544 = vmatprep.subr.mxu0 0.0
    %2545 = vmatpush1.msra.mxu0 0.0
    %2546 = vmatprep.subr.mxu0 0.0
    %2547 = vmatpush1.msra.mxu0 0.0
    %2548 = vmatprep.subr.mxu0 0.0
    %2549 = vmatpush1.msra.mxu0 0.0
    %2550 = vmatprep.subr.mxu0 0.0
    %2551 = vmatpush1.msra.mxu0 0.0
    %2552 = vmatprep.subr.mxu0 0.0
    %2553 = vmatpush1.msra.mxu0 0.0
    %2554 = vmatprep.subr.mxu0 0.0
    %2555 = vmatpush1.msra.mxu0 0.0
    %2556 = vmatprep.subr.mxu0 0.0
    %2557 = vmatpush1.msra.mxu0 0.0
    %2558 = vmatprep.subr.mxu0 0.0
    %2559 = vmatpush1.msra.mxu0 0.0
    %2560 = vmatprep.subr.mxu0 0.0
    %2561 = vmatpush1.msra.mxu0 0.0
    %2562 = vmatprep.subr.mxu0 0.0
    %2563 = vmatpush1.msra.mxu0 0.0
    %2564 = vmatprep.subr.mxu0 0.0
    %2565 = vmatpush1.msra.mxu0 0.0
    %2566 = vmatprep.mubr.f32.mxu0 0.0
    %2567 = vmatmul.mubr.f32.gmra.mrb[0].mxu0 %v2500
    %v2568 = vpop.f32.mrb[0].mxu0
    %v2569 = vadd.f32 0.0, %v2568
    %v2570 = vpop.f32.mrb[0].mxu0
    %2571 = vdwg.mxu0
    %v2572 = vadd.f32 %v1084, %v2569
    %v2573 = vxor.u32 %v2495, 2147483648
    %v2574 = vmul.f32 %v2573, 1.442695
    %v2575 = vpow.pop %v2574
    %v2576 = vadd.f32 %v2575, 1.0
    %v2577 = vrcp.pop %v2576
    %v2578 = vmul.f32 1.0, %v2577
    %v2579 = vtanh.pop %v2495
    %v2581 = vrot.slane %v2382, 6
    %v2583 = vmul.f32 %v2578, %v2581
    %2585 = vrot.lane.b32.xlu0 %v2579, 64
    %v2586 = vpop.permute.xlu0 %2585
    %v2588 = vmul.f32 %v2578, %v2586
    %2590 = vrot.lane.b32.xlu0 %v2588, 32
    %v2591 = vpop.permute.xlu0 %2590
    %v2593 = vadd.f32 %v2583, %v2591
    %v2594 = vtanh.pop %v2593
    %2596 = vrot.lane.b32.xlu0 %v2594, 64
    %v2597 = vpop.permute.xlu0 %2596
    %v2599 = vmul.f32 %v2578, %v2597
    %v2600 = vxor.u32 %v2572, 2147483648
    %v2601 = vmul.f32 %v2600, 1.442695
    %v2602 = vpow.pop %v2601
    %v2603 = vadd.f32 %v2602, 1.0
    %v2604 = vrcp.pop %v2603
    %v2605 = vmul.f32 1.0, %v2604
    %v2606 = vtanh.pop %v2572
    %v2608 = vrot.slane %v2409, 2
    %v2610 = vmul.f32 %v2605, %v2608
    %2612 = vrot.lane.b32.xlu0 %v2606, 64
    %v2613 = vpop.permute.xlu0 %2612
    %v2615 = vmul.f32 %v2605, %v2613
    %2617 = vrot.lane.b32.xlu0 %v2615, 32
    %v2618 = vpop.permute.xlu0 %2617
    %v2620 = vadd.f32 %v2610, %v2618
    %v2621 = vtanh.pop %v2620
    %2623 = vrot.lane.b32.xlu0 %v2621, 64
    %v2624 = vpop.permute.xlu0 %2623
    %v2626 = vmul.f32 %v2605, %v2624
    %vm2627 = vcmask 1041408
    %v2628 = vsel %vm2627, %v1117, %v1324
    %vm2629 = vcmask 1043456
    %v2630 = vsel %vm2629, %v2628, %v1540
    %vm2631 = vcmask 1045504
    %v2632 = vsel %vm2631, %v2630, %v1751
    %v2633 = vsel %vm2627, %v1961, %v2174
    %v2634 = vsel %vm2629, %v2633, %v2388
    %v2635 = vsel %vm2631, %v2634, %v2599
    %v2636 = vsel %vm2627, %v2626, %v2415
    %v2637 = vsel %vm2629, %v2636, %v2201
    %v2638 = vsel %vm2631, %v2637, %v1988
    %v2639 = vsel %vm2627, %v1778, %v1567
    %v2640 = vsel %vm2629, %v2639, %v1353
    %v2641 = vsel %vm2631, %v2640, %v1135
    %2644 = vrot.lane.b32.xlu0 %v2632, 32
    %v2645 = vpop.permute.xlu0 %2644
    %2646 = vrot.lane.b32.xlu0 %v2635, 32
    %v2647 = vpop.permute.xlu0 %2646
    %2652 = vrot.lane.b32.xlu0 %v2638, 64
    %v2653 = vpop.permute.xlu0 %2652
    %2654 = vrot.lane.b32.xlu0 %v2641, 64
    %v2655 = vpop.permute.xlu0 %2654
    %v2658 = vsel %vm1139, %v2645, %v2653
    %v2659 = vsel %vm1139, %v2647, %v2655
    %v2660 = vld [vmem:[%s31] sm:$0xff]
    %v2661 = vld [vmem:[%s31 + $0x8] sm:$0xff]
    %v2662 = vld [vmem:[%s31 + $0x10] sm:$0xff]
    %v2663 = vld [vmem:[%s31 + $0x18] sm:$0xff]
    %v2664 = vld [vmem:[%s31 + $0x20] sm:$0xff]
    %v2665 = vld [vmem:[%s31 + $0x28] sm:$0xff]
    %v2666 = vld [vmem:[%s31 + $0x30] sm:$0xff]
    %v2667 = vld [vmem:[%s31 + $0x38] sm:$0xff]
    %v2668 = vld [vmem:[%s31 + $0x40] sm:$0xff]
    %v2669 = vld [vmem:[%s31 + $0x48] sm:$0xff]
    %v2670 = vld [vmem:[%s31 + $0x50] sm:$0xff]
    %v2671 = vld [vmem:[%s31 + $0x58] sm:$0xff]
    %v2672 = vld [vmem:[%s31 + $0x60] sm:$0xff]
    %v2673 = vld [vmem:[%s31 + $0x68] sm:$0xff]
    %v2674 = vld [vmem:[%s31 + $0x70] sm:$0xff]
    %v2675 = vld [vmem:[%s31 + $0x78] sm:$0xff]
    %v2676 = vld [vmem:[%s35] sm:$0x3]
    %v2678 = vlaneseq
    %v2679 = vshrl.u32 %v2678, 7
    %v2680 = vsub.s32 0, %v2679
    %v2681 = vrot.slane %v2676, %v2680
    %v2682 = vlaneseq
    %v2683 = vshrl.u32 %v2682, 7
    %v2684 = vsub.s32 1, %v2683
    %v2685 = vrot.slane %v2676, %v2684
    %v2689 = vsel %vm307, %v2658, 0
    %v2692 = vsel %vm307, %v2659, 0
    %2694 = vmatprep.subr.mxu0 %v2661
    %2695 = vmatpush1.msra.mxu0 %v2660
    %2696 = vmatprep.subr.mxu0 %v2663
    %2697 = vmatpush1.msra.mxu0 %v2662
    %2698 = vmatprep.subr.mxu0 %v2665
    %2699 = vmatpush1.msra.mxu0 %v2664
    %2700 = vmatprep.subr.mxu0 %v2667
    %2701 = vmatpush1.msra.mxu0 %v2666
    %2702 = vmatprep.subr.mxu0 %v2669
    %2703 = vmatpush1.msra.mxu0 %v2668
    %2704 = vmatprep.subr.mxu0 %v2671
    %2705 = vmatpush1.msra.mxu0 %v2670
    %2706 = vmatprep.subr.mxu0 %v2673
    %2707 = vmatpush1.msra.mxu0 %v2672
    %2708 = vmatprep.subr.mxu0 %v2675
    %2709 = vmatpush1.msra.mxu0 %v2674
    %2710 = vmatprep.subr.mxu0 0.0
    %2711 = vmatpush1.msra.mxu0 0.0
    %2712 = vmatprep.subr.mxu0 0.0
    %2713 = vmatpush1.msra.mxu0 0.0
    %2714 = vmatprep.subr.mxu0 0.0
    %2715 = vmatpush1.msra.mxu0 0.0
    %2716 = vmatprep.subr.mxu0 0.0
    %2717 = vmatpush1.msra.mxu0 0.0
    %2718 = vmatprep.subr.mxu0 0.0
    %2719 = vmatpush1.msra.mxu0 0.0
    %2720 = vmatprep.subr.mxu0 0.0
    %2721 = vmatpush1.msra.mxu0 0.0
    %2722 = vmatprep.subr.mxu0 0.0
    %2723 = vmatpush1.msra.mxu0 0.0
    %2724 = vmatprep.subr.mxu0 0.0
    %2725 = vmatpush1.msra.mxu0 0.0
    %2726 = vmatprep.subr.mxu0 0.0
    %2727 = vmatpush1.msra.mxu0 0.0
    %2728 = vmatprep.subr.mxu0 0.0
    %2729 = vmatpush1.msra.mxu0 0.0
    %2730 = vmatprep.subr.mxu0 0.0
    %2731 = vmatpush1.msra.mxu0 0.0
    %2732 = vmatprep.subr.mxu0 0.0
    %2733 = vmatpush1.msra.mxu0 0.0
    %2734 = vmatprep.subr.mxu0 0.0
    %2735 = vmatpush1.msra.mxu0 0.0
    %2736 = vmatprep.subr.mxu0 0.0
    %2737 = vmatpush1.msra.mxu0 0.0
    %2738 = vmatprep.subr.mxu0 0.0
    %2739 = vmatpush1.msra.mxu0 0.0
    %2740 = vmatprep.subr.mxu0 0.0
    %2741 = vmatpush1.msra.mxu0 0.0
    %2742 = vmatprep.subr.mxu0 0.0
    %2743 = vmatpush1.msra.mxu0 0.0
    %2744 = vmatprep.subr.mxu0 0.0
    %2745 = vmatpush1.msra.mxu0 0.0
    %2746 = vmatprep.subr.mxu0 0.0
    %2747 = vmatpush1.msra.mxu0 0.0
    %2748 = vmatprep.subr.mxu0 0.0
    %2749 = vmatpush1.msra.mxu0 0.0
    %2750 = vmatprep.subr.mxu0 0.0
    %2751 = vmatpush1.msra.mxu0 0.0
    %2752 = vmatprep.subr.mxu0 0.0
    %2753 = vmatpush1.msra.mxu0 0.0
    %2754 = vmatprep.subr.mxu0 0.0
    %2755 = vmatpush1.msra.mxu0 0.0
    %2756 = vmatprep.subr.mxu0 0.0
    %2757 = vmatpush1.msra.mxu0 0.0
    %2758 = vmatprep.mubr.f32.mxu0 0.0
    %2759 = vmatmul.mubr.f32.gmra.mrb[0].mxu0 %v2689
    %v2760 = vpop.f32.mrb[0].mxu0
    %v2761 = vadd.f32 %v2681, %v2760
    %v2762 = vpop.f32.mrb[0].mxu0
    %v2763 = vadd.f32 %v2685, %v2762
    %2764 = vmatprep.mubr.f32.mxu0 0.0
    %2765 = vmatmul.mubr.f32.gmra.mrb[0].mxu0 %v2692
    %v2766 = vpop.f32.mrb[0].mxu0
    %v2767 = vadd.f32 %v2681, %v2766
    %v2768 = vpop.f32.mrb[0].mxu0
    %v2769 = vadd.f32 %v2685, %v2768
    %2770 = vdwg.mxu0
    %v2771 = vld [vmem:[%s33] sm:$0xff]
    %v2772 = vld [vmem:[%s33 + $0x8] sm:$0xff]
    %v2773 = vld [vmem:[%s33 + $0x10] sm:$0xff]
    %v2774 = vld [vmem:[%s33 + $0x18] sm:$0xff]
    %v2775 = vld [vmem:[%s33 + $0x20] sm:$0xff]
    %v2776 = vld [vmem:[%s33 + $0x28] sm:$0xff]
    %v2777 = vld [vmem:[%s33 + $0x30] sm:$0xff]
    %v2778 = vld [vmem:[%s33 + $0x38] sm:$0xff]
    %v2779 = vxor.u32 %v2761, 2147483648
    %v2780 = vmul.f32 %v2779, 1.442695
    %v2781 = vpow.pop %v2780
    %v2782 = vadd.f32 %v2781, 1.0
    %v2783 = vrcp.pop %v2782
    %v2784 = vmul.f32 1.0, %v2783
    %v2785 = vtanh.pop %v2761
    %2787 = vrot.lane.b32.xlu0 %v2785, 64
    %v2788 = vpop.permute.xlu0 %2787
    %v2790 = vmul.f32 %v2784, %v2788
    %v2791 = vtanh.pop %v2790
    %2793 = vrot.lane.b32.xlu0 %v2791, 96
    %v2794 = vpop.permute.xlu0 %2793
    %v2796 = vmul.f32 %v2784, %v2794
    %v2797 = vxor.u32 %v2769, 2147483648
    %v2798 = vmul.f32 %v2797, 1.442695
    %v2799 = vpow.pop %v2798
    %v2800 = vadd.f32 %v2799, 1.0
    %v2801 = vrcp.pop %v2800
    %v2802 = vmul.f32 1.0, %v2801
    %v2803 = vtanh.pop %v2769
    %2805 = vrot.lane.b32.xlu0 %v2803, 64
    %v2806 = vpop.permute.xlu0 %2805
    %v2808 = vmul.f32 %v2802, %v2806
    %v2809 = vtanh.pop %v2808
    %2811 = vrot.lane.b32.xlu0 %v2809, 96
    %v2812 = vpop.permute.xlu0 %2811
    %v2814 = vmul.f32 %v2802, %v2812
    %2816 = vrot.lane.b32.xlu0 %v2796, 32
    %v2817 = vpop.permute.xlu0 %2816
    %v2818 = vsel %vm1139, %v2817, 0
    %2820 = vmatprep.subr.mxu0 0.0
    %2821 = vmatpush1.msra.mxu0 %v2771
    %2822 = vmatprep.subr.mxu0 0.0
    %2823 = vmatpush1.msra.mxu0 %v2773
    %2824 = vmatprep.subr.mxu0 0.0
    %2825 = vmatpush1.msra.mxu0 %v2775
    %2826 = vmatprep.subr.mxu0 0.0
    %2827 = vmatpush1.msra.mxu0 %v2777
    %2828 = vmatprep.subr.mxu0 0.0
    %2829 = vmatpush1.msra.mxu0 0.0
    %2830 = vmatprep.subr.mxu0 0.0
    %2831 = vmatpush1.msra.mxu0 0.0
    %2832 = vmatprep.subr.mxu0 0.0
    %2833 = vmatpush1.msra.mxu0 0.0
    %2834 = vmatprep.subr.mxu0 0.0
    %2835 = vmatpush1.msra.mxu0 0.0
    %2836 = vmatprep.subr.mxu0 0.0
    %2837 = vmatpush1.msra.mxu0 0.0
    %2838 = vmatprep.subr.mxu0 0.0
    %2839 = vmatpush1.msra.mxu0 0.0
    %2840 = vmatprep.subr.mxu0 0.0
    %2841 = vmatpush1.msra.mxu0 0.0
    %2842 = vmatprep.subr.mxu0 0.0
    %2843 = vmatpush1.msra.mxu0 0.0
    %2844 = vmatprep.subr.mxu0 0.0
    %2845 = vmatpush1.msra.mxu0 0.0
    %2846 = vmatprep.subr.mxu0 0.0
    %2847 = vmatpush1.msra.mxu0 0.0
    %2848 = vmatprep.subr.mxu0 0.0
    %2849 = vmatpush1.msra.mxu0 0.0
    %2850 = vmatprep.subr.mxu0 0.0
    %2851 = vmatpush1.msra.mxu0 0.0
    %2852 = vmatprep.subr.mxu0 0.0
    %2853 = vmatpush1.msra.mxu0 0.0
    %2854 = vmatprep.subr.mxu0 0.0
    %2855 = vmatpush1.msra.mxu0 0.0
    %2856 = vmatprep.subr.mxu0 0.0
    %2857 = vmatpush1.msra.mxu0 0.0
    %2858 = vmatprep.subr.mxu0 0.0
    %2859 = vmatpush1.msra.mxu0 0.0
    %2860 = vmatprep.subr.mxu0 0.0
    %2861 = vmatpush1.msra.mxu0 0.0
    %2862 = vmatprep.subr.mxu0 0.0
    %2863 = vmatpush1.msra.mxu0 0.0
    %2864 = vmatprep.subr.mxu0 0.0
    %2865 = vmatpush1.msra.mxu0 0.0
    %2866 = vmatprep.subr.mxu0 0.0
    %2867 = vmatpush1.msra.mxu0 0.0
    %2868 = vmatprep.subr.mxu0 0.0
    %2869 = vmatpush1.msra.mxu0 0.0
    %2870 = vmatprep.subr.mxu0 0.0
    %2871 = vmatpush1.msra.mxu0 0.0
    %2872 = vmatprep.subr.mxu0 0.0
    %2873 = vmatpush1.msra.mxu0 0.0
    %2874 = vmatprep.subr.mxu0 0.0
    %2875 = vmatpush1.msra.mxu0 0.0
    %2876 = vmatprep.subr.mxu0 0.0
    %2877 = vmatpush1.msra.mxu0 0.0
    %2878 = vmatprep.subr.mxu0 0.0
    %2879 = vmatpush1.msra.mxu0 0.0
    %2880 = vmatprep.subr.mxu0 0.0
    %2881 = vmatpush1.msra.mxu0 0.0
    %2882 = vmatprep.subr.mxu0 0.0
    %2883 = vmatpush1.msra.mxu0 0.0
    %2884 = vmatprep.mubr.f32.mxu0 0.0
    %2885 = vmatmul.mubr.f32.gmra.mrb[0].mxu0 %v2818
    %v2886 = vpop.f32.mrb[0].mxu0
    %v2887 = vadd.f32 0.0, %v2886
    %v2888 = vpop.f32.mrb[0].mxu0
    %2889 = vdwg.mxu0
    %v2891 = vrot.slane %v2887, 6
    %v2893 = vadd.f32 %v2761, %v2891
    %v2895 = vrot.slane %v2814, 6
    %2896 = vrot.lane.b32.xlu0 %v2895, 32
    %v2897 = vpop.permute.xlu0 %2896
    %v2898 = vsel %vm1139, %v2897, 0
    %2900 = vmatprep.subr.mxu0 0.0
    %2901 = vmatpush1.msra.mxu0 %v2772
    %2902 = vmatprep.subr.mxu0 0.0
    %2903 = vmatpush1.msra.mxu0 %v2774
    %2904 = vmatprep.subr.mxu0 0.0
    %2905 = vmatpush1.msra.mxu0 %v2776
    %2906 = vmatprep.subr.mxu0 0.0
    %2907 = vmatpush1.msra.mxu0 %v2778
    %2908 = vmatprep.subr.mxu0 0.0
    %2909 = vmatpush1.msra.mxu0 0.0
    %2910 = vmatprep.subr.mxu0 0.0
    %2911 = vmatpush1.msra.mxu0 0.0
    %2912 = vmatprep.subr.mxu0 0.0
    %2913 = vmatpush1.msra.mxu0 0.0
    %2914 = vmatprep.subr.mxu0 0.0
    %2915 = vmatpush1.msra.mxu0 0.0
    %2916 = vmatprep.subr.mxu0 0.0
    %2917 = vmatpush1.msra.mxu0 0.0
    %2918 = vmatprep.subr.mxu0 0.0
    %2919 = vmatpush1.msra.mxu0 0.0
    %2920 = vmatprep.subr.mxu0 0.0
    %2921 = vmatpush1.msra.mxu0 0.0
    %2922 = vmatprep.subr.mxu0 0.0
    %2923 = vmatpush1.msra.mxu0 0.0
    %2924 = vmatprep.subr.mxu0 0.0
    %2925 = vmatpush1.msra.mxu0 0.0
    %2926 = vmatprep.subr.mxu0 0.0
    %2927 = vmatpush1.msra.mxu0 0.0
    %2928 = vmatprep.subr.mxu0 0.0
    %2929 = vmatpush1.msra.mxu0 0.0
    %2930 = vmatprep.subr.mxu0 0.0
    %2931 = vmatpush1.msra.mxu0 0.0
    %2932 = vmatprep.subr.mxu0 0.0
    %2933 = vmatpush1.msra.mxu0 0.0
    %2934 = vmatprep.subr.mxu0 0.0
    %2935 = vmatpush1.msra.mxu0 0.0
    %2936 = vmatprep.subr.mxu0 0.0
    %2937 = vmatpush1.msra.mxu0 0.0
    %2938 = vmatprep.subr.mxu0 0.0
    %2939 = vmatpush1.msra.mxu0 0.0
    %2940 = vmatprep.subr.mxu0 0.0
    %2941 = vmatpush1.msra.mxu0 0.0
    %2942 = vmatprep.subr.mxu0 0.0
    %2943 = vmatpush1.msra.mxu0 0.0
    %2944 = vmatprep.subr.mxu0 0.0
    %2945 = vmatpush1.msra.mxu0 0.0
    %2946 = vmatprep.subr.mxu0 0.0
    %2947 = vmatpush1.msra.mxu0 0.0
    %2948 = vmatprep.subr.mxu0 0.0
    %2949 = vmatpush1.msra.mxu0 0.0
    %2950 = vmatprep.subr.mxu0 0.0
    %2951 = vmatpush1.msra.mxu0 0.0
    %2952 = vmatprep.subr.mxu0 0.0
    %2953 = vmatpush1.msra.mxu0 0.0
    %2954 = vmatprep.subr.mxu0 0.0
    %2955 = vmatpush1.msra.mxu0 0.0
    %2956 = vmatprep.subr.mxu0 0.0
    %2957 = vmatpush1.msra.mxu0 0.0
    %2958 = vmatprep.subr.mxu0 0.0
    %2959 = vmatpush1.msra.mxu0 0.0
    %2960 = vmatprep.subr.mxu0 0.0
    %2961 = vmatpush1.msra.mxu0 0.0
    %2962 = vmatprep.subr.mxu0 0.0
    %2963 = vmatpush1.msra.mxu0 0.0
    %2964 = vmatprep.mubr.f32.mxu0 0.0
    %2965 = vmatmul.mubr.f32.gmra.mrb[0].mxu0 %v2898
    %v2966 = vpop.f32.mrb[0].mxu0
    %v2967 = vadd.f32 0.0, %v2966
    %v2968 = vpop.f32.mrb[0].mxu0
    %2969 = vdwg.mxu0
    %v2971 = vrot.slane %v2967, 4
    %v2973 = vadd.f32 %v2769, %v2971
    %v2974 = vxor.u32 %v2893, 2147483648
    %v2975 = vmul.f32 %v2974, 1.442695
    %v2976 = vpow.pop %v2975
    %v2977 = vadd.f32 %v2976, 1.0
    %v2978 = vrcp.pop %v2977
    %v2979 = vmul.f32 1.0, %v2978
    %v2980 = vtanh.pop %v2893
    %v2982 = vrot.slane %v2790, 6
    %2983 = vrot.lane.b32.xlu0 %v2982, 32
    %v2984 = vpop.permute.xlu0 %2983
    %v2986 = vmul.f32 %v2979, %v2984
    %2988 = vrot.lane.b32.xlu0 %v2980, 64
    %v2989 = vpop.permute.xlu0 %2988
    %v2991 = vmul.f32 %v2979, %v2989
    %2993 = vrot.lane.b32.xlu0 %v2991, 32
    %v2994 = vpop.permute.xlu0 %2993
    %v2996 = vadd.f32 %v2986, %v2994
    %v2997 = vtanh.pop %v2996
    %2999 = vrot.lane.b32.xlu0 %v2997, 64
    %v3000 = vpop.permute.xlu0 %2999
    %v3002 = vmul.f32 %v2979, %v3000
    %v3003 = vxor.u32 %v2973, 2147483648
    %v3004 = vmul.f32 %v3003, 1.442695
    %v3005 = vpow.pop %v3004
    %v3006 = vadd.f32 %v3005, 1.0
    %v3007 = vrcp.pop %v3006
    %v3008 = vmul.f32 1.0, %v3007
    %v3009 = vtanh.pop %v2973
    %v3011 = vrot.slane %v2808, 2
    %3012 = vrot.lane.b32.xlu0 %v3011, 32
    %v3013 = vpop.permute.xlu0 %3012
    %v3015 = vmul.f32 %v3008, %v3013
    %3017 = vrot.lane.b32.xlu0 %v3009, 64
    %v3018 = vpop.permute.xlu0 %3017
    %v3020 = vmul.f32 %v3008, %v3018
    %3022 = vrot.lane.b32.xlu0 %v3020, 32
    %v3023 = vpop.permute.xlu0 %3022
    %v3025 = vadd.f32 %v3015, %v3023
    %v3026 = vtanh.pop %v3025
    %3028 = vrot.lane.b32.xlu0 %v3026, 64
    %v3029 = vpop.permute.xlu0 %3028
    %v3031 = vmul.f32 %v3008, %v3029
    %v3033 = vrot.slane %v3002, 2
    %3034 = vrot.lane.b32.xlu0 %v3033, 32
    %v3035 = vpop.permute.xlu0 %3034
    %v3036 = vsel %vm1139, %v3035, 0
    %3038 = vmatprep.subr.mxu0 0.0
    %3039 = vmatpush1.msra.mxu0 %v2771
    %3040 = vmatprep.subr.mxu0 0.0
    %3041 = vmatpush1.msra.mxu0 %v2773
    %3042 = vmatprep.subr.mxu0 0.0
    %3043 = vmatpush1.msra.mxu0 %v2775
    %3044 = vmatprep.subr.mxu0 0.0
    %3045 = vmatpush1.msra.mxu0 %v2777
    %3046 = vmatprep.subr.mxu0 0.0
    %3047 = vmatpush1.msra.mxu0 0.0
    %3048 = vmatprep.subr.mxu0 0.0
    %3049 = vmatpush1.msra.mxu0 0.0
    %3050 = vmatprep.subr.mxu0 0.0
    %3051 = vmatpush1.msra.mxu0 0.0
    %3052 = vmatprep.subr.mxu0 0.0
    %3053 = vmatpush1.msra.mxu0 0.0
    %3054 = vmatprep.subr.mxu0 0.0
    %3055 = vmatpush1.msra.mxu0 0.0
    %3056 = vmatprep.subr.mxu0 0.0
    %3057 = vmatpush1.msra.mxu0 0.0
    %3058 = vmatprep.subr.mxu0 0.0
    %3059 = vmatpush1.msra.mxu0 0.0
    %3060 = vmatprep.subr.mxu0 0.0
    %3061 = vmatpush1.msra.mxu0 0.0
    %3062 = vmatprep.subr.mxu0 0.0
    %3063 = vmatpush1.msra.mxu0 0.0
    %3064 = vmatprep.subr.mxu0 0.0
    %3065 = vmatpush1.msra.mxu0 0.0
    %3066 = vmatprep.subr.mxu0 0.0
    %3067 = vmatpush1.msra.mxu0 0.0
    %3068 = vmatprep.subr.mxu0 0.0
    %3069 = vmatpush1.msra.mxu0 0.0
    %3070 = vmatprep.subr.mxu0 0.0
    %3071 = vmatpush1.msra.mxu0 0.0
    %3072 = vmatprep.subr.mxu0 0.0
    %3073 = vmatpush1.msra.mxu0 0.0
    %3074 = vmatprep.subr.mxu0 0.0
    %3075 = vmatpush1.msra.mxu0 0.0
    %3076 = vmatprep.subr.mxu0 0.0
    %3077 = vmatpush1.msra.mxu0 0.0
    %3078 = vmatprep.subr.mxu0 0.0
    %3079 = vmatpush1.msra.mxu0 0.0
    %3080 = vmatprep.subr.mxu0 0.0
    %3081 = vmatpush1.msra.mxu0 0.0
    %3082 = vmatprep.subr.mxu0 0.0
    %3083 = vmatpush1.msra.mxu0 0.0
    %3084 = vmatprep.subr.mxu0 0.0
    %3085 = vmatpush1.msra.mxu0 0.0
    %3086 = vmatprep.subr.mxu0 0.0
    %3087 = vmatpush1.msra.mxu0 0.0
    %3088 = vmatprep.subr.mxu0 0.0
    %3089 = vmatpush1.msra.mxu0 0.0
    %3090 = vmatprep.subr.mxu0 0.0
    %3091 = vmatpush1.msra.mxu0 0.0
    %3092 = vmatprep.subr.mxu0 0.0
    %3093 = vmatpush1.msra.mxu0 0.0
    %3094 = vmatprep.subr.mxu0 0.0
    %3095 = vmatpush1.msra.mxu0 0.0
    %3096 = vmatprep.subr.mxu0 0.0
    %3097 = vmatpush1.msra.mxu0 0.0
    %3098 = vmatprep.subr.mxu0 0.0
    %3099 = vmatpush1.msra.mxu0 0.0
    %3100 = vmatprep.subr.mxu0 0.0
    %3101 = vmatpush1.msra.mxu0 0.0
    %3102 = vmatprep.mubr.f32.mxu0 0.0
    %3103 = vmatmul.mubr.f32.gmra.mrb[0].mxu0 %v3036
    %v3104 = vpop.f32.mrb[0].mxu0
    %v3105 = vadd.f32 0.0, %v3104
    %v3106 = vpop.f32.mrb[0].mxu0
    %3107 = vdwg.mxu0
    %v3109 = vrot.slane %v3105, 4
    %v3111 = vadd.f32 %v2761, %v3109
    %v3113 = vrot.slane %v3031, 4
    %3114 = vrot.lane.b32.xlu0 %v3113, 32
    %v3115 = vpop.permute.xlu0 %3114
    %v3116 = vsel %vm1139, %v3115, 0
    %3118 = vmatprep.subr.mxu0 0.0
    %3119 = vmatpush1.msra.mxu0 %v2772
    %3120 = vmatprep.subr.mxu0 0.0
    %3121 = vmatpush1.msra.mxu0 %v2774
    %3122 = vmatprep.subr.mxu0 0.0
    %3123 = vmatpush1.msra.mxu0 %v2776
    %3124 = vmatprep.subr.mxu0 0.0
    %3125 = vmatpush1.msra.mxu0 %v2778
    %3126 = vmatprep.subr.mxu0 0.0
    %3127 = vmatpush1.msra.mxu0 0.0
    %3128 = vmatprep.subr.mxu0 0.0
    %3129 = vmatpush1.msra.mxu0 0.0
    %3130 = vmatprep.subr.mxu0 0.0
    %3131 = vmatpush1.msra.mxu0 0.0
    %3132 = vmatprep.subr.mxu0 0.0
    %3133 = vmatpush1.msra.mxu0 0.0
    %3134 = vmatprep.subr.mxu0 0.0
    %3135 = vmatpush1.msra.mxu0 0.0
    %3136 = vmatprep.subr.mxu0 0.0
    %3137 = vmatpush1.msra.mxu0 0.0
    %3138 = vmatprep.subr.mxu0 0.0
    %3139 = vmatpush1.msra.mxu0 0.0
    %3140 = vmatprep.subr.mxu0 0.0
    %3141 = vmatpush1.msra.mxu0 0.0
    %3142 = vmatprep.subr.mxu0 0.0
    %3143 = vmatpush1.msra.mxu0 0.0
    %3144 = vmatprep.subr.mxu0 0.0
    %3145 = vmatpush1.msra.mxu0 0.0
    %3146 = vmatprep.subr.mxu0 0.0
    %3147 = vmatpush1.msra.mxu0 0.0
    %3148 = vmatprep.subr.mxu0 0.0
    %3149 = vmatpush1.msra.mxu0 0.0
    %3150 = vmatprep.subr.mxu0 0.0
    %3151 = vmatpush1.msra.mxu0 0.0
    %3152 = vmatprep.subr.mxu0 0.0
    %3153 = vmatpush1.msra.mxu0 0.0
    %3154 = vmatprep.subr.mxu0 0.0
    %3155 = vmatpush1.msra.mxu0 0.0
    %3156 = vmatprep.subr.mxu0 0.0
    %3157 = vmatpush1.msra.mxu0 0.0
    %3158 = vmatprep.subr.mxu0 0.0
    %3159 = vmatpush1.msra.mxu0 0.0
    %3160 = vmatprep.subr.mxu0 0.0
    %3161 = vmatpush1.msra.mxu0 0.0
    %3162 = vmatprep.subr.mxu0 0.0
    %3163 = vmatpush1.msra.mxu0 0.0
    %3164 = vmatprep.subr.mxu0 0.0
    %3165 = vmatpush1.msra.mxu0 0.0
    %3166 = vmatprep.subr.mxu0 0.0
    %3167 = vmatpush1.msra.mxu0 0.0
    %3168 = vmatprep.subr.mxu0 0.0
    %3169 = vmatpush1.msra.mxu0 0.0
    %3170 = vmatprep.subr.mxu0 0.0
    %3171 = vmatpush1.msra.mxu0 0.0
    %3172 = vmatprep.subr.mxu0 0.0
    %3173 = vmatpush1.msra.mxu0 0.0
    %3174 = vmatprep.subr.mxu0 0.0
    %3175 = vmatpush1.msra.mxu0 0.0
    %3176 = vmatprep.subr.mxu0 0.0
    %3177 = vmatpush1.msra.mxu0 0.0
    %3178 = vmatprep.subr.mxu0 0.0
    %3179 = vmatpush1.msra.mxu0 0.0
    %3180 = vmatprep.subr.mxu0 0.0
    %3181 = vmatpush1.msra.mxu0 0.0
    %3182 = vmatprep.mubr.f32.mxu0 0.0
    %3183 = vmatmul.mubr.f32.gmra.mrb[0].mxu0 %v3116
    %v3184 = vpop.f32.mrb[0].mxu0
    %v3185 = vadd.f32 0.0, %v3184
    %v3186 = vpop.f32.mrb[0].mxu0
    %3187 = vdwg.mxu0
    %v3189 = vrot.slane %v3185, 6
    %v3191 = vadd.f32 %v2769, %v3189
    %v3192 = vxor.u32 %v3111, 2147483648
    %v3193 = vmul.f32 %v3192, 1.442695
    %v3194 = vpow.pop %v3193
    %v3195 = vadd.f32 %v3194, 1.0
    %v3196 = vrcp.pop %v3195
    %v3197 = vmul.f32 1.0, %v3196
    %v3198 = vtanh.pop %v3111
    %v3200 = vrot.slane %v2996, 6
    %v3202 = vmul.f32 %v3197, %v3200
    %3204 = vrot.lane.b32.xlu0 %v3198, 64
    %v3205 = vpop.permute.xlu0 %3204
    %v3207 = vmul.f32 %v3197, %v3205
    %3209 = vrot.lane.b32.xlu0 %v3207, 32
    %v3210 = vpop.permute.xlu0 %3209
    %v3212 = vadd.f32 %v3202, %v3210
    %v3213 = vtanh.pop %v3212
    %3215 = vrot.lane.b32.xlu0 %v3213, 64
    %v3216 = vpop.permute.xlu0 %3215
    %v3218 = vmul.f32 %v3197, %v3216
    %v3219 = vxor.u32 %v3191, 2147483648
    %v3220 = vmul.f32 %v3219, 1.442695
    %v3221 = vpow.pop %v3220
    %v3222 = vadd.f32 %v3221, 1.0
    %v3223 = vrcp.pop %v3222
    %v3224 = vmul.f32 1.0, %v3223
    %v3225 = vtanh.pop %v3191
    %v3227 = vrot.slane %v3025, 2
    %v3229 = vmul.f32 %v3224, %v3227
    %3231 = vrot.lane.b32.xlu0 %v3225, 64
    %v3232 = vpop.permute.xlu0 %3231
    %v3234 = vmul.f32 %v3224, %v3232
    %3236 = vrot.lane.b32.xlu0 %v3234, 32
    %v3237 = vpop.permute.xlu0 %3236
    %v3239 = vadd.f32 %v3229, %v3237
    %v3240 = vtanh.pop %v3239
    %3242 = vrot.lane.b32.xlu0 %v3240, 64
    %v3243 = vpop.permute.xlu0 %3242
    %v3245 = vmul.f32 %v3224, %v3243
    %v3247 = vrot.slane %v3218, 4
    %3248 = vrot.lane.b32.xlu0 %v3247, 32
    %v3249 = vpop.permute.xlu0 %3248
    %v3250 = vsel %vm1139, %v3249, 0
    %3252 = vmatprep.subr.mxu0 0.0
    %3253 = vmatpush1.msra.mxu0 %v2771
    %3254 = vmatprep.subr.mxu0 0.0
    %3255 = vmatpush1.msra.mxu0 %v2773
    %3256 = vmatprep.subr.mxu0 0.0
    %3257 = vmatpush1.msra.mxu0 %v2775
    %3258 = vmatprep.subr.mxu0 0.0
    %3259 = vmatpush1.msra.mxu0 %v2777
    %3260 = vmatprep.subr.mxu0 0.0
    %3261 = vmatpush1.msra.mxu0 0.0
    %3262 = vmatprep.subr.mxu0 0.0
    %3263 = vmatpush1.msra.mxu0 0.0
    %3264 = vmatprep.subr.mxu0 0.0
    %3265 = vmatpush1.msra.mxu0 0.0
    %3266 = vmatprep.subr.mxu0 0.0
    %3267 = vmatpush1.msra.mxu0 0.0
    %3268 = vmatprep.subr.mxu0 0.0
    %3269 = vmatpush1.msra.mxu0 0.0
    %3270 = vmatprep.subr.mxu0 0.0
    %3271 = vmatpush1.msra.mxu0 0.0
    %3272 = vmatprep.subr.mxu0 0.0
    %3273 = vmatpush1.msra.mxu0 0.0
    %3274 = vmatprep.subr.mxu0 0.0
    %3275 = vmatpush1.msra.mxu0 0.0
    %3276 = vmatprep.subr.mxu0 0.0
    %3277 = vmatpush1.msra.mxu0 0.0
    %3278 = vmatprep.subr.mxu0 0.0
    %3279 = vmatpush1.msra.mxu0 0.0
    %3280 = vmatprep.subr.mxu0 0.0
    %3281 = vmatpush1.msra.mxu0 0.0
    %3282 = vmatprep.subr.mxu0 0.0
    %3283 = vmatpush1.msra.mxu0 0.0
    %3284 = vmatprep.subr.mxu0 0.0
    %3285 = vmatpush1.msra.mxu0 0.0
    %3286 = vmatprep.subr.mxu0 0.0
    %3287 = vmatpush1.msra.mxu0 0.0
    %3288 = vmatprep.subr.mxu0 0.0
    %3289 = vmatpush1.msra.mxu0 0.0
    %3290 = vmatprep.subr.mxu0 0.0
    %3291 = vmatpush1.msra.mxu0 0.0
    %3292 = vmatprep.subr.mxu0 0.0
    %3293 = vmatpush1.msra.mxu0 0.0
    %3294 = vmatprep.subr.mxu0 0.0
    %3295 = vmatpush1.msra.mxu0 0.0
    %3296 = vmatprep.subr.mxu0 0.0
    %3297 = vmatpush1.msra.mxu0 0.0
    %3298 = vmatprep.subr.mxu0 0.0
    %3299 = vmatpush1.msra.mxu0 0.0
    %3300 = vmatprep.subr.mxu0 0.0
    %3301 = vmatpush1.msra.mxu0 0.0
    %3302 = vmatprep.subr.mxu0 0.0
    %3303 = vmatpush1.msra.mxu0 0.0
    %3304 = vmatprep.subr.mxu0 0.0
    %3305 = vmatpush1.msra.mxu0 0.0
    %3306 = vmatprep.subr.mxu0 0.0
    %3307 = vmatpush1.msra.mxu0 0.0
    %3308 = vmatprep.subr.mxu0 0.0
    %3309 = vmatpush1.msra.mxu0 0.0
    %3310 = vmatprep.subr.mxu0 0.0
    %3311 = vmatpush1.msra.mxu0 0.0
    %3312 = vmatprep.subr.mxu0 0.0
    %3313 = vmatpush1.msra.mxu0 0.0
    %3314 = vmatprep.subr.mxu0 0.0
    %3315 = vmatpush1.msra.mxu0 0.0
    %3316 = vmatprep.mubr.f32.mxu0 0.0
    %3317 = vmatmul.mubr.f32.gmra.mrb[0].mxu0 %v3250
    %v3318 = vpop.f32.mrb[0].mxu0
    %v3319 = vadd.f32 0.0, %v3318
    %v3320 = vpop.f32.mrb[0].mxu0
    %3321 = vdwg.mxu0
    %v3323 = vrot.slane %v3319, 2
    %v3325 = vadd.f32 %v2761, %v3323
    %v3327 = vrot.slane %v3245, 2
    %3328 = vrot.lane.b32.xlu0 %v3327, 32
    %v3329 = vpop.permute.xlu0 %3328
    %v3330 = vsel %vm1139, %v3329, 0
    %3332 = vmatprep.subr.mxu0 0.0
    %3333 = vmatpush1.msra.mxu0 %v2772
    %3334 = vmatprep.subr.mxu0 0.0
    %3335 = vmatpush1.msra.mxu0 %v2774
    %3336 = vmatprep.subr.mxu0 0.0
    %3337 = vmatpush1.msra.mxu0 %v2776
    %3338 = vmatprep.subr.mxu0 0.0
    %3339 = vmatpush1.msra.mxu0 %v2778
    %3340 = vmatprep.subr.mxu0 0.0
    %3341 = vmatpush1.msra.mxu0 0.0
    %3342 = vmatprep.subr.mxu0 0.0
    %3343 = vmatpush1.msra.mxu0 0.0
    %3344 = vmatprep.subr.mxu0 0.0
    %3345 = vmatpush1.msra.mxu0 0.0
    %3346 = vmatprep.subr.mxu0 0.0
    %3347 = vmatpush1.msra.mxu0 0.0
    %3348 = vmatprep.subr.mxu0 0.0
    %3349 = vmatpush1.msra.mxu0 0.0
    %3350 = vmatprep.subr.mxu0 0.0
    %3351 = vmatpush1.msra.mxu0 0.0
    %3352 = vmatprep.subr.mxu0 0.0
    %3353 = vmatpush1.msra.mxu0 0.0
    %3354 = vmatprep.subr.mxu0 0.0
    %3355 = vmatpush1.msra.mxu0 0.0
    %3356 = vmatprep.subr.mxu0 0.0
    %3357 = vmatpush1.msra.mxu0 0.0
    %3358 = vmatprep.subr.mxu0 0.0
    %3359 = vmatpush1.msra.mxu0 0.0
    %3360 = vmatprep.subr.mxu0 0.0
    %3361 = vmatpush1.msra.mxu0 0.0
    %3362 = vmatprep.subr.mxu0 0.0
    %3363 = vmatpush1.msra.mxu0 0.0
    %3364 = vmatprep.subr.mxu0 0.0
    %3365 = vmatpush1.msra.mxu0 0.0
    %3366 = vmatprep.subr.mxu0 0.0
    %3367 = vmatpush1.msra.mxu0 0.0
    %3368 = vmatprep.subr.mxu0 0.0
    %3369 = vmatpush1.msra.mxu0 0.0
    %3370 = vmatprep.subr.mxu0 0.0
    %3371 = vmatpush1.msra.mxu0 0.0
    %3372 = vmatprep.subr.mxu0 0.0
    %3373 = vmatpush1.msra.mxu0 0.0
    %3374 = vmatprep.subr.mxu0 0.0
    %3375 = vmatpush1.msra.mxu0 0.0
    %3376 = vmatprep.subr.mxu0 0.0
    %3377 = vmatpush1.msra.mxu0 0.0
    %3378 = vmatprep.subr.mxu0 0.0
    %3379 = vmatpush1.msra.mxu0 0.0
    %3380 = vmatprep.subr.mxu0 0.0
    %3381 = vmatpush1.msra.mxu0 0.0
    %3382 = vmatprep.subr.mxu0 0.0
    %3383 = vmatpush1.msra.mxu0 0.0
    %3384 = vmatprep.subr.mxu0 0.0
    %3385 = vmatpush1.msra.mxu0 0.0
    %3386 = vmatprep.subr.mxu0 0.0
    %3387 = vmatpush1.msra.mxu0 0.0
    %3388 = vmatprep.subr.mxu0 0.0
    %3389 = vmatpush1.msra.mxu0 0.0
    %3390 = vmatprep.subr.mxu0 0.0
    %3391 = vmatpush1.msra.mxu0 0.0
    %3392 = vmatprep.subr.mxu0 0.0
    %3393 = vmatpush1.msra.mxu0 0.0
    %3394 = vmatprep.subr.mxu0 0.0
    %3395 = vmatpush1.msra.mxu0 0.0
    %3396 = vmatprep.mubr.f32.mxu0 0.0
    %3397 = vmatmul.mubr.f32.gmra.mrb[0].mxu0 %v3330
    %v3398 = vpop.f32.mrb[0].mxu0
    %v3399 = vadd.f32 0.0, %v3398
    %v3400 = vpop.f32.mrb[0].mxu0
    %3401 = vdwg.mxu0
    %v3402 = vadd.f32 %v2769, %v3399
    %v3403 = vxor.u32 %v3325, 2147483648
    %v3404 = vmul.f32 %v3403, 1.442695
    %v3405 = vpow.pop %v3404
    %v3406 = vadd.f32 %v3405, 1.0
    %v3407 = vrcp.pop %v3406
    %v3408 = vmul.f32 1.0, %v3407
    %v3409 = vtanh.pop %v3325
    %v3411 = vrot.slane %v3212, 6
    %v3413 = vmul.f32 %v3408, %v3411
    %3415 = vrot.lane.b32.xlu0 %v3409, 64
    %v3416 = vpop.permute.xlu0 %3415
    %v3418 = vmul.f32 %v3408, %v3416
    %3420 = vrot.lane.b32.xlu0 %v3418, 32
    %v3421 = vpop.permute.xlu0 %3420
    %v3423 = vadd.f32 %v3413, %v3421
    %v3424 = vtanh.pop %v3423
    %3426 = vrot.lane.b32.xlu0 %v3424, 64
    %v3427 = vpop.permute.xlu0 %3426
    %v3429 = vmul.f32 %v3408, %v3427
    %v3430 = vxor.u32 %v3402, 2147483648
    %v3431 = vmul.f32 %v3430, 1.442695
    %v3432 = vpow.pop %v3431
    %v3433 = vadd.f32 %v3432, 1.0
    %v3434 = vrcp.pop %v3433
    %v3435 = vmul.f32 1.0, %v3434
    %v3436 = vtanh.pop %v3402
    %v3438 = vrot.slane %v3239, 2
    %v3440 = vmul.f32 %v3435, %v3438
    %3442 = vrot.lane.b32.xlu0 %v3436, 64
    %v3443 = vpop.permute.xlu0 %3442
    %v3445 = vmul.f32 %v3435, %v3443
    %3447 = vrot.lane.b32.xlu0 %v3445, 32
    %v3448 = vpop.permute.xlu0 %3447
    %v3450 = vadd.f32 %v3440, %v3448
    %v3451 = vtanh.pop %v3450
    %3453 = vrot.lane.b32.xlu0 %v3451, 64
    %v3454 = vpop.permute.xlu0 %3453
    %v3456 = vmul.f32 %v3435, %v3454
    %v3458 = vrot.slane %v3429, 6
    %3459 = vrot.lane.b32.xlu0 %v3458, 32
    %v3460 = vpop.permute.xlu0 %3459
    %v3461 = vsel %vm1139, %v3460, 0
    %3463 = vmatprep.subr.mxu0 0.0
    %3464 = vmatpush1.msra.mxu0 %v2771
    %3465 = vmatprep.subr.mxu0 0.0
    %3466 = vmatpush1.msra.mxu0 %v2773
    %3467 = vmatprep.subr.mxu0 0.0
    %3468 = vmatpush1.msra.mxu0 %v2775
    %3469 = vmatprep.subr.mxu0 0.0
    %3470 = vmatpush1.msra.mxu0 %v2777
    %3471 = vmatprep.subr.mxu0 0.0
    %3472 = vmatpush1.msra.mxu0 0.0
    %3473 = vmatprep.subr.mxu0 0.0
    %3474 = vmatpush1.msra.mxu0 0.0
    %3475 = vmatprep.subr.mxu0 0.0
    %3476 = vmatpush1.msra.mxu0 0.0
    %3477 = vmatprep.subr.mxu0 0.0
    %3478 = vmatpush1.msra.mxu0 0.0
    %3479 = vmatprep.subr.mxu0 0.0
    %3480 = vmatpush1.msra.mxu0 0.0
    %3481 = vmatprep.subr.mxu0 0.0
    %3482 = vmatpush1.msra.mxu0 0.0
    %3483 = vmatprep.subr.mxu0 0.0
    %3484 = vmatpush1.msra.mxu0 0.0
    %3485 = vmatprep.subr.mxu0 0.0
    %3486 = vmatpush1.msra.mxu0 0.0
    %3487 = vmatprep.subr.mxu0 0.0
    %3488 = vmatpush1.msra.mxu0 0.0
    %3489 = vmatprep.subr.mxu0 0.0
    %3490 = vmatpush1.msra.mxu0 0.0
    %3491 = vmatprep.subr.mxu0 0.0
    %3492 = vmatpush1.msra.mxu0 0.0
    %3493 = vmatprep.subr.mxu0 0.0
    %3494 = vmatpush1.msra.mxu0 0.0
    %3495 = vmatprep.subr.mxu0 0.0
    %3496 = vmatpush1.msra.mxu0 0.0
    %3497 = vmatprep.subr.mxu0 0.0
    %3498 = vmatpush1.msra.mxu0 0.0
    %3499 = vmatprep.subr.mxu0 0.0
    %3500 = vmatpush1.msra.mxu0 0.0
    %3501 = vmatprep.subr.mxu0 0.0
    %3502 = vmatpush1.msra.mxu0 0.0
    %3503 = vmatprep.subr.mxu0 0.0
    %3504 = vmatpush1.msra.mxu0 0.0
    %3505 = vmatprep.subr.mxu0 0.0
    %3506 = vmatpush1.msra.mxu0 0.0
    %3507 = vmatprep.subr.mxu0 0.0
    %3508 = vmatpush1.msra.mxu0 0.0
    %3509 = vmatprep.subr.mxu0 0.0
    %3510 = vmatpush1.msra.mxu0 0.0
    %3511 = vmatprep.subr.mxu0 0.0
    %3512 = vmatpush1.msra.mxu0 0.0
    %3513 = vmatprep.subr.mxu0 0.0
    %3514 = vmatpush1.msra.mxu0 0.0
    %3515 = vmatprep.subr.mxu0 0.0
    %3516 = vmatpush1.msra.mxu0 0.0
    %3517 = vmatprep.subr.mxu0 0.0
    %3518 = vmatpush1.msra.mxu0 0.0
    %3519 = vmatprep.subr.mxu0 0.0
    %3520 = vmatpush1.msra.mxu0 0.0
    %3521 = vmatprep.subr.mxu0 0.0
    %3522 = vmatpush1.msra.mxu0 0.0
    %3523 = vmatprep.subr.mxu0 0.0
    %3524 = vmatpush1.msra.mxu0 0.0
    %3525 = vmatprep.subr.mxu0 0.0
    %3526 = vmatpush1.msra.mxu0 0.0
    %3527 = vmatprep.mubr.f32.mxu0 0.0
    %3528 = vmatmul.mubr.f32.gmra.mrb[0].mxu0 %v3461
    %v3529 = vpop.f32.mrb[0].mxu0
    %v3530 = vadd.f32 0.0, %v3529
    %v3531 = vpop.f32.mrb[0].mxu0
    %3532 = vdwg.mxu0
    %v3533 = vadd.f32 %v2767, %v3530
    %3535 = vrot.lane.b32.xlu0 %v3456, 32
    %v3536 = vpop.permute.xlu0 %3535
    %v3537 = vsel %vm1139, %v3536, 0
    %3539 = vmatprep.subr.mxu0 0.0
    %3540 = vmatpush1.msra.mxu0 %v2772
    %3541 = vmatprep.subr.mxu0 0.0
    %3542 = vmatpush1.msra.mxu0 %v2774
    %3543 = vmatprep.subr.mxu0 0.0
    %3544 = vmatpush1.msra.mxu0 %v2776
    %3545 = vmatprep.subr.mxu0 0.0
    %3546 = vmatpush1.msra.mxu0 %v2778
    %3547 = vmatprep.subr.mxu0 0.0
    %3548 = vmatpush1.msra.mxu0 0.0
    %3549 = vmatprep.subr.mxu0 0.0
    %3550 = vmatpush1.msra.mxu0 0.0
    %3551 = vmatprep.subr.mxu0 0.0
    %3552 = vmatpush1.msra.mxu0 0.0
    %3553 = vmatprep.subr.mxu0 0.0
    %3554 = vmatpush1.msra.mxu0 0.0
    %3555 = vmatprep.subr.mxu0 0.0
    %3556 = vmatpush1.msra.mxu0 0.0
    %3557 = vmatprep.subr.mxu0 0.0
    %3558 = vmatpush1.msra.mxu0 0.0
    %3559 = vmatprep.subr.mxu0 0.0
    %3560 = vmatpush1.msra.mxu0 0.0
    %3561 = vmatprep.subr.mxu0 0.0
    %3562 = vmatpush1.msra.mxu0 0.0
    %3563 = vmatprep.subr.mxu0 0.0
    %3564 = vmatpush1.msra.mxu0 0.0
    %3565 = vmatprep.subr.mxu0 0.0
    %3566 = vmatpush1.msra.mxu0 0.0
    %3567 = vmatprep.subr.mxu0 0.0
    %3568 = vmatpush1.msra.mxu0 0.0
    %3569 = vmatprep.subr.mxu0 0.0
    %3570 = vmatpush1.msra.mxu0 0.0
    %3571 = vmatprep.subr.mxu0 0.0
    %3572 = vmatpush1.msra.mxu0 0.0
    %3573 = vmatprep.subr.mxu0 0.0
    %3574 = vmatpush1.msra.mxu0 0.0
    %3575 = vmatprep.subr.mxu0 0.0
    %3576 = vmatpush1.msra.mxu0 0.0
    %3577 = vmatprep.subr.mxu0 0.0
    %3578 = vmatpush1.msra.mxu0 0.0
    %3579 = vmatprep.subr.mxu0 0.0
    %3580 = vmatpush1.msra.mxu0 0.0
    %3581 = vmatprep.subr.mxu0 0.0
    %3582 = vmatpush1.msra.mxu0 0.0
    %3583 = vmatprep.subr.mxu0 0.0
    %3584 = vmatpush1.msra.mxu0 0.0
    %3585 = vmatprep.subr.mxu0 0.0
    %3586 = vmatpush1.msra.mxu0 0.0
    %3587 = vmatprep.subr.mxu0 0.0
    %3588 = vmatpush1.msra.mxu0 0.0
    %3589 = vmatprep.subr.mxu0 0.0
    %3590 = vmatpush1.msra.mxu0 0.0
    %3591 = vmatprep.subr.mxu0 0.0
    %3592 = vmatpush1.msra.mxu0 0.0
    %3593 = vmatprep.subr.mxu0 0.0
    %3594 = vmatpush1.msra.mxu0 0.0
    %3595 = vmatprep.subr.mxu0 0.0
    %3596 = vmatpush1.msra.mxu0 0.0
    %3597 = vmatprep.subr.mxu0 0.0
    %3598 = vmatpush1.msra.mxu0 0.0
    %3599 = vmatprep.subr.mxu0 0.0
    %3600 = vmatpush1.msra.mxu0 0.0
    %3601 = vmatprep.subr.mxu0 0.0
    %3602 = vmatpush1.msra.mxu0 0.0
    %3603 = vmatprep.mubr.f32.mxu0 0.0
    %3604 = vmatmul.mubr.f32.gmra.mrb[0].mxu0 %v3537
    %v3605 = vpop.f32.mrb[0].mxu0
    %v3606 = vadd.f32 0.0, %v3605
    %v3607 = vpop.f32.mrb[0].mxu0
    %3608 = vdwg.mxu0
    %v3610 = vrot.slane %v3606, 2
    %v3612 = vadd.f32 %v2763, %v3610
    %v3613 = vxor.u32 %v3533, 2147483648
    %v3614 = vmul.f32 %v3613, 1.442695
    %v3615 = vpow.pop %v3614
    %v3616 = vadd.f32 %v3615, 1.0
    %v3617 = vrcp.pop %v3616
    %v3618 = vmul.f32 1.0, %v3617
    %v3619 = vtanh.pop %v3533
    %v3621 = vrot.slane %v3423, 6
    %v3623 = vmul.f32 %v3618, %v3621
    %3625 = vrot.lane.b32.xlu0 %v3619, 64
    %v3626 = vpop.permute.xlu0 %3625
    %v3628 = vmul.f32 %v3618, %v3626
    %3630 = vrot.lane.b32.xlu0 %v3628, 32
    %v3631 = vpop.permute.xlu0 %3630
    %v3633 = vadd.f32 %v3623, %v3631
    %v3634 = vtanh.pop %v3633
    %3636 = vrot.lane.b32.xlu0 %v3634, 64
    %v3637 = vpop.permute.xlu0 %3636
    %v3639 = vmul.f32 %v3618, %v3637
    %v3640 = vxor.u32 %v3612, 2147483648
    %v3641 = vmul.f32 %v3640, 1.442695
    %v3642 = vpow.pop %v3641
    %v3643 = vadd.f32 %v3642, 1.0
    %v3644 = vrcp.pop %v3643
    %v3645 = vmul.f32 1.0, %v3644
    %v3646 = vtanh.pop %v3612
    %v3648 = vrot.slane %v3450, 2
    %v3650 = vmul.f32 %v3645, %v3648
    %3652 = vrot.lane.b32.xlu0 %v3646, 64
    %v3653 = vpop.permute.xlu0 %3652
    %v3655 = vmul.f32 %v3645, %v3653
    %3657 = vrot.lane.b32.xlu0 %v3655, 32
    %v3658 = vpop.permute.xlu0 %3657
    %v3660 = vadd.f32 %v3650, %v3658
    %v3661 = vtanh.pop %v3660
    %3663 = vrot.lane.b32.xlu0 %v3661, 64
    %v3664 = vpop.permute.xlu0 %3663
    %v3666 = vmul.f32 %v3645, %v3664
    %3668 = vrot.lane.b32.xlu0 %v3639, 32
    %v3669 = vpop.permute.xlu0 %3668
    %v3670 = vsel %vm1139, %v3669, 0
    %3672 = vmatprep.subr.mxu0 0.0
    %3673 = vmatpush1.msra.mxu0 %v2771
    %3674 = vmatprep.subr.mxu0 0.0
    %3675 = vmatpush1.msra.mxu0 %v2773
    %3676 = vmatprep.subr.mxu0 0.0
    %3677 = vmatpush1.msra.mxu0 %v2775
    %3678 = vmatprep.subr.mxu0 0.0
    %3679 = vmatpush1.msra.mxu0 %v2777
    %3680 = vmatprep.subr.mxu0 0.0
    %3681 = vmatpush1.msra.mxu0 0.0
    %3682 = vmatprep.subr.mxu0 0.0
    %3683 = vmatpush1.msra.mxu0 0.0
    %3684 = vmatprep.subr.mxu0 0.0
    %3685 = vmatpush1.msra.mxu0 0.0
    %3686 = vmatprep.subr.mxu0 0.0
    %3687 = vmatpush1.msra.mxu0 0.0
    %3688 = vmatprep.subr.mxu0 0.0
    %3689 = vmatpush1.msra.mxu0 0.0
    %3690 = vmatprep.subr.mxu0 0.0
    %3691 = vmatpush1.msra.mxu0 0.0
    %3692 = vmatprep.subr.mxu0 0.0
    %3693 = vmatpush1.msra.mxu0 0.0
    %3694 = vmatprep.subr.mxu0 0.0
    %3695 = vmatpush1.msra.mxu0 0.0
    %3696 = vmatprep.subr.mxu0 0.0
    %3697 = vmatpush1.msra.mxu0 0.0
    %3698 = vmatprep.subr.mxu0 0.0
    %3699 = vmatpush1.msra.mxu0 0.0
    %3700 = vmatprep.subr.mxu0 0.0
    %3701 = vmatpush1.msra.mxu0 0.0
    %3702 = vmatprep.subr.mxu0 0.0
    %3703 = vmatpush1.msra.mxu0 0.0
    %3704 = vmatprep.subr.mxu0 0.0
    %3705 = vmatpush1.msra.mxu0 0.0
    %3706 = vmatprep.subr.mxu0 0.0
    %3707 = vmatpush1.msra.mxu0 0.0
    %3708 = vmatprep.subr.mxu0 0.0
    %3709 = vmatpush1.msra.mxu0 0.0
    %3710 = vmatprep.subr.mxu0 0.0
    %3711 = vmatpush1.msra.mxu0 0.0
    %3712 = vmatprep.subr.mxu0 0.0
    %3713 = vmatpush1.msra.mxu0 0.0
    %3714 = vmatprep.subr.mxu0 0.0
    %3715 = vmatpush1.msra.mxu0 0.0
    %3716 = vmatprep.subr.mxu0 0.0
    %3717 = vmatpush1.msra.mxu0 0.0
    %3718 = vmatprep.subr.mxu0 0.0
    %3719 = vmatpush1.msra.mxu0 0.0
    %3720 = vmatprep.subr.mxu0 0.0
    %3721 = vmatpush1.msra.mxu0 0.0
    %3722 = vmatprep.subr.mxu0 0.0
    %3723 = vmatpush1.msra.mxu0 0.0
    %3724 = vmatprep.subr.mxu0 0.0
    %3725 = vmatpush1.msra.mxu0 0.0
    %3726 = vmatprep.subr.mxu0 0.0
    %3727 = vmatpush1.msra.mxu0 0.0
    %3728 = vmatprep.subr.mxu0 0.0
    %3729 = vmatpush1.msra.mxu0 0.0
    %3730 = vmatprep.subr.mxu0 0.0
    %3731 = vmatpush1.msra.mxu0 0.0
    %3732 = vmatprep.subr.mxu0 0.0
    %3733 = vmatpush1.msra.mxu0 0.0
    %3734 = vmatprep.subr.mxu0 0.0
    %3735 = vmatpush1.msra.mxu0 0.0
    %3736 = vmatprep.mubr.f32.mxu0 0.0
    %3737 = vmatmul.mubr.f32.gmra.mrb[0].mxu0 %v3670
    %v3738 = vpop.f32.mrb[0].mxu0
    %v3739 = vadd.f32 0.0, %v3738
    %v3740 = vpop.f32.mrb[0].mxu0
    %3741 = vdwg.mxu0
    %v3743 = vrot.slane %v3739, 6
    %v3745 = vadd.f32 %v2767, %v3743
    %v3747 = vrot.slane %v3666, 6
    %3748 = vrot.lane.b32.xlu0 %v3747, 32
    %v3749 = vpop.permute.xlu0 %3748
    %v3750 = vsel %vm1139, %v3749, 0
    %3752 = vmatprep.subr.mxu0 0.0
    %3753 = vmatpush1.msra.mxu0 %v2772
    %3754 = vmatprep.subr.mxu0 0.0
    %3755 = vmatpush1.msra.mxu0 %v2774
    %3756 = vmatprep.subr.mxu0 0.0
    %3757 = vmatpush1.msra.mxu0 %v2776
    %3758 = vmatprep.subr.mxu0 0.0
    %3759 = vmatpush1.msra.mxu0 %v2778
    %3760 = vmatprep.subr.mxu0 0.0
    %3761 = vmatpush1.msra.mxu0 0.0
    %3762 = vmatprep.subr.mxu0 0.0
    %3763 = vmatpush1.msra.mxu0 0.0
    %3764 = vmatprep.subr.mxu0 0.0
    %3765 = vmatpush1.msra.mxu0 0.0
    %3766 = vmatprep.subr.mxu0 0.0
    %3767 = vmatpush1.msra.mxu0 0.0
    %3768 = vmatprep.subr.mxu0 0.0
    %3769 = vmatpush1.msra.mxu0 0.0
    %3770 = vmatprep.subr.mxu0 0.0
    %3771 = vmatpush1.msra.mxu0 0.0
    %3772 = vmatprep.subr.mxu0 0.0
    %3773 = vmatpush1.msra.mxu0 0.0
    %3774 = vmatprep.subr.mxu0 0.0
    %3775 = vmatpush1.msra.mxu0 0.0
    %3776 = vmatprep.subr.mxu0 0.0
    %3777 = vmatpush1.msra.mxu0 0.0
    %3778 = vmatprep.subr.mxu0 0.0
    %3779 = vmatpush1.msra.mxu0 0.0
    %3780 = vmatprep.subr.mxu0 0.0
    %3781 = vmatpush1.msra.mxu0 0.0
    %3782 = vmatprep.subr.mxu0 0.0
    %3783 = vmatpush1.msra.mxu0 0.0
    %3784 = vmatprep.subr.mxu0 0.0
    %3785 = vmatpush1.msra.mxu0 0.0
    %3786 = vmatprep.subr.mxu0 0.0
    %3787 = vmatpush1.msra.mxu0 0.0
    %3788 = vmatprep.subr.mxu0 0.0
    %3789 = vmatpush1.msra.mxu0 0.0
    %3790 = vmatprep.subr.mxu0 0.0
    %3791 = vmatpush1.msra.mxu0 0.0
    %3792 = vmatprep.subr.mxu0 0.0
    %3793 = vmatpush1.msra.mxu0 0.0
    %3794 = vmatprep.subr.mxu0 0.0
    %3795 = vmatpush1.msra.mxu0 0.0
    %3796 = vmatprep.subr.mxu0 0.0
    %3797 = vmatpush1.msra.mxu0 0.0
    %3798 = vmatprep.subr.mxu0 0.0
    %3799 = vmatpush1.msra.mxu0 0.0
    %3800 = vmatprep.subr.mxu0 0.0
    %3801 = vmatpush1.msra.mxu0 0.0
    %3802 = vmatprep.subr.mxu0 0.0
    %3803 = vmatpush1.msra.mxu0 0.0
    %3804 = vmatprep.subr.mxu0 0.0
    %3805 = vmatpush1.msra.mxu0 0.0
    %3806 = vmatprep.subr.mxu0 0.0
    %3807 = vmatpush1.msra.mxu0 0.0
    %3808 = vmatprep.subr.mxu0 0.0
    %3809 = vmatpush1.msra.mxu0 0.0
    %3810 = vmatprep.subr.mxu0 0.0
    %3811 = vmatpush1.msra.mxu0 0.0
    %3812 = vmatprep.subr.mxu0 0.0
    %3813 = vmatpush1.msra.mxu0 0.0
    %3814 = vmatprep.subr.mxu0 0.0
    %3815 = vmatpush1.msra.mxu0 0.0
    %3816 = vmatprep.mubr.f32.mxu0 0.0
    %3817 = vmatmul.mubr.f32.gmra.mrb[0].mxu0 %v3750
    %v3818 = vpop.f32.mrb[0].mxu0
    %v3819 = vadd.f32 0.0, %v3818
    %v3820 = vpop.f32.mrb[0].mxu0
    %3821 = vdwg.mxu0
    %v3823 = vrot.slane %v3819, 4
    %v3825 = vadd.f32 %v2763, %v3823
    %v3826 = vxor.u32 %v3745, 2147483648
    %v3827 = vmul.f32 %v3826, 1.442695
    %v3828 = vpow.pop %v3827
    %v3829 = vadd.f32 %v3828, 1.0
    %v3830 = vrcp.pop %v3829
    %v3831 = vmul.f32 1.0, %v3830
    %v3832 = vtanh.pop %v3745
    %v3834 = vrot.slane %v3633, 6
    %v3836 = vmul.f32 %v3831, %v3834
    %3838 = vrot.lane.b32.xlu0 %v3832, 64
    %v3839 = vpop.permute.xlu0 %3838
    %v3841 = vmul.f32 %v3831, %v3839
    %3843 = vrot.lane.b32.xlu0 %v3841, 32
    %v3844 = vpop.permute.xlu0 %3843
    %v3846 = vadd.f32 %v3836, %v3844
    %v3847 = vtanh.pop %v3846
    %3849 = vrot.lane.b32.xlu0 %v3847, 64
    %v3850 = vpop.permute.xlu0 %3849
    %v3852 = vmul.f32 %v3831, %v3850
    %v3853 = vxor.u32 %v3825, 2147483648
    %v3854 = vmul.f32 %v3853, 1.442695
    %v3855 = vpow.pop %v3854
    %v3856 = vadd.f32 %v3855, 1.0
    %v3857 = vrcp.pop %v3856
    %v3858 = vmul.f32 1.0, %v3857
    %v3859 = vtanh.pop %v3825
    %v3861 = vrot.slane %v3660, 2
    %v3863 = vmul.f32 %v3858, %v3861
    %3865 = vrot.lane.b32.xlu0 %v3859, 64
    %v3866 = vpop.permute.xlu0 %3865
    %v3868 = vmul.f32 %v3858, %v3866
    %3870 = vrot.lane.b32.xlu0 %v3868, 32
    %v3871 = vpop.permute.xlu0 %3870
    %v3873 = vadd.f32 %v3863, %v3871
    %v3874 = vtanh.pop %v3873
    %3876 = vrot.lane.b32.xlu0 %v3874, 64
    %v3877 = vpop.permute.xlu0 %3876
    %v3879 = vmul.f32 %v3858, %v3877
    %v3881 = vrot.slane %v3852, 2
    %3882 = vrot.lane.b32.xlu0 %v3881, 32
    %v3883 = vpop.permute.xlu0 %3882
    %v3884 = vsel %vm1139, %v3883, 0
    %3886 = vmatprep.subr.mxu0 0.0
    %3887 = vmatpush1.msra.mxu0 %v2771
    %3888 = vmatprep.subr.mxu0 0.0
    %3889 = vmatpush1.msra.mxu0 %v2773
    %3890 = vmatprep.subr.mxu0 0.0
    %3891 = vmatpush1.msra.mxu0 %v2775
    %3892 = vmatprep.subr.mxu0 0.0
    %3893 = vmatpush1.msra.mxu0 %v2777
    %3894 = vmatprep.subr.mxu0 0.0
    %3895 = vmatpush1.msra.mxu0 0.0
    %3896 = vmatprep.subr.mxu0 0.0
    %3897 = vmatpush1.msra.mxu0 0.0
    %3898 = vmatprep.subr.mxu0 0.0
    %3899 = vmatpush1.msra.mxu0 0.0
    %3900 = vmatprep.subr.mxu0 0.0
    %3901 = vmatpush1.msra.mxu0 0.0
    %3902 = vmatprep.subr.mxu0 0.0
    %3903 = vmatpush1.msra.mxu0 0.0
    %3904 = vmatprep.subr.mxu0 0.0
    %3905 = vmatpush1.msra.mxu0 0.0
    %3906 = vmatprep.subr.mxu0 0.0
    %3907 = vmatpush1.msra.mxu0 0.0
    %3908 = vmatprep.subr.mxu0 0.0
    %3909 = vmatpush1.msra.mxu0 0.0
    %3910 = vmatprep.subr.mxu0 0.0
    %3911 = vmatpush1.msra.mxu0 0.0
    %3912 = vmatprep.subr.mxu0 0.0
    %3913 = vmatpush1.msra.mxu0 0.0
    %3914 = vmatprep.subr.mxu0 0.0
    %3915 = vmatpush1.msra.mxu0 0.0
    %3916 = vmatprep.subr.mxu0 0.0
    %3917 = vmatpush1.msra.mxu0 0.0
    %3918 = vmatprep.subr.mxu0 0.0
    %3919 = vmatpush1.msra.mxu0 0.0
    %3920 = vmatprep.subr.mxu0 0.0
    %3921 = vmatpush1.msra.mxu0 0.0
    %3922 = vmatprep.subr.mxu0 0.0
    %3923 = vmatpush1.msra.mxu0 0.0
    %3924 = vmatprep.subr.mxu0 0.0
    %3925 = vmatpush1.msra.mxu0 0.0
    %3926 = vmatprep.subr.mxu0 0.0
    %3927 = vmatpush1.msra.mxu0 0.0
    %3928 = vmatprep.subr.mxu0 0.0
    %3929 = vmatpush1.msra.mxu0 0.0
    %3930 = vmatprep.subr.mxu0 0.0
    %3931 = vmatpush1.msra.mxu0 0.0
    %3932 = vmatprep.subr.mxu0 0.0
    %3933 = vmatpush1.msra.mxu0 0.0
    %3934 = vmatprep.subr.mxu0 0.0
    %3935 = vmatpush1.msra.mxu0 0.0
    %3936 = vmatprep.subr.mxu0 0.0
    %3937 = vmatpush1.msra.mxu0 0.0
    %3938 = vmatprep.subr.mxu0 0.0
    %3939 = vmatpush1.msra.mxu0 0.0
    %3940 = vmatprep.subr.mxu0 0.0
    %3941 = vmatpush1.msra.mxu0 0.0
    %3942 = vmatprep.subr.mxu0 0.0
    %3943 = vmatpush1.msra.mxu0 0.0
    %3944 = vmatprep.subr.mxu0 0.0
    %3945 = vmatpush1.msra.mxu0 0.0
    %3946 = vmatprep.subr.mxu0 0.0
    %3947 = vmatpush1.msra.mxu0 0.0
    %3948 = vmatprep.subr.mxu0 0.0
    %3949 = vmatpush1.msra.mxu0 0.0
    %3950 = vmatprep.mubr.f32.mxu0 0.0
    %3951 = vmatmul.mubr.f32.gmra.mrb[0].mxu0 %v3884
    %v3952 = vpop.f32.mrb[0].mxu0
    %v3953 = vadd.f32 0.0, %v3952
    %v3954 = vpop.f32.mrb[0].mxu0
    %3955 = vdwg.mxu0
    %v3957 = vrot.slane %v3953, 4
    %v3959 = vadd.f32 %v2767, %v3957
    %v3961 = vrot.slane %v3879, 4
    %3962 = vrot.lane.b32.xlu0 %v3961, 32
    %v3963 = vpop.permute.xlu0 %3962
    %v3964 = vsel %vm1139, %v3963, 0
    %3966 = vmatprep.subr.mxu0 0.0
    %3967 = vmatpush1.msra.mxu0 %v2772
    %3968 = vmatprep.subr.mxu0 0.0
    %3969 = vmatpush1.msra.mxu0 %v2774
    %3970 = vmatprep.subr.mxu0 0.0
    %3971 = vmatpush1.msra.mxu0 %v2776
    %3972 = vmatprep.subr.mxu0 0.0
    %3973 = vmatpush1.msra.mxu0 %v2778
    %3974 = vmatprep.subr.mxu0 0.0
    %3975 = vmatpush1.msra.mxu0 0.0
    %3976 = vmatprep.subr.mxu0 0.0
    %3977 = vmatpush1.msra.mxu0 0.0
    %3978 = vmatprep.subr.mxu0 0.0
    %3979 = vmatpush1.msra.mxu0 0.0
    %3980 = vmatprep.subr.mxu0 0.0
    %3981 = vmatpush1.msra.mxu0 0.0
    %3982 = vmatprep.subr.mxu0 0.0
    %3983 = vmatpush1.msra.mxu0 0.0
    %3984 = vmatprep.subr.mxu0 0.0
    %3985 = vmatpush1.msra.mxu0 0.0
    %3986 = vmatprep.subr.mxu0 0.0
    %3987 = vmatpush1.msra.mxu0 0.0
    %3988 = vmatprep.subr.mxu0 0.0
    %3989 = vmatpush1.msra.mxu0 0.0
    %3990 = vmatprep.subr.mxu0 0.0
    %3991 = vmatpush1.msra.mxu0 0.0
    %3992 = vmatprep.subr.mxu0 0.0
    %3993 = vmatpush1.msra.mxu0 0.0
    %3994 = vmatprep.subr.mxu0 0.0
    %3995 = vmatpush1.msra.mxu0 0.0
    %3996 = vmatprep.subr.mxu0 0.0
    %3997 = vmatpush1.msra.mxu0 0.0
    %3998 = vmatprep.subr.mxu0 0.0
    %3999 = vmatpush1.msra.mxu0 0.0
    %4000 = vmatprep.subr.mxu0 0.0
    %4001 = vmatpush1.msra.mxu0 0.0
    %4002 = vmatprep.subr.mxu0 0.0
    %4003 = vmatpush1.msra.mxu0 0.0
    %4004 = vmatprep.subr.mxu0 0.0
    %4005 = vmatpush1.msra.mxu0 0.0
    %4006 = vmatprep.subr.mxu0 0.0
    %4007 = vmatpush1.msra.mxu0 0.0
    %4008 = vmatprep.subr.mxu0 0.0
    %4009 = vmatpush1.msra.mxu0 0.0
    %4010 = vmatprep.subr.mxu0 0.0
    %4011 = vmatpush1.msra.mxu0 0.0
    %4012 = vmatprep.subr.mxu0 0.0
    %4013 = vmatpush1.msra.mxu0 0.0
    %4014 = vmatprep.subr.mxu0 0.0
    %4015 = vmatpush1.msra.mxu0 0.0
    %4016 = vmatprep.subr.mxu0 0.0
    %4017 = vmatpush1.msra.mxu0 0.0
    %4018 = vmatprep.subr.mxu0 0.0
    %4019 = vmatpush1.msra.mxu0 0.0
    %4020 = vmatprep.subr.mxu0 0.0
    %4021 = vmatpush1.msra.mxu0 0.0
    %4022 = vmatprep.subr.mxu0 0.0
    %4023 = vmatpush1.msra.mxu0 0.0
    %4024 = vmatprep.subr.mxu0 0.0
    %4025 = vmatpush1.msra.mxu0 0.0
    %4026 = vmatprep.subr.mxu0 0.0
    %4027 = vmatpush1.msra.mxu0 0.0
    %4028 = vmatprep.subr.mxu0 0.0
    %4029 = vmatpush1.msra.mxu0 0.0
    %4030 = vmatprep.mubr.f32.mxu0 0.0
    %4031 = vmatmul.mubr.f32.gmra.mrb[0].mxu0 %v3964
    %v4032 = vpop.f32.mrb[0].mxu0
    %v4033 = vadd.f32 0.0, %v4032
    %v4034 = vpop.f32.mrb[0].mxu0
    %4035 = vdwg.mxu0
    %v4037 = vrot.slane %v4033, 6
    %v4039 = vadd.f32 %v2763, %v4037
    %v4040 = vxor.u32 %v3959, 2147483648
    %v4041 = vmul.f32 %v4040, 1.442695
    %v4042 = vpow.pop %v4041
    %v4043 = vadd.f32 %v4042, 1.0
    %v4044 = vrcp.pop %v4043
    %v4045 = vmul.f32 1.0, %v4044
    %v4046 = vtanh.pop %v3959
    %v4048 = vrot.slane %v3846, 6
    %v4050 = vmul.f32 %v4045, %v4048
    %4052 = vrot.lane.b32.xlu0 %v4046, 64
    %v4053 = vpop.permute.xlu0 %4052
    %v4055 = vmul.f32 %v4045, %v4053
    %4057 = vrot.lane.b32.xlu0 %v4055, 32
    %v4058 = vpop.permute.xlu0 %4057
    %v4060 = vadd.f32 %v4050, %v4058
    %v4061 = vtanh.pop %v4060
    %4063 = vrot.lane.b32.xlu0 %v4061, 64
    %v4064 = vpop.permute.xlu0 %4063
    %v4066 = vmul.f32 %v4045, %v4064
    %v4067 = vxor.u32 %v4039, 2147483648
    %v4068 = vmul.f32 %v4067, 1.442695
    %v4069 = vpow.pop %v4068
    %v4070 = vadd.f32 %v4069, 1.0
    %v4071 = vrcp.pop %v4070
    %v4072 = vmul.f32 1.0, %v4071
    %v4073 = vtanh.pop %v4039
    %v4075 = vrot.slane %v3873, 2
    %v4077 = vmul.f32 %v4072, %v4075
    %4079 = vrot.lane.b32.xlu0 %v4073, 64
    %v4080 = vpop.permute.xlu0 %4079
    %v4082 = vmul.f32 %v4072, %v4080
    %4084 = vrot.lane.b32.xlu0 %v4082, 32
    %v4085 = vpop.permute.xlu0 %4084
    %v4087 = vadd.f32 %v4077, %v4085
    %v4088 = vtanh.pop %v4087
    %4090 = vrot.lane.b32.xlu0 %v4088, 64
    %v4091 = vpop.permute.xlu0 %4090
    %v4093 = vmul.f32 %v4072, %v4091
    %v4095 = vrot.slane %v4066, 4
    %4096 = vrot.lane.b32.xlu0 %v4095, 32
    %v4097 = vpop.permute.xlu0 %4096
    %v4098 = vsel %vm1139, %v4097, 0
    %4100 = vmatprep.subr.mxu0 0.0
    %4101 = vmatpush1.msra.mxu0 %v2771
    %4102 = vmatprep.subr.mxu0 0.0
    %4103 = vmatpush1.msra.mxu0 %v2773
    %4104 = vmatprep.subr.mxu0 0.0
    %4105 = vmatpush1.msra.mxu0 %v2775
    %4106 = vmatprep.subr.mxu0 0.0
    %4107 = vmatpush1.msra.mxu0 %v2777
    %4108 = vmatprep.subr.mxu0 0.0
    %4109 = vmatpush1.msra.mxu0 0.0
    %4110 = vmatprep.subr.mxu0 0.0
    %4111 = vmatpush1.msra.mxu0 0.0
    %4112 = vmatprep.subr.mxu0 0.0
    %4113 = vmatpush1.msra.mxu0 0.0
    %4114 = vmatprep.subr.mxu0 0.0
    %4115 = vmatpush1.msra.mxu0 0.0
    %4116 = vmatprep.subr.mxu0 0.0
    %4117 = vmatpush1.msra.mxu0 0.0
    %4118 = vmatprep.subr.mxu0 0.0
    %4119 = vmatpush1.msra.mxu0 0.0
    %4120 = vmatprep.subr.mxu0 0.0
    %4121 = vmatpush1.msra.mxu0 0.0
    %4122 = vmatprep.subr.mxu0 0.0
    %4123 = vmatpush1.msra.mxu0 0.0
    %4124 = vmatprep.subr.mxu0 0.0
    %4125 = vmatpush1.msra.mxu0 0.0
    %4126 = vmatprep.subr.mxu0 0.0
    %4127 = vmatpush1.msra.mxu0 0.0
    %4128 = vmatprep.subr.mxu0 0.0
    %4129 = vmatpush1.msra.mxu0 0.0
    %4130 = vmatprep.subr.mxu0 0.0
    %4131 = vmatpush1.msra.mxu0 0.0
    %4132 = vmatprep.subr.mxu0 0.0
    %4133 = vmatpush1.msra.mxu0 0.0
    %4134 = vmatprep.subr.mxu0 0.0
    %4135 = vmatpush1.msra.mxu0 0.0
    %4136 = vmatprep.subr.mxu0 0.0
    %4137 = vmatpush1.msra.mxu0 0.0
    %4138 = vmatprep.subr.mxu0 0.0
    %4139 = vmatpush1.msra.mxu0 0.0
    %4140 = vmatprep.subr.mxu0 0.0
    %4141 = vmatpush1.msra.mxu0 0.0
    %4142 = vmatprep.subr.mxu0 0.0
    %4143 = vmatpush1.msra.mxu0 0.0
    %4144 = vmatprep.subr.mxu0 0.0
    %4145 = vmatpush1.msra.mxu0 0.0
    %4146 = vmatprep.subr.mxu0 0.0
    %4147 = vmatpush1.msra.mxu0 0.0
    %4148 = vmatprep.subr.mxu0 0.0
    %4149 = vmatpush1.msra.mxu0 0.0
    %4150 = vmatprep.subr.mxu0 0.0
    %4151 = vmatpush1.msra.mxu0 0.0
    %4152 = vmatprep.subr.mxu0 0.0
    %4153 = vmatpush1.msra.mxu0 0.0
    %4154 = vmatprep.subr.mxu0 0.0
    %4155 = vmatpush1.msra.mxu0 0.0
    %4156 = vmatprep.subr.mxu0 0.0
    %4157 = vmatpush1.msra.mxu0 0.0
    %4158 = vmatprep.subr.mxu0 0.0
    %4159 = vmatpush1.msra.mxu0 0.0
    %4160 = vmatprep.subr.mxu0 0.0
    %4161 = vmatpush1.msra.mxu0 0.0
    %4162 = vmatprep.subr.mxu0 0.0
    %4163 = vmatpush1.msra.mxu0 0.0
    %4164 = vmatprep.mubr.f32.mxu0 0.0
    %4165 = vmatmul.mubr.f32.gmra.mrb[0].mxu0 %v4098
    %v4166 = vpop.f32.mrb[0].mxu0
    %v4167 = vadd.f32 0.0, %v4166
    %v4168 = vpop.f32.mrb[0].mxu0
    %4169 = vdwg.mxu0
    %v4171 = vrot.slane %v4167, 2
    %v4173 = vadd.f32 %v2767, %v4171
    %v4175 = vrot.slane %v4093, 2
    %4176 = vrot.lane.b32.xlu0 %v4175, 32
    %v4177 = vpop.permute.xlu0 %4176
    %v4178 = vsel %vm1139, %v4177, 0
    %4180 = vmatprep.subr.mxu0 0.0
    %4181 = vmatpush1.msra.mxu0 %v2772
    %4182 = vmatprep.subr.mxu0 0.0
    %4183 = vmatpush1.msra.mxu0 %v2774
    %4184 = vmatprep.subr.mxu0 0.0
    %4185 = vmatpush1.msra.mxu0 %v2776
    %4186 = vmatprep.subr.mxu0 0.0
    %4187 = vmatpush1.msra.mxu0 %v2778
    %4188 = vmatprep.subr.mxu0 0.0
    %4189 = vmatpush1.msra.mxu0 0.0
    %4190 = vmatprep.subr.mxu0 0.0
    %4191 = vmatpush1.msra.mxu0 0.0
    %4192 = vmatprep.subr.mxu0 0.0
    %4193 = vmatpush1.msra.mxu0 0.0
    %4194 = vmatprep.subr.mxu0 0.0
    %4195 = vmatpush1.msra.mxu0 0.0
    %4196 = vmatprep.subr.mxu0 0.0
    %4197 = vmatpush1.msra.mxu0 0.0
    %4198 = vmatprep.subr.mxu0 0.0
    %4199 = vmatpush1.msra.mxu0 0.0
    %4200 = vmatprep.subr.mxu0 0.0
    %4201 = vmatpush1.msra.mxu0 0.0
    %4202 = vmatprep.subr.mxu0 0.0
    %4203 = vmatpush1.msra.mxu0 0.0
    %4204 = vmatprep.subr.mxu0 0.0
    %4205 = vmatpush1.msra.mxu0 0.0
    %4206 = vmatprep.subr.mxu0 0.0
    %4207 = vmatpush1.msra.mxu0 0.0
    %4208 = vmatprep.subr.mxu0 0.0
    %4209 = vmatpush1.msra.mxu0 0.0
    %4210 = vmatprep.subr.mxu0 0.0
    %4211 = vmatpush1.msra.mxu0 0.0
    %4212 = vmatprep.subr.mxu0 0.0
    %4213 = vmatpush1.msra.mxu0 0.0
    %4214 = vmatprep.subr.mxu0 0.0
    %4215 = vmatpush1.msra.mxu0 0.0
    %4216 = vmatprep.subr.mxu0 0.0
    %4217 = vmatpush1.msra.mxu0 0.0
    %4218 = vmatprep.subr.mxu0 0.0
    %4219 = vmatpush1.msra.mxu0 0.0
    %4220 = vmatprep.subr.mxu0 0.0
    %4221 = vmatpush1.msra.mxu0 0.0
    %4222 = vmatprep.subr.mxu0 0.0
    %4223 = vmatpush1.msra.mxu0 0.0
    %4224 = vmatprep.subr.mxu0 0.0
    %4225 = vmatpush1.msra.mxu0 0.0
    %4226 = vmatprep.subr.mxu0 0.0
    %4227 = vmatpush1.msra.mxu0 0.0
    %4228 = vmatprep.subr.mxu0 0.0
    %4229 = vmatpush1.msra.mxu0 0.0
    %4230 = vmatprep.subr.mxu0 0.0
    %4231 = vmatpush1.msra.mxu0 0.0
    %4232 = vmatprep.subr.mxu0 0.0
    %4233 = vmatpush1.msra.mxu0 0.0
    %4234 = vmatprep.subr.mxu0 0.0
    %4235 = vmatpush1.msra.mxu0 0.0
    %4236 = vmatprep.subr.mxu0 0.0
    %4237 = vmatpush1.msra.mxu0 0.0
    %4238 = vmatprep.subr.mxu0 0.0
    %4239 = vmatpush1.msra.mxu0 0.0
    %4240 = vmatprep.subr.mxu0 0.0
    %4241 = vmatpush1.msra.mxu0 0.0
    %4242 = vmatprep.subr.mxu0 0.0
    %4243 = vmatpush1.msra.mxu0 0.0
    %4244 = vmatprep.mubr.f32.mxu0 0.0
    %4245 = vmatmul.mubr.f32.gmra.mrb[0].mxu0 %v4178
    %v4246 = vpop.f32.mrb[0].mxu0
    %v4247 = vadd.f32 0.0, %v4246
    %v4248 = vpop.f32.mrb[0].mxu0
    %4249 = vdwg.mxu0
    %v4250 = vadd.f32 %v2763, %v4247
    %v4251 = vxor.u32 %v4173, 2147483648
    %v4252 = vmul.f32 %v4251, 1.442695
    %v4253 = vpow.pop %v4252
    %v4254 = vadd.f32 %v4253, 1.0
    %v4255 = vrcp.pop %v4254
    %v4256 = vmul.f32 1.0, %v4255
    %v4257 = vtanh.pop %v4173
    %v4259 = vrot.slane %v4060, 6
    %v4261 = vmul.f32 %v4256, %v4259
    %4263 = vrot.lane.b32.xlu0 %v4257, 64
    %v4264 = vpop.permute.xlu0 %4263
    %v4266 = vmul.f32 %v4256, %v4264
    %4268 = vrot.lane.b32.xlu0 %v4266, 32
    %v4269 = vpop.permute.xlu0 %4268
    %v4271 = vadd.f32 %v4261, %v4269
    %v4272 = vtanh.pop %v4271
    %4274 = vrot.lane.b32.xlu0 %v4272, 64
    %v4275 = vpop.permute.xlu0 %4274
    %v4277 = vmul.f32 %v4256, %v4275
    %v4278 = vxor.u32 %v4250, 2147483648
    %v4279 = vmul.f32 %v4278, 1.442695
    %v4280 = vpow.pop %v4279
    %v4281 = vadd.f32 %v4280, 1.0
    %v4282 = vrcp.pop %v4281
    %v4283 = vmul.f32 1.0, %v4282
    %v4284 = vtanh.pop %v4250
    %v4286 = vrot.slane %v4087, 2
    %v4288 = vmul.f32 %v4283, %v4286
    %4290 = vrot.lane.b32.xlu0 %v4284, 64
    %v4291 = vpop.permute.xlu0 %4290
    %v4293 = vmul.f32 %v4283, %v4291
    %4295 = vrot.lane.b32.xlu0 %v4293, 32
    %v4296 = vpop.permute.xlu0 %4295
    %v4298 = vadd.f32 %v4288, %v4296
    %v4299 = vtanh.pop %v4298
    %4301 = vrot.lane.b32.xlu0 %v4299, 64
    %v4302 = vpop.permute.xlu0 %4301
    %v4304 = vmul.f32 %v4283, %v4302
    %v4305 = vsel %vm2627, %v2796, %v3002
    %v4306 = vsel %vm2629, %v4305, %v3218
    %v4307 = vsel %vm2631, %v4306, %v3429
    %v4308 = vsel %vm2627, %v3639, %v3852
    %v4309 = vsel %vm2629, %v4308, %v4066
    %v4310 = vsel %vm2631, %v4309, %v4277
    %v4311 = vsel %vm2627, %v4304, %v4093
    %v4312 = vsel %vm2629, %v4311, %v3879
    %v4313 = vsel %vm2631, %v4312, %v3666
    %v4314 = vsel %vm2627, %v3456, %v3245
    %v4315 = vsel %vm2629, %v4314, %v3031
    %v4316 = vsel %vm2631, %v4315, %v2814
    %4319 = vrot.lane.b32.xlu0 %v4307, 32
    %v4320 = vpop.permute.xlu0 %4319
    %4321 = vrot.lane.b32.xlu0 %v4310, 32
    %v4322 = vpop.permute.xlu0 %4321
    %4327 = vrot.lane.b32.xlu0 %v4313, 64
    %v4328 = vpop.permute.xlu0 %4327
    %4329 = vrot.lane.b32.xlu0 %v4316, 64
    %v4330 = vpop.permute.xlu0 %4329
    %v4333 = vsel %vm1139, %v4320, %v4328
    %v4334 = vsel %vm1139, %v4322, %v4330
    %v4335 = vld [vmem:[%s37] sm:$0xff]
    %v4336 = vld [vmem:[%s37 + $0x8] sm:$0xff]
    %v4337 = vld [vmem:[%s37 + $0x10] sm:$0xff]
    %v4338 = vld [vmem:[%s37 + $0x18] sm:$0xff]
    %v4339 = vld [vmem:[%s37 + $0x20] sm:$0xff]
    %v4340 = vld [vmem:[%s37 + $0x28] sm:$0xff]
    %v4341 = vld [vmem:[%s37 + $0x30] sm:$0xff]
    %v4342 = vld [vmem:[%s37 + $0x38] sm:$0xff]
    %v4343 = vld [vmem:[%s37 + $0x40] sm:$0xff]
    %v4344 = vld [vmem:[%s37 + $0x48] sm:$0xff]
    %v4345 = vld [vmem:[%s37 + $0x50] sm:$0xff]
    %v4346 = vld [vmem:[%s37 + $0x58] sm:$0xff]
    %v4347 = vld [vmem:[%s37 + $0x60] sm:$0xff]
    %v4348 = vld [vmem:[%s37 + $0x68] sm:$0xff]
    %v4349 = vld [vmem:[%s37 + $0x70] sm:$0xff]
    %v4350 = vld [vmem:[%s37 + $0x78] sm:$0xff]
    %v4351 = vld [vmem:[%s41] sm:$0x3]
    %v4353 = vlaneseq
    %v4354 = vshrl.u32 %v4353, 7
    %v4355 = vsub.s32 0, %v4354
    %v4356 = vrot.slane %v4351, %v4355
    %v4357 = vlaneseq
    %v4358 = vshrl.u32 %v4357, 7
    %v4359 = vsub.s32 1, %v4358
    %v4360 = vrot.slane %v4351, %v4359
    %v4364 = vsel %vm307, %v4333, 0
    %v4367 = vsel %vm307, %v4334, 0
    %4369 = vmatprep.subr.mxu0 %v4336
    %4370 = vmatpush1.msra.mxu0 %v4335
    %4371 = vmatprep.subr.mxu0 %v4338
    %4372 = vmatpush1.msra.mxu0 %v4337
    %4373 = vmatprep.subr.mxu0 %v4340
    %4374 = vmatpush1.msra.mxu0 %v4339
    %4375 = vmatprep.subr.mxu0 %v4342
    %4376 = vmatpush1.msra.mxu0 %v4341
    %4377 = vmatprep.subr.mxu0 %v4344
    %4378 = vmatpush1.msra.mxu0 %v4343
    %4379 = vmatprep.subr.mxu0 %v4346
    %4380 = vmatpush1.msra.mxu0 %v4345
    %4381 = vmatprep.subr.mxu0 %v4348
    %4382 = vmatpush1.msra.mxu0 %v4347
    %4383 = vmatprep.subr.mxu0 %v4350
    %4384 = vmatpush1.msra.mxu0 %v4349
    %4385 = vmatprep.subr.mxu0 0.0
    %4386 = vmatpush1.msra.mxu0 0.0
    %4387 = vmatprep.subr.mxu0 0.0
    %4388 = vmatpush1.msra.mxu0 0.0
    %4389 = vmatprep.subr.mxu0 0.0
    %4390 = vmatpush1.msra.mxu0 0.0
    %4391 = vmatprep.subr.mxu0 0.0
    %4392 = vmatpush1.msra.mxu0 0.0
    %4393 = vmatprep.subr.mxu0 0.0
    %4394 = vmatpush1.msra.mxu0 0.0
    %4395 = vmatprep.subr.mxu0 0.0
    %4396 = vmatpush1.msra.mxu0 0.0
    %4397 = vmatprep.subr.mxu0 0.0
    %4398 = vmatpush1.msra.mxu0 0.0
    %4399 = vmatprep.subr.mxu0 0.0
    %4400 = vmatpush1.msra.mxu0 0.0
    %4401 = vmatprep.subr.mxu0 0.0
    %4402 = vmatpush1.msra.mxu0 0.0
    %4403 = vmatprep.subr.mxu0 0.0
    %4404 = vmatpush1.msra.mxu0 0.0
    %4405 = vmatprep.subr.mxu0 0.0
    %4406 = vmatpush1.msra.mxu0 0.0
    %4407 = vmatprep.subr.mxu0 0.0
    %4408 = vmatpush1.msra.mxu0 0.0
    %4409 = vmatprep.subr.mxu0 0.0
    %4410 = vmatpush1.msra.mxu0 0.0
    %4411 = vmatprep.subr.mxu0 0.0
    %4412 = vmatpush1.msra.mxu0 0.0
    %4413 = vmatprep.subr.mxu0 0.0
    %4414 = vmatpush1.msra.mxu0 0.0
    %4415 = vmatprep.subr.mxu0 0.0
    %4416 = vmatpush1.msra.mxu0 0.0
    %4417 = vmatprep.subr.mxu0 0.0
    %4418 = vmatpush1.msra.mxu0 0.0
    %4419 = vmatprep.subr.mxu0 0.0
    %4420 = vmatpush1.msra.mxu0 0.0
    %4421 = vmatprep.subr.mxu0 0.0
    %4422 = vmatpush1.msra.mxu0 0.0
    %4423 = vmatprep.subr.mxu0 0.0
    %4424 = vmatpush1.msra.mxu0 0.0
    %4425 = vmatprep.subr.mxu0 0.0
    %4426 = vmatpush1.msra.mxu0 0.0
    %4427 = vmatprep.subr.mxu0 0.0
    %4428 = vmatpush1.msra.mxu0 0.0
    %4429 = vmatprep.subr.mxu0 0.0
    %4430 = vmatpush1.msra.mxu0 0.0
    %4431 = vmatprep.subr.mxu0 0.0
    %4432 = vmatpush1.msra.mxu0 0.0
    %4433 = vmatprep.mubr.f32.mxu0 0.0
    %4434 = vmatmul.mubr.f32.gmra.mrb[0].mxu0 %v4364
    %v4435 = vpop.f32.mrb[0].mxu0
    %v4436 = vadd.f32 %v4356, %v4435
    %v4437 = vpop.f32.mrb[0].mxu0
    %v4438 = vadd.f32 %v4360, %v4437
    %4439 = vmatprep.mubr.f32.mxu0 0.0
    %4440 = vmatmul.mubr.f32.gmra.mrb[0].mxu0 %v4367
    %v4441 = vpop.f32.mrb[0].mxu0
    %v4442 = vadd.f32 %v4356, %v4441
    %v4443 = vpop.f32.mrb[0].mxu0
    %v4444 = vadd.f32 %v4360, %v4443
    %4445 = vdwg.mxu0
    %v4446 = vld [vmem:[%s39] sm:$0xff]
    %v4447 = vld [vmem:[%s39 + $0x8] sm:$0xff]
    %v4448 = vld [vmem:[%s39 + $0x10] sm:$0xff]
    %v4449 = vld [vmem:[%s39 + $0x18] sm:$0xff]
    %v4450 = vld [vmem:[%s39 + $0x20] sm:$0xff]
    %v4451 = vld [vmem:[%s39 + $0x28] sm:$0xff]
    %v4452 = vld [vmem:[%s39 + $0x30] sm:$0xff]
    %v4453 = vld [vmem:[%s39 + $0x38] sm:$0xff]
    %v4454 = vxor.u32 %v4436, 2147483648
    %v4455 = vmul.f32 %v4454, 1.442695
    %v4456 = vpow.pop %v4455
    %v4457 = vadd.f32 %v4456, 1.0
    %v4458 = vrcp.pop %v4457
    %v4459 = vmul.f32 1.0, %v4458
    %v4460 = vtanh.pop %v4436
    %4462 = vrot.lane.b32.xlu0 %v4460, 64
    %v4463 = vpop.permute.xlu0 %4462
    %v4465 = vmul.f32 %v4459, %v4463
    %v4466 = vtanh.pop %v4465
    %4468 = vrot.lane.b32.xlu0 %v4466, 96
    %v4469 = vpop.permute.xlu0 %4468
    %v4471 = vmul.f32 %v4459, %v4469
    %v4472 = vxor.u32 %v4444, 2147483648
    %v4473 = vmul.f32 %v4472, 1.442695
    %v4474 = vpow.pop %v4473
    %v4475 = vadd.f32 %v4474, 1.0
    %v4476 = vrcp.pop %v4475
    %v4477 = vmul.f32 1.0, %v4476
    %v4478 = vtanh.pop %v4444
    %4480 = vrot.lane.b32.xlu0 %v4478, 64
    %v4481 = vpop.permute.xlu0 %4480
    %v4483 = vmul.f32 %v4477, %v4481
    %v4484 = vtanh.pop %v4483
    %4486 = vrot.lane.b32.xlu0 %v4484, 96
    %v4487 = vpop.permute.xlu0 %4486
    %v4489 = vmul.f32 %v4477, %v4487
    %4491 = vrot.lane.b32.xlu0 %v4471, 32
    %v4492 = vpop.permute.xlu0 %4491
    %v4493 = vsel %vm1139, %v4492, 0
    %4495 = vmatprep.subr.mxu0 0.0
    %4496 = vmatpush1.msra.mxu0 %v4446
    %4497 = vmatprep.subr.mxu0 0.0
    %4498 = vmatpush1.msra.mxu0 %v4448
    %4499 = vmatprep.subr.mxu0 0.0
    %4500 = vmatpush1.msra.mxu0 %v4450
    %4501 = vmatprep.subr.mxu0 0.0
    %4502 = vmatpush1.msra.mxu0 %v4452
    %4503 = vmatprep.subr.mxu0 0.0
    %4504 = vmatpush1.msra.mxu0 0.0
    %4505 = vmatprep.subr.mxu0 0.0
    %4506 = vmatpush1.msra.mxu0 0.0
    %4507 = vmatprep.subr.mxu0 0.0
    %4508 = vmatpush1.msra.mxu0 0.0
    %4509 = vmatprep.subr.mxu0 0.0
    %4510 = vmatpush1.msra.mxu0 0.0
    %4511 = vmatprep.subr.mxu0 0.0
    %4512 = vmatpush1.msra.mxu0 0.0
    %4513 = vmatprep.subr.mxu0 0.0
    %4514 = vmatpush1.msra.mxu0 0.0
    %4515 = vmatprep.subr.mxu0 0.0
    %4516 = vmatpush1.msra.mxu0 0.0
    %4517 = vmatprep.subr.mxu0 0.0
    %4518 = vmatpush1.msra.mxu0 0.0
    %4519 = vmatprep.subr.mxu0 0.0
    %4520 = vmatpush1.msra.mxu0 0.0
    %4521 = vmatprep.subr.mxu0 0.0
    %4522 = vmatpush1.msra.mxu0 0.0
    %4523 = vmatprep.subr.mxu0 0.0
    %4524 = vmatpush1.msra.mxu0 0.0
    %4525 = vmatprep.subr.mxu0 0.0
    %4526 = vmatpush1.msra.mxu0 0.0
    %4527 = vmatprep.subr.mxu0 0.0
    %4528 = vmatpush1.msra.mxu0 0.0
    %4529 = vmatprep.subr.mxu0 0.0
    %4530 = vmatpush1.msra.mxu0 0.0
    %4531 = vmatprep.subr.mxu0 0.0
    %4532 = vmatpush1.msra.mxu0 0.0
    %4533 = vmatprep.subr.mxu0 0.0
    %4534 = vmatpush1.msra.mxu0 0.0
    %4535 = vmatprep.subr.mxu0 0.0
    %4536 = vmatpush1.msra.mxu0 0.0
    %4537 = vmatprep.subr.mxu0 0.0
    %4538 = vmatpush1.msra.mxu0 0.0
    %4539 = vmatprep.subr.mxu0 0.0
    %4540 = vmatpush1.msra.mxu0 0.0
    %4541 = vmatprep.subr.mxu0 0.0
    %4542 = vmatpush1.msra.mxu0 0.0
    %4543 = vmatprep.subr.mxu0 0.0
    %4544 = vmatpush1.msra.mxu0 0.0
    %4545 = vmatprep.subr.mxu0 0.0
    %4546 = vmatpush1.msra.mxu0 0.0
    %4547 = vmatprep.subr.mxu0 0.0
    %4548 = vmatpush1.msra.mxu0 0.0
    %4549 = vmatprep.subr.mxu0 0.0
    %4550 = vmatpush1.msra.mxu0 0.0
    %4551 = vmatprep.subr.mxu0 0.0
    %4552 = vmatpush1.msra.mxu0 0.0
    %4553 = vmatprep.subr.mxu0 0.0
    %4554 = vmatpush1.msra.mxu0 0.0
    %4555 = vmatprep.subr.mxu0 0.0
    %4556 = vmatpush1.msra.mxu0 0.0
    %4557 = vmatprep.subr.mxu0 0.0
    %4558 = vmatpush1.msra.mxu0 0.0
    %4559 = vmatprep.mubr.f32.mxu0 0.0
    %4560 = vmatmul.mubr.f32.gmra.mrb[0].mxu0 %v4493
    %v4561 = vpop.f32.mrb[0].mxu0
    %v4562 = vadd.f32 0.0, %v4561
    %v4563 = vpop.f32.mrb[0].mxu0
    %4564 = vdwg.mxu0
    %v4566 = vrot.slane %v4562, 6
    %v4568 = vadd.f32 %v4436, %v4566
    %v4570 = vrot.slane %v4489, 6
    %4571 = vrot.lane.b32.xlu0 %v4570, 32
    %v4572 = vpop.permute.xlu0 %4571
    %v4573 = vsel %vm1139, %v4572, 0
    %4575 = vmatprep.subr.mxu0 0.0
    %4576 = vmatpush1.msra.mxu0 %v4447
    %4577 = vmatprep.subr.mxu0 0.0
    %4578 = vmatpush1.msra.mxu0 %v4449
    %4579 = vmatprep.subr.mxu0 0.0
    %4580 = vmatpush1.msra.mxu0 %v4451
    %4581 = vmatprep.subr.mxu0 0.0
    %4582 = vmatpush1.msra.mxu0 %v4453
    %4583 = vmatprep.subr.mxu0 0.0
    %4584 = vmatpush1.msra.mxu0 0.0
    %4585 = vmatprep.subr.mxu0 0.0
    %4586 = vmatpush1.msra.mxu0 0.0
    %4587 = vmatprep.subr.mxu0 0.0
    %4588 = vmatpush1.msra.mxu0 0.0
    %4589 = vmatprep.subr.mxu0 0.0
    %4590 = vmatpush1.msra.mxu0 0.0
    %4591 = vmatprep.subr.mxu0 0.0
    %4592 = vmatpush1.msra.mxu0 0.0
    %4593 = vmatprep.subr.mxu0 0.0
    %4594 = vmatpush1.msra.mxu0 0.0
    %4595 = vmatprep.subr.mxu0 0.0
    %4596 = vmatpush1.msra.mxu0 0.0
    %4597 = vmatprep.subr.mxu0 0.0
    %4598 = vmatpush1.msra.mxu0 0.0
    %4599 = vmatprep.subr.mxu0 0.0
    %4600 = vmatpush1.msra.mxu0 0.0
    %4601 = vmatprep.subr.mxu0 0.0
    %4602 = vmatpush1.msra.mxu0 0.0
    %4603 = vmatprep.subr.mxu0 0.0
    %4604 = vmatpush1.msra.mxu0 0.0
    %4605 = vmatprep.subr.mxu0 0.0
    %4606 = vmatpush1.msra.mxu0 0.0
    %4607 = vmatprep.subr.mxu0 0.0
    %4608 = vmatpush1.msra.mxu0 0.0
    %4609 = vmatprep.subr.mxu0 0.0
    %4610 = vmatpush1.msra.mxu0 0.0
    %4611 = vmatprep.subr.mxu0 0.0
    %4612 = vmatpush1.msra.mxu0 0.0
    %4613 = vmatprep.subr.mxu0 0.0
    %4614 = vmatpush1.msra.mxu0 0.0
    %4615 = vmatprep.subr.mxu0 0.0
    %4616 = vmatpush1.msra.mxu0 0.0
    %4617 = vmatprep.subr.mxu0 0.0
    %4618 = vmatpush1.msra.mxu0 0.0
    %4619 = vmatprep.subr.mxu0 0.0
    %4620 = vmatpush1.msra.mxu0 0.0
    %4621 = vmatprep.subr.mxu0 0.0
    %4622 = vmatpush1.msra.mxu0 0.0
    %4623 = vmatprep.subr.mxu0 0.0
    %4624 = vmatpush1.msra.mxu0 0.0
    %4625 = vmatprep.subr.mxu0 0.0
    %4626 = vmatpush1.msra.mxu0 0.0
    %4627 = vmatprep.subr.mxu0 0.0
    %4628 = vmatpush1.msra.mxu0 0.0
    %4629 = vmatprep.subr.mxu0 0.0
    %4630 = vmatpush1.msra.mxu0 0.0
    %4631 = vmatprep.subr.mxu0 0.0
    %4632 = vmatpush1.msra.mxu0 0.0
    %4633 = vmatprep.subr.mxu0 0.0
    %4634 = vmatpush1.msra.mxu0 0.0
    %4635 = vmatprep.subr.mxu0 0.0
    %4636 = vmatpush1.msra.mxu0 0.0
    %4637 = vmatprep.subr.mxu0 0.0
    %4638 = vmatpush1.msra.mxu0 0.0
    %4639 = vmatprep.mubr.f32.mxu0 0.0
    %4640 = vmatmul.mubr.f32.gmra.mrb[0].mxu0 %v4573
    %v4641 = vpop.f32.mrb[0].mxu0
    %v4642 = vadd.f32 0.0, %v4641
    %v4643 = vpop.f32.mrb[0].mxu0
    %4644 = vdwg.mxu0
    %v4646 = vrot.slane %v4642, 4
    %v4648 = vadd.f32 %v4444, %v4646
    %v4649 = vxor.u32 %v4568, 2147483648
    %v4650 = vmul.f32 %v4649, 1.442695
    %v4651 = vpow.pop %v4650
    %v4652 = vadd.f32 %v4651, 1.0
    %v4653 = vrcp.pop %v4652
    %v4654 = vmul.f32 1.0, %v4653
    %v4655 = vtanh.pop %v4568
    %v4657 = vrot.slane %v4465, 6
    %4658 = vrot.lane.b32.xlu0 %v4657, 32
    %v4659 = vpop.permute.xlu0 %4658
    %v4661 = vmul.f32 %v4654, %v4659
    %4663 = vrot.lane.b32.xlu0 %v4655, 64
    %v4664 = vpop.permute.xlu0 %4663
    %v4666 = vmul.f32 %v4654, %v4664
    %4668 = vrot.lane.b32.xlu0 %v4666, 32
    %v4669 = vpop.permute.xlu0 %4668
    %v4671 = vadd.f32 %v4661, %v4669
    %v4672 = vtanh.pop %v4671
    %4674 = vrot.lane.b32.xlu0 %v4672, 64
    %v4675 = vpop.permute.xlu0 %4674
    %v4677 = vmul.f32 %v4654, %v4675
    %v4678 = vxor.u32 %v4648, 2147483648
    %v4679 = vmul.f32 %v4678, 1.442695
    %v4680 = vpow.pop %v4679
    %v4681 = vadd.f32 %v4680, 1.0
    %v4682 = vrcp.pop %v4681
    %v4683 = vmul.f32 1.0, %v4682
    %v4684 = vtanh.pop %v4648
    %v4686 = vrot.slane %v4483, 2
    %4687 = vrot.lane.b32.xlu0 %v4686, 32
    %v4688 = vpop.permute.xlu0 %4687
    %v4690 = vmul.f32 %v4683, %v4688
    %4692 = vrot.lane.b32.xlu0 %v4684, 64
    %v4693 = vpop.permute.xlu0 %4692
    %v4695 = vmul.f32 %v4683, %v4693
    %4697 = vrot.lane.b32.xlu0 %v4695, 32
    %v4698 = vpop.permute.xlu0 %4697
    %v4700 = vadd.f32 %v4690, %v4698
    %v4701 = vtanh.pop %v4700
    %4703 = vrot.lane.b32.xlu0 %v4701, 64
    %v4704 = vpop.permute.xlu0 %4703
    %v4706 = vmul.f32 %v4683, %v4704
    %v4708 = vrot.slane %v4677, 2
    %4709 = vrot.lane.b32.xlu0 %v4708, 32
    %v4710 = vpop.permute.xlu0 %4709
    %v4711 = vsel %vm1139, %v4710, 0
    %4713 = vmatprep.subr.mxu0 0.0
    %4714 = vmatpush1.msra.mxu0 %v4446
    %4715 = vmatprep.subr.mxu0 0.0
    %4716 = vmatpush1.msra.mxu0 %v4448
    %4717 = vmatprep.subr.mxu0 0.0
    %4718 = vmatpush1.msra.mxu0 %v4450
    %4719 = vmatprep.subr.mxu0 0.0
    %4720 = vmatpush1.msra.mxu0 %v4452
    %4721 = vmatprep.subr.mxu0 0.0
    %4722 = vmatpush1.msra.mxu0 0.0
    %4723 = vmatprep.subr.mxu0 0.0
    %4724 = vmatpush1.msra.mxu0 0.0
    %4725 = vmatprep.subr.mxu0 0.0
    %4726 = vmatpush1.msra.mxu0 0.0
    %4727 = vmatprep.subr.mxu0 0.0
    %4728 = vmatpush1.msra.mxu0 0.0
    %4729 = vmatprep.subr.mxu0 0.0
    %4730 = vmatpush1.msra.mxu0 0.0
    %4731 = vmatprep.subr.mxu0 0.0
    %4732 = vmatpush1.msra.mxu0 0.0
    %4733 = vmatprep.subr.mxu0 0.0
    %4734 = vmatpush1.msra.mxu0 0.0
    %4735 = vmatprep.subr.mxu0 0.0
    %4736 = vmatpush1.msra.mxu0 0.0
    %4737 = vmatprep.subr.mxu0 0.0
    %4738 = vmatpush1.msra.mxu0 0.0
    %4739 = vmatprep.subr.mxu0 0.0
    %4740 = vmatpush1.msra.mxu0 0.0
    %4741 = vmatprep.subr.mxu0 0.0
    %4742 = vmatpush1.msra.mxu0 0.0
    %4743 = vmatprep.subr.mxu0 0.0
    %4744 = vmatpush1.msra.mxu0 0.0
    %4745 = vmatprep.subr.mxu0 0.0
    %4746 = vmatpush1.msra.mxu0 0.0
    %4747 = vmatprep.subr.mxu0 0.0
    %4748 = vmatpush1.msra.mxu0 0.0
    %4749 = vmatprep.subr.mxu0 0.0
    %4750 = vmatpush1.msra.mxu0 0.0
    %4751 = vmatprep.subr.mxu0 0.0
    %4752 = vmatpush1.msra.mxu0 0.0
    %4753 = vmatprep.subr.mxu0 0.0
    %4754 = vmatpush1.msra.mxu0 0.0
    %4755 = vmatprep.subr.mxu0 0.0
    %4756 = vmatpush1.msra.mxu0 0.0
    %4757 = vmatprep.subr.mxu0 0.0
    %4758 = vmatpush1.msra.mxu0 0.0
    %4759 = vmatprep.subr.mxu0 0.0
    %4760 = vmatpush1.msra.mxu0 0.0
    %4761 = vmatprep.subr.mxu0 0.0
    %4762 = vmatpush1.msra.mxu0 0.0
    %4763 = vmatprep.subr.mxu0 0.0
    %4764 = vmatpush1.msra.mxu0 0.0
    %4765 = vmatprep.subr.mxu0 0.0
    %4766 = vmatpush1.msra.mxu0 0.0
    %4767 = vmatprep.subr.mxu0 0.0
    %4768 = vmatpush1.msra.mxu0 0.0
    %4769 = vmatprep.subr.mxu0 0.0
    %4770 = vmatpush1.msra.mxu0 0.0
    %4771 = vmatprep.subr.mxu0 0.0
    %4772 = vmatpush1.msra.mxu0 0.0
    %4773 = vmatprep.subr.mxu0 0.0
    %4774 = vmatpush1.msra.mxu0 0.0
    %4775 = vmatprep.subr.mxu0 0.0
    %4776 = vmatpush1.msra.mxu0 0.0
    %4777 = vmatprep.mubr.f32.mxu0 0.0
    %4778 = vmatmul.mubr.f32.gmra.mrb[0].mxu0 %v4711
    %v4779 = vpop.f32.mrb[0].mxu0
    %v4780 = vadd.f32 0.0, %v4779
    %v4781 = vpop.f32.mrb[0].mxu0
    %4782 = vdwg.mxu0
    %v4784 = vrot.slane %v4780, 4
    %v4786 = vadd.f32 %v4436, %v4784
    %v4788 = vrot.slane %v4706, 4
    %4789 = vrot.lane.b32.xlu0 %v4788, 32
    %v4790 = vpop.permute.xlu0 %4789
    %v4791 = vsel %vm1139, %v4790, 0
    %4793 = vmatprep.subr.mxu0 0.0
    %4794 = vmatpush1.msra.mxu0 %v4447
    %4795 = vmatprep.subr.mxu0 0.0
    %4796 = vmatpush1.msra.mxu0 %v4449
    %4797 = vmatprep.subr.mxu0 0.0
    %4798 = vmatpush1.msra.mxu0 %v4451
    %4799 = vmatprep.subr.mxu0 0.0
    %4800 = vmatpush1.msra.mxu0 %v4453
    %4801 = vmatprep.subr.mxu0 0.0
    %4802 = vmatpush1.msra.mxu0 0.0
    %4803 = vmatprep.subr.mxu0 0.0
    %4804 = vmatpush1.msra.mxu0 0.0
    %4805 = vmatprep.subr.mxu0 0.0
    %4806 = vmatpush1.msra.mxu0 0.0
    %4807 = vmatprep.subr.mxu0 0.0
    %4808 = vmatpush1.msra.mxu0 0.0
    %4809 = vmatprep.subr.mxu0 0.0
    %4810 = vmatpush1.msra.mxu0 0.0
    %4811 = vmatprep.subr.mxu0 0.0
    %4812 = vmatpush1.msra.mxu0 0.0
    %4813 = vmatprep.subr.mxu0 0.0
    %4814 = vmatpush1.msra.mxu0 0.0
    %4815 = vmatprep.subr.mxu0 0.0
    %4816 = vmatpush1.msra.mxu0 0.0
    %4817 = vmatprep.subr.mxu0 0.0
    %4818 = vmatpush1.msra.mxu0 0.0
    %4819 = vmatprep.subr.mxu0 0.0
    %4820 = vmatpush1.msra.mxu0 0.0
    %4821 = vmatprep.subr.mxu0 0.0
    %4822 = vmatpush1.msra.mxu0 0.0
    %4823 = vmatprep.subr.mxu0 0.0
    %4824 = vmatpush1.msra.mxu0 0.0
    %4825 = vmatprep.subr.mxu0 0.0
    %4826 = vmatpush1.msra.mxu0 0.0
    %4827 = vmatprep.subr.mxu0 0.0
    %4828 = vmatpush1.msra.mxu0 0.0
    %4829 = vmatprep.subr.mxu0 0.0
    %4830 = vmatpush1.msra.mxu0 0.0
    %4831 = vmatprep.subr.mxu0 0.0
    %4832 = vmatpush1.msra.mxu0 0.0
    %4833 = vmatprep.subr.mxu0 0.0
    %4834 = vmatpush1.msra.mxu0 0.0
    %4835 = vmatprep.subr.mxu0 0.0
    %4836 = vmatpush1.msra.mxu0 0.0
    %4837 = vmatprep.subr.mxu0 0.0
    %4838 = vmatpush1.msra.mxu0 0.0
    %4839 = vmatprep.subr.mxu0 0.0
    %4840 = vmatpush1.msra.mxu0 0.0
    %4841 = vmatprep.subr.mxu0 0.0
    %4842 = vmatpush1.msra.mxu0 0.0
    %4843 = vmatprep.subr.mxu0 0.0
    %4844 = vmatpush1.msra.mxu0 0.0
    %4845 = vmatprep.subr.mxu0 0.0
    %4846 = vmatpush1.msra.mxu0 0.0
    %4847 = vmatprep.subr.mxu0 0.0
    %4848 = vmatpush1.msra.mxu0 0.0
    %4849 = vmatprep.subr.mxu0 0.0
    %4850 = vmatpush1.msra.mxu0 0.0
    %4851 = vmatprep.subr.mxu0 0.0
    %4852 = vmatpush1.msra.mxu0 0.0
    %4853 = vmatprep.subr.mxu0 0.0
    %4854 = vmatpush1.msra.mxu0 0.0
    %4855 = vmatprep.subr.mxu0 0.0
    %4856 = vmatpush1.msra.mxu0 0.0
    %4857 = vmatprep.mubr.f32.mxu0 0.0
    %4858 = vmatmul.mubr.f32.gmra.mrb[0].mxu0 %v4791
    %v4859 = vpop.f32.mrb[0].mxu0
    %v4860 = vadd.f32 0.0, %v4859
    %v4861 = vpop.f32.mrb[0].mxu0
    %4862 = vdwg.mxu0
    %v4864 = vrot.slane %v4860, 6
    %v4866 = vadd.f32 %v4444, %v4864
    %v4867 = vxor.u32 %v4786, 2147483648
    %v4868 = vmul.f32 %v4867, 1.442695
    %v4869 = vpow.pop %v4868
    %v4870 = vadd.f32 %v4869, 1.0
    %v4871 = vrcp.pop %v4870
    %v4872 = vmul.f32 1.0, %v4871
    %v4873 = vtanh.pop %v4786
    %v4875 = vrot.slane %v4671, 6
    %v4877 = vmul.f32 %v4872, %v4875
    %4879 = vrot.lane.b32.xlu0 %v4873, 64
    %v4880 = vpop.permute.xlu0 %4879
    %v4882 = vmul.f32 %v4872, %v4880
    %4884 = vrot.lane.b32.xlu0 %v4882, 32
    %v4885 = vpop.permute.xlu0 %4884
    %v4887 = vadd.f32 %v4877, %v4885
    %v4888 = vtanh.pop %v4887
    %4890 = vrot.lane.b32.xlu0 %v4888, 64
    %v4891 = vpop.permute.xlu0 %4890
    %v4893 = vmul.f32 %v4872, %v4891
    %v4894 = vxor.u32 %v4866, 2147483648
    %v4895 = vmul.f32 %v4894, 1.442695
    %v4896 = vpow.pop %v4895
    %v4897 = vadd.f32 %v4896, 1.0
    %v4898 = vrcp.pop %v4897
    %v4899 = vmul.f32 1.0, %v4898
    %v4900 = vtanh.pop %v4866
    %v4902 = vrot.slane %v4700, 2
    %v4904 = vmul.f32 %v4899, %v4902
    %4906 = vrot.lane.b32.xlu0 %v4900, 64
    %v4907 = vpop.permute.xlu0 %4906
    %v4909 = vmul.f32 %v4899, %v4907
    %4911 = vrot.lane.b32.xlu0 %v4909, 32
    %v4912 = vpop.permute.xlu0 %4911
    %v4914 = vadd.f32 %v4904, %v4912
    %v4915 = vtanh.pop %v4914
    %4917 = vrot.lane.b32.xlu0 %v4915, 64
    %v4918 = vpop.permute.xlu0 %4917
    %v4920 = vmul.f32 %v4899, %v4918
    %v4922 = vrot.slane %v4893, 4
    %4923 = vrot.lane.b32.xlu0 %v4922, 32
    %v4924 = vpop.permute.xlu0 %4923
    %v4925 = vsel %vm1139, %v4924, 0
    %4927 = vmatprep.subr.mxu0 0.0
    %4928 = vmatpush1.msra.mxu0 %v4446
    %4929 = vmatprep.subr.mxu0 0.0
    %4930 = vmatpush1.msra.mxu0 %v4448
    %4931 = vmatprep.subr.mxu0 0.0
    %4932 = vmatpush1.msra.mxu0 %v4450
    %4933 = vmatprep.subr.mxu0 0.0
    %4934 = vmatpush1.msra.mxu0 %v4452
    %4935 = vmatprep.subr.mxu0 0.0
    %4936 = vmatpush1.msra.mxu0 0.0
    %4937 = vmatprep.subr.mxu0 0.0
    %4938 = vmatpush1.msra.mxu0 0.0
    %4939 = vmatprep.subr.mxu0 0.0
    %4940 = vmatpush1.msra.mxu0 0.0
    %4941 = vmatprep.subr.mxu0 0.0
    %4942 = vmatpush1.msra.mxu0 0.0
    %4943 = vmatprep.subr.mxu0 0.0
    %4944 = vmatpush1.msra.mxu0 0.0
    %4945 = vmatprep.subr.mxu0 0.0
    %4946 = vmatpush1.msra.mxu0 0.0
    %4947 = vmatprep.subr.mxu0 0.0
    %4948 = vmatpush1.msra.mxu0 0.0
    %4949 = vmatprep.subr.mxu0 0.0
    %4950 = vmatpush1.msra.mxu0 0.0
    %4951 = vmatprep.subr.mxu0 0.0
    %4952 = vmatpush1.msra.mxu0 0.0
    %4953 = vmatprep.subr.mxu0 0.0
    %4954 = vmatpush1.msra.mxu0 0.0
    %4955 = vmatprep.subr.mxu0 0.0
    %4956 = vmatpush1.msra.mxu0 0.0
    %4957 = vmatprep.subr.mxu0 0.0
    %4958 = vmatpush1.msra.mxu0 0.0
    %4959 = vmatprep.subr.mxu0 0.0
    %4960 = vmatpush1.msra.mxu0 0.0
    %4961 = vmatprep.subr.mxu0 0.0
    %4962 = vmatpush1.msra.mxu0 0.0
    %4963 = vmatprep.subr.mxu0 0.0
    %4964 = vmatpush1.msra.mxu0 0.0
    %4965 = vmatprep.subr.mxu0 0.0
    %4966 = vmatpush1.msra.mxu0 0.0
    %4967 = vmatprep.subr.mxu0 0.0
    %4968 = vmatpush1.msra.mxu0 0.0
    %4969 = vmatprep.subr.mxu0 0.0
    %4970 = vmatpush1.msra.mxu0 0.0
    %4971 = vmatprep.subr.mxu0 0.0
    %4972 = vmatpush1.msra.mxu0 0.0
    %4973 = vmatprep.subr.mxu0 0.0
    %4974 = vmatpush1.msra.mxu0 0.0
    %4975 = vmatprep.subr.mxu0 0.0
    %4976 = vmatpush1.msra.mxu0 0.0
    %4977 = vmatprep.subr.mxu0 0.0
    %4978 = vmatpush1.msra.mxu0 0.0
    %4979 = vmatprep.subr.mxu0 0.0
    %4980 = vmatpush1.msra.mxu0 0.0
    %4981 = vmatprep.subr.mxu0 0.0
    %4982 = vmatpush1.msra.mxu0 0.0
    %4983 = vmatprep.subr.mxu0 0.0
    %4984 = vmatpush1.msra.mxu0 0.0
    %4985 = vmatprep.subr.mxu0 0.0
    %4986 = vmatpush1.msra.mxu0 0.0
    %4987 = vmatprep.subr.mxu0 0.0
    %4988 = vmatpush1.msra.mxu0 0.0
    %4989 = vmatprep.subr.mxu0 0.0
    %4990 = vmatpush1.msra.mxu0 0.0
    %4991 = vmatprep.mubr.f32.mxu0 0.0
    %4992 = vmatmul.mubr.f32.gmra.mrb[0].mxu0 %v4925
    %v4993 = vpop.f32.mrb[0].mxu0
    %v4994 = vadd.f32 0.0, %v4993
    %v4995 = vpop.f32.mrb[0].mxu0
    %4996 = vdwg.mxu0
    %v4998 = vrot.slane %v4994, 2
    %v5000 = vadd.f32 %v4436, %v4998
    %v5002 = vrot.slane %v4920, 2
    %5003 = vrot.lane.b32.xlu0 %v5002, 32
    %v5004 = vpop.permute.xlu0 %5003
    %v5005 = vsel %vm1139, %v5004, 0
    %5007 = vmatprep.subr.mxu0 0.0
    %5008 = vmatpush1.msra.mxu0 %v4447
    %5009 = vmatprep.subr.mxu0 0.0
    %5010 = vmatpush1.msra.mxu0 %v4449
    %5011 = vmatprep.subr.mxu0 0.0
    %5012 = vmatpush1.msra.mxu0 %v4451
    %5013 = vmatprep.subr.mxu0 0.0
    %5014 = vmatpush1.msra.mxu0 %v4453
    %5015 = vmatprep.subr.mxu0 0.0
    %5016 = vmatpush1.msra.mxu0 0.0
    %5017 = vmatprep.subr.mxu0 0.0
    %5018 = vmatpush1.msra.mxu0 0.0
    %5019 = vmatprep.subr.mxu0 0.0
    %5020 = vmatpush1.msra.mxu0 0.0
    %5021 = vmatprep.subr.mxu0 0.0
    %5022 = vmatpush1.msra.mxu0 0.0
    %5023 = vmatprep.subr.mxu0 0.0
    %5024 = vmatpush1.msra.mxu0 0.0
    %5025 = vmatprep.subr.mxu0 0.0
    %5026 = vmatpush1.msra.mxu0 0.0
    %5027 = vmatprep.subr.mxu0 0.0
    %5028 = vmatpush1.msra.mxu0 0.0
    %5029 = vmatprep.subr.mxu0 0.0
    %5030 = vmatpush1.msra.mxu0 0.0
    %5031 = vmatprep.subr.mxu0 0.0
    %5032 = vmatpush1.msra.mxu0 0.0
    %5033 = vmatprep.subr.mxu0 0.0
    %5034 = vmatpush1.msra.mxu0 0.0
    %5035 = vmatprep.subr.mxu0 0.0
    %5036 = vmatpush1.msra.mxu0 0.0
    %5037 = vmatprep.subr.mxu0 0.0
    %5038 = vmatpush1.msra.mxu0 0.0
    %5039 = vmatprep.subr.mxu0 0.0
    %5040 = vmatpush1.msra.mxu0 0.0
    %5041 = vmatprep.subr.mxu0 0.0
    %5042 = vmatpush1.msra.mxu0 0.0
    %5043 = vmatprep.subr.mxu0 0.0
    %5044 = vmatpush1.msra.mxu0 0.0
    %5045 = vmatprep.subr.mxu0 0.0
    %5046 = vmatpush1.msra.mxu0 0.0
    %5047 = vmatprep.subr.mxu0 0.0
    %5048 = vmatpush1.msra.mxu0 0.0
    %5049 = vmatprep.subr.mxu0 0.0
    %5050 = vmatpush1.msra.mxu0 0.0
    %5051 = vmatprep.subr.mxu0 0.0
    %5052 = vmatpush1.msra.mxu0 0.0
    %5053 = vmatprep.subr.mxu0 0.0
    %5054 = vmatpush1.msra.mxu0 0.0
    %5055 = vmatprep.subr.mxu0 0.0
    %5056 = vmatpush1.msra.mxu0 0.0
    %5057 = vmatprep.subr.mxu0 0.0
    %5058 = vmatpush1.msra.mxu0 0.0
    %5059 = vmatprep.subr.mxu0 0.0
    %5060 = vmatpush1.msra.mxu0 0.0
    %5061 = vmatprep.subr.mxu0 0.0
    %5062 = vmatpush1.msra.mxu0 0.0
    %5063 = vmatprep.subr.mxu0 0.0
    %5064 = vmatpush1.msra.mxu0 0.0
    %5065 = vmatprep.subr.mxu0 0.0
    %5066 = vmatpush1.msra.mxu0 0.0
    %5067 = vmatprep.subr.mxu0 0.0
    %5068 = vmatpush1.msra.mxu0 0.0
    %5069 = vmatprep.subr.mxu0 0.0
    %5070 = vmatpush1.msra.mxu0 0.0
    %5071 = vmatprep.mubr.f32.mxu0 0.0
    %5072 = vmatmul.mubr.f32.gmra.mrb[0].mxu0 %v5005
    %v5073 = vpop.f32.mrb[0].mxu0
    %v5074 = vadd.f32 0.0, %v5073
    %v5075 = vpop.f32.mrb[0].mxu0
    %5076 = vdwg.mxu0
    %v5077 = vadd.f32 %v4444, %v5074
    %v5078 = vxor.u32 %v5000, 2147483648
    %v5079 = vmul.f32 %v5078, 1.442695
    %v5080 = vpow.pop %v5079
    %v5081 = vadd.f32 %v5080, 1.0
    %v5082 = vrcp.pop %v5081
    %v5083 = vmul.f32 1.0, %v5082
    %v5084 = vtanh.pop %v5000
    %v5086 = vrot.slane %v4887, 6
    %v5088 = vmul.f32 %v5083, %v5086
    %5090 = vrot.lane.b32.xlu0 %v5084, 64
    %v5091 = vpop.permute.xlu0 %5090
    %v5093 = vmul.f32 %v5083, %v5091
    %5095 = vrot.lane.b32.xlu0 %v5093, 32
    %v5096 = vpop.permute.xlu0 %5095
    %v5098 = vadd.f32 %v5088, %v5096
    %v5099 = vtanh.pop %v5098
    %5101 = vrot.lane.b32.xlu0 %v5099, 64
    %v5102 = vpop.permute.xlu0 %5101
    %v5104 = vmul.f32 %v5083, %v5102
    %v5105 = vxor.u32 %v5077, 2147483648
    %v5106 = vmul.f32 %v5105, 1.442695
    %v5107 = vpow.pop %v5106
    %v5108 = vadd.f32 %v5107, 1.0
    %v5109 = vrcp.pop %v5108
    %v5110 = vmul.f32 1.0, %v5109
    %v5111 = vtanh.pop %v5077
    %v5113 = vrot.slane %v4914, 2
    %v5115 = vmul.f32 %v5110, %v5113
    %5117 = vrot.lane.b32.xlu0 %v5111, 64
    %v5118 = vpop.permute.xlu0 %5117
    %v5120 = vmul.f32 %v5110, %v5118
    %5122 = vrot.lane.b32.xlu0 %v5120, 32
    %v5123 = vpop.permute.xlu0 %5122
    %v5125 = vadd.f32 %v5115, %v5123
    %v5126 = vtanh.pop %v5125
    %5128 = vrot.lane.b32.xlu0 %v5126, 64
    %v5129 = vpop.permute.xlu0 %5128
    %v5131 = vmul.f32 %v5110, %v5129
    %v5133 = vrot.slane %v5104, 6
    %5134 = vrot.lane.b32.xlu0 %v5133, 32
    %v5135 = vpop.permute.xlu0 %5134
    %v5136 = vsel %vm1139, %v5135, 0
    %5138 = vmatprep.subr.mxu0 0.0
    %5139 = vmatpush1.msra.mxu0 %v4446
    %5140 = vmatprep.subr.mxu0 0.0
    %5141 = vmatpush1.msra.mxu0 %v4448
    %5142 = vmatprep.subr.mxu0 0.0
    %5143 = vmatpush1.msra.mxu0 %v4450
    %5144 = vmatprep.subr.mxu0 0.0
    %5145 = vmatpush1.msra.mxu0 %v4452
    %5146 = vmatprep.subr.mxu0 0.0
    %5147 = vmatpush1.msra.mxu0 0.0
    %5148 = vmatprep.subr.mxu0 0.0
    %5149 = vmatpush1.msra.mxu0 0.0
    %5150 = vmatprep.subr.mxu0 0.0
    %5151 = vmatpush1.msra.mxu0 0.0
    %5152 = vmatprep.subr.mxu0 0.0
    %5153 = vmatpush1.msra.mxu0 0.0
    %5154 = vmatprep.subr.mxu0 0.0
    %5155 = vmatpush1.msra.mxu0 0.0
    %5156 = vmatprep.subr.mxu0 0.0
    %5157 = vmatpush1.msra.mxu0 0.0
    %5158 = vmatprep.subr.mxu0 0.0
    %5159 = vmatpush1.msra.mxu0 0.0
    %5160 = vmatprep.subr.mxu0 0.0
    %5161 = vmatpush1.msra.mxu0 0.0
    %5162 = vmatprep.subr.mxu0 0.0
    %5163 = vmatpush1.msra.mxu0 0.0
    %5164 = vmatprep.subr.mxu0 0.0
    %5165 = vmatpush1.msra.mxu0 0.0
    %5166 = vmatprep.subr.mxu0 0.0
    %5167 = vmatpush1.msra.mxu0 0.0
    %5168 = vmatprep.subr.mxu0 0.0
    %5169 = vmatpush1.msra.mxu0 0.0
    %5170 = vmatprep.subr.mxu0 0.0
    %5171 = vmatpush1.msra.mxu0 0.0
    %5172 = vmatprep.subr.mxu0 0.0
    %5173 = vmatpush1.msra.mxu0 0.0
    %5174 = vmatprep.subr.mxu0 0.0
    %5175 = vmatpush1.msra.mxu0 0.0
    %5176 = vmatprep.subr.mxu0 0.0
    %5177 = vmatpush1.msra.mxu0 0.0
    %5178 = vmatprep.subr.mxu0 0.0
    %5179 = vmatpush1.msra.mxu0 0.0
    %5180 = vmatprep.subr.mxu0 0.0
    %5181 = vmatpush1.msra.mxu0 0.0
    %5182 = vmatprep.subr.mxu0 0.0
    %5183 = vmatpush1.msra.mxu0 0.0
    %5184 = vmatprep.subr.mxu0 0.0
    %5185 = vmatpush1.msra.mxu0 0.0
    %5186 = vmatprep.subr.mxu0 0.0
    %5187 = vmatpush1.msra.mxu0 0.0
    %5188 = vmatprep.subr.mxu0 0.0
    %5189 = vmatpush1.msra.mxu0 0.0
    %5190 = vmatprep.subr.mxu0 0.0
    %5191 = vmatpush1.msra.mxu0 0.0
    %5192 = vmatprep.subr.mxu0 0.0
    %5193 = vmatpush1.msra.mxu0 0.0
    %5194 = vmatprep.subr.mxu0 0.0
    %5195 = vmatpush1.msra.mxu0 0.0
    %5196 = vmatprep.subr.mxu0 0.0
    %5197 = vmatpush1.msra.mxu0 0.0
    %5198 = vmatprep.subr.mxu0 0.0
    %5199 = vmatpush1.msra.mxu0 0.0
    %5200 = vmatprep.subr.mxu0 0.0
    %5201 = vmatpush1.msra.mxu0 0.0
    %5202 = vmatprep.mubr.f32.mxu0 0.0
    %5203 = vmatmul.mubr.f32.gmra.mrb[0].mxu0 %v5136
    %v5204 = vpop.f32.mrb[0].mxu0
    %v5205 = vadd.f32 0.0, %v5204
    %v5206 = vpop.f32.mrb[0].mxu0
    %5207 = vdwg.mxu0
    %v5208 = vadd.f32 %v4442, %v5205
    %5210 = vrot.lane.b32.xlu0 %v5131, 32
    %v5211 = vpop.permute.xlu0 %5210
    %v5212 = vsel %vm1139, %v5211, 0
    %5214 = vmatprep.subr.mxu0 0.0
    %5215 = vmatpush1.msra.mxu0 %v4447
    %5216 = vmatprep.subr.mxu0 0.0
    %5217 = vmatpush1.msra.mxu0 %v4449
    %5218 = vmatprep.subr.mxu0 0.0
    %5219 = vmatpush1.msra.mxu0 %v4451
    %5220 = vmatprep.subr.mxu0 0.0
    %5221 = vmatpush1.msra.mxu0 %v4453
    %5222 = vmatprep.subr.mxu0 0.0
    %5223 = vmatpush1.msra.mxu0 0.0
    %5224 = vmatprep.subr.mxu0 0.0
    %5225 = vmatpush1.msra.mxu0 0.0
    %5226 = vmatprep.subr.mxu0 0.0
    %5227 = vmatpush1.msra.mxu0 0.0
    %5228 = vmatprep.subr.mxu0 0.0
    %5229 = vmatpush1.msra.mxu0 0.0
    %5230 = vmatprep.subr.mxu0 0.0
    %5231 = vmatpush1.msra.mxu0 0.0
    %5232 = vmatprep.subr.mxu0 0.0
    %5233 = vmatpush1.msra.mxu0 0.0
    %5234 = vmatprep.subr.mxu0 0.0
    %5235 = vmatpush1.msra.mxu0 0.0
    %5236 = vmatprep.subr.mxu0 0.0
    %5237 = vmatpush1.msra.mxu0 0.0
    %5238 = vmatprep.subr.mxu0 0.0
    %5239 = vmatpush1.msra.mxu0 0.0
    %5240 = vmatprep.subr.mxu0 0.0
    %5241 = vmatpush1.msra.mxu0 0.0
    %5242 = vmatprep.subr.mxu0 0.0
    %5243 = vmatpush1.msra.mxu0 0.0
    %5244 = vmatprep.subr.mxu0 0.0
    %5245 = vmatpush1.msra.mxu0 0.0
    %5246 = vmatprep.subr.mxu0 0.0
    %5247 = vmatpush1.msra.mxu0 0.0
    %5248 = vmatprep.subr.mxu0 0.0
    %5249 = vmatpush1.msra.mxu0 0.0
    %5250 = vmatprep.subr.mxu0 0.0
    %5251 = vmatpush1.msra.mxu0 0.0
    %5252 = vmatprep.subr.mxu0 0.0
    %5253 = vmatpush1.msra.mxu0 0.0
    %5254 = vmatprep.subr.mxu0 0.0
    %5255 = vmatpush1.msra.mxu0 0.0
    %5256 = vmatprep.subr.mxu0 0.0
    %5257 = vmatpush1.msra.mxu0 0.0
    %5258 = vmatprep.subr.mxu0 0.0
    %5259 = vmatpush1.msra.mxu0 0.0
    %5260 = vmatprep.subr.mxu0 0.0
    %5261 = vmatpush1.msra.mxu0 0.0
    %5262 = vmatprep.subr.mxu0 0.0
    %5263 = vmatpush1.msra.mxu0 0.0
    %5264 = vmatprep.subr.mxu0 0.0
    %5265 = vmatpush1.msra.mxu0 0.0
    %5266 = vmatprep.subr.mxu0 0.0
    %5267 = vmatpush1.msra.mxu0 0.0
    %5268 = vmatprep.subr.mxu0 0.0
    %5269 = vmatpush1.msra.mxu0 0.0
    %5270 = vmatprep.subr.mxu0 0.0
    %5271 = vmatpush1.msra.mxu0 0.0
    %5272 = vmatprep.subr.mxu0 0.0
    %5273 = vmatpush1.msra.mxu0 0.0
    %5274 = vmatprep.subr.mxu0 0.0
    %5275 = vmatpush1.msra.mxu0 0.0
    %5276 = vmatprep.subr.mxu0 0.0
    %5277 = vmatpush1.msra.mxu0 0.0
    %5278 = vmatprep.mubr.f32.mxu0 0.0
    %5279 = vmatmul.mubr.f32.gmra.mrb[0].mxu0 %v5212
    %v5280 = vpop.f32.mrb[0].mxu0
    %v5281 = vadd.f32 0.0, %v5280
    %v5282 = vpop.f32.mrb[0].mxu0
    %5283 = vdwg.mxu0
    %v5285 = vrot.slane %v5281, 2
    %v5287 = vadd.f32 %v4438, %v5285
    %v5288 = vxor.u32 %v5208, 2147483648
    %v5289 = vmul.f32 %v5288, 1.442695
    %v5290 = vpow.pop %v5289
    %v5291 = vadd.f32 %v5290, 1.0
    %v5292 = vrcp.pop %v5291
    %v5293 = vmul.f32 1.0, %v5292
    %v5294 = vtanh.pop %v5208
    %v5296 = vrot.slane %v5098, 6
    %v5298 = vmul.f32 %v5293, %v5296
    %5300 = vrot.lane.b32.xlu0 %v5294, 64
    %v5301 = vpop.permute.xlu0 %5300
    %v5303 = vmul.f32 %v5293, %v5301
    %5305 = vrot.lane.b32.xlu0 %v5303, 32
    %v5306 = vpop.permute.xlu0 %5305
    %v5308 = vadd.f32 %v5298, %v5306
    %v5309 = vtanh.pop %v5308
    %5311 = vrot.lane.b32.xlu0 %v5309, 64
    %v5312 = vpop.permute.xlu0 %5311
    %v5314 = vmul.f32 %v5293, %v5312
    %v5315 = vxor.u32 %v5287, 2147483648
    %v5316 = vmul.f32 %v5315, 1.442695
    %v5317 = vpow.pop %v5316
    %v5318 = vadd.f32 %v5317, 1.0
    %v5319 = vrcp.pop %v5318
    %v5320 = vmul.f32 1.0, %v5319
    %v5321 = vtanh.pop %v5287
    %v5323 = vrot.slane %v5125, 2
    %v5325 = vmul.f32 %v5320, %v5323
    %5327 = vrot.lane.b32.xlu0 %v5321, 64
    %v5328 = vpop.permute.xlu0 %5327
    %v5330 = vmul.f32 %v5320, %v5328
    %5332 = vrot.lane.b32.xlu0 %v5330, 32
    %v5333 = vpop.permute.xlu0 %5332
    %v5335 = vadd.f32 %v5325, %v5333
    %v5336 = vtanh.pop %v5335
    %5338 = vrot.lane.b32.xlu0 %v5336, 64
    %v5339 = vpop.permute.xlu0 %5338
    %v5341 = vmul.f32 %v5320, %v5339
    %5343 = vrot.lane.b32.xlu0 %v5314, 32
    %v5344 = vpop.permute.xlu0 %5343
    %v5345 = vsel %vm1139, %v5344, 0
    %5347 = vmatprep.subr.mxu0 0.0
    %5348 = vmatpush1.msra.mxu0 %v4446
    %5349 = vmatprep.subr.mxu0 0.0
    %5350 = vmatpush1.msra.mxu0 %v4448
    %5351 = vmatprep.subr.mxu0 0.0
    %5352 = vmatpush1.msra.mxu0 %v4450
    %5353 = vmatprep.subr.mxu0 0.0
    %5354 = vmatpush1.msra.mxu0 %v4452
    %5355 = vmatprep.subr.mxu0 0.0
    %5356 = vmatpush1.msra.mxu0 0.0
    %5357 = vmatprep.subr.mxu0 0.0
    %5358 = vmatpush1.msra.mxu0 0.0
    %5359 = vmatprep.subr.mxu0 0.0
    %5360 = vmatpush1.msra.mxu0 0.0
    %5361 = vmatprep.subr.mxu0 0.0
    %5362 = vmatpush1.msra.mxu0 0.0
    %5363 = vmatprep.subr.mxu0 0.0
    %5364 = vmatpush1.msra.mxu0 0.0
    %5365 = vmatprep.subr.mxu0 0.0
    %5366 = vmatpush1.msra.mxu0 0.0
    %5367 = vmatprep.subr.mxu0 0.0
    %5368 = vmatpush1.msra.mxu0 0.0
    %5369 = vmatprep.subr.mxu0 0.0
    %5370 = vmatpush1.msra.mxu0 0.0
    %5371 = vmatprep.subr.mxu0 0.0
    %5372 = vmatpush1.msra.mxu0 0.0
    %5373 = vmatprep.subr.mxu0 0.0
    %5374 = vmatpush1.msra.mxu0 0.0
    %5375 = vmatprep.subr.mxu0 0.0
    %5376 = vmatpush1.msra.mxu0 0.0
    %5377 = vmatprep.subr.mxu0 0.0
    %5378 = vmatpush1.msra.mxu0 0.0
    %5379 = vmatprep.subr.mxu0 0.0
    %5380 = vmatpush1.msra.mxu0 0.0
    %5381 = vmatprep.subr.mxu0 0.0
    %5382 = vmatpush1.msra.mxu0 0.0
    %5383 = vmatprep.subr.mxu0 0.0
    %5384 = vmatpush1.msra.mxu0 0.0
    %5385 = vmatprep.subr.mxu0 0.0
    %5386 = vmatpush1.msra.mxu0 0.0
    %5387 = vmatprep.subr.mxu0 0.0
    %5388 = vmatpush1.msra.mxu0 0.0
    %5389 = vmatprep.subr.mxu0 0.0
    %5390 = vmatpush1.msra.mxu0 0.0
    %5391 = vmatprep.subr.mxu0 0.0
    %5392 = vmatpush1.msra.mxu0 0.0
    %5393 = vmatprep.subr.mxu0 0.0
    %5394 = vmatpush1.msra.mxu0 0.0
    %5395 = vmatprep.subr.mxu0 0.0
    %5396 = vmatpush1.msra.mxu0 0.0
    %5397 = vmatprep.subr.mxu0 0.0
    %5398 = vmatpush1.msra.mxu0 0.0
    %5399 = vmatprep.subr.mxu0 0.0
    %5400 = vmatpush1.msra.mxu0 0.0
    %5401 = vmatprep.subr.mxu0 0.0
    %5402 = vmatpush1.msra.mxu0 0.0
    %5403 = vmatprep.subr.mxu0 0.0
    %5404 = vmatpush1.msra.mxu0 0.0
    %5405 = vmatprep.subr.mxu0 0.0
    %5406 = vmatpush1.msra.mxu0 0.0
    %5407 = vmatprep.subr.mxu0 0.0
    %5408 = vmatpush1.msra.mxu0 0.0
    %5409 = vmatprep.subr.mxu0 0.0
    %5410 = vmatpush1.msra.mxu0 0.0
    %5411 = vmatprep.mubr.f32.mxu0 0.0
    %5412 = vmatmul.mubr.f32.gmra.mrb[0].mxu0 %v5345
    %v5413 = vpop.f32.mrb[0].mxu0
    %v5414 = vadd.f32 0.0, %v5413
    %v5415 = vpop.f32.mrb[0].mxu0
    %5416 = vdwg.mxu0
    %v5418 = vrot.slane %v5414, 6
    %v5420 = vadd.f32 %v4442, %v5418
    %v5422 = vrot.slane %v5341, 6
    %5423 = vrot.lane.b32.xlu0 %v5422, 32
    %v5424 = vpop.permute.xlu0 %5423
    %v5425 = vsel %vm1139, %v5424, 0
    %5427 = vmatprep.subr.mxu0 0.0
    %5428 = vmatpush1.msra.mxu0 %v4447
    %5429 = vmatprep.subr.mxu0 0.0
    %5430 = vmatpush1.msra.mxu0 %v4449
    %5431 = vmatprep.subr.mxu0 0.0
    %5432 = vmatpush1.msra.mxu0 %v4451
    %5433 = vmatprep.subr.mxu0 0.0
    %5434 = vmatpush1.msra.mxu0 %v4453
    %5435 = vmatprep.subr.mxu0 0.0
    %5436 = vmatpush1.msra.mxu0 0.0
    %5437 = vmatprep.subr.mxu0 0.0
    %5438 = vmatpush1.msra.mxu0 0.0
    %5439 = vmatprep.subr.mxu0 0.0
    %5440 = vmatpush1.msra.mxu0 0.0
    %5441 = vmatprep.subr.mxu0 0.0
    %5442 = vmatpush1.msra.mxu0 0.0
    %5443 = vmatprep.subr.mxu0 0.0
    %5444 = vmatpush1.msra.mxu0 0.0
    %5445 = vmatprep.subr.mxu0 0.0
    %5446 = vmatpush1.msra.mxu0 0.0
    %5447 = vmatprep.subr.mxu0 0.0
    %5448 = vmatpush1.msra.mxu0 0.0
    %5449 = vmatprep.subr.mxu0 0.0
    %5450 = vmatpush1.msra.mxu0 0.0
    %5451 = vmatprep.subr.mxu0 0.0
    %5452 = vmatpush1.msra.mxu0 0.0
    %5453 = vmatprep.subr.mxu0 0.0
    %5454 = vmatpush1.msra.mxu0 0.0
    %5455 = vmatprep.subr.mxu0 0.0
    %5456 = vmatpush1.msra.mxu0 0.0
    %5457 = vmatprep.subr.mxu0 0.0
    %5458 = vmatpush1.msra.mxu0 0.0
    %5459 = vmatprep.subr.mxu0 0.0
    %5460 = vmatpush1.msra.mxu0 0.0
    %5461 = vmatprep.subr.mxu0 0.0
    %5462 = vmatpush1.msra.mxu0 0.0
    %5463 = vmatprep.subr.mxu0 0.0
    %5464 = vmatpush1.msra.mxu0 0.0
    %5465 = vmatprep.subr.mxu0 0.0
    %5466 = vmatpush1.msra.mxu0 0.0
    %5467 = vmatprep.subr.mxu0 0.0
    %5468 = vmatpush1.msra.mxu0 0.0
    %5469 = vmatprep.subr.mxu0 0.0
    %5470 = vmatpush1.msra.mxu0 0.0
    %5471 = vmatprep.subr.mxu0 0.0
    %5472 = vmatpush1.msra.mxu0 0.0
    %5473 = vmatprep.subr.mxu0 0.0
    %5474 = vmatpush1.msra.mxu0 0.0
    %5475 = vmatprep.subr.mxu0 0.0
    %5476 = vmatpush1.msra.mxu0 0.0
    %5477 = vmatprep.subr.mxu0 0.0
    %5478 = vmatpush1.msra.mxu0 0.0
    %5479 = vmatprep.subr.mxu0 0.0
    %5480 = vmatpush1.msra.mxu0 0.0
    %5481 = vmatprep.subr.mxu0 0.0
    %5482 = vmatpush1.msra.mxu0 0.0
    %5483 = vmatprep.subr.mxu0 0.0
    %5484 = vmatpush1.msra.mxu0 0.0
    %5485 = vmatprep.subr.mxu0 0.0
    %5486 = vmatpush1.msra.mxu0 0.0
    %5487 = vmatprep.subr.mxu0 0.0
    %5488 = vmatpush1.msra.mxu0 0.0
    %5489 = vmatprep.subr.mxu0 0.0
    %5490 = vmatpush1.msra.mxu0 0.0
    %5491 = vmatprep.mubr.f32.mxu0 0.0
    %5492 = vmatmul.mubr.f32.gmra.mrb[0].mxu0 %v5425
    %v5493 = vpop.f32.mrb[0].mxu0
    %v5494 = vadd.f32 0.0, %v5493
    %v5495 = vpop.f32.mrb[0].mxu0
    %5496 = vdwg.mxu0
    %v5498 = vrot.slane %v5494, 4
    %v5500 = vadd.f32 %v4438, %v5498
    %v5501 = vxor.u32 %v5420, 2147483648
    %v5502 = vmul.f32 %v5501, 1.442695
    %v5503 = vpow.pop %v5502
    %v5504 = vadd.f32 %v5503, 1.0
    %v5505 = vrcp.pop %v5504
    %v5506 = vmul.f32 1.0, %v5505
    %v5507 = vtanh.pop %v5420
    %v5509 = vrot.slane %v5308, 6
    %v5511 = vmul.f32 %v5506, %v5509
    %5513 = vrot.lane.b32.xlu0 %v5507, 64
    %v5514 = vpop.permute.xlu0 %5513
    %v5516 = vmul.f32 %v5506, %v5514
    %5518 = vrot.lane.b32.xlu0 %v5516, 32
    %v5519 = vpop.permute.xlu0 %5518
    %v5521 = vadd.f32 %v5511, %v5519
    %v5522 = vtanh.pop %v5521
    %5524 = vrot.lane.b32.xlu0 %v5522, 64
    %v5525 = vpop.permute.xlu0 %5524
    %v5527 = vmul.f32 %v5506, %v5525
    %v5528 = vxor.u32 %v5500, 2147483648
    %v5529 = vmul.f32 %v5528, 1.442695
    %v5530 = vpow.pop %v5529
    %v5531 = vadd.f32 %v5530, 1.0
    %v5532 = vrcp.pop %v5531
    %v5533 = vmul.f32 1.0, %v5532
    %v5534 = vtanh.pop %v5500
    %v5536 = vrot.slane %v5335, 2
    %v5538 = vmul.f32 %v5533, %v5536
    %5540 = vrot.lane.b32.xlu0 %v5534, 64
    %v5541 = vpop.permute.xlu0 %5540
    %v5543 = vmul.f32 %v5533, %v5541
    %5545 = vrot.lane.b32.xlu0 %v5543, 32
    %v5546 = vpop.permute.xlu0 %5545
    %v5548 = vadd.f32 %v5538, %v5546
    %v5549 = vtanh.pop %v5548
    %5551 = vrot.lane.b32.xlu0 %v5549, 64
    %v5552 = vpop.permute.xlu0 %5551
    %v5554 = vmul.f32 %v5533, %v5552
    %v5556 = vrot.slane %v5527, 2
    %5557 = vrot.lane.b32.xlu0 %v5556, 32
    %v5558 = vpop.permute.xlu0 %5557
    %v5559 = vsel %vm1139, %v5558, 0
    %5561 = vmatprep.subr.mxu0 0.0
    %5562 = vmatpush1.msra.mxu0 %v4446
    %5563 = vmatprep.subr.mxu0 0.0
    %5564 = vmatpush1.msra.mxu0 %v4448
    %5565 = vmatprep.subr.mxu0 0.0
    %5566 = vmatpush1.msra.mxu0 %v4450
    %5567 = vmatprep.subr.mxu0 0.0
    %5568 = vmatpush1.msra.mxu0 %v4452
    %5569 = vmatprep.subr.mxu0 0.0
    %5570 = vmatpush1.msra.mxu0 0.0
    %5571 = vmatprep.subr.mxu0 0.0
    %5572 = vmatpush1.msra.mxu0 0.0
    %5573 = vmatprep.subr.mxu0 0.0
    %5574 = vmatpush1.msra.mxu0 0.0
    %5575 = vmatprep.subr.mxu0 0.0
    %5576 = vmatpush1.msra.mxu0 0.0
    %5577 = vmatprep.subr.mxu0 0.0
    %5578 = vmatpush1.msra.mxu0 0.0
    %5579 = vmatprep.subr.mxu0 0.0
    %5580 = vmatpush1.msra.mxu0 0.0
    %5581 = vmatprep.subr.mxu0 0.0
    %5582 = vmatpush1.msra.mxu0 0.0
    %5583 = vmatprep.subr.mxu0 0.0
    %5584 = vmatpush1.msra.mxu0 0.0
    %5585 = vmatprep.subr.mxu0 0.0
    %5586 = vmatpush1.msra.mxu0 0.0
    %5587 = vmatprep.subr.mxu0 0.0
    %5588 = vmatpush1.msra.mxu0 0.0
    %5589 = vmatprep.subr.mxu0 0.0
    %5590 = vmatpush1.msra.mxu0 0.0
    %5591 = vmatprep.subr.mxu0 0.0
    %5592 = vmatpush1.msra.mxu0 0.0
    %5593 = vmatprep.subr.mxu0 0.0
    %5594 = vmatpush1.msra.mxu0 0.0
    %5595 = vmatprep.subr.mxu0 0.0
    %5596 = vmatpush1.msra.mxu0 0.0
    %5597 = vmatprep.subr.mxu0 0.0
    %5598 = vmatpush1.msra.mxu0 0.0
    %5599 = vmatprep.subr.mxu0 0.0
    %5600 = vmatpush1.msra.mxu0 0.0
    %5601 = vmatprep.subr.mxu0 0.0
    %5602 = vmatpush1.msra.mxu0 0.0
    %5603 = vmatprep.subr.mxu0 0.0
    %5604 = vmatpush1.msra.mxu0 0.0
    %5605 = vmatprep.subr.mxu0 0.0
    %5606 = vmatpush1.msra.mxu0 0.0
    %5607 = vmatprep.subr.mxu0 0.0
    %5608 = vmatpush1.msra.mxu0 0.0
    %5609 = vmatprep.subr.mxu0 0.0
    %5610 = vmatpush1.msra.mxu0 0.0
    %5611 = vmatprep.subr.mxu0 0.0
    %5612 = vmatpush1.msra.mxu0 0.0
    %5613 = vmatprep.subr.mxu0 0.0
    %5614 = vmatpush1.msra.mxu0 0.0
    %5615 = vmatprep.subr.mxu0 0.0
    %5616 = vmatpush1.msra.mxu0 0.0
    %5617 = vmatprep.subr.mxu0 0.0
    %5618 = vmatpush1.msra.mxu0 0.0
    %5619 = vmatprep.subr.mxu0 0.0
    %5620 = vmatpush1.msra.mxu0 0.0
    %5621 = vmatprep.subr.mxu0 0.0
    %5622 = vmatpush1.msra.mxu0 0.0
    %5623 = vmatprep.subr.mxu0 0.0
    %5624 = vmatpush1.msra.mxu0 0.0
    %5625 = vmatprep.mubr.f32.mxu0 0.0
    %5626 = vmatmul.mubr.f32.gmra.mrb[0].mxu0 %v5559
    %v5627 = vpop.f32.mrb[0].mxu0
    %v5628 = vadd.f32 0.0, %v5627
    %v5629 = vpop.f32.mrb[0].mxu0
    %5630 = vdwg.mxu0
    %v5632 = vrot.slane %v5628, 4
    %v5634 = vadd.f32 %v4442, %v5632
    %v5636 = vrot.slane %v5554, 4
    %5637 = vrot.lane.b32.xlu0 %v5636, 32
    %v5638 = vpop.permute.xlu0 %5637
    %v5639 = vsel %vm1139, %v5638, 0
    %5641 = vmatprep.subr.mxu0 0.0
    %5642 = vmatpush1.msra.mxu0 %v4447
    %5643 = vmatprep.subr.mxu0 0.0
    %5644 = vmatpush1.msra.mxu0 %v4449
    %5645 = vmatprep.subr.mxu0 0.0
    %5646 = vmatpush1.msra.mxu0 %v4451
    %5647 = vmatprep.subr.mxu0 0.0
    %5648 = vmatpush1.msra.mxu0 %v4453
    %5649 = vmatprep.subr.mxu0 0.0
    %5650 = vmatpush1.msra.mxu0 0.0
    %5651 = vmatprep.subr.mxu0 0.0
    %5652 = vmatpush1.msra.mxu0 0.0
    %5653 = vmatprep.subr.mxu0 0.0
    %5654 = vmatpush1.msra.mxu0 0.0
    %5655 = vmatprep.subr.mxu0 0.0
    %5656 = vmatpush1.msra.mxu0 0.0
    %5657 = vmatprep.subr.mxu0 0.0
    %5658 = vmatpush1.msra.mxu0 0.0
    %5659 = vmatprep.subr.mxu0 0.0
    %5660 = vmatpush1.msra.mxu0 0.0
    %5661 = vmatprep.subr.mxu0 0.0
    %5662 = vmatpush1.msra.mxu0 0.0
    %5663 = vmatprep.subr.mxu0 0.0
    %5664 = vmatpush1.msra.mxu0 0.0
    %5665 = vmatprep.subr.mxu0 0.0
    %5666 = vmatpush1.msra.mxu0 0.0
    %5667 = vmatprep.subr.mxu0 0.0
    %5668 = vmatpush1.msra.mxu0 0.0
    %5669 = vmatprep.subr.mxu0 0.0
    %5670 = vmatpush1.msra.mxu0 0.0
    %5671 = vmatprep.subr.mxu0 0.0
    %5672 = vmatpush1.msra.mxu0 0.0
    %5673 = vmatprep.subr.mxu0 0.0
    %5674 = vmatpush1.msra.mxu0 0.0
    %5675 = vmatprep.subr.mxu0 0.0
    %5676 = vmatpush1.msra.mxu0 0.0
    %5677 = vmatprep.subr.mxu0 0.0
    %5678 = vmatpush1.msra.mxu0 0.0
    %5679 = vmatprep.subr.mxu0 0.0
    %5680 = vmatpush1.msra.mxu0 0.0
    %5681 = vmatprep.subr.mxu0 0.0
    %5682 = vmatpush1.msra.mxu0 0.0
    %5683 = vmatprep.subr.mxu0 0.0
    %5684 = vmatpush1.msra.mxu0 0.0
    %5685 = vmatprep.subr.mxu0 0.0
    %5686 = vmatpush1.msra.mxu0 0.0
    %5687 = vmatprep.subr.mxu0 0.0
    %5688 = vmatpush1.msra.mxu0 0.0
    %5689 = vmatprep.subr.mxu0 0.0
    %5690 = vmatpush1.msra.mxu0 0.0
    %5691 = vmatprep.subr.mxu0 0.0
    %5692 = vmatpush1.msra.mxu0 0.0
    %5693 = vmatprep.subr.mxu0 0.0
    %5694 = vmatpush1.msra.mxu0 0.0
    %5695 = vmatprep.subr.mxu0 0.0
    %5696 = vmatpush1.msra.mxu0 0.0
    %5697 = vmatprep.subr.mxu0 0.0
    %5698 = vmatpush1.msra.mxu0 0.0
    %5699 = vmatprep.subr.mxu0 0.0
    %5700 = vmatpush1.msra.mxu0 0.0
    %5701 = vmatprep.subr.mxu0 0.0
    %5702 = vmatpush1.msra.mxu0 0.0
    %5703 = vmatprep.subr.mxu0 0.0
    %5704 = vmatpush1.msra.mxu0 0.0
    %5705 = vmatprep.mubr.f32.mxu0 0.0
    %5706 = vmatmul.mubr.f32.gmra.mrb[0].mxu0 %v5639
    %v5707 = vpop.f32.mrb[0].mxu0
    %v5708 = vadd.f32 0.0, %v5707
    %v5709 = vpop.f32.mrb[0].mxu0
    %5710 = vdwg.mxu0
    %v5712 = vrot.slane %v5708, 6
    %v5714 = vadd.f32 %v4438, %v5712
    %v5715 = vxor.u32 %v5634, 2147483648
    %v5716 = vmul.f32 %v5715, 1.442695
    %v5717 = vpow.pop %v5716
    %v5718 = vadd.f32 %v5717, 1.0
    %v5719 = vrcp.pop %v5718
    %v5720 = vmul.f32 1.0, %v5719
    %v5721 = vtanh.pop %v5634
    %v5723 = vrot.slane %v5521, 6
    %v5725 = vmul.f32 %v5720, %v5723
    %5727 = vrot.lane.b32.xlu0 %v5721, 64
    %v5728 = vpop.permute.xlu0 %5727
    %v5730 = vmul.f32 %v5720, %v5728
    %5732 = vrot.lane.b32.xlu0 %v5730, 32
    %v5733 = vpop.permute.xlu0 %5732
    %v5735 = vadd.f32 %v5725, %v5733
    %v5736 = vtanh.pop %v5735
    %5738 = vrot.lane.b32.xlu0 %v5736, 64
    %v5739 = vpop.permute.xlu0 %5738
    %v5741 = vmul.f32 %v5720, %v5739
    %v5742 = vxor.u32 %v5714, 2147483648
    %v5743 = vmul.f32 %v5742, 1.442695
    %v5744 = vpow.pop %v5743
    %v5745 = vadd.f32 %v5744, 1.0
    %v5746 = vrcp.pop %v5745
    %v5747 = vmul.f32 1.0, %v5746
    %v5748 = vtanh.pop %v5714
    %v5750 = vrot.slane %v5548, 2
    %v5752 = vmul.f32 %v5747, %v5750
    %5754 = vrot.lane.b32.xlu0 %v5748, 64
    %v5755 = vpop.permute.xlu0 %5754
    %v5757 = vmul.f32 %v5747, %v5755
    %5759 = vrot.lane.b32.xlu0 %v5757, 32
    %v5760 = vpop.permute.xlu0 %5759
    %v5762 = vadd.f32 %v5752, %v5760
    %v5763 = vtanh.pop %v5762
    %5765 = vrot.lane.b32.xlu0 %v5763, 64
    %v5766 = vpop.permute.xlu0 %5765
    %v5768 = vmul.f32 %v5747, %v5766
    %v5770 = vrot.slane %v5741, 4
    %5771 = vrot.lane.b32.xlu0 %v5770, 32
    %v5772 = vpop.permute.xlu0 %5771
    %v5773 = vsel %vm1139, %v5772, 0
    %5775 = vmatprep.subr.mxu0 0.0
    %5776 = vmatpush1.msra.mxu0 %v4446
    %5777 = vmatprep.subr.mxu0 0.0
    %5778 = vmatpush1.msra.mxu0 %v4448
    %5779 = vmatprep.subr.mxu0 0.0
    %5780 = vmatpush1.msra.mxu0 %v4450
    %5781 = vmatprep.subr.mxu0 0.0
    %5782 = vmatpush1.msra.mxu0 %v4452
    %5783 = vmatprep.subr.mxu0 0.0
    %5784 = vmatpush1.msra.mxu0 0.0
    %5785 = vmatprep.subr.mxu0 0.0
    %5786 = vmatpush1.msra.mxu0 0.0
    %5787 = vmatprep.subr.mxu0 0.0
    %5788 = vmatpush1.msra.mxu0 0.0
    %5789 = vmatprep.subr.mxu0 0.0
    %5790 = vmatpush1.msra.mxu0 0.0
    %5791 = vmatprep.subr.mxu0 0.0
    %5792 = vmatpush1.msra.mxu0 0.0
    %5793 = vmatprep.subr.mxu0 0.0
    %5794 = vmatpush1.msra.mxu0 0.0
    %5795 = vmatprep.subr.mxu0 0.0
    %5796 = vmatpush1.msra.mxu0 0.0
    %5797 = vmatprep.subr.mxu0 0.0
    %5798 = vmatpush1.msra.mxu0 0.0
    %5799 = vmatprep.subr.mxu0 0.0
    %5800 = vmatpush1.msra.mxu0 0.0
    %5801 = vmatprep.subr.mxu0 0.0
    %5802 = vmatpush1.msra.mxu0 0.0
    %5803 = vmatprep.subr.mxu0 0.0
    %5804 = vmatpush1.msra.mxu0 0.0
    %5805 = vmatprep.subr.mxu0 0.0
    %5806 = vmatpush1.msra.mxu0 0.0
    %5807 = vmatprep.subr.mxu0 0.0
    %5808 = vmatpush1.msra.mxu0 0.0
    %5809 = vmatprep.subr.mxu0 0.0
    %5810 = vmatpush1.msra.mxu0 0.0
    %5811 = vmatprep.subr.mxu0 0.0
    %5812 = vmatpush1.msra.mxu0 0.0
    %5813 = vmatprep.subr.mxu0 0.0
    %5814 = vmatpush1.msra.mxu0 0.0
    %5815 = vmatprep.subr.mxu0 0.0
    %5816 = vmatpush1.msra.mxu0 0.0
    %5817 = vmatprep.subr.mxu0 0.0
    %5818 = vmatpush1.msra.mxu0 0.0
    %5819 = vmatprep.subr.mxu0 0.0
    %5820 = vmatpush1.msra.mxu0 0.0
    %5821 = vmatprep.subr.mxu0 0.0
    %5822 = vmatpush1.msra.mxu0 0.0
    %5823 = vmatprep.subr.mxu0 0.0
    %5824 = vmatpush1.msra.mxu0 0.0
    %5825 = vmatprep.subr.mxu0 0.0
    %5826 = vmatpush1.msra.mxu0 0.0
    %5827 = vmatprep.subr.mxu0 0.0
    %5828 = vmatpush1.msra.mxu0 0.0
    %5829 = vmatprep.subr.mxu0 0.0
    %5830 = vmatpush1.msra.mxu0 0.0
    %5831 = vmatprep.subr.mxu0 0.0
    %5832 = vmatpush1.msra.mxu0 0.0
    %5833 = vmatprep.subr.mxu0 0.0
    %5834 = vmatpush1.msra.mxu0 0.0
    %5835 = vmatprep.subr.mxu0 0.0
    %5836 = vmatpush1.msra.mxu0 0.0
    %5837 = vmatprep.subr.mxu0 0.0
    %5838 = vmatpush1.msra.mxu0 0.0
    %5839 = vmatprep.mubr.f32.mxu0 0.0
    %5840 = vmatmul.mubr.f32.gmra.mrb[0].mxu0 %v5773
    %v5841 = vpop.f32.mrb[0].mxu0
    %v5842 = vadd.f32 0.0, %v5841
    %v5843 = vpop.f32.mrb[0].mxu0
    %5844 = vdwg.mxu0
    %v5846 = vrot.slane %v5842, 2
    %v5848 = vadd.f32 %v4442, %v5846
    %v5850 = vrot.slane %v5768, 2
    %5851 = vrot.lane.b32.xlu0 %v5850, 32
    %v5852 = vpop.permute.xlu0 %5851
    %v5853 = vsel %vm1139, %v5852, 0
    %5855 = vmatprep.subr.mxu0 0.0
    %5856 = vmatpush1.msra.mxu0 %v4447
    %5857 = vmatprep.subr.mxu0 0.0
    %5858 = vmatpush1.msra.mxu0 %v4449
    %5859 = vmatprep.subr.mxu0 0.0
    %5860 = vmatpush1.msra.mxu0 %v4451
    %5861 = vmatprep.subr.mxu0 0.0
    %5862 = vmatpush1.msra.mxu0 %v4453
    %5863 = vmatprep.subr.mxu0 0.0
    %5864 = vmatpush1.msra.mxu0 0.0
    %5865 = vmatprep.subr.mxu0 0.0
    %5866 = vmatpush1.msra.mxu0 0.0
    %5867 = vmatprep.subr.mxu0 0.0
    %5868 = vmatpush1.msra.mxu0 0.0
    %5869 = vmatprep.subr.mxu0 0.0
    %5870 = vmatpush1.msra.mxu0 0.0
    %5871 = vmatprep.subr.mxu0 0.0
    %5872 = vmatpush1.msra.mxu0 0.0
    %5873 = vmatprep.subr.mxu0 0.0
    %5874 = vmatpush1.msra.mxu0 0.0
    %5875 = vmatprep.subr.mxu0 0.0
    %5876 = vmatpush1.msra.mxu0 0.0
    %5877 = vmatprep.subr.mxu0 0.0
    %5878 = vmatpush1.msra.mxu0 0.0
    %5879 = vmatprep.subr.mxu0 0.0
    %5880 = vmatpush1.msra.mxu0 0.0
    %5881 = vmatprep.subr.mxu0 0.0
    %5882 = vmatpush1.msra.mxu0 0.0
    %5883 = vmatprep.subr.mxu0 0.0
    %5884 = vmatpush1.msra.mxu0 0.0
    %5885 = vmatprep.subr.mxu0 0.0
    %5886 = vmatpush1.msra.mxu0 0.0
    %5887 = vmatprep.subr.mxu0 0.0
    %5888 = vmatpush1.msra.mxu0 0.0
    %5889 = vmatprep.subr.mxu0 0.0
    %5890 = vmatpush1.msra.mxu0 0.0
    %5891 = vmatprep.subr.mxu0 0.0
    %5892 = vmatpush1.msra.mxu0 0.0
    %5893 = vmatprep.subr.mxu0 0.0
    %5894 = vmatpush1.msra.mxu0 0.0
    %5895 = vmatprep.subr.mxu0 0.0
    %5896 = vmatpush1.msra.mxu0 0.0
    %5897 = vmatprep.subr.mxu0 0.0
    %5898 = vmatpush1.msra.mxu0 0.0
    %5899 = vmatprep.subr.mxu0 0.0
    %5900 = vmatpush1.msra.mxu0 0.0
    %5901 = vmatprep.subr.mxu0 0.0
    %5902 = vmatpush1.msra.mxu0 0.0
    %5903 = vmatprep.subr.mxu0 0.0
    %5904 = vmatpush1.msra.mxu0 0.0
    %5905 = vmatprep.subr.mxu0 0.0
    %5906 = vmatpush1.msra.mxu0 0.0
    %5907 = vmatprep.subr.mxu0 0.0
    %5908 = vmatpush1.msra.mxu0 0.0
    %5909 = vmatprep.subr.mxu0 0.0
    %5910 = vmatpush1.msra.mxu0 0.0
    %5911 = vmatprep.subr.mxu0 0.0
    %5912 = vmatpush1.msra.mxu0 0.0
    %5913 = vmatprep.subr.mxu0 0.0
    %5914 = vmatpush1.msra.mxu0 0.0
    %5915 = vmatprep.subr.mxu0 0.0
    %5916 = vmatpush1.msra.mxu0 0.0
    %5917 = vmatprep.subr.mxu0 0.0
    %5918 = vmatpush1.msra.mxu0 0.0
    %5919 = vmatprep.mubr.f32.mxu0 0.0
    %5920 = vmatmul.mubr.f32.gmra.mrb[0].mxu0 %v5853
    %v5921 = vpop.f32.mrb[0].mxu0
    %v5922 = vadd.f32 0.0, %v5921
    %v5923 = vpop.f32.mrb[0].mxu0
    %5924 = vdwg.mxu0
    %v5925 = vadd.f32 %v4438, %v5922
    %v5926 = vxor.u32 %v5848, 2147483648
    %v5927 = vmul.f32 %v5926, 1.442695
    %v5928 = vpow.pop %v5927
    %v5929 = vadd.f32 %v5928, 1.0
    %v5930 = vrcp.pop %v5929
    %v5931 = vmul.f32 1.0, %v5930
    %v5932 = vtanh.pop %v5848
    %v5934 = vrot.slane %v5735, 6
    %v5936 = vmul.f32 %v5931, %v5934
    %5938 = vrot.lane.b32.xlu0 %v5932, 64
    %v5939 = vpop.permute.xlu0 %5938
    %v5941 = vmul.f32 %v5931, %v5939
    %5943 = vrot.lane.b32.xlu0 %v5941, 32
    %v5944 = vpop.permute.xlu0 %5943
    %v5946 = vadd.f32 %v5936, %v5944
    %v5947 = vtanh.pop %v5946
    %5949 = vrot.lane.b32.xlu0 %v5947, 64
    %v5950 = vpop.permute.xlu0 %5949
    %v5952 = vmul.f32 %v5931, %v5950
    %v5953 = vxor.u32 %v5925, 2147483648
    %v5954 = vmul.f32 %v5953, 1.442695
    %v5955 = vpow.pop %v5954
    %v5956 = vadd.f32 %v5955, 1.0
    %v5957 = vrcp.pop %v5956
    %v5958 = vmul.f32 1.0, %v5957
    %v5959 = vtanh.pop %v5925
    %v5961 = vrot.slane %v5762, 2
    %v5963 = vmul.f32 %v5958, %v5961
    %5965 = vrot.lane.b32.xlu0 %v5959, 64
    %v5966 = vpop.permute.xlu0 %5965
    %v5968 = vmul.f32 %v5958, %v5966
    %5970 = vrot.lane.b32.xlu0 %v5968, 32
    %v5971 = vpop.permute.xlu0 %5970
    %v5973 = vadd.f32 %v5963, %v5971
    %v5974 = vtanh.pop %v5973
    %5976 = vrot.lane.b32.xlu0 %v5974, 64
    %v5977 = vpop.permute.xlu0 %5976
    %v5979 = vmul.f32 %v5958, %v5977
    %v5980 = vsel %vm2627, %v4471, %v4677
    %v5981 = vsel %vm2629, %v5980, %v4893
    %v5982 = vsel %vm2631, %v5981, %v5104
    %v5983 = vsel %vm2627, %v5314, %v5527
    %v5984 = vsel %vm2629, %v5983, %v5741
    %v5985 = vsel %vm2631, %v5984, %v5952
    %v5986 = vsel %vm2627, %v5979, %v5768
    %v5987 = vsel %vm2629, %v5986, %v5554
    %v5988 = vsel %vm2631, %v5987, %v5341
    %v5989 = vsel %vm2627, %v5131, %v4920
    %v5990 = vsel %vm2629, %v5989, %v4706
    %v5991 = vsel %vm2631, %v5990, %v4489
    %5994 = vrot.lane.b32.xlu0 %v5982, 32
    %v5995 = vpop.permute.xlu0 %5994
    %5996 = vrot.lane.b32.xlu0 %v5985, 32
    %v5997 = vpop.permute.xlu0 %5996
    %6002 = vrot.lane.b32.xlu0 %v5988, 64
    %v6003 = vpop.permute.xlu0 %6002
    %6004 = vrot.lane.b32.xlu0 %v5991, 64
    %v6005 = vpop.permute.xlu0 %6004
    %v6008 = vsel %vm1139, %v5995, %v6003
    %v6009 = vsel %vm1139, %v5997, %v6005
    %v6010 = vld [vmem:[%s43] sm:$0xff]
    %v6011 = vld [vmem:[%s43 + $0x8] sm:$0xff]
    %v6012 = vld [vmem:[%s43 + $0x10] sm:$0xff]
    %v6013 = vld [vmem:[%s43 + $0x18] sm:$0xff]
    %v6014 = vld [vmem:[%s43 + $0x20] sm:$0xff]
    %v6015 = vld [vmem:[%s43 + $0x28] sm:$0xff]
    %v6016 = vld [vmem:[%s43 + $0x30] sm:$0xff]
    %v6017 = vld [vmem:[%s43 + $0x38] sm:$0xff]
    %v6018 = vld [vmem:[%s43 + $0x40] sm:$0xff]
    %v6019 = vld [vmem:[%s43 + $0x48] sm:$0xff]
    %v6020 = vld [vmem:[%s43 + $0x50] sm:$0xff]
    %v6021 = vld [vmem:[%s43 + $0x58] sm:$0xff]
    %v6022 = vld [vmem:[%s43 + $0x60] sm:$0xff]
    %v6023 = vld [vmem:[%s43 + $0x68] sm:$0xff]
    %v6024 = vld [vmem:[%s43 + $0x70] sm:$0xff]
    %v6025 = vld [vmem:[%s43 + $0x78] sm:$0xff]
    %v6026 = vld [vmem:[%s47] sm:$0x3]
    %v6028 = vlaneseq
    %v6029 = vshrl.u32 %v6028, 7
    %v6030 = vsub.s32 0, %v6029
    %v6031 = vrot.slane %v6026, %v6030
    %v6032 = vlaneseq
    %v6033 = vshrl.u32 %v6032, 7
    %v6034 = vsub.s32 1, %v6033
    %v6035 = vrot.slane %v6026, %v6034
    %6038 = vmatprep.subr.mxu0 %v6011
    %6039 = vmatpush1.msra.mxu0 %v6010
    %6040 = vmatprep.subr.mxu0 %v6013
    %6041 = vmatpush1.msra.mxu0 %v6012
    %6042 = vmatprep.subr.mxu0 %v6015
    %6043 = vmatpush1.msra.mxu0 %v6014
    %6044 = vmatprep.subr.mxu0 %v6017
    %6045 = vmatpush1.msra.mxu0 %v6016
    %6046 = vmatprep.subr.mxu0 %v6019
    %6047 = vmatpush1.msra.mxu0 %v6018
    %6048 = vmatprep.subr.mxu0 %v6021
    %6049 = vmatpush1.msra.mxu0 %v6020
    %6050 = vmatprep.subr.mxu0 %v6023
    %6051 = vmatpush1.msra.mxu0 %v6022
    %6052 = vmatprep.subr.mxu0 %v6025
    %6053 = vmatpush1.msra.mxu0 %v6024
    %6054 = vmatprep.subr.mxu0 0.0
    %6055 = vmatpush1.msra.mxu0 0.0
    %6056 = vmatprep.subr.mxu0 0.0
    %6057 = vmatpush1.msra.mxu0 0.0
    %6058 = vmatprep.subr.mxu0 0.0
    %6059 = vmatpush1.msra.mxu0 0.0
    %6060 = vmatprep.subr.mxu0 0.0
    %6061 = vmatpush1.msra.mxu0 0.0
    %6062 = vmatprep.subr.mxu0 0.0
    %6063 = vmatpush1.msra.mxu0 0.0
    %6064 = vmatprep.subr.mxu0 0.0
    %6065 = vmatpush1.msra.mxu0 0.0
    %6066 = vmatprep.subr.mxu0 0.0
    %6067 = vmatpush1.msra.mxu0 0.0
    %6068 = vmatprep.subr.mxu0 0.0
    %6069 = vmatpush1.msra.mxu0 0.0
    %6070 = vmatprep.subr.mxu0 0.0
    %6071 = vmatpush1.msra.mxu0 0.0
    %6072 = vmatprep.subr.mxu0 0.0
    %6073 = vmatpush1.msra.mxu0 0.0
    %6074 = vmatprep.subr.mxu0 0.0
    %6075 = vmatpush1.msra.mxu0 0.0
    %6076 = vmatprep.subr.mxu0 0.0
    %6077 = vmatpush1.msra.mxu0 0.0
    %6078 = vmatprep.subr.mxu0 0.0
    %6079 = vmatpush1.msra.mxu0 0.0
    %6080 = vmatprep.subr.mxu0 0.0
    %6081 = vmatpush1.msra.mxu0 0.0
    %6082 = vmatprep.subr.mxu0 0.0
    %6083 = vmatpush1.msra.mxu0 0.0
    %6084 = vmatprep.subr.mxu0 0.0
    %6085 = vmatpush1.msra.mxu0 0.0
    %6086 = vmatprep.subr.mxu0 0.0
    %6087 = vmatpush1.msra.mxu0 0.0
    %6088 = vmatprep.subr.mxu0 0.0
    %6089 = vmatpush1.msra.mxu0 0.0
    %6090 = vmatprep.subr.mxu0 0.0
    %6091 = vmatpush1.msra.mxu0 0.0
    %6092 = vmatprep.subr.mxu0 0.0
    %6093 = vmatpush1.msra.mxu0 0.0
    %6094 = vmatprep.subr.mxu0 0.0
    %6095 = vmatpush1.msra.mxu0 0.0
    %6096 = vmatprep.subr.mxu0 0.0
    %6097 = vmatpush1.msra.mxu0 0.0
    %6098 = vmatprep.subr.mxu0 0.0
    %6099 = vmatpush1.msra.mxu0 0.0
    %6100 = vmatprep.subr.mxu0 0.0
    %6101 = vmatpush1.msra.mxu0 0.0
    %6102 = vmatprep.mubr.f32.mxu0 0.0
    %6103 = vmatmul.mubr.f32.gmra.mrb[0].mxu0 %v4364
    %v6104 = vpop.f32.mrb[0].mxu0
    %v6105 = vadd.f32 %v6031, %v6104
    %v6106 = vpop.f32.mrb[0].mxu0
    %v6107 = vadd.f32 %v6035, %v6106
    %6108 = vmatprep.mubr.f32.mxu0 0.0
    %6109 = vmatmul.mubr.f32.gmra.mrb[0].mxu0 %v4367
    %v6110 = vpop.f32.mrb[0].mxu0
    %v6111 = vadd.f32 %v6031, %v6110
    %v6112 = vpop.f32.mrb[0].mxu0
    %v6113 = vadd.f32 %v6035, %v6112
    %6114 = vdwg.mxu0
    %v6115 = vld [vmem:[%s45] sm:$0xff]
    %v6116 = vld [vmem:[%s45 + $0x8] sm:$0xff]
    %v6117 = vld [vmem:[%s45 + $0x10] sm:$0xff]
    %v6118 = vld [vmem:[%s45 + $0x18] sm:$0xff]
    %v6119 = vld [vmem:[%s45 + $0x20] sm:$0xff]
    %v6120 = vld [vmem:[%s45 + $0x28] sm:$0xff]
    %v6121 = vld [vmem:[%s45 + $0x30] sm:$0xff]
    %v6122 = vld [vmem:[%s45 + $0x38] sm:$0xff]
    %v6123 = vxor.u32 %v6105, 2147483648
    %v6124 = vmul.f32 %v6123, 1.442695
    %v6125 = vpow.pop %v6124
    %v6126 = vadd.f32 %v6125, 1.0
    %v6127 = vrcp.pop %v6126
    %v6128 = vmul.f32 1.0, %v6127
    %v6129 = vtanh.pop %v6105
    %6131 = vrot.lane.b32.xlu0 %v6129, 64
    %v6132 = vpop.permute.xlu0 %6131
    %v6134 = vmul.f32 %v6128, %v6132
    %v6135 = vtanh.pop %v6134
    %6137 = vrot.lane.b32.xlu0 %v6135, 96
    %v6138 = vpop.permute.xlu0 %6137
    %v6140 = vmul.f32 %v6128, %v6138
    %v6141 = vxor.u32 %v6113, 2147483648
    %v6142 = vmul.f32 %v6141, 1.442695
    %v6143 = vpow.pop %v6142
    %v6144 = vadd.f32 %v6143, 1.0
    %v6145 = vrcp.pop %v6144
    %v6146 = vmul.f32 1.0, %v6145
    %v6147 = vtanh.pop %v6113
    %6149 = vrot.lane.b32.xlu0 %v6147, 64
    %v6150 = vpop.permute.xlu0 %6149
    %v6152 = vmul.f32 %v6146, %v6150
    %v6153 = vtanh.pop %v6152
    %6155 = vrot.lane.b32.xlu0 %v6153, 96
    %v6156 = vpop.permute.xlu0 %6155
    %v6158 = vmul.f32 %v6146, %v6156
    %6160 = vrot.lane.b32.xlu0 %v6140, 32
    %v6161 = vpop.permute.xlu0 %6160
    %v6162 = vsel %vm1139, %v6161, 0
    %6164 = vmatprep.subr.mxu0 0.0
    %6165 = vmatpush1.msra.mxu0 %v6115
    %6166 = vmatprep.subr.mxu0 0.0
    %6167 = vmatpush1.msra.mxu0 %v6117
    %6168 = vmatprep.subr.mxu0 0.0
    %6169 = vmatpush1.msra.mxu0 %v6119
    %6170 = vmatprep.subr.mxu0 0.0
    %6171 = vmatpush1.msra.mxu0 %v6121
    %6172 = vmatprep.subr.mxu0 0.0
    %6173 = vmatpush1.msra.mxu0 0.0
    %6174 = vmatprep.subr.mxu0 0.0
    %6175 = vmatpush1.msra.mxu0 0.0
    %6176 = vmatprep.subr.mxu0 0.0
    %6177 = vmatpush1.msra.mxu0 0.0
    %6178 = vmatprep.subr.mxu0 0.0
    %6179 = vmatpush1.msra.mxu0 0.0
    %6180 = vmatprep.subr.mxu0 0.0
    %6181 = vmatpush1.msra.mxu0 0.0
    %6182 = vmatprep.subr.mxu0 0.0
    %6183 = vmatpush1.msra.mxu0 0.0
    %6184 = vmatprep.subr.mxu0 0.0
    %6185 = vmatpush1.msra.mxu0 0.0
    %6186 = vmatprep.subr.mxu0 0.0
    %6187 = vmatpush1.msra.mxu0 0.0
    %6188 = vmatprep.subr.mxu0 0.0
    %6189 = vmatpush1.msra.mxu0 0.0
    %6190 = vmatprep.subr.mxu0 0.0
    %6191 = vmatpush1.msra.mxu0 0.0
    %6192 = vmatprep.subr.mxu0 0.0
    %6193 = vmatpush1.msra.mxu0 0.0
    %6194 = vmatprep.subr.mxu0 0.0
    %6195 = vmatpush1.msra.mxu0 0.0
    %6196 = vmatprep.subr.mxu0 0.0
    %6197 = vmatpush1.msra.mxu0 0.0
    %6198 = vmatprep.subr.mxu0 0.0
    %6199 = vmatpush1.msra.mxu0 0.0
    %6200 = vmatprep.subr.mxu0 0.0
    %6201 = vmatpush1.msra.mxu0 0.0
    %6202 = vmatprep.subr.mxu0 0.0
    %6203 = vmatpush1.msra.mxu0 0.0
    %6204 = vmatprep.subr.mxu0 0.0
    %6205 = vmatpush1.msra.mxu0 0.0
    %6206 = vmatprep.subr.mxu0 0.0
    %6207 = vmatpush1.msra.mxu0 0.0
    %6208 = vmatprep.subr.mxu0 0.0
    %6209 = vmatpush1.msra.mxu0 0.0
    %6210 = vmatprep.subr.mxu0 0.0
    %6211 = vmatpush1.msra.mxu0 0.0
    %6212 = vmatprep.subr.mxu0 0.0
    %6213 = vmatpush1.msra.mxu0 0.0
    %6214 = vmatprep.subr.mxu0 0.0
    %6215 = vmatpush1.msra.mxu0 0.0
    %6216 = vmatprep.subr.mxu0 0.0
    %6217 = vmatpush1.msra.mxu0 0.0
    %6218 = vmatprep.subr.mxu0 0.0
    %6219 = vmatpush1.msra.mxu0 0.0
    %6220 = vmatprep.subr.mxu0 0.0
    %6221 = vmatpush1.msra.mxu0 0.0
    %6222 = vmatprep.subr.mxu0 0.0
    %6223 = vmatpush1.msra.mxu0 0.0
    %6224 = vmatprep.subr.mxu0 0.0
    %6225 = vmatpush1.msra.mxu0 0.0
    %6226 = vmatprep.subr.mxu0 0.0
    %6227 = vmatpush1.msra.mxu0 0.0
    %6228 = vmatprep.mubr.f32.mxu0 0.0
    %6229 = vmatmul.mubr.f32.gmra.mrb[0].mxu0 %v6162
    %v6230 = vpop.f32.mrb[0].mxu0
    %v6231 = vadd.f32 0.0, %v6230
    %v6232 = vpop.f32.mrb[0].mxu0
    %6233 = vdwg.mxu0
    %v6235 = vrot.slane %v6231, 6
    %v6237 = vadd.f32 %v6105, %v6235
    %v6239 = vrot.slane %v6158, 6
    %6240 = vrot.lane.b32.xlu0 %v6239, 32
    %v6241 = vpop.permute.xlu0 %6240
    %v6242 = vsel %vm1139, %v6241, 0
    %6244 = vmatprep.subr.mxu0 0.0
    %6245 = vmatpush1.msra.mxu0 %v6116
    %6246 = vmatprep.subr.mxu0 0.0
    %6247 = vmatpush1.msra.mxu0 %v6118
    %6248 = vmatprep.subr.mxu0 0.0
    %6249 = vmatpush1.msra.mxu0 %v6120
    %6250 = vmatprep.subr.mxu0 0.0
    %6251 = vmatpush1.msra.mxu0 %v6122
    %6252 = vmatprep.subr.mxu0 0.0
    %6253 = vmatpush1.msra.mxu0 0.0
    %6254 = vmatprep.subr.mxu0 0.0
    %6255 = vmatpush1.msra.mxu0 0.0
    %6256 = vmatprep.subr.mxu0 0.0
    %6257 = vmatpush1.msra.mxu0 0.0
    %6258 = vmatprep.subr.mxu0 0.0
    %6259 = vmatpush1.msra.mxu0 0.0
    %6260 = vmatprep.subr.mxu0 0.0
    %6261 = vmatpush1.msra.mxu0 0.0
    %6262 = vmatprep.subr.mxu0 0.0
    %6263 = vmatpush1.msra.mxu0 0.0
    %6264 = vmatprep.subr.mxu0 0.0
    %6265 = vmatpush1.msra.mxu0 0.0
    %6266 = vmatprep.subr.mxu0 0.0
    %6267 = vmatpush1.msra.mxu0 0.0
    %6268 = vmatprep.subr.mxu0 0.0
    %6269 = vmatpush1.msra.mxu0 0.0
    %6270 = vmatprep.subr.mxu0 0.0
    %6271 = vmatpush1.msra.mxu0 0.0
    %6272 = vmatprep.subr.mxu0 0.0
    %6273 = vmatpush1.msra.mxu0 0.0
    %6274 = vmatprep.subr.mxu0 0.0
    %6275 = vmatpush1.msra.mxu0 0.0
    %6276 = vmatprep.subr.mxu0 0.0
    %6277 = vmatpush1.msra.mxu0 0.0
    %6278 = vmatprep.subr.mxu0 0.0
    %6279 = vmatpush1.msra.mxu0 0.0
    %6280 = vmatprep.subr.mxu0 0.0
    %6281 = vmatpush1.msra.mxu0 0.0
    %6282 = vmatprep.subr.mxu0 0.0
    %6283 = vmatpush1.msra.mxu0 0.0
    %6284 = vmatprep.subr.mxu0 0.0
    %6285 = vmatpush1.msra.mxu0 0.0
    %6286 = vmatprep.subr.mxu0 0.0
    %6287 = vmatpush1.msra.mxu0 0.0
    %6288 = vmatprep.subr.mxu0 0.0
    %6289 = vmatpush1.msra.mxu0 0.0
    %6290 = vmatprep.subr.mxu0 0.0
    %6291 = vmatpush1.msra.mxu0 0.0
    %6292 = vmatprep.subr.mxu0 0.0
    %6293 = vmatpush1.msra.mxu0 0.0
    %6294 = vmatprep.subr.mxu0 0.0
    %6295 = vmatpush1.msra.mxu0 0.0
    %6296 = vmatprep.subr.mxu0 0.0
    %6297 = vmatpush1.msra.mxu0 0.0
    %6298 = vmatprep.subr.mxu0 0.0
    %6299 = vmatpush1.msra.mxu0 0.0
    %6300 = vmatprep.subr.mxu0 0.0
    %6301 = vmatpush1.msra.mxu0 0.0
    %6302 = vmatprep.subr.mxu0 0.0
    %6303 = vmatpush1.msra.mxu0 0.0
    %6304 = vmatprep.subr.mxu0 0.0
    %6305 = vmatpush1.msra.mxu0 0.0
    %6306 = vmatprep.subr.mxu0 0.0
    %6307 = vmatpush1.msra.mxu0 0.0
    %6308 = vmatprep.mubr.f32.mxu0 0.0
    %6309 = vmatmul.mubr.f32.gmra.mrb[0].mxu0 %v6242
    %v6310 = vpop.f32.mrb[0].mxu0
    %v6311 = vadd.f32 0.0, %v6310
    %v6312 = vpop.f32.mrb[0].mxu0
    %6313 = vdwg.mxu0
    %v6315 = vrot.slane %v6311, 4
    %v6317 = vadd.f32 %v6113, %v6315
    %v6318 = vxor.u32 %v6237, 2147483648
    %v6319 = vmul.f32 %v6318, 1.442695
    %v6320 = vpow.pop %v6319
    %v6321 = vadd.f32 %v6320, 1.0
    %v6322 = vrcp.pop %v6321
    %v6323 = vmul.f32 1.0, %v6322
    %v6324 = vtanh.pop %v6237
    %v6326 = vrot.slane %v6134, 6
    %6327 = vrot.lane.b32.xlu0 %v6326, 32
    %v6328 = vpop.permute.xlu0 %6327
    %v6330 = vmul.f32 %v6323, %v6328
    %6332 = vrot.lane.b32.xlu0 %v6324, 64
    %v6333 = vpop.permute.xlu0 %6332
    %v6335 = vmul.f32 %v6323, %v6333
    %6337 = vrot.lane.b32.xlu0 %v6335, 32
    %v6338 = vpop.permute.xlu0 %6337
    %v6340 = vadd.f32 %v6330, %v6338
    %v6341 = vtanh.pop %v6340
    %6343 = vrot.lane.b32.xlu0 %v6341, 64
    %v6344 = vpop.permute.xlu0 %6343
    %v6346 = vmul.f32 %v6323, %v6344
    %v6347 = vxor.u32 %v6317, 2147483648
    %v6348 = vmul.f32 %v6347, 1.442695
    %v6349 = vpow.pop %v6348
    %v6350 = vadd.f32 %v6349, 1.0
    %v6351 = vrcp.pop %v6350
    %v6352 = vmul.f32 1.0, %v6351
    %v6353 = vtanh.pop %v6317
    %v6355 = vrot.slane %v6152, 2
    %6356 = vrot.lane.b32.xlu0 %v6355, 32
    %v6357 = vpop.permute.xlu0 %6356
    %v6359 = vmul.f32 %v6352, %v6357
    %6361 = vrot.lane.b32.xlu0 %v6353, 64
    %v6362 = vpop.permute.xlu0 %6361
    %v6364 = vmul.f32 %v6352, %v6362
    %6366 = vrot.lane.b32.xlu0 %v6364, 32
    %v6367 = vpop.permute.xlu0 %6366
    %v6369 = vadd.f32 %v6359, %v6367
    %v6370 = vtanh.pop %v6369
    %6372 = vrot.lane.b32.xlu0 %v6370, 64
    %v6373 = vpop.permute.xlu0 %6372
    %v6375 = vmul.f32 %v6352, %v6373
    %v6377 = vrot.slane %v6346, 2
    %6378 = vrot.lane.b32.xlu0 %v6377, 32
    %v6379 = vpop.permute.xlu0 %6378
    %v6380 = vsel %vm1139, %v6379, 0
    %6382 = vmatprep.subr.mxu0 0.0
    %6383 = vmatpush1.msra.mxu0 %v6115
    %6384 = vmatprep.subr.mxu0 0.0
    %6385 = vmatpush1.msra.mxu0 %v6117
    %6386 = vmatprep.subr.mxu0 0.0
    %6387 = vmatpush1.msra.mxu0 %v6119
    %6388 = vmatprep.subr.mxu0 0.0
    %6389 = vmatpush1.msra.mxu0 %v6121
    %6390 = vmatprep.subr.mxu0 0.0
    %6391 = vmatpush1.msra.mxu0 0.0
    %6392 = vmatprep.subr.mxu0 0.0
    %6393 = vmatpush1.msra.mxu0 0.0
    %6394 = vmatprep.subr.mxu0 0.0
    %6395 = vmatpush1.msra.mxu0 0.0
    %6396 = vmatprep.subr.mxu0 0.0
    %6397 = vmatpush1.msra.mxu0 0.0
    %6398 = vmatprep.subr.mxu0 0.0
    %6399 = vmatpush1.msra.mxu0 0.0
    %6400 = vmatprep.subr.mxu0 0.0
    %6401 = vmatpush1.msra.mxu0 0.0
    %6402 = vmatprep.subr.mxu0 0.0
    %6403 = vmatpush1.msra.mxu0 0.0
    %6404 = vmatprep.subr.mxu0 0.0
    %6405 = vmatpush1.msra.mxu0 0.0
    %6406 = vmatprep.subr.mxu0 0.0
    %6407 = vmatpush1.msra.mxu0 0.0
    %6408 = vmatprep.subr.mxu0 0.0
    %6409 = vmatpush1.msra.mxu0 0.0
    %6410 = vmatprep.subr.mxu0 0.0
    %6411 = vmatpush1.msra.mxu0 0.0
    %6412 = vmatprep.subr.mxu0 0.0
    %6413 = vmatpush1.msra.mxu0 0.0
    %6414 = vmatprep.subr.mxu0 0.0
    %6415 = vmatpush1.msra.mxu0 0.0
    %6416 = vmatprep.subr.mxu0 0.0
    %6417 = vmatpush1.msra.mxu0 0.0
    %6418 = vmatprep.subr.mxu0 0.0
    %6419 = vmatpush1.msra.mxu0 0.0
    %6420 = vmatprep.subr.mxu0 0.0
    %6421 = vmatpush1.msra.mxu0 0.0
    %6422 = vmatprep.subr.mxu0 0.0
    %6423 = vmatpush1.msra.mxu0 0.0
    %6424 = vmatprep.subr.mxu0 0.0
    %6425 = vmatpush1.msra.mxu0 0.0
    %6426 = vmatprep.subr.mxu0 0.0
    %6427 = vmatpush1.msra.mxu0 0.0
    %6428 = vmatprep.subr.mxu0 0.0
    %6429 = vmatpush1.msra.mxu0 0.0
    %6430 = vmatprep.subr.mxu0 0.0
    %6431 = vmatpush1.msra.mxu0 0.0
    %6432 = vmatprep.subr.mxu0 0.0
    %6433 = vmatpush1.msra.mxu0 0.0
    %6434 = vmatprep.subr.mxu0 0.0
    %6435 = vmatpush1.msra.mxu0 0.0
    %6436 = vmatprep.subr.mxu0 0.0
    %6437 = vmatpush1.msra.mxu0 0.0
    %6438 = vmatprep.subr.mxu0 0.0
    %6439 = vmatpush1.msra.mxu0 0.0
    %6440 = vmatprep.subr.mxu0 0.0
    %6441 = vmatpush1.msra.mxu0 0.0
    %6442 = vmatprep.subr.mxu0 0.0
    %6443 = vmatpush1.msra.mxu0 0.0
    %6444 = vmatprep.subr.mxu0 0.0
    %6445 = vmatpush1.msra.mxu0 0.0
    %6446 = vmatprep.mubr.f32.mxu0 0.0
    %6447 = vmatmul.mubr.f32.gmra.mrb[0].mxu0 %v6380
    %v6448 = vpop.f32.mrb[0].mxu0
    %v6449 = vadd.f32 0.0, %v6448
    %v6450 = vpop.f32.mrb[0].mxu0
    %6451 = vdwg.mxu0
    %v6453 = vrot.slane %v6449, 4
    %v6455 = vadd.f32 %v6105, %v6453
    %v6457 = vrot.slane %v6375, 4
    %6458 = vrot.lane.b32.xlu0 %v6457, 32
    %v6459 = vpop.permute.xlu0 %6458
    %v6460 = vsel %vm1139, %v6459, 0
    %6462 = vmatprep.subr.mxu0 0.0
    %6463 = vmatpush1.msra.mxu0 %v6116
    %6464 = vmatprep.subr.mxu0 0.0
    %6465 = vmatpush1.msra.mxu0 %v6118
    %6466 = vmatprep.subr.mxu0 0.0
    %6467 = vmatpush1.msra.mxu0 %v6120
    %6468 = vmatprep.subr.mxu0 0.0
    %6469 = vmatpush1.msra.mxu0 %v6122
    %6470 = vmatprep.subr.mxu0 0.0
    %6471 = vmatpush1.msra.mxu0 0.0
    %6472 = vmatprep.subr.mxu0 0.0
    %6473 = vmatpush1.msra.mxu0 0.0
    %6474 = vmatprep.subr.mxu0 0.0
    %6475 = vmatpush1.msra.mxu0 0.0
    %6476 = vmatprep.subr.mxu0 0.0
    %6477 = vmatpush1.msra.mxu0 0.0
    %6478 = vmatprep.subr.mxu0 0.0
    %6479 = vmatpush1.msra.mxu0 0.0
    %6480 = vmatprep.subr.mxu0 0.0
    %6481 = vmatpush1.msra.mxu0 0.0
    %6482 = vmatprep.subr.mxu0 0.0
    %6483 = vmatpush1.msra.mxu0 0.0
    %6484 = vmatprep.subr.mxu0 0.0
    %6485 = vmatpush1.msra.mxu0 0.0
    %6486 = vmatprep.subr.mxu0 0.0
    %6487 = vmatpush1.msra.mxu0 0.0
    %6488 = vmatprep.subr.mxu0 0.0
    %6489 = vmatpush1.msra.mxu0 0.0
    %6490 = vmatprep.subr.mxu0 0.0
    %6491 = vmatpush1.msra.mxu0 0.0
    %6492 = vmatprep.subr.mxu0 0.0
    %6493 = vmatpush1.msra.mxu0 0.0
    %6494 = vmatprep.subr.mxu0 0.0
    %6495 = vmatpush1.msra.mxu0 0.0
    %6496 = vmatprep.subr.mxu0 0.0
    %6497 = vmatpush1.msra.mxu0 0.0
    %6498 = vmatprep.subr.mxu0 0.0
    %6499 = vmatpush1.msra.mxu0 0.0
    %6500 = vmatprep.subr.mxu0 0.0
    %6501 = vmatpush1.msra.mxu0 0.0
    %6502 = vmatprep.subr.mxu0 0.0
    %6503 = vmatpush1.msra.mxu0 0.0
    %6504 = vmatprep.subr.mxu0 0.0
    %6505 = vmatpush1.msra.mxu0 0.0
    %6506 = vmatprep.subr.mxu0 0.0
    %6507 = vmatpush1.msra.mxu0 0.0
    %6508 = vmatprep.subr.mxu0 0.0
    %6509 = vmatpush1.msra.mxu0 0.0
    %6510 = vmatprep.subr.mxu0 0.0
    %6511 = vmatpush1.msra.mxu0 0.0
    %6512 = vmatprep.subr.mxu0 0.0
    %6513 = vmatpush1.msra.mxu0 0.0
    %6514 = vmatprep.subr.mxu0 0.0
    %6515 = vmatpush1.msra.mxu0 0.0
    %6516 = vmatprep.subr.mxu0 0.0
    %6517 = vmatpush1.msra.mxu0 0.0
    %6518 = vmatprep.subr.mxu0 0.0
    %6519 = vmatpush1.msra.mxu0 0.0
    %6520 = vmatprep.subr.mxu0 0.0
    %6521 = vmatpush1.msra.mxu0 0.0
    %6522 = vmatprep.subr.mxu0 0.0
    %6523 = vmatpush1.msra.mxu0 0.0
    %6524 = vmatprep.subr.mxu0 0.0
    %6525 = vmatpush1.msra.mxu0 0.0
    %6526 = vmatprep.mubr.f32.mxu0 0.0
    %6527 = vmatmul.mubr.f32.gmra.mrb[0].mxu0 %v6460
    %v6528 = vpop.f32.mrb[0].mxu0
    %v6529 = vadd.f32 0.0, %v6528
    %v6530 = vpop.f32.mrb[0].mxu0
    %6531 = vdwg.mxu0
    %v6533 = vrot.slane %v6529, 6
    %v6535 = vadd.f32 %v6113, %v6533
    %v6536 = vxor.u32 %v6455, 2147483648
    %v6537 = vmul.f32 %v6536, 1.442695
    %v6538 = vpow.pop %v6537
    %v6539 = vadd.f32 %v6538, 1.0
    %v6540 = vrcp.pop %v6539
    %v6541 = vmul.f32 1.0, %v6540
    %v6542 = vtanh.pop %v6455
    %v6544 = vrot.slane %v6340, 6
    %v6546 = vmul.f32 %v6541, %v6544
    %6548 = vrot.lane.b32.xlu0 %v6542, 64
    %v6549 = vpop.permute.xlu0 %6548
    %v6551 = vmul.f32 %v6541, %v6549
    %6553 = vrot.lane.b32.xlu0 %v6551, 32
    %v6554 = vpop.permute.xlu0 %6553
    %v6556 = vadd.f32 %v6546, %v6554
    %v6557 = vtanh.pop %v6556
    %6559 = vrot.lane.b32.xlu0 %v6557, 64
    %v6560 = vpop.permute.xlu0 %6559
    %v6562 = vmul.f32 %v6541, %v6560
    %v6563 = vxor.u32 %v6535, 2147483648
    %v6564 = vmul.f32 %v6563, 1.442695
    %v6565 = vpow.pop %v6564
    %v6566 = vadd.f32 %v6565, 1.0
    %v6567 = vrcp.pop %v6566
    %v6568 = vmul.f32 1.0, %v6567
    %v6569 = vtanh.pop %v6535
    %v6571 = vrot.slane %v6369, 2
    %v6573 = vmul.f32 %v6568, %v6571
    %6575 = vrot.lane.b32.xlu0 %v6569, 64
    %v6576 = vpop.permute.xlu0 %6575
    %v6578 = vmul.f32 %v6568, %v6576
    %6580 = vrot.lane.b32.xlu0 %v6578, 32
    %v6581 = vpop.permute.xlu0 %6580
    %v6583 = vadd.f32 %v6573, %v6581
    %v6584 = vtanh.pop %v6583
    %6586 = vrot.lane.b32.xlu0 %v6584, 64
    %v6587 = vpop.permute.xlu0 %6586
    %v6589 = vmul.f32 %v6568, %v6587
    %v6591 = vrot.slane %v6562, 4
    %6592 = vrot.lane.b32.xlu0 %v6591, 32
    %v6593 = vpop.permute.xlu0 %6592
    %v6594 = vsel %vm1139, %v6593, 0
    %6596 = vmatprep.subr.mxu0 0.0
    %6597 = vmatpush1.msra.mxu0 %v6115
    %6598 = vmatprep.subr.mxu0 0.0
    %6599 = vmatpush1.msra.mxu0 %v6117
    %6600 = vmatprep.subr.mxu0 0.0
    %6601 = vmatpush1.msra.mxu0 %v6119
    %6602 = vmatprep.subr.mxu0 0.0
    %6603 = vmatpush1.msra.mxu0 %v6121
    %6604 = vmatprep.subr.mxu0 0.0
    %6605 = vmatpush1.msra.mxu0 0.0
    %6606 = vmatprep.subr.mxu0 0.0
    %6607 = vmatpush1.msra.mxu0 0.0
    %6608 = vmatprep.subr.mxu0 0.0
    %6609 = vmatpush1.msra.mxu0 0.0
    %6610 = vmatprep.subr.mxu0 0.0
    %6611 = vmatpush1.msra.mxu0 0.0
    %6612 = vmatprep.subr.mxu0 0.0
    %6613 = vmatpush1.msra.mxu0 0.0
    %6614 = vmatprep.subr.mxu0 0.0
    %6615 = vmatpush1.msra.mxu0 0.0
    %6616 = vmatprep.subr.mxu0 0.0
    %6617 = vmatpush1.msra.mxu0 0.0
    %6618 = vmatprep.subr.mxu0 0.0
    %6619 = vmatpush1.msra.mxu0 0.0
    %6620 = vmatprep.subr.mxu0 0.0
    %6621 = vmatpush1.msra.mxu0 0.0
    %6622 = vmatprep.subr.mxu0 0.0
    %6623 = vmatpush1.msra.mxu0 0.0
    %6624 = vmatprep.subr.mxu0 0.0
    %6625 = vmatpush1.msra.mxu0 0.0
    %6626 = vmatprep.subr.mxu0 0.0
    %6627 = vmatpush1.msra.mxu0 0.0
    %6628 = vmatprep.subr.mxu0 0.0
    %6629 = vmatpush1.msra.mxu0 0.0
    %6630 = vmatprep.subr.mxu0 0.0
    %6631 = vmatpush1.msra.mxu0 0.0
    %6632 = vmatprep.subr.mxu0 0.0
    %6633 = vmatpush1.msra.mxu0 0.0
    %6634 = vmatprep.subr.mxu0 0.0
    %6635 = vmatpush1.msra.mxu0 0.0
    %6636 = vmatprep.subr.mxu0 0.0
    %6637 = vmatpush1.msra.mxu0 0.0
    %6638 = vmatprep.subr.mxu0 0.0
    %6639 = vmatpush1.msra.mxu0 0.0
    %6640 = vmatprep.subr.mxu0 0.0
    %6641 = vmatpush1.msra.mxu0 0.0
    %6642 = vmatprep.subr.mxu0 0.0
    %6643 = vmatpush1.msra.mxu0 0.0
    %6644 = vmatprep.subr.mxu0 0.0
    %6645 = vmatpush1.msra.mxu0 0.0
    %6646 = vmatprep.subr.mxu0 0.0
    %6647 = vmatpush1.msra.mxu0 0.0
    %6648 = vmatprep.subr.mxu0 0.0
    %6649 = vmatpush1.msra.mxu0 0.0
    %6650 = vmatprep.subr.mxu0 0.0
    %6651 = vmatpush1.msra.mxu0 0.0
    %6652 = vmatprep.subr.mxu0 0.0
    %6653 = vmatpush1.msra.mxu0 0.0
    %6654 = vmatprep.subr.mxu0 0.0
    %6655 = vmatpush1.msra.mxu0 0.0
    %6656 = vmatprep.subr.mxu0 0.0
    %6657 = vmatpush1.msra.mxu0 0.0
    %6658 = vmatprep.subr.mxu0 0.0
    %6659 = vmatpush1.msra.mxu0 0.0
    %6660 = vmatprep.mubr.f32.mxu0 0.0
    %6661 = vmatmul.mubr.f32.gmra.mrb[0].mxu0 %v6594
    %v6662 = vpop.f32.mrb[0].mxu0
    %v6663 = vadd.f32 0.0, %v6662
    %v6664 = vpop.f32.mrb[0].mxu0
    %6665 = vdwg.mxu0
    %v6667 = vrot.slane %v6663, 2
    %v6669 = vadd.f32 %v6105, %v6667
    %v6671 = vrot.slane %v6589, 2
    %6672 = vrot.lane.b32.xlu0 %v6671, 32
    %v6673 = vpop.permute.xlu0 %6672
    %v6674 = vsel %vm1139, %v6673, 0
    %6676 = vmatprep.subr.mxu0 0.0
    %6677 = vmatpush1.msra.mxu0 %v6116
    %6678 = vmatprep.subr.mxu0 0.0
    %6679 = vmatpush1.msra.mxu0 %v6118
    %6680 = vmatprep.subr.mxu0 0.0
    %6681 = vmatpush1.msra.mxu0 %v6120
    %6682 = vmatprep.subr.mxu0 0.0
    %6683 = vmatpush1.msra.mxu0 %v6122
    %6684 = vmatprep.subr.mxu0 0.0
    %6685 = vmatpush1.msra.mxu0 0.0
    %6686 = vmatprep.subr.mxu0 0.0
    %6687 = vmatpush1.msra.mxu0 0.0
    %6688 = vmatprep.subr.mxu0 0.0
    %6689 = vmatpush1.msra.mxu0 0.0
    %6690 = vmatprep.subr.mxu0 0.0
    %6691 = vmatpush1.msra.mxu0 0.0
    %6692 = vmatprep.subr.mxu0 0.0
    %6693 = vmatpush1.msra.mxu0 0.0
    %6694 = vmatprep.subr.mxu0 0.0
    %6695 = vmatpush1.msra.mxu0 0.0
    %6696 = vmatprep.subr.mxu0 0.0
    %6697 = vmatpush1.msra.mxu0 0.0
    %6698 = vmatprep.subr.mxu0 0.0
    %6699 = vmatpush1.msra.mxu0 0.0
    %6700 = vmatprep.subr.mxu0 0.0
    %6701 = vmatpush1.msra.mxu0 0.0
    %6702 = vmatprep.subr.mxu0 0.0
    %6703 = vmatpush1.msra.mxu0 0.0
    %6704 = vmatprep.subr.mxu0 0.0
    %6705 = vmatpush1.msra.mxu0 0.0
    %6706 = vmatprep.subr.mxu0 0.0
    %6707 = vmatpush1.msra.mxu0 0.0
    %6708 = vmatprep.subr.mxu0 0.0
    %6709 = vmatpush1.msra.mxu0 0.0
    %6710 = vmatprep.subr.mxu0 0.0
    %6711 = vmatpush1.msra.mxu0 0.0
    %6712 = vmatprep.subr.mxu0 0.0
    %6713 = vmatpush1.msra.mxu0 0.0
    %6714 = vmatprep.subr.mxu0 0.0
    %6715 = vmatpush1.msra.mxu0 0.0
    %6716 = vmatprep.subr.mxu0 0.0
    %6717 = vmatpush1.msra.mxu0 0.0
    %6718 = vmatprep.subr.mxu0 0.0
    %6719 = vmatpush1.msra.mxu0 0.0
    %6720 = vmatprep.subr.mxu0 0.0
    %6721 = vmatpush1.msra.mxu0 0.0
    %6722 = vmatprep.subr.mxu0 0.0
    %6723 = vmatpush1.msra.mxu0 0.0
    %6724 = vmatprep.subr.mxu0 0.0
    %6725 = vmatpush1.msra.mxu0 0.0
    %6726 = vmatprep.subr.mxu0 0.0
    %6727 = vmatpush1.msra.mxu0 0.0
    %6728 = vmatprep.subr.mxu0 0.0
    %6729 = vmatpush1.msra.mxu0 0.0
    %6730 = vmatprep.subr.mxu0 0.0
    %6731 = vmatpush1.msra.mxu0 0.0
    %6732 = vmatprep.subr.mxu0 0.0
    %6733 = vmatpush1.msra.mxu0 0.0
    %6734 = vmatprep.subr.mxu0 0.0
    %6735 = vmatpush1.msra.mxu0 0.0
    %6736 = vmatprep.subr.mxu0 0.0
    %6737 = vmatpush1.msra.mxu0 0.0
    %6738 = vmatprep.subr.mxu0 0.0
    %6739 = vmatpush1.msra.mxu0 0.0
    %6740 = vmatprep.mubr.f32.mxu0 0.0
    %6741 = vmatmul.mubr.f32.gmra.mrb[0].mxu0 %v6674
    %v6742 = vpop.f32.mrb[0].mxu0
    %v6743 = vadd.f32 0.0, %v6742
    %v6744 = vpop.f32.mrb[0].mxu0
    %6745 = vdwg.mxu0
    %v6746 = vadd.f32 %v6113, %v6743
    %v6747 = vxor.u32 %v6669, 2147483648
    %v6748 = vmul.f32 %v6747, 1.442695
    %v6749 = vpow.pop %v6748
    %v6750 = vadd.f32 %v6749, 1.0
    %v6751 = vrcp.pop %v6750
    %v6752 = vmul.f32 1.0, %v6751
    %v6753 = vtanh.pop %v6669
    %v6755 = vrot.slane %v6556, 6
    %v6757 = vmul.f32 %v6752, %v6755
    %6759 = vrot.lane.b32.xlu0 %v6753, 64
    %v6760 = vpop.permute.xlu0 %6759
    %v6762 = vmul.f32 %v6752, %v6760
    %6764 = vrot.lane.b32.xlu0 %v6762, 32
    %v6765 = vpop.permute.xlu0 %6764
    %v6767 = vadd.f32 %v6757, %v6765
    %v6768 = vtanh.pop %v6767
    %6770 = vrot.lane.b32.xlu0 %v6768, 64
    %v6771 = vpop.permute.xlu0 %6770
    %v6773 = vmul.f32 %v6752, %v6771
    %v6774 = vxor.u32 %v6746, 2147483648
    %v6775 = vmul.f32 %v6774, 1.442695
    %v6776 = vpow.pop %v6775
    %v6777 = vadd.f32 %v6776, 1.0
    %v6778 = vrcp.pop %v6777
    %v6779 = vmul.f32 1.0, %v6778
    %v6780 = vtanh.pop %v6746
    %v6782 = vrot.slane %v6583, 2
    %v6784 = vmul.f32 %v6779, %v6782
    %6786 = vrot.lane.b32.xlu0 %v6780, 64
    %v6787 = vpop.permute.xlu0 %6786
    %v6789 = vmul.f32 %v6779, %v6787
    %6791 = vrot.lane.b32.xlu0 %v6789, 32
    %v6792 = vpop.permute.xlu0 %6791
    %v6794 = vadd.f32 %v6784, %v6792
    %v6795 = vtanh.pop %v6794
    %6797 = vrot.lane.b32.xlu0 %v6795, 64
    %v6798 = vpop.permute.xlu0 %6797
    %v6800 = vmul.f32 %v6779, %v6798
    %v6802 = vrot.slane %v6773, 6
    %6803 = vrot.lane.b32.xlu0 %v6802, 32
    %v6804 = vpop.permute.xlu0 %6803
    %v6805 = vsel %vm1139, %v6804, 0
    %6807 = vmatprep.subr.mxu0 0.0
    %6808 = vmatpush1.msra.mxu0 %v6115
    %6809 = vmatprep.subr.mxu0 0.0
    %6810 = vmatpush1.msra.mxu0 %v6117
    %6811 = vmatprep.subr.mxu0 0.0
    %6812 = vmatpush1.msra.mxu0 %v6119
    %6813 = vmatprep.subr.mxu0 0.0
    %6814 = vmatpush1.msra.mxu0 %v6121
    %6815 = vmatprep.subr.mxu0 0.0
    %6816 = vmatpush1.msra.mxu0 0.0
    %6817 = vmatprep.subr.mxu0 0.0
    %6818 = vmatpush1.msra.mxu0 0.0
    %6819 = vmatprep.subr.mxu0 0.0
    %6820 = vmatpush1.msra.mxu0 0.0
    %6821 = vmatprep.subr.mxu0 0.0
    %6822 = vmatpush1.msra.mxu0 0.0
    %6823 = vmatprep.subr.mxu0 0.0
    %6824 = vmatpush1.msra.mxu0 0.0
    %6825 = vmatprep.subr.mxu0 0.0
    %6826 = vmatpush1.msra.mxu0 0.0
    %6827 = vmatprep.subr.mxu0 0.0
    %6828 = vmatpush1.msra.mxu0 0.0
    %6829 = vmatprep.subr.mxu0 0.0
    %6830 = vmatpush1.msra.mxu0 0.0
    %6831 = vmatprep.subr.mxu0 0.0
    %6832 = vmatpush1.msra.mxu0 0.0
    %6833 = vmatprep.subr.mxu0 0.0
    %6834 = vmatpush1.msra.mxu0 0.0
    %6835 = vmatprep.subr.mxu0 0.0
    %6836 = vmatpush1.msra.mxu0 0.0
    %6837 = vmatprep.subr.mxu0 0.0
    %6838 = vmatpush1.msra.mxu0 0.0
    %6839 = vmatprep.subr.mxu0 0.0
    %6840 = vmatpush1.msra.mxu0 0.0
    %6841 = vmatprep.subr.mxu0 0.0
    %6842 = vmatpush1.msra.mxu0 0.0
    %6843 = vmatprep.subr.mxu0 0.0
    %6844 = vmatpush1.msra.mxu0 0.0
    %6845 = vmatprep.subr.mxu0 0.0
    %6846 = vmatpush1.msra.mxu0 0.0
    %6847 = vmatprep.subr.mxu0 0.0
    %6848 = vmatpush1.msra.mxu0 0.0
    %6849 = vmatprep.subr.mxu0 0.0
    %6850 = vmatpush1.msra.mxu0 0.0
    %6851 = vmatprep.subr.mxu0 0.0
    %6852 = vmatpush1.msra.mxu0 0.0
    %6853 = vmatprep.subr.mxu0 0.0
    %6854 = vmatpush1.msra.mxu0 0.0
    %6855 = vmatprep.subr.mxu0 0.0
    %6856 = vmatpush1.msra.mxu0 0.0
    %6857 = vmatprep.subr.mxu0 0.0
    %6858 = vmatpush1.msra.mxu0 0.0
    %6859 = vmatprep.subr.mxu0 0.0
    %6860 = vmatpush1.msra.mxu0 0.0
    %6861 = vmatprep.subr.mxu0 0.0
    %6862 = vmatpush1.msra.mxu0 0.0
    %6863 = vmatprep.subr.mxu0 0.0
    %6864 = vmatpush1.msra.mxu0 0.0
    %6865 = vmatprep.subr.mxu0 0.0
    %6866 = vmatpush1.msra.mxu0 0.0
    %6867 = vmatprep.subr.mxu0 0.0
    %6868 = vmatpush1.msra.mxu0 0.0
    %6869 = vmatprep.subr.mxu0 0.0
    %6870 = vmatpush1.msra.mxu0 0.0
    %6871 = vmatprep.mubr.f32.mxu0 0.0
    %6872 = vmatmul.mubr.f32.gmra.mrb[0].mxu0 %v6805
    %v6873 = vpop.f32.mrb[0].mxu0
    %v6874 = vadd.f32 0.0, %v6873
    %v6875 = vpop.f32.mrb[0].mxu0
    %6876 = vdwg.mxu0
    %v6877 = vadd.f32 %v6111, %v6874
    %6879 = vrot.lane.b32.xlu0 %v6800, 32
    %v6880 = vpop.permute.xlu0 %6879
    %v6881 = vsel %vm1139, %v6880, 0
    %6883 = vmatprep.subr.mxu0 0.0
    %6884 = vmatpush1.msra.mxu0 %v6116
    %6885 = vmatprep.subr.mxu0 0.0
    %6886 = vmatpush1.msra.mxu0 %v6118
    %6887 = vmatprep.subr.mxu0 0.0
    %6888 = vmatpush1.msra.mxu0 %v6120
    %6889 = vmatprep.subr.mxu0 0.0
    %6890 = vmatpush1.msra.mxu0 %v6122
    %6891 = vmatprep.subr.mxu0 0.0
    %6892 = vmatpush1.msra.mxu0 0.0
    %6893 = vmatprep.subr.mxu0 0.0
    %6894 = vmatpush1.msra.mxu0 0.0
    %6895 = vmatprep.subr.mxu0 0.0
    %6896 = vmatpush1.msra.mxu0 0.0
    %6897 = vmatprep.subr.mxu0 0.0
    %6898 = vmatpush1.msra.mxu0 0.0
    %6899 = vmatprep.subr.mxu0 0.0
    %6900 = vmatpush1.msra.mxu0 0.0
    %6901 = vmatprep.subr.mxu0 0.0
    %6902 = vmatpush1.msra.mxu0 0.0
    %6903 = vmatprep.subr.mxu0 0.0
    %6904 = vmatpush1.msra.mxu0 0.0
    %6905 = vmatprep.subr.mxu0 0.0
    %6906 = vmatpush1.msra.mxu0 0.0
    %6907 = vmatprep.subr.mxu0 0.0
    %6908 = vmatpush1.msra.mxu0 0.0
    %6909 = vmatprep.subr.mxu0 0.0
    %6910 = vmatpush1.msra.mxu0 0.0
    %6911 = vmatprep.subr.mxu0 0.0
    %6912 = vmatpush1.msra.mxu0 0.0
    %6913 = vmatprep.subr.mxu0 0.0
    %6914 = vmatpush1.msra.mxu0 0.0
    %6915 = vmatprep.subr.mxu0 0.0
    %6916 = vmatpush1.msra.mxu0 0.0
    %6917 = vmatprep.subr.mxu0 0.0
    %6918 = vmatpush1.msra.mxu0 0.0
    %6919 = vmatprep.subr.mxu0 0.0
    %6920 = vmatpush1.msra.mxu0 0.0
    %6921 = vmatprep.subr.mxu0 0.0
    %6922 = vmatpush1.msra.mxu0 0.0
    %6923 = vmatprep.subr.mxu0 0.0
    %6924 = vmatpush1.msra.mxu0 0.0
    %6925 = vmatprep.subr.mxu0 0.0
    %6926 = vmatpush1.msra.mxu0 0.0
    %6927 = vmatprep.subr.mxu0 0.0
    %6928 = vmatpush1.msra.mxu0 0.0
    %6929 = vmatprep.subr.mxu0 0.0
    %6930 = vmatpush1.msra.mxu0 0.0
    %6931 = vmatprep.subr.mxu0 0.0
    %6932 = vmatpush1.msra.mxu0 0.0
    %6933 = vmatprep.subr.mxu0 0.0
    %6934 = vmatpush1.msra.mxu0 0.0
    %6935 = vmatprep.subr.mxu0 0.0
    %6936 = vmatpush1.msra.mxu0 0.0
    %6937 = vmatprep.subr.mxu0 0.0
    %6938 = vmatpush1.msra.mxu0 0.0
    %6939 = vmatprep.subr.mxu0 0.0
    %6940 = vmatpush1.msra.mxu0 0.0
    %6941 = vmatprep.subr.mxu0 0.0
    %6942 = vmatpush1.msra.mxu0 0.0
    %6943 = vmatprep.subr.mxu0 0.0
    %6944 = vmatpush1.msra.mxu0 0.0
    %6945 = vmatprep.subr.mxu0 0.0
    %6946 = vmatpush1.msra.mxu0 0.0
    %6947 = vmatprep.mubr.f32.mxu0 0.0
    %6948 = vmatmul.mubr.f32.gmra.mrb[0].mxu0 %v6881
    %v6949 = vpop.f32.mrb[0].mxu0
    %v6950 = vadd.f32 0.0, %v6949
    %v6951 = vpop.f32.mrb[0].mxu0
    %6952 = vdwg.mxu0
    %v6954 = vrot.slane %v6950, 2
    %v6956 = vadd.f32 %v6107, %v6954
    %v6957 = vxor.u32 %v6877, 2147483648
    %v6958 = vmul.f32 %v6957, 1.442695
    %v6959 = vpow.pop %v6958
    %v6960 = vadd.f32 %v6959, 1.0
    %v6961 = vrcp.pop %v6960
    %v6962 = vmul.f32 1.0, %v6961
    %v6963 = vtanh.pop %v6877
    %v6965 = vrot.slane %v6767, 6
    %v6967 = vmul.f32 %v6962, %v6965
    %6969 = vrot.lane.b32.xlu0 %v6963, 64
    %v6970 = vpop.permute.xlu0 %6969
    %v6972 = vmul.f32 %v6962, %v6970
    %6974 = vrot.lane.b32.xlu0 %v6972, 32
    %v6975 = vpop.permute.xlu0 %6974
    %v6977 = vadd.f32 %v6967, %v6975
    %v6978 = vtanh.pop %v6977
    %6980 = vrot.lane.b32.xlu0 %v6978, 64
    %v6981 = vpop.permute.xlu0 %6980
    %v6983 = vmul.f32 %v6962, %v6981
    %v6984 = vxor.u32 %v6956, 2147483648
    %v6985 = vmul.f32 %v6984, 1.442695
    %v6986 = vpow.pop %v6985
    %v6987 = vadd.f32 %v6986, 1.0
    %v6988 = vrcp.pop %v6987
    %v6989 = vmul.f32 1.0, %v6988
    %v6990 = vtanh.pop %v6956
    %v6992 = vrot.slane %v6794, 2
    %v6994 = vmul.f32 %v6989, %v6992
    %6996 = vrot.lane.b32.xlu0 %v6990, 64
    %v6997 = vpop.permute.xlu0 %6996
    %v6999 = vmul.f32 %v6989, %v6997
    %7001 = vrot.lane.b32.xlu0 %v6999, 32
    %v7002 = vpop.permute.xlu0 %7001
    %v7004 = vadd.f32 %v6994, %v7002
    %v7005 = vtanh.pop %v7004
    %7007 = vrot.lane.b32.xlu0 %v7005, 64
    %v7008 = vpop.permute.xlu0 %7007
    %v7010 = vmul.f32 %v6989, %v7008
    %7012 = vrot.lane.b32.xlu0 %v6983, 32
    %v7013 = vpop.permute.xlu0 %7012
    %v7014 = vsel %vm1139, %v7013, 0
    %7016 = vmatprep.subr.mxu0 0.0
    %7017 = vmatpush1.msra.mxu0 %v6115
    %7018 = vmatprep.subr.mxu0 0.0
    %7019 = vmatpush1.msra.mxu0 %v6117
    %7020 = vmatprep.subr.mxu0 0.0
    %7021 = vmatpush1.msra.mxu0 %v6119
    %7022 = vmatprep.subr.mxu0 0.0
    %7023 = vmatpush1.msra.mxu0 %v6121
    %7024 = vmatprep.subr.mxu0 0.0
    %7025 = vmatpush1.msra.mxu0 0.0
    %7026 = vmatprep.subr.mxu0 0.0
    %7027 = vmatpush1.msra.mxu0 0.0
    %7028 = vmatprep.subr.mxu0 0.0
    %7029 = vmatpush1.msra.mxu0 0.0
    %7030 = vmatprep.subr.mxu0 0.0
    %7031 = vmatpush1.msra.mxu0 0.0
    %7032 = vmatprep.subr.mxu0 0.0
    %7033 = vmatpush1.msra.mxu0 0.0
    %7034 = vmatprep.subr.mxu0 0.0
    %7035 = vmatpush1.msra.mxu0 0.0
    %7036 = vmatprep.subr.mxu0 0.0
    %7037 = vmatpush1.msra.mxu0 0.0
    %7038 = vmatprep.subr.mxu0 0.0
    %7039 = vmatpush1.msra.mxu0 0.0
    %7040 = vmatprep.subr.mxu0 0.0
    %7041 = vmatpush1.msra.mxu0 0.0
    %7042 = vmatprep.subr.mxu0 0.0
    %7043 = vmatpush1.msra.mxu0 0.0
    %7044 = vmatprep.subr.mxu0 0.0
    %7045 = vmatpush1.msra.mxu0 0.0
    %7046 = vmatprep.subr.mxu0 0.0
    %7047 = vmatpush1.msra.mxu0 0.0
    %7048 = vmatprep.subr.mxu0 0.0
    %7049 = vmatpush1.msra.mxu0 0.0
    %7050 = vmatprep.subr.mxu0 0.0
    %7051 = vmatpush1.msra.mxu0 0.0
    %7052 = vmatprep.subr.mxu0 0.0
    %7053 = vmatpush1.msra.mxu0 0.0
    %7054 = vmatprep.subr.mxu0 0.0
    %7055 = vmatpush1.msra.mxu0 0.0
    %7056 = vmatprep.subr.mxu0 0.0
    %7057 = vmatpush1.msra.mxu0 0.0
    %7058 = vmatprep.subr.mxu0 0.0
    %7059 = vmatpush1.msra.mxu0 0.0
    %7060 = vmatprep.subr.mxu0 0.0
    %7061 = vmatpush1.msra.mxu0 0.0
    %7062 = vmatprep.subr.mxu0 0.0
    %7063 = vmatpush1.msra.mxu0 0.0
    %7064 = vmatprep.subr.mxu0 0.0
    %7065 = vmatpush1.msra.mxu0 0.0
    %7066 = vmatprep.subr.mxu0 0.0
    %7067 = vmatpush1.msra.mxu0 0.0
    %7068 = vmatprep.subr.mxu0 0.0
    %7069 = vmatpush1.msra.mxu0 0.0
    %7070 = vmatprep.subr.mxu0 0.0
    %7071 = vmatpush1.msra.mxu0 0.0
    %7072 = vmatprep.subr.mxu0 0.0
    %7073 = vmatpush1.msra.mxu0 0.0
    %7074 = vmatprep.subr.mxu0 0.0
    %7075 = vmatpush1.msra.mxu0 0.0
    %7076 = vmatprep.subr.mxu0 0.0
    %7077 = vmatpush1.msra.mxu0 0.0
    %7078 = vmatprep.subr.mxu0 0.0
    %7079 = vmatpush1.msra.mxu0 0.0
    %7080 = vmatprep.mubr.f32.mxu0 0.0
    %7081 = vmatmul.mubr.f32.gmra.mrb[0].mxu0 %v7014
    %v7082 = vpop.f32.mrb[0].mxu0
    %v7083 = vadd.f32 0.0, %v7082
    %v7084 = vpop.f32.mrb[0].mxu0
    %7085 = vdwg.mxu0
    %v7087 = vrot.slane %v7083, 6
    %v7089 = vadd.f32 %v6111, %v7087
    %v7091 = vrot.slane %v7010, 6
    %7092 = vrot.lane.b32.xlu0 %v7091, 32
    %v7093 = vpop.permute.xlu0 %7092
    %v7094 = vsel %vm1139, %v7093, 0
    %7096 = vmatprep.subr.mxu0 0.0
    %7097 = vmatpush1.msra.mxu0 %v6116
    %7098 = vmatprep.subr.mxu0 0.0
    %7099 = vmatpush1.msra.mxu0 %v6118
    %7100 = vmatprep.subr.mxu0 0.0
    %7101 = vmatpush1.msra.mxu0 %v6120
    %7102 = vmatprep.subr.mxu0 0.0
    %7103 = vmatpush1.msra.mxu0 %v6122
    %7104 = vmatprep.subr.mxu0 0.0
    %7105 = vmatpush1.msra.mxu0 0.0
    %7106 = vmatprep.subr.mxu0 0.0
    %7107 = vmatpush1.msra.mxu0 0.0
    %7108 = vmatprep.subr.mxu0 0.0
    %7109 = vmatpush1.msra.mxu0 0.0
    %7110 = vmatprep.subr.mxu0 0.0
    %7111 = vmatpush1.msra.mxu0 0.0
    %7112 = vmatprep.subr.mxu0 0.0
    %7113 = vmatpush1.msra.mxu0 0.0
    %7114 = vmatprep.subr.mxu0 0.0
    %7115 = vmatpush1.msra.mxu0 0.0
    %7116 = vmatprep.subr.mxu0 0.0
    %7117 = vmatpush1.msra.mxu0 0.0
    %7118 = vmatprep.subr.mxu0 0.0
    %7119 = vmatpush1.msra.mxu0 0.0
    %7120 = vmatprep.subr.mxu0 0.0
    %7121 = vmatpush1.msra.mxu0 0.0
    %7122 = vmatprep.subr.mxu0 0.0
    %7123 = vmatpush1.msra.mxu0 0.0
    %7124 = vmatprep.subr.mxu0 0.0
    %7125 = vmatpush1.msra.mxu0 0.0
    %7126 = vmatprep.subr.mxu0 0.0
    %7127 = vmatpush1.msra.mxu0 0.0
    %7128 = vmatprep.subr.mxu0 0.0
    %7129 = vmatpush1.msra.mxu0 0.0
    %7130 = vmatprep.subr.mxu0 0.0
    %7131 = vmatpush1.msra.mxu0 0.0
    %7132 = vmatprep.subr.mxu0 0.0
    %7133 = vmatpush1.msra.mxu0 0.0
    %7134 = vmatprep.subr.mxu0 0.0
    %7135 = vmatpush1.msra.mxu0 0.0
    %7136 = vmatprep.subr.mxu0 0.0
    %7137 = vmatpush1.msra.mxu0 0.0
    %7138 = vmatprep.subr.mxu0 0.0
    %7139 = vmatpush1.msra.mxu0 0.0
    %7140 = vmatprep.subr.mxu0 0.0
    %7141 = vmatpush1.msra.mxu0 0.0
    %7142 = vmatprep.subr.mxu0 0.0
    %7143 = vmatpush1.msra.mxu0 0.0
    %7144 = vmatprep.subr.mxu0 0.0
    %7145 = vmatpush1.msra.mxu0 0.0
    %7146 = vmatprep.subr.mxu0 0.0
    %7147 = vmatpush1.msra.mxu0 0.0
    %7148 = vmatprep.subr.mxu0 0.0
    %7149 = vmatpush1.msra.mxu0 0.0
    %7150 = vmatprep.subr.mxu0 0.0
    %7151 = vmatpush1.msra.mxu0 0.0
    %7152 = vmatprep.subr.mxu0 0.0
    %7153 = vmatpush1.msra.mxu0 0.0
    %7154 = vmatprep.subr.mxu0 0.0
    %7155 = vmatpush1.msra.mxu0 0.0
    %7156 = vmatprep.subr.mxu0 0.0
    %7157 = vmatpush1.msra.mxu0 0.0
    %7158 = vmatprep.subr.mxu0 0.0
    %7159 = vmatpush1.msra.mxu0 0.0
    %7160 = vmatprep.mubr.f32.mxu0 0.0
    %7161 = vmatmul.mubr.f32.gmra.mrb[0].mxu0 %v7094
    %v7162 = vpop.f32.mrb[0].mxu0
    %v7163 = vadd.f32 0.0, %v7162
    %v7164 = vpop.f32.mrb[0].mxu0
    %7165 = vdwg.mxu0
    %v7167 = vrot.slane %v7163, 4
    %v7169 = vadd.f32 %v6107, %v7167
    %v7170 = vxor.u32 %v7089, 2147483648
    %v7171 = vmul.f32 %v7170, 1.442695
    %v7172 = vpow.pop %v7171
    %v7173 = vadd.f32 %v7172, 1.0
    %v7174 = vrcp.pop %v7173
    %v7175 = vmul.f32 1.0, %v7174
    %v7176 = vtanh.pop %v7089
    %v7178 = vrot.slane %v6977, 6
    %v7180 = vmul.f32 %v7175, %v7178
    %7182 = vrot.lane.b32.xlu0 %v7176, 64
    %v7183 = vpop.permute.xlu0 %7182
    %v7185 = vmul.f32 %v7175, %v7183
    %7187 = vrot.lane.b32.xlu0 %v7185, 32
    %v7188 = vpop.permute.xlu0 %7187
    %v7190 = vadd.f32 %v7180, %v7188
    %v7191 = vtanh.pop %v7190
    %7193 = vrot.lane.b32.xlu0 %v7191, 64
    %v7194 = vpop.permute.xlu0 %7193
    %v7196 = vmul.f32 %v7175, %v7194
    %v7197 = vxor.u32 %v7169, 2147483648
    %v7198 = vmul.f32 %v7197, 1.442695
    %v7199 = vpow.pop %v7198
    %v7200 = vadd.f32 %v7199, 1.0
    %v7201 = vrcp.pop %v7200
    %v7202 = vmul.f32 1.0, %v7201
    %v7203 = vtanh.pop %v7169
    %v7205 = vrot.slane %v7004, 2
    %v7207 = vmul.f32 %v7202, %v7205
    %7209 = vrot.lane.b32.xlu0 %v7203, 64
    %v7210 = vpop.permute.xlu0 %7209
    %v7212 = vmul.f32 %v7202, %v7210
    %7214 = vrot.lane.b32.xlu0 %v7212, 32
    %v7215 = vpop.permute.xlu0 %7214
    %v7217 = vadd.f32 %v7207, %v7215
    %v7218 = vtanh.pop %v7217
    %7220 = vrot.lane.b32.xlu0 %v7218, 64
    %v7221 = vpop.permute.xlu0 %7220
    %v7223 = vmul.f32 %v7202, %v7221
    %v7225 = vrot.slane %v7196, 2
    %7226 = vrot.lane.b32.xlu0 %v7225, 32
    %v7227 = vpop.permute.xlu0 %7226
    %v7228 = vsel %vm1139, %v7227, 0
    %7230 = vmatprep.subr.mxu0 0.0
    %7231 = vmatpush1.msra.mxu0 %v6115
    %7232 = vmatprep.subr.mxu0 0.0
    %7233 = vmatpush1.msra.mxu0 %v6117
    %7234 = vmatprep.subr.mxu0 0.0
    %7235 = vmatpush1.msra.mxu0 %v6119
    %7236 = vmatprep.subr.mxu0 0.0
    %7237 = vmatpush1.msra.mxu0 %v6121
    %7238 = vmatprep.subr.mxu0 0.0
    %7239 = vmatpush1.msra.mxu0 0.0
    %7240 = vmatprep.subr.mxu0 0.0
    %7241 = vmatpush1.msra.mxu0 0.0
    %7242 = vmatprep.subr.mxu0 0.0
    %7243 = vmatpush1.msra.mxu0 0.0
    %7244 = vmatprep.subr.mxu0 0.0
    %7245 = vmatpush1.msra.mxu0 0.0
    %7246 = vmatprep.subr.mxu0 0.0
    %7247 = vmatpush1.msra.mxu0 0.0
    %7248 = vmatprep.subr.mxu0 0.0
    %7249 = vmatpush1.msra.mxu0 0.0
    %7250 = vmatprep.subr.mxu0 0.0
    %7251 = vmatpush1.msra.mxu0 0.0
    %7252 = vmatprep.subr.mxu0 0.0
    %7253 = vmatpush1.msra.mxu0 0.0
    %7254 = vmatprep.subr.mxu0 0.0
    %7255 = vmatpush1.msra.mxu0 0.0
    %7256 = vmatprep.subr.mxu0 0.0
    %7257 = vmatpush1.msra.mxu0 0.0
    %7258 = vmatprep.subr.mxu0 0.0
    %7259 = vmatpush1.msra.mxu0 0.0
    %7260 = vmatprep.subr.mxu0 0.0
    %7261 = vmatpush1.msra.mxu0 0.0
    %7262 = vmatprep.subr.mxu0 0.0
    %7263 = vmatpush1.msra.mxu0 0.0
    %7264 = vmatprep.subr.mxu0 0.0
    %7265 = vmatpush1.msra.mxu0 0.0
    %7266 = vmatprep.subr.mxu0 0.0
    %7267 = vmatpush1.msra.mxu0 0.0
    %7268 = vmatprep.subr.mxu0 0.0
    %7269 = vmatpush1.msra.mxu0 0.0
    %7270 = vmatprep.subr.mxu0 0.0
    %7271 = vmatpush1.msra.mxu0 0.0
    %7272 = vmatprep.subr.mxu0 0.0
    %7273 = vmatpush1.msra.mxu0 0.0
    %7274 = vmatprep.subr.mxu0 0.0
    %7275 = vmatpush1.msra.mxu0 0.0
    %7276 = vmatprep.subr.mxu0 0.0
    %7277 = vmatpush1.msra.mxu0 0.0
    %7278 = vmatprep.subr.mxu0 0.0
    %7279 = vmatpush1.msra.mxu0 0.0
    %7280 = vmatprep.subr.mxu0 0.0
    %7281 = vmatpush1.msra.mxu0 0.0
    %7282 = vmatprep.subr.mxu0 0.0
    %7283 = vmatpush1.msra.mxu0 0.0
    %7284 = vmatprep.subr.mxu0 0.0
    %7285 = vmatpush1.msra.mxu0 0.0
    %7286 = vmatprep.subr.mxu0 0.0
    %7287 = vmatpush1.msra.mxu0 0.0
    %7288 = vmatprep.subr.mxu0 0.0
    %7289 = vmatpush1.msra.mxu0 0.0
    %7290 = vmatprep.subr.mxu0 0.0
    %7291 = vmatpush1.msra.mxu0 0.0
    %7292 = vmatprep.subr.mxu0 0.0
    %7293 = vmatpush1.msra.mxu0 0.0
    %7294 = vmatprep.mubr.f32.mxu0 0.0
    %7295 = vmatmul.mubr.f32.gmra.mrb[0].mxu0 %v7228
    %v7296 = vpop.f32.mrb[0].mxu0
    %v7297 = vadd.f32 0.0, %v7296
    %v7298 = vpop.f32.mrb[0].mxu0
    %7299 = vdwg.mxu0
    %v7301 = vrot.slane %v7297, 4
    %v7303 = vadd.f32 %v6111, %v7301
    %v7305 = vrot.slane %v7223, 4
    %7306 = vrot.lane.b32.xlu0 %v7305, 32
    %v7307 = vpop.permute.xlu0 %7306
    %v7308 = vsel %vm1139, %v7307, 0
    %7310 = vmatprep.subr.mxu0 0.0
    %7311 = vmatpush1.msra.mxu0 %v6116
    %7312 = vmatprep.subr.mxu0 0.0
    %7313 = vmatpush1.msra.mxu0 %v6118
    %7314 = vmatprep.subr.mxu0 0.0
    %7315 = vmatpush1.msra.mxu0 %v6120
    %7316 = vmatprep.subr.mxu0 0.0
    %7317 = vmatpush1.msra.mxu0 %v6122
    %7318 = vmatprep.subr.mxu0 0.0
    %7319 = vmatpush1.msra.mxu0 0.0
    %7320 = vmatprep.subr.mxu0 0.0
    %7321 = vmatpush1.msra.mxu0 0.0
    %7322 = vmatprep.subr.mxu0 0.0
    %7323 = vmatpush1.msra.mxu0 0.0
    %7324 = vmatprep.subr.mxu0 0.0
    %7325 = vmatpush1.msra.mxu0 0.0
    %7326 = vmatprep.subr.mxu0 0.0
    %7327 = vmatpush1.msra.mxu0 0.0
    %7328 = vmatprep.subr.mxu0 0.0
    %7329 = vmatpush1.msra.mxu0 0.0
    %7330 = vmatprep.subr.mxu0 0.0
    %7331 = vmatpush1.msra.mxu0 0.0
    %7332 = vmatprep.subr.mxu0 0.0
    %7333 = vmatpush1.msra.mxu0 0.0
    %7334 = vmatprep.subr.mxu0 0.0
    %7335 = vmatpush1.msra.mxu0 0.0
    %7336 = vmatprep.subr.mxu0 0.0
    %7337 = vmatpush1.msra.mxu0 0.0
    %7338 = vmatprep.subr.mxu0 0.0
    %7339 = vmatpush1.msra.mxu0 0.0
    %7340 = vmatprep.subr.mxu0 0.0
    %7341 = vmatpush1.msra.mxu0 0.0
    %7342 = vmatprep.subr.mxu0 0.0
    %7343 = vmatpush1.msra.mxu0 0.0
    %7344 = vmatprep.subr.mxu0 0.0
    %7345 = vmatpush1.msra.mxu0 0.0
    %7346 = vmatprep.subr.mxu0 0.0
    %7347 = vmatpush1.msra.mxu0 0.0
    %7348 = vmatprep.subr.mxu0 0.0
    %7349 = vmatpush1.msra.mxu0 0.0
    %7350 = vmatprep.subr.mxu0 0.0
    %7351 = vmatpush1.msra.mxu0 0.0
    %7352 = vmatprep.subr.mxu0 0.0
    %7353 = vmatpush1.msra.mxu0 0.0
    %7354 = vmatprep.subr.mxu0 0.0
    %7355 = vmatpush1.msra.mxu0 0.0
    %7356 = vmatprep.subr.mxu0 0.0
    %7357 = vmatpush1.msra.mxu0 0.0
    %7358 = vmatprep.subr.mxu0 0.0
    %7359 = vmatpush1.msra.mxu0 0.0
    %7360 = vmatprep.subr.mxu0 0.0
    %7361 = vmatpush1.msra.mxu0 0.0
    %7362 = vmatprep.subr.mxu0 0.0
    %7363 = vmatpush1.msra.mxu0 0.0
    %7364 = vmatprep.subr.mxu0 0.0
    %7365 = vmatpush1.msra.mxu0 0.0
    %7366 = vmatprep.subr.mxu0 0.0
    %7367 = vmatpush1.msra.mxu0 0.0
    %7368 = vmatprep.subr.mxu0 0.0
    %7369 = vmatpush1.msra.mxu0 0.0
    %7370 = vmatprep.subr.mxu0 0.0
    %7371 = vmatpush1.msra.mxu0 0.0
    %7372 = vmatprep.subr.mxu0 0.0
    %7373 = vmatpush1.msra.mxu0 0.0
    %7374 = vmatprep.mubr.f32.mxu0 0.0
    %7375 = vmatmul.mubr.f32.gmra.mrb[0].mxu0 %v7308
    %v7376 = vpop.f32.mrb[0].mxu0
    %v7377 = vadd.f32 0.0, %v7376
    %v7378 = vpop.f32.mrb[0].mxu0
    %7379 = vdwg.mxu0
    %v7381 = vrot.slane %v7377, 6
    %v7383 = vadd.f32 %v6107, %v7381
    %v7384 = vxor.u32 %v7303, 2147483648
    %v7385 = vmul.f32 %v7384, 1.442695
    %v7386 = vpow.pop %v7385
    %v7387 = vadd.f32 %v7386, 1.0
    %v7388 = vrcp.pop %v7387
    %v7389 = vmul.f32 1.0, %v7388
    %v7390 = vtanh.pop %v7303
    %v7392 = vrot.slane %v7190, 6
    %v7394 = vmul.f32 %v7389, %v7392
    %7396 = vrot.lane.b32.xlu0 %v7390, 64
    %v7397 = vpop.permute.xlu0 %7396
    %v7399 = vmul.f32 %v7389, %v7397
    %7401 = vrot.lane.b32.xlu0 %v7399, 32
    %v7402 = vpop.permute.xlu0 %7401
    %v7404 = vadd.f32 %v7394, %v7402
    %v7405 = vtanh.pop %v7404
    %7407 = vrot.lane.b32.xlu0 %v7405, 64
    %v7408 = vpop.permute.xlu0 %7407
    %v7410 = vmul.f32 %v7389, %v7408
    %v7411 = vxor.u32 %v7383, 2147483648
    %v7412 = vmul.f32 %v7411, 1.442695
    %v7413 = vpow.pop %v7412
    %v7414 = vadd.f32 %v7413, 1.0
    %v7415 = vrcp.pop %v7414
    %v7416 = vmul.f32 1.0, %v7415
    %v7417 = vtanh.pop %v7383
    %v7419 = vrot.slane %v7217, 2
    %v7421 = vmul.f32 %v7416, %v7419
    %7423 = vrot.lane.b32.xlu0 %v7417, 64
    %v7424 = vpop.permute.xlu0 %7423
    %v7426 = vmul.f32 %v7416, %v7424
    %7428 = vrot.lane.b32.xlu0 %v7426, 32
    %v7429 = vpop.permute.xlu0 %7428
    %v7431 = vadd.f32 %v7421, %v7429
    %v7432 = vtanh.pop %v7431
    %7434 = vrot.lane.b32.xlu0 %v7432, 64
    %v7435 = vpop.permute.xlu0 %7434
    %v7437 = vmul.f32 %v7416, %v7435
    %v7439 = vrot.slane %v7410, 4
    %7440 = vrot.lane.b32.xlu0 %v7439, 32
    %v7441 = vpop.permute.xlu0 %7440
    %v7442 = vsel %vm1139, %v7441, 0
    %7444 = vmatprep.subr.mxu0 0.0
    %7445 = vmatpush1.msra.mxu0 %v6115
    %7446 = vmatprep.subr.mxu0 0.0
    %7447 = vmatpush1.msra.mxu0 %v6117
    %7448 = vmatprep.subr.mxu0 0.0
    %7449 = vmatpush1.msra.mxu0 %v6119
    %7450 = vmatprep.subr.mxu0 0.0
    %7451 = vmatpush1.msra.mxu0 %v6121
    %7452 = vmatprep.subr.mxu0 0.0
    %7453 = vmatpush1.msra.mxu0 0.0
    %7454 = vmatprep.subr.mxu0 0.0
    %7455 = vmatpush1.msra.mxu0 0.0
    %7456 = vmatprep.subr.mxu0 0.0
    %7457 = vmatpush1.msra.mxu0 0.0
    %7458 = vmatprep.subr.mxu0 0.0
    %7459 = vmatpush1.msra.mxu0 0.0
    %7460 = vmatprep.subr.mxu0 0.0
    %7461 = vmatpush1.msra.mxu0 0.0
    %7462 = vmatprep.subr.mxu0 0.0
    %7463 = vmatpush1.msra.mxu0 0.0
    %7464 = vmatprep.subr.mxu0 0.0
    %7465 = vmatpush1.msra.mxu0 0.0
    %7466 = vmatprep.subr.mxu0 0.0
    %7467 = vmatpush1.msra.mxu0 0.0
    %7468 = vmatprep.subr.mxu0 0.0
    %7469 = vmatpush1.msra.mxu0 0.0
    %7470 = vmatprep.subr.mxu0 0.0
    %7471 = vmatpush1.msra.mxu0 0.0
    %7472 = vmatprep.subr.mxu0 0.0
    %7473 = vmatpush1.msra.mxu0 0.0
    %7474 = vmatprep.subr.mxu0 0.0
    %7475 = vmatpush1.msra.mxu0 0.0
    %7476 = vmatprep.subr.mxu0 0.0
    %7477 = vmatpush1.msra.mxu0 0.0
    %7478 = vmatprep.subr.mxu0 0.0
    %7479 = vmatpush1.msra.mxu0 0.0
    %7480 = vmatprep.subr.mxu0 0.0
    %7481 = vmatpush1.msra.mxu0 0.0
    %7482 = vmatprep.subr.mxu0 0.0
    %7483 = vmatpush1.msra.mxu0 0.0
    %7484 = vmatprep.subr.mxu0 0.0
    %7485 = vmatpush1.msra.mxu0 0.0
    %7486 = vmatprep.subr.mxu0 0.0
    %7487 = vmatpush1.msra.mxu0 0.0
    %7488 = vmatprep.subr.mxu0 0.0
    %7489 = vmatpush1.msra.mxu0 0.0
    %7490 = vmatprep.subr.mxu0 0.0
    %7491 = vmatpush1.msra.mxu0 0.0
    %7492 = vmatprep.subr.mxu0 0.0
    %7493 = vmatpush1.msra.mxu0 0.0
    %7494 = vmatprep.subr.mxu0 0.0
    %7495 = vmatpush1.msra.mxu0 0.0
    %7496 = vmatprep.subr.mxu0 0.0
    %7497 = vmatpush1.msra.mxu0 0.0
    %7498 = vmatprep.subr.mxu0 0.0
    %7499 = vmatpush1.msra.mxu0 0.0
    %7500 = vmatprep.subr.mxu0 0.0
    %7501 = vmatpush1.msra.mxu0 0.0
    %7502 = vmatprep.subr.mxu0 0.0
    %7503 = vmatpush1.msra.mxu0 0.0
    %7504 = vmatprep.subr.mxu0 0.0
    %7505 = vmatpush1.msra.mxu0 0.0
    %7506 = vmatprep.subr.mxu0 0.0
    %7507 = vmatpush1.msra.mxu0 0.0
    %7508 = vmatprep.mubr.f32.mxu0 0.0
    %7509 = vmatmul.mubr.f32.gmra.mrb[0].mxu0 %v7442
    %v7510 = vpop.f32.mrb[0].mxu0
    %v7511 = vadd.f32 0.0, %v7510
    %v7512 = vpop.f32.mrb[0].mxu0
    %7513 = vdwg.mxu0
    %v7515 = vrot.slane %v7511, 2
    %v7517 = vadd.f32 %v6111, %v7515
    %v7519 = vrot.slane %v7437, 2
    %7520 = vrot.lane.b32.xlu0 %v7519, 32
    %v7521 = vpop.permute.xlu0 %7520
    %v7522 = vsel %vm1139, %v7521, 0
    %7524 = vmatprep.subr.mxu0 0.0
    %7525 = vmatpush1.msra.mxu0 %v6116
    %7526 = vmatprep.subr.mxu0 0.0
    %7527 = vmatpush1.msra.mxu0 %v6118
    %7528 = vmatprep.subr.mxu0 0.0
    %7529 = vmatpush1.msra.mxu0 %v6120
    %7530 = vmatprep.subr.mxu0 0.0
    %7531 = vmatpush1.msra.mxu0 %v6122
    %7532 = vmatprep.subr.mxu0 0.0
    %7533 = vmatpush1.msra.mxu0 0.0
    %7534 = vmatprep.subr.mxu0 0.0
    %7535 = vmatpush1.msra.mxu0 0.0
    %7536 = vmatprep.subr.mxu0 0.0
    %7537 = vmatpush1.msra.mxu0 0.0
    %7538 = vmatprep.subr.mxu0 0.0
    %7539 = vmatpush1.msra.mxu0 0.0
    %7540 = vmatprep.subr.mxu0 0.0
    %7541 = vmatpush1.msra.mxu0 0.0
    %7542 = vmatprep.subr.mxu0 0.0
    %7543 = vmatpush1.msra.mxu0 0.0
    %7544 = vmatprep.subr.mxu0 0.0
    %7545 = vmatpush1.msra.mxu0 0.0
    %7546 = vmatprep.subr.mxu0 0.0
    %7547 = vmatpush1.msra.mxu0 0.0
    %7548 = vmatprep.subr.mxu0 0.0
    %7549 = vmatpush1.msra.mxu0 0.0
    %7550 = vmatprep.subr.mxu0 0.0
    %7551 = vmatpush1.msra.mxu0 0.0
    %7552 = vmatprep.subr.mxu0 0.0
    %7553 = vmatpush1.msra.mxu0 0.0
    %7554 = vmatprep.subr.mxu0 0.0
    %7555 = vmatpush1.msra.mxu0 0.0
    %7556 = vmatprep.subr.mxu0 0.0
    %7557 = vmatpush1.msra.mxu0 0.0
    %7558 = vmatprep.subr.mxu0 0.0
    %7559 = vmatpush1.msra.mxu0 0.0
    %7560 = vmatprep.subr.mxu0 0.0
    %7561 = vmatpush1.msra.mxu0 0.0
    %7562 = vmatprep.subr.mxu0 0.0
    %7563 = vmatpush1.msra.mxu0 0.0
    %7564 = vmatprep.subr.mxu0 0.0
    %7565 = vmatpush1.msra.mxu0 0.0
    %7566 = vmatprep.subr.mxu0 0.0
    %7567 = vmatpush1.msra.mxu0 0.0
    %7568 = vmatprep.subr.mxu0 0.0
    %7569 = vmatpush1.msra.mxu0 0.0
    %7570 = vmatprep.subr.mxu0 0.0
    %7571 = vmatpush1.msra.mxu0 0.0
    %7572 = vmatprep.subr.mxu0 0.0
    %7573 = vmatpush1.msra.mxu0 0.0
    %7574 = vmatprep.subr.mxu0 0.0
    %7575 = vmatpush1.msra.mxu0 0.0
    %7576 = vmatprep.subr.mxu0 0.0
    %7577 = vmatpush1.msra.mxu0 0.0
    %7578 = vmatprep.subr.mxu0 0.0
    %7579 = vmatpush1.msra.mxu0 0.0
    %7580 = vmatprep.subr.mxu0 0.0
    %7581 = vmatpush1.msra.mxu0 0.0
    %7582 = vmatprep.subr.mxu0 0.0
    %7583 = vmatpush1.msra.mxu0 0.0
    %7584 = vmatprep.subr.mxu0 0.0
    %7585 = vmatpush1.msra.mxu0 0.0
    %7586 = vmatprep.subr.mxu0 0.0
    %7587 = vmatpush1.msra.mxu0 0.0
    %7588 = vmatprep.mubr.f32.mxu0 0.0
    %7589 = vmatmul.mubr.f32.gmra.mrb[0].mxu0 %v7522
    %v7590 = vpop.f32.mrb[0].mxu0
    %v7591 = vadd.f32 0.0, %v7590
    %v7592 = vpop.f32.mrb[0].mxu0
    %7593 = vdwg.mxu0
    %v7594 = vadd.f32 %v6107, %v7591
    %v7595 = vxor.u32 %v7517, 2147483648
    %v7596 = vmul.f32 %v7595, 1.442695
    %v7597 = vpow.pop %v7596
    %v7598 = vadd.f32 %v7597, 1.0
    %v7599 = vrcp.pop %v7598
    %v7600 = vmul.f32 1.0, %v7599
    %v7601 = vtanh.pop %v7517
    %v7603 = vrot.slane %v7404, 6
    %v7605 = vmul.f32 %v7600, %v7603
    %7607 = vrot.lane.b32.xlu0 %v7601, 64
    %v7608 = vpop.permute.xlu0 %7607
    %v7610 = vmul.f32 %v7600, %v7608
    %7612 = vrot.lane.b32.xlu0 %v7610, 32
    %v7613 = vpop.permute.xlu0 %7612
    %v7615 = vadd.f32 %v7605, %v7613
    %v7616 = vtanh.pop %v7615
    %7618 = vrot.lane.b32.xlu0 %v7616, 64
    %v7619 = vpop.permute.xlu0 %7618
    %v7621 = vmul.f32 %v7600, %v7619
    %v7622 = vxor.u32 %v7594, 2147483648
    %v7623 = vmul.f32 %v7622, 1.442695
    %v7624 = vpow.pop %v7623
    %v7625 = vadd.f32 %v7624, 1.0
    %v7626 = vrcp.pop %v7625
    %v7627 = vmul.f32 1.0, %v7626
    %v7628 = vtanh.pop %v7594
    %v7630 = vrot.slane %v7431, 2
    %v7632 = vmul.f32 %v7627, %v7630
    %7634 = vrot.lane.b32.xlu0 %v7628, 64
    %v7635 = vpop.permute.xlu0 %7634
    %v7637 = vmul.f32 %v7627, %v7635
    %7639 = vrot.lane.b32.xlu0 %v7637, 32
    %v7640 = vpop.permute.xlu0 %7639
    %v7642 = vadd.f32 %v7632, %v7640
    %v7643 = vtanh.pop %v7642
    %7645 = vrot.lane.b32.xlu0 %v7643, 64
    %v7646 = vpop.permute.xlu0 %7645
    %v7648 = vmul.f32 %v7627, %v7646
    %v7649 = vsel %vm2627, %v6140, %v6346
    %v7650 = vsel %vm2629, %v7649, %v6562
    %v7651 = vsel %vm2631, %v7650, %v6773
    %v7652 = vsel %vm2627, %v6983, %v7196
    %v7653 = vsel %vm2629, %v7652, %v7410
    %v7654 = vsel %vm2631, %v7653, %v7621
    %v7655 = vsel %vm2627, %v7648, %v7437
    %v7656 = vsel %vm2629, %v7655, %v7223
    %v7657 = vsel %vm2631, %v7656, %v7010
    %v7658 = vsel %vm2627, %v6800, %v6589
    %v7659 = vsel %vm2629, %v7658, %v6375
    %v7660 = vsel %vm2631, %v7659, %v6158
    %7663 = vrot.lane.b32.xlu0 %v7651, 32
    %v7664 = vpop.permute.xlu0 %7663
    %7665 = vrot.lane.b32.xlu0 %v7654, 32
    %v7666 = vpop.permute.xlu0 %7665
    %7671 = vrot.lane.b32.xlu0 %v7657, 64
    %v7672 = vpop.permute.xlu0 %7671
    %7673 = vrot.lane.b32.xlu0 %v7660, 64
    %v7674 = vpop.permute.xlu0 %7673
    %v7677 = vsel %vm1139, %v7664, %v7672
    %v7678 = vsel %vm1139, %v7666, %v7674
    %v7679 = vld [vmem:[#allocation11] sm:$0xff]
    %v7680 = vld [vmem:[#allocation11 + $0x8] sm:$0xff]
    %v7681 = vld [vmem:[#allocation11 + $0x10] sm:$0xff]
    %v7682 = vld [vmem:[#allocation11 + $0x18] sm:$0xff]
    %v7683 = vld [vmem:[#allocation11 + $0x20] sm:$0xff]
    %v7684 = vld [vmem:[#allocation11 + $0x28] sm:$0xff]
    %v7685 = vld [vmem:[#allocation11 + $0x30] sm:$0xff]
    %v7686 = vld [vmem:[#allocation11 + $0x38] sm:$0xff]
    %v7687 = vld [vmem:[#allocation13] sm:$0xff]
    %v7688 = vld [vmem:[#allocation13 + $0x8] sm:$0xff]
    %v7689 = vld [vmem:[#allocation13 + $0x10] sm:$0xff]
    %v7690 = vld [vmem:[#allocation13 + $0x18] sm:$0xff]
    %v7691 = vld [vmem:[#allocation13 + $0x20] sm:$0xff]
    %v7692 = vld [vmem:[#allocation13 + $0x28] sm:$0xff]
    %v7693 = vld [vmem:[#allocation13 + $0x30] sm:$0xff]
    %v7694 = vld [vmem:[#allocation13 + $0x38] sm:$0xff]
    %7695 = vmatprep.subr.mxu0 0.0
    %7696 = vmatpush1.msra.mxu0 %v7687
    %7697 = vmatprep.subr.mxu0 0.0
    %7698 = vmatpush1.msra.mxu0 %v7688
    %7699 = vmatprep.subr.mxu0 0.0
    %7700 = vmatpush1.msra.mxu0 %v7689
    %7701 = vmatprep.subr.mxu0 0.0
    %7702 = vmatpush1.msra.mxu0 %v7690
    %7703 = vmatprep.subr.mxu0 0.0
    %7704 = vmatpush1.msra.mxu0 %v7691
    %7705 = vmatprep.subr.mxu0 0.0
    %7706 = vmatpush1.msra.mxu0 %v7692
    %7707 = vmatprep.subr.mxu0 0.0
    %7708 = vmatpush1.msra.mxu0 %v7693
    %7709 = vmatprep.subr.mxu0 0.0
    %7710 = vmatpush1.msra.mxu0 %v7694
    %7711 = vmatprep.subr.mxu0 0.0
    %7712 = vmatpush1.msra.mxu0 0.0
    %7713 = vmatprep.subr.mxu0 0.0
    %7714 = vmatpush1.msra.mxu0 0.0
    %7715 = vmatprep.subr.mxu0 0.0
    %7716 = vmatpush1.msra.mxu0 0.0
    %7717 = vmatprep.subr.mxu0 0.0
    %7718 = vmatpush1.msra.mxu0 0.0
    %7719 = vmatprep.subr.mxu0 0.0
    %7720 = vmatpush1.msra.mxu0 0.0
    %7721 = vmatprep.subr.mxu0 0.0
    %7722 = vmatpush1.msra.mxu0 0.0
    %7723 = vmatprep.subr.mxu0 0.0
    %7724 = vmatpush1.msra.mxu0 0.0
    %7725 = vmatprep.subr.mxu0 0.0
    %7726 = vmatpush1.msra.mxu0 0.0
    %7727 = vmatprep.subr.mxu0 0.0
    %7728 = vmatpush1.msra.mxu0 0.0
    %7729 = vmatprep.subr.mxu0 0.0
    %7730 = vmatpush1.msra.mxu0 0.0
    %7731 = vmatprep.subr.mxu0 0.0
    %7732 = vmatpush1.msra.mxu0 0.0
    %7733 = vmatprep.subr.mxu0 0.0
    %7734 = vmatpush1.msra.mxu0 0.0
    %7735 = vmatprep.subr.mxu0 0.0
    %7736 = vmatpush1.msra.mxu0 0.0
    %7737 = vmatprep.subr.mxu0 0.0
    %7738 = vmatpush1.msra.mxu0 0.0
    %7739 = vmatprep.subr.mxu0 0.0
    %7740 = vmatpush1.msra.mxu0 0.0
    %7741 = vmatprep.subr.mxu0 0.0
    %7742 = vmatpush1.msra.mxu0 0.0
    %7743 = vmatprep.subr.mxu0 0.0
    %7744 = vmatpush1.msra.mxu0 0.0
    %7745 = vmatprep.subr.mxu0 0.0
    %7746 = vmatpush1.msra.mxu0 0.0
    %7747 = vmatprep.subr.mxu0 0.0
    %7748 = vmatpush1.msra.mxu0 0.0
    %7749 = vmatprep.subr.mxu0 0.0
    %7750 = vmatpush1.msra.mxu0 0.0
    %7751 = vmatprep.subr.mxu0 0.0
    %7752 = vmatpush1.msra.mxu0 0.0
    %7753 = vmatprep.subr.mxu0 0.0
    %7754 = vmatpush1.msra.mxu0 0.0
    %7755 = vmatprep.subr.mxu0 0.0
    %7756 = vmatpush1.msra.mxu0 0.0
    %7757 = vmatprep.subr.mxu0 0.0
    %7758 = vmatpush1.msra.mxu0 0.0
    %7759 = vmatprep.mubr.f32.mxu0 0.0
    %7760 = vmatmul.mubr.f32.gmra.mrb[0].mxu0 %v1010
    %v7761 = vpop.f32.mrb[0].mxu0
    %v7762 = vadd.f32 0.0, %v7761
    %v7763 = vpop.f32.mrb[0].mxu0
    %7764 = vmatprep.mubr.f32.mxu0 0.0
    %7765 = vmatmul.mubr.f32.gmra.mrb[0].mxu0 %v1013
    %v7766 = vpop.f32.mrb[0].mxu0
    %v7767 = vadd.f32 0.0, %v7766
    %v7768 = vpop.f32.mrb[0].mxu0
    %7769 = vdwg.mxu0
    %v7771 = vsel %vm307, %v6008, 0
    %v7774 = vsel %vm307, %v6009, 0
    %7776 = vmatprep.subr.mxu0 0.0
    %7777 = vmatpush1.msra.mxu0 %v7679
    %7778 = vmatprep.subr.mxu0 0.0
    %7779 = vmatpush1.msra.mxu0 %v7680
    %7780 = vmatprep.subr.mxu0 0.0
    %7781 = vmatpush1.msra.mxu0 %v7681
    %7782 = vmatprep.subr.mxu0 0.0
    %7783 = vmatpush1.msra.mxu0 %v7682
    %7784 = vmatprep.subr.mxu0 0.0
    %7785 = vmatpush1.msra.mxu0 %v7683
    %7786 = vmatprep.subr.mxu0 0.0
    %7787 = vmatpush1.msra.mxu0 %v7684
    %7788 = vmatprep.subr.mxu0 0.0
    %7789 = vmatpush1.msra.mxu0 %v7685
    %7790 = vmatprep.subr.mxu0 0.0
    %7791 = vmatpush1.msra.mxu0 %v7686
    %7792 = vmatprep.subr.mxu0 0.0
    %7793 = vmatpush1.msra.mxu0 0.0
    %7794 = vmatprep.subr.mxu0 0.0
    %7795 = vmatpush1.msra.mxu0 0.0
    %7796 = vmatprep.subr.mxu0 0.0
    %7797 = vmatpush1.msra.mxu0 0.0
    %7798 = vmatprep.subr.mxu0 0.0
    %7799 = vmatpush1.msra.mxu0 0.0
    %7800 = vmatprep.subr.mxu0 0.0
    %7801 = vmatpush1.msra.mxu0 0.0
    %7802 = vmatprep.subr.mxu0 0.0
    %7803 = vmatpush1.msra.mxu0 0.0
    %7804 = vmatprep.subr.mxu0 0.0
    %7805 = vmatpush1.msra.mxu0 0.0
    %7806 = vmatprep.subr.mxu0 0.0
    %7807 = vmatpush1.msra.mxu0 0.0
    %7808 = vmatprep.subr.mxu0 0.0
    %7809 = vmatpush1.msra.mxu0 0.0
    %7810 = vmatprep.subr.mxu0 0.0
    %7811 = vmatpush1.msra.mxu0 0.0
    %7812 = vmatprep.subr.mxu0 0.0
    %7813 = vmatpush1.msra.mxu0 0.0
    %7814 = vmatprep.subr.mxu0 0.0
    %7815 = vmatpush1.msra.mxu0 0.0
    %7816 = vmatprep.subr.mxu0 0.0
    %7817 = vmatpush1.msra.mxu0 0.0
    %7818 = vmatprep.subr.mxu0 0.0
    %7819 = vmatpush1.msra.mxu0 0.0
    %7820 = vmatprep.subr.mxu0 0.0
    %7821 = vmatpush1.msra.mxu0 0.0
    %7822 = vmatprep.subr.mxu0 0.0
    %7823 = vmatpush1.msra.mxu0 0.0
    %7824 = vmatprep.subr.mxu0 0.0
    %7825 = vmatpush1.msra.mxu0 0.0
    %7826 = vmatprep.subr.mxu0 0.0
    %7827 = vmatpush1.msra.mxu0 0.0
    %7828 = vmatprep.subr.mxu0 0.0
    %7829 = vmatpush1.msra.mxu0 0.0
    %7830 = vmatprep.subr.mxu0 0.0
    %7831 = vmatpush1.msra.mxu0 0.0
    %7832 = vmatprep.subr.mxu0 0.0
    %7833 = vmatpush1.msra.mxu0 0.0
    %7834 = vmatprep.subr.mxu0 0.0
    %7835 = vmatpush1.msra.mxu0 0.0
    %7836 = vmatprep.subr.mxu0 0.0
    %7837 = vmatpush1.msra.mxu0 0.0
    %7838 = vmatprep.subr.mxu0 0.0
    %7839 = vmatpush1.msra.mxu0 0.0
    %7840 = vmatprep.mubr.f32.mxu0 0.0
    %7841 = vmatmul.mubr.f32.gmra.mrb[0].mxu0 %v7771
    %v7842 = vpop.f32.mrb[0].mxu0
    %v7843 = vadd.f32 %v7762, %v7842
    %v7844 = vpop.f32.mrb[0].mxu0
    %7845 = vmatprep.mubr.f32.mxu0 0.0
    %7846 = vmatmul.mubr.f32.gmra.mrb[0].mxu0 %v7774
    %v7847 = vpop.f32.mrb[0].mxu0
    %v7848 = vadd.f32 %v7767, %v7847
    %v7849 = vpop.f32.mrb[0].mxu0
    %7850 = vdwg.mxu0
    %v7851 = vld [vmem:[#allocation14] sm:$0x1]
    %v7853 = vlaneseq
    %v7854 = vshrl.u32 %v7853, 7
    %v7855 = vsub.s32 0, %v7854
    %v7856 = vrot.slane %v7851, %v7855
    %v7858 = vadd.f32 %v7843, %v7856
    %v7859 = vadd.f32 %v7848, %v7856
    %7860 = vst [vmem:[%s67] sm:$0xff] %v7858
    %7861 = vst [vmem:[%s67 + $0x8] sm:$0xff] %v7859
    %v7862 = vld [vmem:[%s49] sm:$0xff]
    %v7863 = vld [vmem:[%s49 + $0x8] sm:$0xff]
    %v7864 = vld [vmem:[%s49 + $0x10] sm:$0xff]
    %v7865 = vld [vmem:[%s49 + $0x18] sm:$0xff]
    %v7866 = vld [vmem:[%s49 + $0x20] sm:$0xff]
    %v7867 = vld [vmem:[%s49 + $0x28] sm:$0xff]
    %v7868 = vld [vmem:[%s49 + $0x30] sm:$0xff]
    %v7869 = vld [vmem:[%s49 + $0x38] sm:$0xff]
    %v7870 = vld [vmem:[#allocation10] sm:$0x1]
    %v7872 = vlaneseq
    %v7873 = vshrl.u32 %v7872, 7
    %v7874 = vsub.s32 0, %v7873
    %v7875 = vrot.slane %v7870, %v7874
    %v7878 = vsel %vm307, %v7677, 0
    %v7881 = vsel %vm307, %v7678, 0
    %7883 = vmatprep.subr.mxu0 0.0
    %7884 = vmatpush1.msra.mxu0 %v7862
    %7885 = vmatprep.subr.mxu0 0.0
    %7886 = vmatpush1.msra.mxu0 %v7863
    %7887 = vmatprep.subr.mxu0 0.0
    %7888 = vmatpush1.msra.mxu0 %v7864
    %7889 = vmatprep.subr.mxu0 0.0
    %7890 = vmatpush1.msra.mxu0 %v7865
    %7891 = vmatprep.subr.mxu0 0.0
    %7892 = vmatpush1.msra.mxu0 %v7866
    %7893 = vmatprep.subr.mxu0 0.0
    %7894 = vmatpush1.msra.mxu0 %v7867
    %7895 = vmatprep.subr.mxu0 0.0
    %7896 = vmatpush1.msra.mxu0 %v7868
    %7897 = vmatprep.subr.mxu0 0.0
    %7898 = vmatpush1.msra.mxu0 %v7869
    %7899 = vmatprep.subr.mxu0 0.0
    %7900 = vmatpush1.msra.mxu0 0.0
    %7901 = vmatprep.subr.mxu0 0.0
    %7902 = vmatpush1.msra.mxu0 0.0
    %7903 = vmatprep.subr.mxu0 0.0
    %7904 = vmatpush1.msra.mxu0 0.0
    %7905 = vmatprep.subr.mxu0 0.0
    %7906 = vmatpush1.msra.mxu0 0.0
    %7907 = vmatprep.subr.mxu0 0.0
    %7908 = vmatpush1.msra.mxu0 0.0
    %7909 = vmatprep.subr.mxu0 0.0
    %7910 = vmatpush1.msra.mxu0 0.0
    %7911 = vmatprep.subr.mxu0 0.0
    %7912 = vmatpush1.msra.mxu0 0.0
    %7913 = vmatprep.subr.mxu0 0.0
    %7914 = vmatpush1.msra.mxu0 0.0
    %7915 = vmatprep.subr.mxu0 0.0
    %7916 = vmatpush1.msra.mxu0 0.0
    %7917 = vmatprep.subr.mxu0 0.0
    %7918 = vmatpush1.msra.mxu0 0.0
    %7919 = vmatprep.subr.mxu0 0.0
    %7920 = vmatpush1.msra.mxu0 0.0
    %7921 = vmatprep.subr.mxu0 0.0
    %7922 = vmatpush1.msra.mxu0 0.0
    %7923 = vmatprep.subr.mxu0 0.0
    %7924 = vmatpush1.msra.mxu0 0.0
    %7925 = vmatprep.subr.mxu0 0.0
    %7926 = vmatpush1.msra.mxu0 0.0
    %7927 = vmatprep.subr.mxu0 0.0
    %7928 = vmatpush1.msra.mxu0 0.0
    %7929 = vmatprep.subr.mxu0 0.0
    %7930 = vmatpush1.msra.mxu0 0.0
    %7931 = vmatprep.subr.mxu0 0.0
    %7932 = vmatpush1.msra.mxu0 0.0
    %7933 = vmatprep.subr.mxu0 0.0
    %7934 = vmatpush1.msra.mxu0 0.0
    %7935 = vmatprep.subr.mxu0 0.0
    %7936 = vmatpush1.msra.mxu0 0.0
    %7937 = vmatprep.subr.mxu0 0.0
    %7938 = vmatpush1.msra.mxu0 0.0
    %7939 = vmatprep.subr.mxu0 0.0
    %7940 = vmatpush1.msra.mxu0 0.0
    %7941 = vmatprep.subr.mxu0 0.0
    %7942 = vmatpush1.msra.mxu0 0.0
    %7943 = vmatprep.subr.mxu0 0.0
    %7944 = vmatpush1.msra.mxu0 0.0
    %7945 = vmatprep.subr.mxu0 0.0
    %7946 = vmatpush1.msra.mxu0 0.0
    %7947 = vmatprep.mubr.f32.mxu0 0.0
    %7948 = vmatmul.mubr.f32.gmra.mrb[0].mxu0 %v7878
    %v7949 = vpop.f32.mrb[0].mxu0
    %v7950 = vadd.f32 %v7875, %v7949
    %v7951 = vpop.f32.mrb[0].mxu0
    %7952 = vmatprep.mubr.f32.mxu0 0.0
    %7953 = vmatmul.mubr.f32.gmra.mrb[0].mxu0 %v7881
    %v7954 = vpop.f32.mrb[0].mxu0
    %v7955 = vadd.f32 %v7875, %v7954
    %v7956 = vpop.f32.mrb[0].mxu0
    %7957 = vdwg.mxu0
    %v7958 = vtanh.pop %v7950
    %v7959 = vtanh.pop %v7955
    %v7960 = vld [vmem:[%s53] sm:$0xff]
    %v7961 = vld [vmem:[%s53 + $0x8] sm:$0xff]
    %v7962 = vld [vmem:[%s53 + $0x10] sm:$0xff]
    %v7963 = vld [vmem:[%s53 + $0x18] sm:$0xff]
    %v7965 = vsel %vm1139, %v7958, 0
    %v7968 = vsel %vm1139, %v7959, 0
    %7970 = vmatprep.subr.mxu0 0.0
    %7971 = vmatpush1.msra.mxu0 %v7960
    %7972 = vmatprep.subr.mxu0 0.0
    %7973 = vmatpush1.msra.mxu0 %v7961
    %7974 = vmatprep.subr.mxu0 0.0
    %7975 = vmatpush1.msra.mxu0 %v7962
    %7976 = vmatprep.subr.mxu0 0.0
    %7977 = vmatpush1.msra.mxu0 %v7963
    %7978 = vmatprep.subr.mxu0 0.0
    %7979 = vmatpush1.msra.mxu0 0.0
    %7980 = vmatprep.subr.mxu0 0.0
    %7981 = vmatpush1.msra.mxu0 0.0
    %7982 = vmatprep.subr.mxu0 0.0
    %7983 = vmatpush1.msra.mxu0 0.0
    %7984 = vmatprep.subr.mxu0 0.0
    %7985 = vmatpush1.msra.mxu0 0.0
    %7986 = vmatprep.subr.mxu0 0.0
    %7987 = vmatpush1.msra.mxu0 0.0
    %7988 = vmatprep.subr.mxu0 0.0
    %7989 = vmatpush1.msra.mxu0 0.0
    %7990 = vmatprep.subr.mxu0 0.0
    %7991 = vmatpush1.msra.mxu0 0.0
    %7992 = vmatprep.subr.mxu0 0.0
    %7993 = vmatpush1.msra.mxu0 0.0
    %7994 = vmatprep.subr.mxu0 0.0
    %7995 = vmatpush1.msra.mxu0 0.0
    %7996 = vmatprep.subr.mxu0 0.0
    %7997 = vmatpush1.msra.mxu0 0.0
    %7998 = vmatprep.subr.mxu0 0.0
    %7999 = vmatpush1.msra.mxu0 0.0
    %8000 = vmatprep.subr.mxu0 0.0
    %8001 = vmatpush1.msra.mxu0 0.0
    %8002 = vmatprep.subr.mxu0 0.0
    %8003 = vmatpush1.msra.mxu0 0.0
    %8004 = vmatprep.subr.mxu0 0.0
    %8005 = vmatpush1.msra.mxu0 0.0
    %8006 = vmatprep.subr.mxu0 0.0
    %8007 = vmatpush1.msra.mxu0 0.0
    %8008 = vmatprep.subr.mxu0 0.0
    %8009 = vmatpush1.msra.mxu0 0.0
    %8010 = vmatprep.subr.mxu0 0.0
    %8011 = vmatpush1.msra.mxu0 0.0
    %8012 = vmatprep.subr.mxu0 0.0
    %8013 = vmatpush1.msra.mxu0 0.0
    %8014 = vmatprep.subr.mxu0 0.0
    %8015 = vmatpush1.msra.mxu0 0.0
    %8016 = vmatprep.subr.mxu0 0.0
    %8017 = vmatpush1.msra.mxu0 0.0
    %8018 = vmatprep.subr.mxu0 0.0
    %8019 = vmatpush1.msra.mxu0 0.0
    %8020 = vmatprep.subr.mxu0 0.0
    %8021 = vmatpush1.msra.mxu0 0.0
    %8022 = vmatprep.subr.mxu0 0.0
    %8023 = vmatpush1.msra.mxu0 0.0
    %8024 = vmatprep.subr.mxu0 0.0
    %8025 = vmatpush1.msra.mxu0 0.0
    %8026 = vmatprep.subr.mxu0 0.0
    %8027 = vmatpush1.msra.mxu0 0.0
    %8028 = vmatprep.subr.mxu0 0.0
    %8029 = vmatpush1.msra.mxu0 0.0
    %8030 = vmatprep.subr.mxu0 0.0
    %8031 = vmatpush1.msra.mxu0 0.0
    %8032 = vmatprep.subr.mxu0 0.0
    %8033 = vmatpush1.msra.mxu0 0.0
    %8034 = vmatprep.mubr.f32.mxu0 0.0
    %8035 = vmatmul.mubr.f32.gmra.mrb[0].mxu0 %v7965
    %v8036 = vpop.f32.mrb[0].mxu0
    %v8037 = vadd.f32 0.0, %v8036
    %v8038 = vpop.f32.mrb[0].mxu0
    %8039 = vmatprep.mubr.f32.mxu0 0.0
    %8040 = vmatmul.mubr.f32.gmra.mrb[0].mxu0 %v7968
    %v8041 = vpop.f32.mrb[0].mxu0
    %v8042 = vadd.f32 0.0, %v8041
    %v8043 = vpop.f32.mrb[0].mxu0
    %8044 = vdwg.mxu0
    %v8045 = vlaneseq
    %v8046 = vshrl.u32 %v8045, 7
    %v8047 = vadd.s32 %v8046, 8
    %vm8048 = vcmp.lt.s32.totalorder %v8046, 0
    %v8049 = vsub.s32 0, %v8046
    %v8050 = vsel %vm8048, %v8049, %v8046
    %v8051 = vshrl.u32 %v8050, 1
    %v8052 = vand.u32 %v8050, 1
    %v8053 = vsub.s32 0, %v8052
    %v8054 = vsel %vm8048, %v8053, %v8052
    %vm8055 = vcmp.lt.s32.totalorder %v8047, 0
    %v8056 = vsub.s32 0, %v8047
    %v8057 = vsel %vm8055, %v8056, %v8047
    %v8058 = vshrl.u32 %v8057, 1
    %v8059 = vand.u32 %v8057, 1
    %v8060 = vsub.s32 0, %v8059
    %v8061 = vsel %vm8055, %v8060, %v8059
    %vm8062 = vcmp.ne.s32.totalorder %v8054, 0
    %vm8063 = vcmp.ne.s32.totalorder %v8061, 0
    %vm8064 = vcmp.lt.s32.totalorder %v8054, 0
    %vm8065 = vcmp.lt.s32.totalorder %v8061, 0
    %vm8066 = vmand %vm8064, %vm8062
    %vm8067 = vmand %vm8065, %vm8063
    %v8068 = vadd.s32 %v8054, 2
    %v8069 = vadd.s32 %v8061, 2
    %v8070 = vsel %vm8066, %v8068, %v8054
    %v8071 = vsel %vm8067, %v8069, %v8061
    %vm8072 = vcmp.eq.s32.totalorder %v8070, 0
    %vm8073 = vcmp.eq.s32.totalorder %v8071, 0
    %v8074 = vsel %vm8072, %v8037, -1e+30
    %v8075 = vsel %vm8073, %v8042, -1e+30
    %vm8076 = vcmask 7168
    %v8077 = vsel %vm8076, %v8074, -inf
    %v8078 = vsel %vm8076, %v8075, -inf
    %v8079 = vmax.f32 %v8077, %v8078
    %v8080 = vrot.slane %v8079, 4
    %v8081 = vmax.f32 %v8079, %v8080
    %v8082 = vrot.slane %v8081, 2
    %v8083 = vmax.f32 %v8081, %v8082
    %v8084 = vrot.slane %v8083, 1
    %v8085 = vmax.f32 %v8083, %v8084
    %v8086 = vsub.f32 %v8037, %v8085
    %v8087 = vsub.f32 %v8042, %v8085
    %v8088 = vmul.f32 %v8086, 1.442695
    %v8089 = vpow.pop %v8088
    %v8090 = vmul.f32 %v8087, 1.442695
    %v8091 = vpow.pop %v8090
    %v8092 = vsel %vm8072, %v8089, 0.0
    %v8093 = vsel %vm8073, %v8091, 0.0
    %v8094 = vsel %vm8076, %v8092, 0.0
    %v8095 = vsel %vm8076, %v8093, 0.0
    %v8096 = vadd.f32 %v8094, %v8095
    %v8097 = vrot.slane %v8096, 4
    %v8098 = vadd.f32 %v8096, %v8097
    %v8099 = vrot.slane %v8098, 2
    %v8100 = vadd.f32 %v8098, %v8099
    %v8101 = vrot.slane %v8100, 1
    %v8102 = vadd.f32 %v8100, %v8101
    %v8103 = vrcp.pop %v8102
    %v8104 = vmul.f32 %v8092, %v8103
    %v8105 = vmul.f32 %v8093, %v8103
    %8107 = vset.pattern.permute.xlu0 0
    %8108 = vperm.xlu0 %8107, %v8104
    %v8109 = vpop.permute.xlu0 %8108
    %8112 = vset.pattern.permute.xlu0 0
    %8113 = vperm.xlu0 %8112, %v8105
    %v8114 = vpop.permute.xlu0 %8113
    %v8116 = vmul.f32 %v8109, %v7677
    %v8117 = vmul.f32 %v8114, %v7678
    %v8118 = vsel %vm307, %v8116, 0.0
    %v8119 = vsel %vm307, %v8117, 0.0
    %v8120 = vadd.f32 %v8118, %v8119
    %v8121 = vrot.slane %v8120, 4
    %v8122 = vadd.f32 %v8120, %v8121
    %v8123 = vrot.slane %v8122, 2
    %v8124 = vadd.f32 %v8122, %v8123
    %v8125 = vrot.slane %v8124, 1
    %v8126 = vadd.f32 %v8124, %v8125
    %vm8127 = vcmp.eq.s32.totalorder %v8070, 1
    %vm8128 = vcmp.eq.s32.totalorder %v8071, 1
    %v8129 = vsel %vm8127, %v8037, -1e+30
    %v8130 = vsel %vm8128, %v8042, -1e+30
    %v8131 = vsel %vm8076, %v8129, -inf
    %v8132 = vsel %vm8076, %v8130, -inf
    %v8133 = vmax.f32 %v8131, %v8132
    %v8134 = vrot.slane %v8133, 4
    %v8135 = vmax.f32 %v8133, %v8134
    %v8136 = vrot.slane %v8135, 2
    %v8137 = vmax.f32 %v8135, %v8136
    %v8138 = vrot.slane %v8137, 1
    %v8139 = vmax.f32 %v8137, %v8138
    %v8140 = vsub.f32 %v8037, %v8139
    %v8141 = vsub.f32 %v8042, %v8139
    %v8142 = vmul.f32 %v8140, 1.442695
    %v8143 = vpow.pop %v8142
    %v8144 = vmul.f32 %v8141, 1.442695
    %v8145 = vpow.pop %v8144
    %v8146 = vsel %vm8127, %v8143, 0.0
    %v8147 = vsel %vm8128, %v8145, 0.0
    %v8148 = vsel %vm8076, %v8146, 0.0
    %v8149 = vsel %vm8076, %v8147, 0.0
    %v8150 = vadd.f32 %v8148, %v8149
    %v8151 = vrot.slane %v8150, 4
    %v8152 = vadd.f32 %v8150, %v8151
    %v8153 = vrot.slane %v8152, 2
    %v8154 = vadd.f32 %v8152, %v8153
    %v8155 = vrot.slane %v8154, 1
    %v8156 = vadd.f32 %v8154, %v8155
    %v8157 = vrcp.pop %v8156
    %v8158 = vmul.f32 %v8146, %v8157
    %v8159 = vmul.f32 %v8147, %v8157
    %8161 = vset.pattern.permute.xlu0 0
    %8162 = vperm.xlu0 %8161, %v8158
    %v8163 = vpop.permute.xlu0 %8162
    %8166 = vset.pattern.permute.xlu0 0
    %8167 = vperm.xlu0 %8166, %v8159
    %v8168 = vpop.permute.xlu0 %8167
    %v8170 = vmul.f32 %v8163, %v7677
    %v8171 = vmul.f32 %v8168, %v7678
    %v8172 = vsel %vm307, %v8170, 0.0
    %v8173 = vsel %vm307, %v8171, 0.0
    %v8174 = vadd.f32 %v8172, %v8173
    %v8175 = vrot.slane %v8174, 4
    %v8176 = vadd.f32 %v8174, %v8175
    %v8177 = vrot.slane %v8176, 2
    %v8178 = vadd.f32 %v8176, %v8177
    %v8179 = vrot.slane %v8178, 1
    %v8180 = vadd.f32 %v8178, %v8179
    %vm8181 = vcmask 1040384
    %v8182 = vsel %vm8181, %v8126, %v8180
    %v8183 = vld [vmem:[#allocation16] sm:$0xff]
    %v8184 = vld [vmem:[#allocation16 + $0x8] sm:$0xff]
    %v8185 = vld [vmem:[#allocation16 + $0x10] sm:$0xff]
    %v8186 = vld [vmem:[#allocation16 + $0x18] sm:$0xff]
    %v8187 = vld [vmem:[#allocation16 + $0x20] sm:$0xff]
    %v8188 = vld [vmem:[#allocation16 + $0x28] sm:$0xff]
    %v8189 = vld [vmem:[#allocation16 + $0x30] sm:$0xff]
    %v8190 = vld [vmem:[#allocation16 + $0x38] sm:$0xff]
    %v8191 = vld [vmem:[#allocation17] sm:$0xff]
    %v8192 = vld [vmem:[#allocation17 + $0x8] sm:$0xff]
    %v8193 = vld [vmem:[#allocation17 + $0x10] sm:$0xff]
    %v8194 = vld [vmem:[#allocation17 + $0x18] sm:$0xff]
    %v8195 = vld [vmem:[#allocation17 + $0x20] sm:$0xff]
    %v8196 = vld [vmem:[#allocation17 + $0x28] sm:$0xff]
    %v8197 = vld [vmem:[#allocation17 + $0x30] sm:$0xff]
    %v8198 = vld [vmem:[#allocation17 + $0x38] sm:$0xff]
    %8199 = vmatprep.subr.mxu0 0.0
    %8200 = vmatpush1.msra.mxu0 %v8191
    %8201 = vmatprep.subr.mxu0 0.0
    %8202 = vmatpush1.msra.mxu0 %v8192
    %8203 = vmatprep.subr.mxu0 0.0
    %8204 = vmatpush1.msra.mxu0 %v8193
    %8205 = vmatprep.subr.mxu0 0.0
    %8206 = vmatpush1.msra.mxu0 %v8194
    %8207 = vmatprep.subr.mxu0 0.0
    %8208 = vmatpush1.msra.mxu0 %v8195
    %8209 = vmatprep.subr.mxu0 0.0
    %8210 = vmatpush1.msra.mxu0 %v8196
    %8211 = vmatprep.subr.mxu0 0.0
    %8212 = vmatpush1.msra.mxu0 %v8197
    %8213 = vmatprep.subr.mxu0 0.0
    %8214 = vmatpush1.msra.mxu0 %v8198
    %8215 = vmatprep.subr.mxu0 0.0
    %8216 = vmatpush1.msra.mxu0 0.0
    %8217 = vmatprep.subr.mxu0 0.0
    %8218 = vmatpush1.msra.mxu0 0.0
    %8219 = vmatprep.subr.mxu0 0.0
    %8220 = vmatpush1.msra.mxu0 0.0
    %8221 = vmatprep.subr.mxu0 0.0
    %8222 = vmatpush1.msra.mxu0 0.0
    %8223 = vmatprep.subr.mxu0 0.0
    %8224 = vmatpush1.msra.mxu0 0.0
    %8225 = vmatprep.subr.mxu0 0.0
    %8226 = vmatpush1.msra.mxu0 0.0
    %8227 = vmatprep.subr.mxu0 0.0
    %8228 = vmatpush1.msra.mxu0 0.0
    %8229 = vmatprep.subr.mxu0 0.0
    %8230 = vmatpush1.msra.mxu0 0.0
    %8231 = vmatprep.subr.mxu0 0.0
    %8232 = vmatpush1.msra.mxu0 0.0
    %8233 = vmatprep.subr.mxu0 0.0
    %8234 = vmatpush1.msra.mxu0 0.0
    %8235 = vmatprep.subr.mxu0 0.0
    %8236 = vmatpush1.msra.mxu0 0.0
    %8237 = vmatprep.subr.mxu0 0.0
    %8238 = vmatpush1.msra.mxu0 0.0
    %8239 = vmatprep.subr.mxu0 0.0
    %8240 = vmatpush1.msra.mxu0 0.0
    %8241 = vmatprep.subr.mxu0 0.0
    %8242 = vmatpush1.msra.mxu0 0.0
    %8243 = vmatprep.subr.mxu0 0.0
    %8244 = vmatpush1.msra.mxu0 0.0
    %8245 = vmatprep.subr.mxu0 0.0
    %8246 = vmatpush1.msra.mxu0 0.0
    %8247 = vmatprep.subr.mxu0 0.0
    %8248 = vmatpush1.msra.mxu0 0.0
    %8249 = vmatprep.subr.mxu0 0.0
    %8250 = vmatpush1.msra.mxu0 0.0
    %8251 = vmatprep.subr.mxu0 0.0
    %8252 = vmatpush1.msra.mxu0 0.0
    %8253 = vmatprep.subr.mxu0 0.0
    %8254 = vmatpush1.msra.mxu0 0.0
    %8255 = vmatprep.subr.mxu0 0.0
    %8256 = vmatpush1.msra.mxu0 0.0
    %8257 = vmatprep.subr.mxu0 0.0
    %8258 = vmatpush1.msra.mxu0 0.0
    %8259 = vmatprep.subr.mxu0 0.0
    %8260 = vmatpush1.msra.mxu0 0.0
    %8261 = vmatprep.subr.mxu0 0.0
    %8262 = vmatpush1.msra.mxu0 0.0
    %8263 = vmatprep.mubr.f32.mxu0 0.0
    %8264 = vmatmul.mubr.f32.gmra.mrb[0].mxu0 %v1010
    %v8265 = vpop.f32.mrb[0].mxu0
    %v8266 = vadd.f32 0.0, %v8265
    %v8267 = vpop.f32.mrb[0].mxu0
    %8268 = vdwg.mxu0
    %v8270 = vsel %vm307, %v8182, 0
    %8272 = vmatprep.subr.mxu0 0.0
    %8273 = vmatpush1.msra.mxu0 %v8183
    %8274 = vmatprep.subr.mxu0 0.0
    %8275 = vmatpush1.msra.mxu0 %v8184
    %8276 = vmatprep.subr.mxu0 0.0
    %8277 = vmatpush1.msra.mxu0 %v8185
    %8278 = vmatprep.subr.mxu0 0.0
    %8279 = vmatpush1.msra.mxu0 %v8186
    %8280 = vmatprep.subr.mxu0 0.0
    %8281 = vmatpush1.msra.mxu0 %v8187
    %8282 = vmatprep.subr.mxu0 0.0
    %8283 = vmatpush1.msra.mxu0 %v8188
    %8284 = vmatprep.subr.mxu0 0.0
    %8285 = vmatpush1.msra.mxu0 %v8189
    %8286 = vmatprep.subr.mxu0 0.0
    %8287 = vmatpush1.msra.mxu0 %v8190
    %8288 = vmatprep.subr.mxu0 0.0
    %8289 = vmatpush1.msra.mxu0 0.0
    %8290 = vmatprep.subr.mxu0 0.0
    %8291 = vmatpush1.msra.mxu0 0.0
    %8292 = vmatprep.subr.mxu0 0.0
    %8293 = vmatpush1.msra.mxu0 0.0
    %8294 = vmatprep.subr.mxu0 0.0
    %8295 = vmatpush1.msra.mxu0 0.0
    %8296 = vmatprep.subr.mxu0 0.0
    %8297 = vmatpush1.msra.mxu0 0.0
    %8298 = vmatprep.subr.mxu0 0.0
    %8299 = vmatpush1.msra.mxu0 0.0
    %8300 = vmatprep.subr.mxu0 0.0
    %8301 = vmatpush1.msra.mxu0 0.0
    %8302 = vmatprep.subr.mxu0 0.0
    %8303 = vmatpush1.msra.mxu0 0.0
    %8304 = vmatprep.subr.mxu0 0.0
    %8305 = vmatpush1.msra.mxu0 0.0
    %8306 = vmatprep.subr.mxu0 0.0
    %8307 = vmatpush1.msra.mxu0 0.0
    %8308 = vmatprep.subr.mxu0 0.0
    %8309 = vmatpush1.msra.mxu0 0.0
    %8310 = vmatprep.subr.mxu0 0.0
    %8311 = vmatpush1.msra.mxu0 0.0
    %8312 = vmatprep.subr.mxu0 0.0
    %8313 = vmatpush1.msra.mxu0 0.0
    %8314 = vmatprep.subr.mxu0 0.0
    %8315 = vmatpush1.msra.mxu0 0.0
    %8316 = vmatprep.subr.mxu0 0.0
    %8317 = vmatpush1.msra.mxu0 0.0
    %8318 = vmatprep.subr.mxu0 0.0
    %8319 = vmatpush1.msra.mxu0 0.0
    %8320 = vmatprep.subr.mxu0 0.0
    %8321 = vmatpush1.msra.mxu0 0.0
    %8322 = vmatprep.subr.mxu0 0.0
    %8323 = vmatpush1.msra.mxu0 0.0
    %8324 = vmatprep.subr.mxu0 0.0
    %8325 = vmatpush1.msra.mxu0 0.0
    %8326 = vmatprep.subr.mxu0 0.0
    %8327 = vmatpush1.msra.mxu0 0.0
    %8328 = vmatprep.subr.mxu0 0.0
    %8329 = vmatpush1.msra.mxu0 0.0
    %8330 = vmatprep.subr.mxu0 0.0
    %8331 = vmatpush1.msra.mxu0 0.0
    %8332 = vmatprep.subr.mxu0 0.0
    %8333 = vmatpush1.msra.mxu0 0.0
    %8334 = vmatprep.subr.mxu0 0.0
    %8335 = vmatpush1.msra.mxu0 0.0
    %8336 = vmatprep.mubr.f32.mxu0 0.0
    %8337 = vmatmul.mubr.f32.gmra.mrb[0].mxu0 %v8270
    %v8338 = vpop.f32.mrb[0].mxu0
    %v8339 = vadd.f32 %v8266, %v8338
    %v8340 = vpop.f32.mrb[0].mxu0
    %8341 = vdwg.mxu0
    %v8342 = vld [vmem:[#allocation19] sm:$0x1]
    %v8344 = vlaneseq
    %v8345 = vshrl.u32 %v8344, 7
    %v8346 = vsub.s32 0, %v8345
    %v8347 = vrot.slane %v8342, %v8346
    %v8349 = vadd.f32 %v8339, %v8347
    %8350 = vst [vmem:[#allocation20] sm:$0x3] %v8349
    // Predicated region
    $region178: #{forward.1} parent=1 // pred_check
      _
    $region179: #{forward.1} parent=1 // pred_check_branch
      %8352 = sbr.rel (0) target = $region181
    $region180: #{forward.1} parent=1 // pred_region
      _
    $region181: #{forward.1} parent=1 // pred_fallthru
      _
    // Predicated region
    $region182: #{forward.1} parent=1 // pred_check
      _
    $region183: #{forward.1} parent=1 // pred_check_branch
      %8354 = sbr.rel (0) target = $region185
    $region184: #{forward.1} parent=1 // pred_region
      %s8356 = ssub.s32 32, 32
      %8357 = vsyncadd [#allocation4], %s8356
      %s8359 = sshll.u32 [#allocation20], 4
      %s8360 = int_to_ptr.vmem [resolvable:$true] %s8359
      %8362 = dma.vmem_to_hbm [thread:$0]  %s8360, 32, %s69, [#allocation4]
    $region185: #{forward.1} parent=1 // pred_fallthru
      _
    // Predicated region
    $region186: #{forward.1} parent=1 // pred_check
      _
    $region187: #{forward.1} parent=1 // pred_check_branch
      %8364 = sbr.rel (0) target = $region189
    $region188: #{forward.1} parent=1 // pred_region
      _
    $region189: #{forward.1} parent=1 // pred_fallthru
      _
    // Predicated region
    $region190: #{forward.1} parent=1 // pred_check
      _
    $region191: #{forward.1} parent=1 // pred_check_branch
      %8366 = sbr.rel (0) target = $region193
    $region192: #{forward.1} parent=1 // pred_region
      %8367 = dma.done [#allocation4], 32
    $region193: #{forward.1} parent=1 // pred_fallthru
      _
    %8368 = vsyncpa [#allocation3], 1
    %8369 = vsyncpa [#allocation6], 1
    %8370 = vsyncpa [#allocation9], 1
    %8371 = vsyncpa [#allocation12], 1
    %8372 = vsyncpa [#allocation15], 1
    %8373 = vsyncpa [#allocation18], 1
    %8374 = vsyncpa [#allocation4], 1

</llo_original>
